<compile_context>
chip_gen: v6e
topology: v6e:2x2x1
jax: 0.10.0
libtpu: 0.0.40
codegen_flags: <defaults>
</compile_context>

<pallas_src>
import jax
import jax.numpy as jnp
from jax.experimental import pallas as pl
from jax.experimental.pallas import tpu as pltpu

# --------------------------------------------------------------------------
# Model configuration (matches the module's __init__ in the spec)
# --------------------------------------------------------------------------
INPUT_CHANNELS = 4
PATCH = 16
N_STAGES = 3
FEATS = [8, 16, 32]
KERNEL = 3
STRIDES = [1, 2, 2]
N_CONV_PER_STAGE = [2, 2, 2]
N_CONV_PER_STAGE_DEC = [2, 2]
NUM_CLASSES = 3
SEG_PAD = 8                      # classes padded to 8 -> lane-dense 16*8 = 128 output

_EPS = 1e-5
_SLOPE = 0.01


# --------------------------------------------------------------------------
# One fused Pallas kernel for the entire forward pass
# --------------------------------------------------------------------------
def _make_fused_kernel(names):
    n_params = len(names)

    def kernel(*refs):
        x_ref = refs[0]
        P = dict(zip(names, refs[1:1 + n_params]))
        o_ref = refs[1 + n_params]

        def conv3x3(xs_bands, sh_key, prefix):
            """3x3 conv: per kh tap, (0/1 row-shift matmul) x (block-banded weight).

            xs_bands: list of (activation value, band name) — multiple entries give
            the split-K form used to avoid the decoder skip concat.
            """
            sh_ref = P[sh_key]
            pairs = [(x.astype(jnp.bfloat16), P[band_key]) for x, band_key in xs_bands]
            acc = None
            for kh in range(KERNEL):
                sh_kh = sh_ref[kh]                       # (N*Ho, N*Hin) bf16 0/1
                for xb, band_ref in pairs:
                    s = jnp.dot(sh_kh, xb,
                                preferred_element_type=jnp.float32).astype(jnp.bfloat16)
                    t = jnp.dot(s, band_ref[kh], preferred_element_type=jnp.float32)
                    acc = t if acc is None else acc + t
            return acc + P[prefix + "_bias"][...]        # (N*Ho, Wo*Cout) f32

        def inorm_lrelu(y, a_key, prefix, wo, cout):
            """InstanceNorm2d(affine) + LeakyReLU(0.01); batch folded into sublanes.

            Per-sample row reduce via a tiny block-diagonal averaging matmul, lane
            (W) reduce via log2(Wo) XLU rolls by Cout.  Norm math stays f32.
            """
            a = P[a_key][...]                            # (N*Ho, N*Ho) f32
            t1 = jnp.dot(a, y, preferred_element_type=jnp.float32)
            t2 = jnp.dot(a, y * y, preferred_element_type=jnp.float32)
            shift = cout
            while shift < wo * cout:                     # Wo is a power of 2
                t1 = t1 + pltpu.roll(t1, shift=shift, axis=1)
                t2 = t2 + pltpu.roll(t2, shift=shift, axis=1)
                shift *= 2
            mean = t1 * (1.0 / wo)
            # NOTE: E[x^2] - mean^2 in f32; fine at this scale (see review notes).
            var = t2 * (1.0 / wo) - mean * mean
            scale = P[prefix + "_gamma"][...] * jax.lax.rsqrt(var + _EPS)
            z = (y - mean) * scale + P[prefix + "_beta"][...]
            return jnp.where(z >= 0, z, _SLOPE * z)

        def transp_up(x, t_key, e_key):
            """ConvTranspose2d (kernel==stride==2): 2 phase matmuls + row interleave."""
            xb = x.astype(jnp.bfloat16)
            tband = P[t_key + "_band"]
            u0 = jnp.dot(xb, tband[0], preferred_element_type=jnp.float32)
            u1 = jnp.dot(xb, tband[1], preferred_element_type=jnp.float32)
            e = P[e_key]                                  # (2, N*Hup, N*Hb) f32 0/1
            return (jnp.dot(e[0], u0, preferred_element_type=jnp.float32)
                    + jnp.dot(e[1], u1, preferred_element_type=jnp.float32)
                    + P[t_key + "_bias"][...])

        x0 = x_ref[...]                                   # (N*16, 16*4) bf16

        # ------------------------------- encoder -------------------------------
        h = conv3x3([(x0, "e00_band")], "sh_16_1", "e00")
        h = inorm_lrelu(h, "A_16", "e00", 16, 8)
        h = conv3x3([(h, "e01_band")], "sh_16_1", "e01")
        skip0 = inorm_lrelu(h, "A_16", "e01", 16, 8)      # (N*16, 128)

        h = conv3x3([(skip0, "e10_band")], "sh_16_2", "e10")
        h = inorm_lrelu(h, "A_8", "e10", 8, 16)
        h = conv3x3([(h, "e11_band")], "sh_8_1", "e11")
        skip1 = inorm_lrelu(h, "A_8", "e11", 8, 16)       # (N*8, 128)

        h = conv3x3([(skip1, "e20_band")], "sh_8_2", "e20")
        h = inorm_lrelu(h, "A_4", "e20", 4, 32)
        h = conv3x3([(h, "e21_band")], "sh_4_1", "e21")
        h = inorm_lrelu(h, "A_4", "e21", 4, 32)           # bottleneck (N*4, 128)

        # ---------------------------- decoder stage 0 ---------------------------
        up = transp_up(h, "t0", "E_4")                    # (N*8, 128)
        h = conv3x3([(up, "d00_band_up"), (skip1, "d00_band_skip")], "sh_8_1", "d00")
        h = inorm_lrelu(h, "A_8", "d00", 8, 16)
        h = conv3x3([(h, "d01_band")], "sh_8_1", "d01")
        h = inorm_lrelu(h, "A_8", "d01", 8, 16)

        # ---------------------------- decoder stage 1 ---------------------------
        up = transp_up(h, "t1", "E_8")                    # (N*16, 128)
        h = conv3x3([(up, "d10_band_up"), (skip0, "d10_band_skip")], "sh_16_1", "d10")
        h = inorm_lrelu(h, "A_16", "d10", 16, 8)
        h = conv3x3([(h, "d11_band")], "sh_16_1", "d11")
        h = inorm_lrelu(h, "A_16", "d11", 16, 8)

        # ---------------- seg head: 1x1 conv, classes zero-padded to 8 ----------
        seg = (jnp.dot(h.astype(jnp.bfloat16), P["seg_band"][0],
                       preferred_element_type=jnp.float32)
               + P["seg_bias"][...])
        o_ref[...] = seg                                  # lane-dense (N*16, 128) f32

    return kernel


def build_forward(names):
    kernel = _make_fused_kernel(names)

    def forward(x_nchw, arrays):
        n, c, hh, ww = x_nchw.shape
        assert (c, hh, ww) == (INPUT_CHANNELS, PATCH, PATCH)
        # NCHW -> (N*H, W*C) rows, bf16 for the MXU (single boundary op).
        x_rows = (jnp.transpose(x_nchw, (0, 2, 3, 1))
                  .reshape(n * hh, ww * c).astype(jnp.bfloat16))
        out = pl.pallas_call(
            kernel,
            out_shape=jax.ShapeDtypeStruct((n * hh, ww * SEG_PAD), jnp.float32),
        )(x_rows, *arrays)
        out = out.reshape(n, hh, ww, SEG_PAD)[..., :NUM_CLASSES]
        return jnp.transpose(out, (0, 3, 1, 2))           # NHWC -> NCHW
    return forward


# --------------------------------------------------------------------------
# Parameters (PyTorch layouts)
# --------------------------------------------------------------------------
def _init(key, shape, scale=0.05):
    return scale * jax.random.normal(key, shape, dtype=jnp.float32)


def make_params(key):
    params = {"enc": [], "dec": [], "seg": {}}
    cnt = [0]

    def nk():
        cnt[0] += 1
        return jax.random.fold_in(key, cnt[0])

    cin = INPUT_CHANNELS
    for s in range(N_STAGES):
        stage = []
        for _ in range(N_CONV_PER_STAGE[s]):
            cout = FEATS[s]
            stage.append({
                "w": _init(nk(), (cout, cin, KERNEL, KERNEL)),
                "b": _init(nk(), (cout,)),
                "gamma": 1.0 + _init(nk(), (cout,)),
                "beta": _init(nk(), (cout,)),
            })
            cin = cout
        params["enc"].append(stage)

    for d in range(N_STAGES - 1):
        s_idx = N_STAGES - 1 - d
        cbelow, cskip, k = FEATS[s_idx], FEATS[s_idx - 1], STRIDES[s_idx]
        dec = {"tw": _init(nk(), (cbelow, cskip, k, k)),
               "tb": _init(nk(), (cskip,)),
               "convs": []}
        ci = 2 * cskip
        for _ in range(N_CONV_PER_STAGE_DEC[d]):
            dec["convs"].append({
                "w": _init(nk(), (cskip, ci, KERNEL, KERNEL)),
                "b": _init(nk(), (cskip,)),
                "gamma": 1.0 + _init(nk(), (cskip,)),
                "beta": _init(nk(), (cskip,)),
            })
            ci = cskip
        params["dec"].append(dec)

    params["seg"] = {"w": _init(nk(), (NUM_CLASSES, FEATS[0], 1, 1)),
                     "b": _init(nk(), (NUM_CLASSES,))}
    return params


# --------------------------------------------------------------------------
# One-time weight / operator repacking
# --------------------------------------------------------------------------
def _band(w_oihw, win, stride):
    """Block-banded conv weight: rows (w, cin), cols (wo, cout); W-halo folded in."""
    cout, cin, k, _ = w_oihw.shape
    pad = (k - 1) // 2
    wo_n = (win + 2 * pad - k) // stride + 1
    wr = jnp.transpose(w_oihw.astype(jnp.float32), (2, 3, 1, 0))   # (kh, kw, cin, cout)
    w_i = jnp.arange(win)[:, None, None]
    kw_i = jnp.arange(k)[None, :, None]
    wo_i = jnp.arange(wo_n)[None, None, :]
    sel = (w_i == stride * wo_i + kw_i - pad).astype(jnp.float32)  # (win, k, wo)
    band = jnp.einsum("wxq,hxio->hwiqo", sel, wr)
    return band.reshape(k, win * cin, wo_n * cout)


def _tband(tw, wb):
    """ConvTranspose (kernel==stride) per-output-row-phase weights:
    (s, wb*cin, s*wb*cout); rows (w, cin), cols (v = s*w + b, cout)."""
    cin, cout, s, _ = tw.shape
    w_i = jnp.arange(wb)[:, None, None]
    b_i = jnp.arange(s)[None, :, None]
    v_i = jnp.arange(s * wb)[None, None, :]
    sel = (v_i == s * w_i + b_i).astype(jnp.float32)               # (wb, s, s*wb)
    band = jnp.einsum("wbv,ioab->awivo", sel, tw.astype(jnp.float32))
    return band.reshape(s, wb * cin, s * wb * cout)


def _shift_mats(n, hin, ho, stride, k=KERNEL, pad=1):
    """Per-tap 0/1 row-selection matrices (k, n*ho, n*hin); H-halo rows all-zero."""
    ho_i = jnp.arange(ho)[:, None]
    hi_i = jnp.arange(hin)[None, :]
    taps = jnp.stack([(hi_i == stride * ho_i + kh - pad).astype(jnp.float32)
                      for kh in range(k)])                         # (k, ho, hin)
    eye_n = jnp.eye(n, dtype=jnp.float32)
    return jnp.einsum("khj,nm->knhmj", taps, eye_n).reshape(k, n * ho, n * hin)


def _interleave(n, hb, s=2):
    """(s, n*s*hb, n*hb) 0/1 matrices placing phase-a row h at output row s*h + a."""
    r_i = jnp.arange(s * hb)[:, None]
    h_i = jnp.arange(hb)[None, :]
    phases = jnp.stack([(r_i == s * h_i + a).astype(jnp.float32) for a in range(s)])
    eye_n = jnp.eye(n, dtype=jnp.float32)
    return jnp.einsum("arh,nm->anrmh", phases, eye_n).reshape(s, n * s * hb, n * hb)


def _rowpool(n, ho):
    """Block-diagonal per-sample row-averaging matrix (n*ho, n*ho) for InstanceNorm."""
    eye_n = jnp.eye(n, dtype=jnp.float32)
    blk = jnp.full((ho, ho), 1.0 / ho, dtype=jnp.float32)
    return jnp.einsum("nm,hk->nhmk", eye_n, blk).reshape(n * ho, n * ho)


def _tile_row(v, reps):
    v = v.astype(jnp.float32)
    return jnp.tile(v, reps).reshape(1, reps * v.shape[0])


def pack_params(params, batch):
    n = batch
    items = []

    def add(name, arr):
        items.append((name, arr))

    # Shared geometry operators (deduped across layers).
    add("sh_16_1", _shift_mats(n, 16, 16, 1).astype(jnp.bfloat16))
    add("sh_16_2", _shift_mats(n, 16, 8, 2).astype(jnp.bfloat16))
    add("sh_8_1", _shift_mats(n, 8, 8, 1).astype(jnp.bfloat16))
    add("sh_8_2", _shift_mats(n, 8, 4, 2).astype(jnp.bfloat16))
    add("sh_4_1", _shift_mats(n, 4, 4, 1).astype(jnp.bfloat16))
    add("A_16", _rowpool(n, 16))
    add("A_8", _rowpool(n, 8))
    add("A_4", _rowpool(n, 4))
    add("E_4", _interleave(n, 4))
    add("E_8", _interleave(n, 8))

    def add_conv(prefix, p, win, stride):
        wo = (win + 2 - KERNEL) // stride + 1
        add(prefix + "_band", _band(p["w"], win, stride).astype(jnp.bfloat16))
        add(prefix + "_bias", _tile_row(p["b"], wo))
        add(prefix + "_gamma", _tile_row(p["gamma"], wo))
        add(prefix + "_beta", _tile_row(p["beta"], wo))

    # Encoder layers: (name, Win, stride).
    enc_plan = [("e00", 16, 1), ("e01", 16, 1), ("e10", 16, 2),
                ("e11", 8, 1), ("e20", 8, 2), ("e21", 4, 1)]
    flat_enc = [params["enc"][s][c]
                for s in range(N_STAGES) for c in range(N_CONV_PER_STAGE[s])]
    for (name, win, st), p in zip(enc_plan, flat_enc):
        add_conv(name, p, win, st)

    # Stage spatial sizes.
    stage_hw = []
    hw = PATCH
    for s in range(N_STAGES):
        hw = hw // STRIDES[s]
        stage_hw.append(hw)

    # Decoder stages.
    for d in range(N_STAGES - 1):
        s_idx = N_STAGES - 1 - d
        wb, wskip, cskip = stage_hw[s_idx], stage_hw[s_idx - 1], FEATS[s_idx - 1]
        dp = params["dec"][d]
        st = dp["tw"].shape[2]
        add(f"t{d}_band", _tband(dp["tw"], wb).astype(jnp.bfloat16))
        add(f"t{d}_bias", _tile_row(dp["tb"], st * wb))
        # First decoder conv: concat replaced by a K-split band (up | skip).
        p0 = dp["convs"][0]
        add(f"d{d}0_band_up", _band(p0["w"][:, :cskip], wskip, 1).astype(jnp.bfloat16))
        add(f"d{d}0_band_skip", _band(p0["w"][:, cskip:], wskip, 1).astype(jnp.bfloat16))
        add(f"d{d}0_bias", _tile_row(p0["b"], wskip))
        add(f"d{d}0_gamma", _tile_row(p0["gamma"], wskip))
        add(f"d{d}0_beta", _tile_row(p0["beta"], wskip))
        add_conv(f"d{d}1", dp["convs"][1], wskip, 1)

    # Seg head: pad classes 3 -> 8 so the output store is lane-dense (16*8 = 128).
    seg_w = jnp.zeros((SEG_PAD, FEATS[0], 1, 1), jnp.float32)
    seg_w = seg_w.at[:NUM_CLASSES].set(params["seg"]["w"])
    seg_b = jnp.zeros((SEG_PAD,), jnp.float32).at[:NUM_CLASSES].set(params["seg"]["b"])
    add("seg_band", _band(seg_w, PATCH, 1).astype(jnp.bfloat16))
    add("seg_bias", _tile_row(seg_b, PATCH))

    names = tuple(nm for nm, _ in items)
    arrays = [a for _, a in items]
    return names, arrays


# --------------------------------------------------------------------------
if __name__ == "__main__":
    key = jax.random.PRNGKey(0)
    kx, kp = jax.random.split(key)
    x = jax.random.normal(kx, (2, INPUT_CHANNELS, PATCH, PATCH), dtype=jnp.float32)

    params = make_params(kp)
    names, arrays = pack_params(params, batch=2)     # one-time repacking

    fwd = jax.jit(build_forward(names))
    out = jax.block_until_ready(fwd(x, arrays))

    assert out.shape == (2, NUM_CLASSES, PATCH, PATCH), out.shape
    assert out.dtype == jnp.float32
    assert bool(jnp.all(jnp.isfinite(out)))
    print("KERNEL_OK")
</pallas_src>

<mosaic_0001>
module attributes {stable_mosaic.version = 11 : i64} {
  func.func @kernel(%arg0: memref<32x64xbf16, #tpu.memory_space<vmem>>, %arg1: memref<3x32x32xbf16, #tpu.memory_space<vmem>>, %arg2: memref<3x16x32xbf16, #tpu.memory_space<vmem>>, %arg3: memref<3x16x16xbf16, #tpu.memory_space<vmem>>, %arg4: memref<3x8x16xbf16, #tpu.memory_space<vmem>>, %arg5: memref<3x8x8xbf16, #tpu.memory_space<vmem>>, %arg6: memref<32x32xf32, #tpu.memory_space<vmem>>, %arg7: memref<16x16xf32, #tpu.memory_space<vmem>>, %arg8: memref<8x8xf32, #tpu.memory_space<vmem>>, %arg9: memref<2x16x8xf32, #tpu.memory_space<vmem>>, %arg10: memref<2x32x16xf32, #tpu.memory_space<vmem>>, %arg11: memref<3x64x128xbf16, #tpu.memory_space<vmem>>, %arg12: memref<1x128xf32, #tpu.memory_space<vmem>>, %arg13: memref<1x128xf32, #tpu.memory_space<vmem>>, %arg14: memref<1x128xf32, #tpu.memory_space<vmem>>, %arg15: memref<3x128x128xbf16, #tpu.memory_space<vmem>>, %arg16: memref<1x128xf32, #tpu.memory_space<vmem>>, %arg17: memref<1x128xf32, #tpu.memory_space<vmem>>, %arg18: memref<1x128xf32, #tpu.memory_space<vmem>>, %arg19: memref<3x128x128xbf16, #tpu.memory_space<vmem>>, %arg20: memref<1x128xf32, #tpu.memory_space<vmem>>, %arg21: memref<1x128xf32, #tpu.memory_space<vmem>>, %arg22: memref<1x128xf32, #tpu.memory_space<vmem>>, %arg23: memref<3x128x128xbf16, #tpu.memory_space<vmem>>, %arg24: memref<1x128xf32, #tpu.memory_space<vmem>>, %arg25: memref<1x128xf32, #tpu.memory_space<vmem>>, %arg26: memref<1x128xf32, #tpu.memory_space<vmem>>, %arg27: memref<3x128x128xbf16, #tpu.memory_space<vmem>>, %arg28: memref<1x128xf32, #tpu.memory_space<vmem>>, %arg29: memref<1x128xf32, #tpu.memory_space<vmem>>, %arg30: memref<1x128xf32, #tpu.memory_space<vmem>>, %arg31: memref<3x128x128xbf16, #tpu.memory_space<vmem>>, %arg32: memref<1x128xf32, #tpu.memory_space<vmem>>, %arg33: memref<1x128xf32, #tpu.memory_space<vmem>>, %arg34: memref<1x128xf32, #tpu.memory_space<vmem>>, %arg35: memref<2x128x128xbf16, #tpu.memory_space<vmem>>, %arg36: memref<1x128xf32, #tpu.memory_space<vmem>>, %arg37: memref<3x128x128xbf16, #tpu.memory_space<vmem>>, %arg38: memref<3x128x128xbf16, #tpu.memory_space<vmem>>, %arg39: memref<1x128xf32, #tpu.memory_space<vmem>>, %arg40: memref<1x128xf32, #tpu.memory_space<vmem>>, %arg41: memref<1x128xf32, #tpu.memory_space<vmem>>, %arg42: memref<3x128x128xbf16, #tpu.memory_space<vmem>>, %arg43: memref<1x128xf32, #tpu.memory_space<vmem>>, %arg44: memref<1x128xf32, #tpu.memory_space<vmem>>, %arg45: memref<1x128xf32, #tpu.memory_space<vmem>>, %arg46: memref<2x128x128xbf16, #tpu.memory_space<vmem>>, %arg47: memref<1x128xf32, #tpu.memory_space<vmem>>, %arg48: memref<3x128x128xbf16, #tpu.memory_space<vmem>>, %arg49: memref<3x128x128xbf16, #tpu.memory_space<vmem>>, %arg50: memref<1x128xf32, #tpu.memory_space<vmem>>, %arg51: memref<1x128xf32, #tpu.memory_space<vmem>>, %arg52: memref<1x128xf32, #tpu.memory_space<vmem>>, %arg53: memref<3x128x128xbf16, #tpu.memory_space<vmem>>, %arg54: memref<1x128xf32, #tpu.memory_space<vmem>>, %arg55: memref<1x128xf32, #tpu.memory_space<vmem>>, %arg56: memref<1x128xf32, #tpu.memory_space<vmem>>, %arg57: memref<1x128x128xbf16, #tpu.memory_space<vmem>>, %arg58: memref<1x128xf32, #tpu.memory_space<vmem>>, %arg59: memref<32x128xf32, #tpu.memory_space<vmem>>) attributes {dimension_semantics = [], scalar_prefetch = 0 : i64, scratch_operands = 0 : i64, tpu.core_type = #tpu.core_type<tc>} {
    %c0 = arith.constant 0 : index
    %c0_0 = arith.constant 0 : index
    %0 = vector.load %arg0[%c0, %c0_0] : memref<32x64xbf16, #tpu.memory_space<vmem>>, vector<32x64xbf16>
    %c0_1 = arith.constant 0 : index
    %c0_2 = arith.constant 0 : index
    %c0_3 = arith.constant 0 : index
    %1 = vector.load %arg1[%c0_1, %c0_2, %c0_3] : memref<3x32x32xbf16, #tpu.memory_space<vmem>>, vector<1x32x32xbf16>
    %2 = vector.shape_cast %1 : vector<1x32x32xbf16> to vector<32x32xbf16>
    %cst = arith.constant dense<0.000000e+00> : vector<32x64xf32>
    %3 = tpu.matmul %2, %0, %cst {dimension_numbers = #tpu.dot_dimension_numbers<[1], [0], [0], [1], [0, 0, 1, 1], [], []>} : vector<32x32xbf16>, vector<32x64xbf16>, vector<32x64xf32> -> vector<32x64xf32>
    %4 = arith.truncf %3 : vector<32x64xf32> to vector<32x64xbf16>
    %c0_4 = arith.constant 0 : index
    %c0_5 = arith.constant 0 : index
    %c0_6 = arith.constant 0 : index
    %5 = vector.load %arg11[%c0_4, %c0_5, %c0_6] : memref<3x64x128xbf16, #tpu.memory_space<vmem>>, vector<1x64x128xbf16>
    %6 = vector.shape_cast %5 : vector<1x64x128xbf16> to vector<64x128xbf16>
    %cst_7 = arith.constant dense<0.000000e+00> : vector<32x128xf32>
    %7 = tpu.matmul %4, %6, %cst_7 {dimension_numbers = #tpu.dot_dimension_numbers<[1], [0], [0], [1], [0, 0, 1, 1], [], []>} : vector<32x64xbf16>, vector<64x128xbf16>, vector<32x128xf32> -> vector<32x128xf32>
    %c1 = arith.constant 1 : index
    %c0_8 = arith.constant 0 : index
    %c0_9 = arith.constant 0 : index
    %8 = vector.load %arg1[%c1, %c0_8, %c0_9] : memref<3x32x32xbf16, #tpu.memory_space<vmem>>, vector<1x32x32xbf16>
    %9 = vector.shape_cast %8 : vector<1x32x32xbf16> to vector<32x32xbf16>
    %cst_10 = arith.constant dense<0.000000e+00> : vector<32x64xf32>
    %10 = tpu.matmul %9, %0, %cst_10 {dimension_numbers = #tpu.dot_dimension_numbers<[1], [0], [0], [1], [0, 0, 1, 1], [], []>} : vector<32x32xbf16>, vector<32x64xbf16>, vector<32x64xf32> -> vector<32x64xf32>
    %11 = arith.truncf %10 : vector<32x64xf32> to vector<32x64xbf16>
    %c1_11 = arith.constant 1 : index
    %c0_12 = arith.constant 0 : index
    %c0_13 = arith.constant 0 : index
    %12 = vector.load %arg11[%c1_11, %c0_12, %c0_13] : memref<3x64x128xbf16, #tpu.memory_space<vmem>>, vector<1x64x128xbf16>
    %13 = vector.shape_cast %12 : vector<1x64x128xbf16> to vector<64x128xbf16>
    %cst_14 = arith.constant dense<0.000000e+00> : vector<32x128xf32>
    %14 = tpu.matmul %11, %13, %cst_14 {dimension_numbers = #tpu.dot_dimension_numbers<[1], [0], [0], [1], [0, 0, 1, 1], [], []>} : vector<32x64xbf16>, vector<64x128xbf16>, vector<32x128xf32> -> vector<32x128xf32>
    %15 = arith.addf %7, %14 : vector<32x128xf32>
    %c2 = arith.constant 2 : index
    %c0_15 = arith.constant 0 : index
    %c0_16 = arith.constant 0 : index
    %16 = vector.load %arg1[%c2, %c0_15, %c0_16] : memref<3x32x32xbf16, #tpu.memory_space<vmem>>, vector<1x32x32xbf16>
    %17 = vector.shape_cast %16 : vector<1x32x32xbf16> to vector<32x32xbf16>
    %cst_17 = arith.constant dense<0.000000e+00> : vector<32x64xf32>
    %18 = tpu.matmul %17, %0, %cst_17 {dimension_numbers = #tpu.dot_dimension_numbers<[1], [0], [0], [1], [0, 0, 1, 1], [], []>} : vector<32x32xbf16>, vector<32x64xbf16>, vector<32x64xf32> -> vector<32x64xf32>
    %19 = arith.truncf %18 : vector<32x64xf32> to vector<32x64xbf16>
    %c2_18 = arith.constant 2 : index
    %c0_19 = arith.constant 0 : index
    %c0_20 = arith.constant 0 : index
    %20 = vector.load %arg11[%c2_18, %c0_19, %c0_20] : memref<3x64x128xbf16, #tpu.memory_space<vmem>>, vector<1x64x128xbf16>
    %21 = vector.shape_cast %20 : vector<1x64x128xbf16> to vector<64x128xbf16>
    %cst_21 = arith.constant dense<0.000000e+00> : vector<32x128xf32>
    %22 = tpu.matmul %19, %21, %cst_21 {dimension_numbers = #tpu.dot_dimension_numbers<[1], [0], [0], [1], [0, 0, 1, 1], [], []>} : vector<32x64xbf16>, vector<64x128xbf16>, vector<32x128xf32> -> vector<32x128xf32>
    %23 = arith.addf %15, %22 : vector<32x128xf32>
    %c0_22 = arith.constant 0 : index
    %c0_23 = arith.constant 0 : index
    %24 = vector.load %arg12[%c0_22, %c0_23] : memref<1x128xf32, #tpu.memory_space<vmem>>, vector<1x128xf32>
    %25 = vector.broadcast %24 : vector<1x128xf32> to vector<32x128xf32>
    %26 = arith.addf %23, %25 : vector<32x128xf32>
    %c0_24 = arith.constant 0 : index
    %c0_25 = arith.constant 0 : index
    %27 = vector.load %arg6[%c0_24, %c0_25] : memref<32x32xf32, #tpu.memory_space<vmem>>, vector<32x32xf32>
    %cst_26 = arith.constant dense<0.000000e+00> : vector<32x128xf32>
    %28 = tpu.matmul %27, %26, %cst_26 {dimension_numbers = #tpu.dot_dimension_numbers<[1], [0], [0], [1], [0, 0, 1, 1], [], []>} : vector<32x32xf32>, vector<32x128xf32>, vector<32x128xf32> -> vector<32x128xf32>
    %29 = arith.mulf %26, %26 : vector<32x128xf32>
    %cst_27 = arith.constant dense<0.000000e+00> : vector<32x128xf32>
    %30 = tpu.matmul %27, %29, %cst_27 {dimension_numbers = #tpu.dot_dimension_numbers<[1], [0], [0], [1], [0, 0, 1, 1], [], []>} : vector<32x32xf32>, vector<32x128xf32>, vector<32x128xf32> -> vector<32x128xf32>
    %c8_i32 = arith.constant 8 : i32
    %31 = tpu.dynamic_rotate %28 by %c8_i32 dim 1 : vector<32x128xf32>, i32 -> vector<32x128xf32>
    %32 = arith.addf %28, %31 : vector<32x128xf32>
    %c8_i32_28 = arith.constant 8 : i32
    %33 = tpu.dynamic_rotate %30 by %c8_i32_28 dim 1 : vector<32x128xf32>, i32 -> vector<32x128xf32>
    %34 = arith.addf %30, %33 : vector<32x128xf32>
    %c16_i32 = arith.constant 16 : i32
    %35 = tpu.dynamic_rotate %32 by %c16_i32 dim 1 : vector<32x128xf32>, i32 -> vector<32x128xf32>
    %36 = arith.addf %32, %35 : vector<32x128xf32>
    %c16_i32_29 = arith.constant 16 : i32
    %37 = tpu.dynamic_rotate %34 by %c16_i32_29 dim 1 : vector<32x128xf32>, i32 -> vector<32x128xf32>
    %38 = arith.addf %34, %37 : vector<32x128xf32>
    %c32_i32 = arith.constant 32 : i32
    %39 = tpu.dynamic_rotate %36 by %c32_i32 dim 1 : vector<32x128xf32>, i32 -> vector<32x128xf32>
    %40 = arith.addf %36, %39 : vector<32x128xf32>
    %c32_i32_30 = arith.constant 32 : i32
    %41 = tpu.dynamic_rotate %38 by %c32_i32_30 dim 1 : vector<32x128xf32>, i32 -> vector<32x128xf32>
    %42 = arith.addf %38, %41 : vector<32x128xf32>
    %c64_i32 = arith.constant 64 : i32
    %43 = tpu.dynamic_rotate %40 by %c64_i32 dim 1 : vector<32x128xf32>, i32 -> vector<32x128xf32>
    %44 = arith.addf %40, %43 : vector<32x128xf32>
    %c64_i32_31 = arith.constant 64 : i32
    %45 = tpu.dynamic_rotate %42 by %c64_i32_31 dim 1 : vector<32x128xf32>, i32 -> vector<32x128xf32>
    %46 = arith.addf %42, %45 : vector<32x128xf32>
    %cst_32 = arith.constant 6.250000e-02 : f32
    %47 = vector.broadcast %cst_32 : f32 to vector<32x128xf32>
    %48 = arith.mulf %44, %47 : vector<32x128xf32>
    %cst_33 = arith.constant 6.250000e-02 : f32
    %49 = vector.broadcast %cst_33 : f32 to vector<32x128xf32>
    %50 = arith.mulf %46, %49 : vector<32x128xf32>
    %51 = arith.mulf %48, %48 : vector<32x128xf32>
    %52 = arith.subf %50, %51 : vector<32x128xf32>
    %c0_34 = arith.constant 0 : index
    %c0_35 = arith.constant 0 : index
    %53 = vector.load %arg13[%c0_34, %c0_35] : memref<1x128xf32, #tpu.memory_space<vmem>>, vector<1x128xf32>
    %cst_36 = arith.constant 9.99999974E-6 : f32
    %54 = vector.broadcast %cst_36 : f32 to vector<32x128xf32>
    %55 = arith.addf %52, %54 : vector<32x128xf32>
    %56 = math.rsqrt %55 : vector<32x128xf32>
    %57 = vector.broadcast %53 : vector<1x128xf32> to vector<32x128xf32>
    %58 = arith.mulf %57, %56 : vector<32x128xf32>
    %59 = arith.subf %26, %48 : vector<32x128xf32>
    %60 = arith.mulf %59, %58 : vector<32x128xf32>
    %c0_37 = arith.constant 0 : index
    %c0_38 = arith.constant 0 : index
    %61 = vector.load %arg14[%c0_37, %c0_38] : memref<1x128xf32, #tpu.memory_space<vmem>>, vector<1x128xf32>
    %62 = vector.broadcast %61 : vector<1x128xf32> to vector<32x128xf32>
    %63 = arith.addf %60, %62 : vector<32x128xf32>
    %cst_39 = arith.constant 0.000000e+00 : f32
    %64 = vector.broadcast %cst_39 : f32 to vector<32x128xf32>
    %65 = arith.cmpf oge, %63, %64 : vector<32x128xf32>
    %cst_40 = arith.constant 0.00999999977 : f32
    %66 = vector.broadcast %cst_40 : f32 to vector<32x128xf32>
    %67 = arith.mulf %66, %63 : vector<32x128xf32>
    %68 = arith.select %65, %63, %67 : vector<32x128xi1>, vector<32x128xf32>
    %69 = arith.truncf %68 : vector<32x128xf32> to vector<32x128xbf16>
    %c0_41 = arith.constant 0 : index
    %c0_42 = arith.constant 0 : index
    %c0_43 = arith.constant 0 : index
    %70 = vector.load %arg1[%c0_41, %c0_42, %c0_43] : memref<3x32x32xbf16, #tpu.memory_space<vmem>>, vector<1x32x32xbf16>
    %71 = vector.shape_cast %70 : vector<1x32x32xbf16> to vector<32x32xbf16>
    %cst_44 = arith.constant dense<0.000000e+00> : vector<32x128xf32>
    %72 = tpu.matmul %71, %69, %cst_44 {dimension_numbers = #tpu.dot_dimension_numbers<[1], [0], [0], [1], [0, 0, 1, 1], [], []>} : vector<32x32xbf16>, vector<32x128xbf16>, vector<32x128xf32> -> vector<32x128xf32>
    %73 = arith.truncf %72 : vector<32x128xf32> to vector<32x128xbf16>
    %c0_45 = arith.constant 0 : index
    %c0_46 = arith.constant 0 : index
    %c0_47 = arith.constant 0 : index
    %74 = vector.load %arg15[%c0_45, %c0_46, %c0_47] : memref<3x128x128xbf16, #tpu.memory_space<vmem>>, vector<1x128x128xbf16>
    %75 = vector.shape_cast %74 : vector<1x128x128xbf16> to vector<128x128xbf16>
    %cst_48 = arith.constant dense<0.000000e+00> : vector<32x128xf32>
    %76 = tpu.matmul %73, %75, %cst_48 {dimension_numbers = #tpu.dot_dimension_numbers<[1], [0], [0], [1], [0, 0, 1, 1], [], []>} : vector<32x128xbf16>, vector<128x128xbf16>, vector<32x128xf32> -> vector<32x128xf32>
    %c1_49 = arith.constant 1 : index
    %c0_50 = arith.constant 0 : index
    %c0_51 = arith.constant 0 : index
    %77 = vector.load %arg1[%c1_49, %c0_50, %c0_51] : memref<3x32x32xbf16, #tpu.memory_space<vmem>>, vector<1x32x32xbf16>
    %78 = vector.shape_cast %77 : vector<1x32x32xbf16> to vector<32x32xbf16>
    %cst_52 = arith.constant dense<0.000000e+00> : vector<32x128xf32>
    %79 = tpu.matmul %78, %69, %cst_52 {dimension_numbers = #tpu.dot_dimension_numbers<[1], [0], [0], [1], [0, 0, 1, 1], [], []>} : vector<32x32xbf16>, vector<32x128xbf16>, vector<32x128xf32> -> vector<32x128xf32>
    %80 = arith.truncf %79 : vector<32x128xf32> to vector<32x128xbf16>
    %c1_53 = arith.constant 1 : index
    %c0_54 = arith.constant 0 : index
    %c0_55 = arith.constant 0 : index
    %81 = vector.load %arg15[%c1_53, %c0_54, %c0_55] : memref<3x128x128xbf16, #tpu.memory_space<vmem>>, vector<1x128x128xbf16>
    %82 = vector.shape_cast %81 : vector<1x128x128xbf16> to vector<128x128xbf16>
    %cst_56 = arith.constant dense<0.000000e+00> : vector<32x128xf32>
    %83 = tpu.matmul %80, %82, %cst_56 {dimension_numbers = #tpu.dot_dimension_numbers<[1], [0], [0], [1], [0, 0, 1, 1], [], []>} : vector<32x128xbf16>, vector<128x128xbf16>, vector<32x128xf32> -> vector<32x128xf32>
    %84 = arith.addf %76, %83 : vector<32x128xf32>
    %c2_57 = arith.constant 2 : index
    %c0_58 = arith.constant 0 : index
    %c0_59 = arith.constant 0 : index
    %85 = vector.load %arg1[%c2_57, %c0_58, %c0_59] : memref<3x32x32xbf16, #tpu.memory_space<vmem>>, vector<1x32x32xbf16>
    %86 = vector.shape_cast %85 : vector<1x32x32xbf16> to vector<32x32xbf16>
    %cst_60 = arith.constant dense<0.000000e+00> : vector<32x128xf32>
    %87 = tpu.matmul %86, %69, %cst_60 {dimension_numbers = #tpu.dot_dimension_numbers<[1], [0], [0], [1], [0, 0, 1, 1], [], []>} : vector<32x32xbf16>, vector<32x128xbf16>, vector<32x128xf32> -> vector<32x128xf32>
    %88 = arith.truncf %87 : vector<32x128xf32> to vector<32x128xbf16>
    %c2_61 = arith.constant 2 : index
    %c0_62 = arith.constant 0 : index
    %c0_63 = arith.constant 0 : index
    %89 = vector.load %arg15[%c2_61, %c0_62, %c0_63] : memref<3x128x128xbf16, #tpu.memory_space<vmem>>, vector<1x128x128xbf16>
    %90 = vector.shape_cast %89 : vector<1x128x128xbf16> to vector<128x128xbf16>
    %cst_64 = arith.constant dense<0.000000e+00> : vector<32x128xf32>
    %91 = tpu.matmul %88, %90, %cst_64 {dimension_numbers = #tpu.dot_dimension_numbers<[1], [0], [0], [1], [0, 0, 1, 1], [], []>} : vector<32x128xbf16>, vector<128x128xbf16>, vector<32x128xf32> -> vector<32x128xf32>
    %92 = arith.addf %84, %91 : vector<32x128xf32>
    %c0_65 = arith.constant 0 : index
    %c0_66 = arith.constant 0 : index
    %93 = vector.load %arg16[%c0_65, %c0_66] : memref<1x128xf32, #tpu.memory_space<vmem>>, vector<1x128xf32>
    %94 = vector.broadcast %93 : vector<1x128xf32> to vector<32x128xf32>
    %95 = arith.addf %92, %94 : vector<32x128xf32>
    %c0_67 = arith.constant 0 : index
    %c0_68 = arith.constant 0 : index
    %96 = vector.load %arg6[%c0_67, %c0_68] : memref<32x32xf32, #tpu.memory_space<vmem>>, vector<32x32xf32>
    %cst_69 = arith.constant dense<0.000000e+00> : vector<32x128xf32>
    %97 = tpu.matmul %96, %95, %cst_69 {dimension_numbers = #tpu.dot_dimension_numbers<[1], [0], [0], [1], [0, 0, 1, 1], [], []>} : vector<32x32xf32>, vector<32x128xf32>, vector<32x128xf32> -> vector<32x128xf32>
    %98 = arith.mulf %95, %95 : vector<32x128xf32>
    %cst_70 = arith.constant dense<0.000000e+00> : vector<32x128xf32>
    %99 = tpu.matmul %96, %98, %cst_70 {dimension_numbers = #tpu.dot_dimension_numbers<[1], [0], [0], [1], [0, 0, 1, 1], [], []>} : vector<32x32xf32>, vector<32x128xf32>, vector<32x128xf32> -> vector<32x128xf32>
    %c8_i32_71 = arith.constant 8 : i32
    %100 = tpu.dynamic_rotate %97 by %c8_i32_71 dim 1 : vector<32x128xf32>, i32 -> vector<32x128xf32>
    %101 = arith.addf %97, %100 : vector<32x128xf32>
    %c8_i32_72 = arith.constant 8 : i32
    %102 = tpu.dynamic_rotate %99 by %c8_i32_72 dim 1 : vector<32x128xf32>, i32 -> vector<32x128xf32>
    %103 = arith.addf %99, %102 : vector<32x128xf32>
    %c16_i32_73 = arith.constant 16 : i32
    %104 = tpu.dynamic_rotate %101 by %c16_i32_73 dim 1 : vector<32x128xf32>, i32 -> vector<32x128xf32>
    %105 = arith.addf %101, %104 : vector<32x128xf32>
    %c16_i32_74 = arith.constant 16 : i32
    %106 = tpu.dynamic_rotate %103 by %c16_i32_74 dim 1 : vector<32x128xf32>, i32 -> vector<32x128xf32>
    %107 = arith.addf %103, %106 : vector<32x128xf32>
    %c32_i32_75 = arith.constant 32 : i32
    %108 = tpu.dynamic_rotate %105 by %c32_i32_75 dim 1 : vector<32x128xf32>, i32 -> vector<32x128xf32>
    %109 = arith.addf %105, %108 : vector<32x128xf32>
    %c32_i32_76 = arith.constant 32 : i32
    %110 = tpu.dynamic_rotate %107 by %c32_i32_76 dim 1 : vector<32x128xf32>, i32 -> vector<32x128xf32>
    %111 = arith.addf %107, %110 : vector<32x128xf32>
    %c64_i32_77 = arith.constant 64 : i32
    %112 = tpu.dynamic_rotate %109 by %c64_i32_77 dim 1 : vector<32x128xf32>, i32 -> vector<32x128xf32>
    %113 = arith.addf %109, %112 : vector<32x128xf32>
    %c64_i32_78 = arith.constant 64 : i32
    %114 = tpu.dynamic_rotate %111 by %c64_i32_78 dim 1 : vector<32x128xf32>, i32 -> vector<32x128xf32>
    %115 = arith.addf %111, %114 : vector<32x128xf32>
    %cst_79 = arith.constant 6.250000e-02 : f32
    %116 = vector.broadcast %cst_79 : f32 to vector<32x128xf32>
    %117 = arith.mulf %113, %116 : vector<32x128xf32>
    %cst_80 = arith.constant 6.250000e-02 : f32
    %118 = vector.broadcast %cst_80 : f32 to vector<32x128xf32>
    %119 = arith.mulf %115, %118 : vector<32x128xf32>
    %120 = arith.mulf %117, %117 : vector<32x128xf32>
    %121 = arith.subf %119, %120 : vector<32x128xf32>
    %c0_81 = arith.constant 0 : index
    %c0_82 = arith.constant 0 : index
    %122 = vector.load %arg17[%c0_81, %c0_82] : memref<1x128xf32, #tpu.memory_space<vmem>>, vector<1x128xf32>
    %cst_83 = arith.constant 9.99999974E-6 : f32
    %123 = vector.broadcast %cst_83 : f32 to vector<32x128xf32>
    %124 = arith.addf %121, %123 : vector<32x128xf32>
    %125 = math.rsqrt %124 : vector<32x128xf32>
    %126 = vector.broadcast %122 : vector<1x128xf32> to vector<32x128xf32>
    %127 = arith.mulf %126, %125 : vector<32x128xf32>
    %128 = arith.subf %95, %117 : vector<32x128xf32>
    %129 = arith.mulf %128, %127 : vector<32x128xf32>
    %c0_84 = arith.constant 0 : index
    %c0_85 = arith.constant 0 : index
    %130 = vector.load %arg18[%c0_84, %c0_85] : memref<1x128xf32, #tpu.memory_space<vmem>>, vector<1x128xf32>
    %131 = vector.broadcast %130 : vector<1x128xf32> to vector<32x128xf32>
    %132 = arith.addf %129, %131 : vector<32x128xf32>
    %cst_86 = arith.constant 0.000000e+00 : f32
    %133 = vector.broadcast %cst_86 : f32 to vector<32x128xf32>
    %134 = arith.cmpf oge, %132, %133 : vector<32x128xf32>
    %cst_87 = arith.constant 0.00999999977 : f32
    %135 = vector.broadcast %cst_87 : f32 to vector<32x128xf32>
    %136 = arith.mulf %135, %132 : vector<32x128xf32>
    %137 = arith.select %134, %132, %136 : vector<32x128xi1>, vector<32x128xf32>
    %138 = arith.truncf %137 : vector<32x128xf32> to vector<32x128xbf16>
    %c0_88 = arith.constant 0 : index
    %c0_89 = arith.constant 0 : index
    %c0_90 = arith.constant 0 : index
    %139 = vector.load %arg2[%c0_88, %c0_89, %c0_90] : memref<3x16x32xbf16, #tpu.memory_space<vmem>>, vector<1x16x32xbf16>
    %140 = vector.shape_cast %139 : vector<1x16x32xbf16> to vector<16x32xbf16>
    %cst_91 = arith.constant dense<0.000000e+00> : vector<16x128xf32>
    %141 = tpu.matmul %140, %138, %cst_91 {dimension_numbers = #tpu.dot_dimension_numbers<[1], [0], [0], [1], [0, 0, 1, 1], [], []>} : vector<16x32xbf16>, vector<32x128xbf16>, vector<16x128xf32> -> vector<16x128xf32>
    %142 = arith.truncf %141 : vector<16x128xf32> to vector<16x128xbf16>
    %c0_92 = arith.constant 0 : index
    %c0_93 = arith.constant 0 : index
    %c0_94 = arith.constant 0 : index
    %143 = vector.load %arg19[%c0_92, %c0_93, %c0_94] : memref<3x128x128xbf16, #tpu.memory_space<vmem>>, vector<1x128x128xbf16>
    %144 = vector.shape_cast %143 : vector<1x128x128xbf16> to vector<128x128xbf16>
    %cst_95 = arith.constant dense<0.000000e+00> : vector<16x128xf32>
    %145 = tpu.matmul %142, %144, %cst_95 {dimension_numbers = #tpu.dot_dimension_numbers<[1], [0], [0], [1], [0, 0, 1, 1], [], []>} : vector<16x128xbf16>, vector<128x128xbf16>, vector<16x128xf32> -> vector<16x128xf32>
    %c1_96 = arith.constant 1 : index
    %c0_97 = arith.constant 0 : index
    %c0_98 = arith.constant 0 : index
    %146 = vector.load %arg2[%c1_96, %c0_97, %c0_98] : memref<3x16x32xbf16, #tpu.memory_space<vmem>>, vector<1x16x32xbf16>
    %147 = vector.shape_cast %146 : vector<1x16x32xbf16> to vector<16x32xbf16>
    %cst_99 = arith.constant dense<0.000000e+00> : vector<16x128xf32>
    %148 = tpu.matmul %147, %138, %cst_99 {dimension_numbers = #tpu.dot_dimension_numbers<[1], [0], [0], [1], [0, 0, 1, 1], [], []>} : vector<16x32xbf16>, vector<32x128xbf16>, vector<16x128xf32> -> vector<16x128xf32>
    %149 = arith.truncf %148 : vector<16x128xf32> to vector<16x128xbf16>
    %c1_100 = arith.constant 1 : index
    %c0_101 = arith.constant 0 : index
    %c0_102 = arith.constant 0 : index
    %150 = vector.load %arg19[%c1_100, %c0_101, %c0_102] : memref<3x128x128xbf16, #tpu.memory_space<vmem>>, vector<1x128x128xbf16>
    %151 = vector.shape_cast %150 : vector<1x128x128xbf16> to vector<128x128xbf16>
    %cst_103 = arith.constant dense<0.000000e+00> : vector<16x128xf32>
    %152 = tpu.matmul %149, %151, %cst_103 {dimension_numbers = #tpu.dot_dimension_numbers<[1], [0], [0], [1], [0, 0, 1, 1], [], []>} : vector<16x128xbf16>, vector<128x128xbf16>, vector<16x128xf32> -> vector<16x128xf32>
    %153 = arith.addf %145, %152 : vector<16x128xf32>
    %c2_104 = arith.constant 2 : index
    %c0_105 = arith.constant 0 : index
    %c0_106 = arith.constant 0 : index
    %154 = vector.load %arg2[%c2_104, %c0_105, %c0_106] : memref<3x16x32xbf16, #tpu.memory_space<vmem>>, vector<1x16x32xbf16>
    %155 = vector.shape_cast %154 : vector<1x16x32xbf16> to vector<16x32xbf16>
    %cst_107 = arith.constant dense<0.000000e+00> : vector<16x128xf32>
    %156 = tpu.matmul %155, %138, %cst_107 {dimension_numbers = #tpu.dot_dimension_numbers<[1], [0], [0], [1], [0, 0, 1, 1], [], []>} : vector<16x32xbf16>, vector<32x128xbf16>, vector<16x128xf32> -> vector<16x128xf32>
    %157 = arith.truncf %156 : vector<16x128xf32> to vector<16x128xbf16>
    %c2_108 = arith.constant 2 : index
    %c0_109 = arith.constant 0 : index
    %c0_110 = arith.constant 0 : index
    %158 = vector.load %arg19[%c2_108, %c0_109, %c0_110] : memref<3x128x128xbf16, #tpu.memory_space<vmem>>, vector<1x128x128xbf16>
    %159 = vector.shape_cast %158 : vector<1x128x128xbf16> to vector<128x128xbf16>
    %cst_111 = arith.constant dense<0.000000e+00> : vector<16x128xf32>
    %160 = tpu.matmul %157, %159, %cst_111 {dimension_numbers = #tpu.dot_dimension_numbers<[1], [0], [0], [1], [0, 0, 1, 1], [], []>} : vector<16x128xbf16>, vector<128x128xbf16>, vector<16x128xf32> -> vector<16x128xf32>
    %161 = arith.addf %153, %160 : vector<16x128xf32>
    %c0_112 = arith.constant 0 : index
    %c0_113 = arith.constant 0 : index
    %162 = vector.load %arg20[%c0_112, %c0_113] : memref<1x128xf32, #tpu.memory_space<vmem>>, vector<1x128xf32>
    %163 = vector.broadcast %162 : vector<1x128xf32> to vector<16x128xf32>
    %164 = arith.addf %161, %163 : vector<16x128xf32>
    %c0_114 = arith.constant 0 : index
    %c0_115 = arith.constant 0 : index
    %165 = vector.load %arg7[%c0_114, %c0_115] : memref<16x16xf32, #tpu.memory_space<vmem>>, vector<16x16xf32>
    %cst_116 = arith.constant dense<0.000000e+00> : vector<16x128xf32>
    %166 = tpu.matmul %165, %164, %cst_116 {dimension_numbers = #tpu.dot_dimension_numbers<[1], [0], [0], [1], [0, 0, 1, 1], [], []>} : vector<16x16xf32>, vector<16x128xf32>, vector<16x128xf32> -> vector<16x128xf32>
    %167 = arith.mulf %164, %164 : vector<16x128xf32>
    %cst_117 = arith.constant dense<0.000000e+00> : vector<16x128xf32>
    %168 = tpu.matmul %165, %167, %cst_117 {dimension_numbers = #tpu.dot_dimension_numbers<[1], [0], [0], [1], [0, 0, 1, 1], [], []>} : vector<16x16xf32>, vector<16x128xf32>, vector<16x128xf32> -> vector<16x128xf32>
    %c16_i32_118 = arith.constant 16 : i32
    %169 = tpu.dynamic_rotate %166 by %c16_i32_118 dim 1 : vector<16x128xf32>, i32 -> vector<16x128xf32>
    %170 = arith.addf %166, %169 : vector<16x128xf32>
    %c16_i32_119 = arith.constant 16 : i32
    %171 = tpu.dynamic_rotate %168 by %c16_i32_119 dim 1 : vector<16x128xf32>, i32 -> vector<16x128xf32>
    %172 = arith.addf %168, %171 : vector<16x128xf32>
    %c32_i32_120 = arith.constant 32 : i32
    %173 = tpu.dynamic_rotate %170 by %c32_i32_120 dim 1 : vector<16x128xf32>, i32 -> vector<16x128xf32>
    %174 = arith.addf %170, %173 : vector<16x128xf32>
    %c32_i32_121 = arith.constant 32 : i32
    %175 = tpu.dynamic_rotate %172 by %c32_i32_121 dim 1 : vector<16x128xf32>, i32 -> vector<16x128xf32>
    %176 = arith.addf %172, %175 : vector<16x128xf32>
    %c64_i32_122 = arith.constant 64 : i32
    %177 = tpu.dynamic_rotate %174 by %c64_i32_122 dim 1 : vector<16x128xf32>, i32 -> vector<16x128xf32>
    %178 = arith.addf %174, %177 : vector<16x128xf32>
    %c64_i32_123 = arith.constant 64 : i32
    %179 = tpu.dynamic_rotate %176 by %c64_i32_123 dim 1 : vector<16x128xf32>, i32 -> vector<16x128xf32>
    %180 = arith.addf %176, %179 : vector<16x128xf32>
    %cst_124 = arith.constant 1.250000e-01 : f32
    %181 = vector.broadcast %cst_124 : f32 to vector<16x128xf32>
    %182 = arith.mulf %178, %181 : vector<16x128xf32>
    %cst_125 = arith.constant 1.250000e-01 : f32
    %183 = vector.broadcast %cst_125 : f32 to vector<16x128xf32>
    %184 = arith.mulf %180, %183 : vector<16x128xf32>
    %185 = arith.mulf %182, %182 : vector<16x128xf32>
    %186 = arith.subf %184, %185 : vector<16x128xf32>
    %c0_126 = arith.constant 0 : index
    %c0_127 = arith.constant 0 : index
    %187 = vector.load %arg21[%c0_126, %c0_127] : memref<1x128xf32, #tpu.memory_space<vmem>>, vector<1x128xf32>
    %cst_128 = arith.constant 9.99999974E-6 : f32
    %188 = vector.broadcast %cst_128 : f32 to vector<16x128xf32>
    %189 = arith.addf %186, %188 : vector<16x128xf32>
    %190 = math.rsqrt %189 : vector<16x128xf32>
    %191 = vector.broadcast %187 : vector<1x128xf32> to vector<16x128xf32>
    %192 = arith.mulf %191, %190 : vector<16x128xf32>
    %193 = arith.subf %164, %182 : vector<16x128xf32>
    %194 = arith.mulf %193, %192 : vector<16x128xf32>
    %c0_129 = arith.constant 0 : index
    %c0_130 = arith.constant 0 : index
    %195 = vector.load %arg22[%c0_129, %c0_130] : memref<1x128xf32, #tpu.memory_space<vmem>>, vector<1x128xf32>
    %196 = vector.broadcast %195 : vector<1x128xf32> to vector<16x128xf32>
    %197 = arith.addf %194, %196 : vector<16x128xf32>
    %cst_131 = arith.constant 0.000000e+00 : f32
    %198 = vector.broadcast %cst_131 : f32 to vector<16x128xf32>
    %199 = arith.cmpf oge, %197, %198 : vector<16x128xf32>
    %cst_132 = arith.constant 0.00999999977 : f32
    %200 = vector.broadcast %cst_132 : f32 to vector<16x128xf32>
    %201 = arith.mulf %200, %197 : vector<16x128xf32>
    %202 = arith.select %199, %197, %201 : vector<16x128xi1>, vector<16x128xf32>
    %203 = arith.truncf %202 : vector<16x128xf32> to vector<16x128xbf16>
    %c0_133 = arith.constant 0 : index
    %c0_134 = arith.constant 0 : index
    %c0_135 = arith.constant 0 : index
    %204 = vector.load %arg3[%c0_133, %c0_134, %c0_135] : memref<3x16x16xbf16, #tpu.memory_space<vmem>>, vector<1x16x16xbf16>
    %205 = vector.shape_cast %204 : vector<1x16x16xbf16> to vector<16x16xbf16>
    %cst_136 = arith.constant dense<0.000000e+00> : vector<16x128xf32>
    %206 = tpu.matmul %205, %203, %cst_136 {dimension_numbers = #tpu.dot_dimension_numbers<[1], [0], [0], [1], [0, 0, 1, 1], [], []>} : vector<16x16xbf16>, vector<16x128xbf16>, vector<16x128xf32> -> vector<16x128xf32>
    %207 = arith.truncf %206 : vector<16x128xf32> to vector<16x128xbf16>
    %c0_137 = arith.constant 0 : index
    %c0_138 = arith.constant 0 : index
    %c0_139 = arith.constant 0 : index
    %208 = vector.load %arg23[%c0_137, %c0_138, %c0_139] : memref<3x128x128xbf16, #tpu.memory_space<vmem>>, vector<1x128x128xbf16>
    %209 = vector.shape_cast %208 : vector<1x128x128xbf16> to vector<128x128xbf16>
    %cst_140 = arith.constant dense<0.000000e+00> : vector<16x128xf32>
    %210 = tpu.matmul %207, %209, %cst_140 {dimension_numbers = #tpu.dot_dimension_numbers<[1], [0], [0], [1], [0, 0, 1, 1], [], []>} : vector<16x128xbf16>, vector<128x128xbf16>, vector<16x128xf32> -> vector<16x128xf32>
    %c1_141 = arith.constant 1 : index
    %c0_142 = arith.constant 0 : index
    %c0_143 = arith.constant 0 : index
    %211 = vector.load %arg3[%c1_141, %c0_142, %c0_143] : memref<3x16x16xbf16, #tpu.memory_space<vmem>>, vector<1x16x16xbf16>
    %212 = vector.shape_cast %211 : vector<1x16x16xbf16> to vector<16x16xbf16>
    %cst_144 = arith.constant dense<0.000000e+00> : vector<16x128xf32>
    %213 = tpu.matmul %212, %203, %cst_144 {dimension_numbers = #tpu.dot_dimension_numbers<[1], [0], [0], [1], [0, 0, 1, 1], [], []>} : vector<16x16xbf16>, vector<16x128xbf16>, vector<16x128xf32> -> vector<16x128xf32>
    %214 = arith.truncf %213 : vector<16x128xf32> to vector<16x128xbf16>
    %c1_145 = arith.constant 1 : index
    %c0_146 = arith.constant 0 : index
    %c0_147 = arith.constant 0 : index
    %215 = vector.load %arg23[%c1_145, %c0_146, %c0_147] : memref<3x128x128xbf16, #tpu.memory_space<vmem>>, vector<1x128x128xbf16>
    %216 = vector.shape_cast %215 : vector<1x128x128xbf16> to vector<128x128xbf16>
    %cst_148 = arith.constant dense<0.000000e+00> : vector<16x128xf32>
    %217 = tpu.matmul %214, %216, %cst_148 {dimension_numbers = #tpu.dot_dimension_numbers<[1], [0], [0], [1], [0, 0, 1, 1], [], []>} : vector<16x128xbf16>, vector<128x128xbf16>, vector<16x128xf32> -> vector<16x128xf32>
    %218 = arith.addf %210, %217 : vector<16x128xf32>
    %c2_149 = arith.constant 2 : index
    %c0_150 = arith.constant 0 : index
    %c0_151 = arith.constant 0 : index
    %219 = vector.load %arg3[%c2_149, %c0_150, %c0_151] : memref<3x16x16xbf16, #tpu.memory_space<vmem>>, vector<1x16x16xbf16>
    %220 = vector.shape_cast %219 : vector<1x16x16xbf16> to vector<16x16xbf16>
    %cst_152 = arith.constant dense<0.000000e+00> : vector<16x128xf32>
    %221 = tpu.matmul %220, %203, %cst_152 {dimension_numbers = #tpu.dot_dimension_numbers<[1], [0], [0], [1], [0, 0, 1, 1], [], []>} : vector<16x16xbf16>, vector<16x128xbf16>, vector<16x128xf32> -> vector<16x128xf32>
    %222 = arith.truncf %221 : vector<16x128xf32> to vector<16x128xbf16>
    %c2_153 = arith.constant 2 : index
    %c0_154 = arith.constant 0 : index
    %c0_155 = arith.constant 0 : index
    %223 = vector.load %arg23[%c2_153, %c0_154, %c0_155] : memref<3x128x128xbf16, #tpu.memory_space<vmem>>, vector<1x128x128xbf16>
    %224 = vector.shape_cast %223 : vector<1x128x128xbf16> to vector<128x128xbf16>
    %cst_156 = arith.constant dense<0.000000e+00> : vector<16x128xf32>
    %225 = tpu.matmul %222, %224, %cst_156 {dimension_numbers = #tpu.dot_dimension_numbers<[1], [0], [0], [1], [0, 0, 1, 1], [], []>} : vector<16x128xbf16>, vector<128x128xbf16>, vector<16x128xf32> -> vector<16x128xf32>
    %226 = arith.addf %218, %225 : vector<16x128xf32>
    %c0_157 = arith.constant 0 : index
    %c0_158 = arith.constant 0 : index
    %227 = vector.load %arg24[%c0_157, %c0_158] : memref<1x128xf32, #tpu.memory_space<vmem>>, vector<1x128xf32>
    %228 = vector.broadcast %227 : vector<1x128xf32> to vector<16x128xf32>
    %229 = arith.addf %226, %228 : vector<16x128xf32>
    %c0_159 = arith.constant 0 : index
    %c0_160 = arith.constant 0 : index
    %230 = vector.load %arg7[%c0_159, %c0_160] : memref<16x16xf32, #tpu.memory_space<vmem>>, vector<16x16xf32>
    %cst_161 = arith.constant dense<0.000000e+00> : vector<16x128xf32>
    %231 = tpu.matmul %230, %229, %cst_161 {dimension_numbers = #tpu.dot_dimension_numbers<[1], [0], [0], [1], [0, 0, 1, 1], [], []>} : vector<16x16xf32>, vector<16x128xf32>, vector<16x128xf32> -> vector<16x128xf32>
    %232 = arith.mulf %229, %229 : vector<16x128xf32>
    %cst_162 = arith.constant dense<0.000000e+00> : vector<16x128xf32>
    %233 = tpu.matmul %230, %232, %cst_162 {dimension_numbers = #tpu.dot_dimension_numbers<[1], [0], [0], [1], [0, 0, 1, 1], [], []>} : vector<16x16xf32>, vector<16x128xf32>, vector<16x128xf32> -> vector<16x128xf32>
    %c16_i32_163 = arith.constant 16 : i32
    %234 = tpu.dynamic_rotate %231 by %c16_i32_163 dim 1 : vector<16x128xf32>, i32 -> vector<16x128xf32>
    %235 = arith.addf %231, %234 : vector<16x128xf32>
    %c16_i32_164 = arith.constant 16 : i32
    %236 = tpu.dynamic_rotate %233 by %c16_i32_164 dim 1 : vector<16x128xf32>, i32 -> vector<16x128xf32>
    %237 = arith.addf %233, %236 : vector<16x128xf32>
    %c32_i32_165 = arith.constant 32 : i32
    %238 = tpu.dynamic_rotate %235 by %c32_i32_165 dim 1 : vector<16x128xf32>, i32 -> vector<16x128xf32>
    %239 = arith.addf %235, %238 : vector<16x128xf32>
    %c32_i32_166 = arith.constant 32 : i32
    %240 = tpu.dynamic_rotate %237 by %c32_i32_166 dim 1 : vector<16x128xf32>, i32 -> vector<16x128xf32>
    %241 = arith.addf %237, %240 : vector<16x128xf32>
    %c64_i32_167 = arith.constant 64 : i32
    %242 = tpu.dynamic_rotate %239 by %c64_i32_167 dim 1 : vector<16x128xf32>, i32 -> vector<16x128xf32>
    %243 = arith.addf %239, %242 : vector<16x128xf32>
    %c64_i32_168 = arith.constant 64 : i32
    %244 = tpu.dynamic_rotate %241 by %c64_i32_168 dim 1 : vector<16x128xf32>, i32 -> vector<16x128xf32>
    %245 = arith.addf %241, %244 : vector<16x128xf32>
    %cst_169 = arith.constant 1.250000e-01 : f32
    %246 = vector.broadcast %cst_169 : f32 to vector<16x128xf32>
    %247 = arith.mulf %243, %246 : vector<16x128xf32>
    %cst_170 = arith.constant 1.250000e-01 : f32
    %248 = vector.broadcast %cst_170 : f32 to vector<16x128xf32>
    %249 = arith.mulf %245, %248 : vector<16x128xf32>
    %250 = arith.mulf %247, %247 : vector<16x128xf32>
    %251 = arith.subf %249, %250 : vector<16x128xf32>
    %c0_171 = arith.constant 0 : index
    %c0_172 = arith.constant 0 : index
    %252 = vector.load %arg25[%c0_171, %c0_172] : memref<1x128xf32, #tpu.memory_space<vmem>>, vector<1x128xf32>
    %cst_173 = arith.constant 9.99999974E-6 : f32
    %253 = vector.broadcast %cst_173 : f32 to vector<16x128xf32>
    %254 = arith.addf %251, %253 : vector<16x128xf32>
    %255 = math.rsqrt %254 : vector<16x128xf32>
    %256 = vector.broadcast %252 : vector<1x128xf32> to vector<16x128xf32>
    %257 = arith.mulf %256, %255 : vector<16x128xf32>
    %258 = arith.subf %229, %247 : vector<16x128xf32>
    %259 = arith.mulf %258, %257 : vector<16x128xf32>
    %c0_174 = arith.constant 0 : index
    %c0_175 = arith.constant 0 : index
    %260 = vector.load %arg26[%c0_174, %c0_175] : memref<1x128xf32, #tpu.memory_space<vmem>>, vector<1x128xf32>
    %261 = vector.broadcast %260 : vector<1x128xf32> to vector<16x128xf32>
    %262 = arith.addf %259, %261 : vector<16x128xf32>
    %cst_176 = arith.constant 0.000000e+00 : f32
    %263 = vector.broadcast %cst_176 : f32 to vector<16x128xf32>
    %264 = arith.cmpf oge, %262, %263 : vector<16x128xf32>
    %cst_177 = arith.constant 0.00999999977 : f32
    %265 = vector.broadcast %cst_177 : f32 to vector<16x128xf32>
    %266 = arith.mulf %265, %262 : vector<16x128xf32>
    %267 = arith.select %264, %262, %266 : vector<16x128xi1>, vector<16x128xf32>
    %268 = arith.truncf %267 : vector<16x128xf32> to vector<16x128xbf16>
    %c0_178 = arith.constant 0 : index
    %c0_179 = arith.constant 0 : index
    %c0_180 = arith.constant 0 : index
    %269 = vector.load %arg4[%c0_178, %c0_179, %c0_180] : memref<3x8x16xbf16, #tpu.memory_space<vmem>>, vector<1x8x16xbf16>
    %270 = vector.shape_cast %269 : vector<1x8x16xbf16> to vector<8x16xbf16>
    %cst_181 = arith.constant dense<0.000000e+00> : vector<8x128xf32>
    %271 = tpu.matmul %270, %268, %cst_181 {dimension_numbers = #tpu.dot_dimension_numbers<[1], [0], [0], [1], [0, 0, 1, 1], [], []>} : vector<8x16xbf16>, vector<16x128xbf16>, vector<8x128xf32> -> vector<8x128xf32>
    %272 = arith.truncf %271 : vector<8x128xf32> to vector<8x128xbf16>
    %c0_182 = arith.constant 0 : index
    %c0_183 = arith.constant 0 : index
    %c0_184 = arith.constant 0 : index
    %273 = vector.load %arg27[%c0_182, %c0_183, %c0_184] : memref<3x128x128xbf16, #tpu.memory_space<vmem>>, vector<1x128x128xbf16>
    %274 = vector.shape_cast %273 : vector<1x128x128xbf16> to vector<128x128xbf16>
    %cst_185 = arith.constant dense<0.000000e+00> : vector<8x128xf32>
    %275 = tpu.matmul %272, %274, %cst_185 {dimension_numbers = #tpu.dot_dimension_numbers<[1], [0], [0], [1], [0, 0, 1, 1], [], []>} : vector<8x128xbf16>, vector<128x128xbf16>, vector<8x128xf32> -> vector<8x128xf32>
    %c1_186 = arith.constant 1 : index
    %c0_187 = arith.constant 0 : index
    %c0_188 = arith.constant 0 : index
    %276 = vector.load %arg4[%c1_186, %c0_187, %c0_188] : memref<3x8x16xbf16, #tpu.memory_space<vmem>>, vector<1x8x16xbf16>
    %277 = vector.shape_cast %276 : vector<1x8x16xbf16> to vector<8x16xbf16>
    %cst_189 = arith.constant dense<0.000000e+00> : vector<8x128xf32>
    %278 = tpu.matmul %277, %268, %cst_189 {dimension_numbers = #tpu.dot_dimension_numbers<[1], [0], [0], [1], [0, 0, 1, 1], [], []>} : vector<8x16xbf16>, vector<16x128xbf16>, vector<8x128xf32> -> vector<8x128xf32>
    %279 = arith.truncf %278 : vector<8x128xf32> to vector<8x128xbf16>
    %c1_190 = arith.constant 1 : index
    %c0_191 = arith.constant 0 : index
    %c0_192 = arith.constant 0 : index
    %280 = vector.load %arg27[%c1_190, %c0_191, %c0_192] : memref<3x128x128xbf16, #tpu.memory_space<vmem>>, vector<1x128x128xbf16>
    %281 = vector.shape_cast %280 : vector<1x128x128xbf16> to vector<128x128xbf16>
    %cst_193 = arith.constant dense<0.000000e+00> : vector<8x128xf32>
    %282 = tpu.matmul %279, %281, %cst_193 {dimension_numbers = #tpu.dot_dimension_numbers<[1], [0], [0], [1], [0, 0, 1, 1], [], []>} : vector<8x128xbf16>, vector<128x128xbf16>, vector<8x128xf32> -> vector<8x128xf32>
    %283 = arith.addf %275, %282 : vector<8x128xf32>
    %c2_194 = arith.constant 2 : index
    %c0_195 = arith.constant 0 : index
    %c0_196 = arith.constant 0 : index
    %284 = vector.load %arg4[%c2_194, %c0_195, %c0_196] : memref<3x8x16xbf16, #tpu.memory_space<vmem>>, vector<1x8x16xbf16>
    %285 = vector.shape_cast %284 : vector<1x8x16xbf16> to vector<8x16xbf16>
    %cst_197 = arith.constant dense<0.000000e+00> : vector<8x128xf32>
    %286 = tpu.matmul %285, %268, %cst_197 {dimension_numbers = #tpu.dot_dimension_numbers<[1], [0], [0], [1], [0, 0, 1, 1], [], []>} : vector<8x16xbf16>, vector<16x128xbf16>, vector<8x128xf32> -> vector<8x128xf32>
    %287 = arith.truncf %286 : vector<8x128xf32> to vector<8x128xbf16>
    %c2_198 = arith.constant 2 : index
    %c0_199 = arith.constant 0 : index
    %c0_200 = arith.constant 0 : index
    %288 = vector.load %arg27[%c2_198, %c0_199, %c0_200] : memref<3x128x128xbf16, #tpu.memory_space<vmem>>, vector<1x128x128xbf16>
    %289 = vector.shape_cast %288 : vector<1x128x128xbf16> to vector<128x128xbf16>
    %cst_201 = arith.constant dense<0.000000e+00> : vector<8x128xf32>
    %290 = tpu.matmul %287, %289, %cst_201 {dimension_numbers = #tpu.dot_dimension_numbers<[1], [0], [0], [1], [0, 0, 1, 1], [], []>} : vector<8x128xbf16>, vector<128x128xbf16>, vector<8x128xf32> -> vector<8x128xf32>
    %291 = arith.addf %283, %290 : vector<8x128xf32>
    %c0_202 = arith.constant 0 : index
    %c0_203 = arith.constant 0 : index
    %292 = vector.load %arg28[%c0_202, %c0_203] : memref<1x128xf32, #tpu.memory_space<vmem>>, vector<1x128xf32>
    %293 = vector.broadcast %292 : vector<1x128xf32> to vector<8x128xf32>
    %294 = arith.addf %291, %293 : vector<8x128xf32>
    %c0_204 = arith.constant 0 : index
    %c0_205 = arith.constant 0 : index
    %295 = vector.load %arg8[%c0_204, %c0_205] : memref<8x8xf32, #tpu.memory_space<vmem>>, vector<8x8xf32>
    %cst_206 = arith.constant dense<0.000000e+00> : vector<8x128xf32>
    %296 = tpu.matmul %295, %294, %cst_206 {dimension_numbers = #tpu.dot_dimension_numbers<[1], [0], [0], [1], [0, 0, 1, 1], [], []>} : vector<8x8xf32>, vector<8x128xf32>, vector<8x128xf32> -> vector<8x128xf32>
    %297 = arith.mulf %294, %294 : vector<8x128xf32>
    %cst_207 = arith.constant dense<0.000000e+00> : vector<8x128xf32>
    %298 = tpu.matmul %295, %297, %cst_207 {dimension_numbers = #tpu.dot_dimension_numbers<[1], [0], [0], [1], [0, 0, 1, 1], [], []>} : vector<8x8xf32>, vector<8x128xf32>, vector<8x128xf32> -> vector<8x128xf32>
    %c32_i32_208 = arith.constant 32 : i32
    %299 = tpu.dynamic_rotate %296 by %c32_i32_208 dim 1 : vector<8x128xf32>, i32 -> vector<8x128xf32>
    %300 = arith.addf %296, %299 : vector<8x128xf32>
    %c32_i32_209 = arith.constant 32 : i32
    %301 = tpu.dynamic_rotate %298 by %c32_i32_209 dim 1 : vector<8x128xf32>, i32 -> vector<8x128xf32>
    %302 = arith.addf %298, %301 : vector<8x128xf32>
    %c64_i32_210 = arith.constant 64 : i32
    %303 = tpu.dynamic_rotate %300 by %c64_i32_210 dim 1 : vector<8x128xf32>, i32 -> vector<8x128xf32>
    %304 = arith.addf %300, %303 : vector<8x128xf32>
    %c64_i32_211 = arith.constant 64 : i32
    %305 = tpu.dynamic_rotate %302 by %c64_i32_211 dim 1 : vector<8x128xf32>, i32 -> vector<8x128xf32>
    %306 = arith.addf %302, %305 : vector<8x128xf32>
    %cst_212 = arith.constant 2.500000e-01 : f32
    %307 = vector.broadcast %cst_212 : f32 to vector<8x128xf32>
    %308 = arith.mulf %304, %307 : vector<8x128xf32>
    %cst_213 = arith.constant 2.500000e-01 : f32
    %309 = vector.broadcast %cst_213 : f32 to vector<8x128xf32>
    %310 = arith.mulf %306, %309 : vector<8x128xf32>
    %311 = arith.mulf %308, %308 : vector<8x128xf32>
    %312 = arith.subf %310, %311 : vector<8x128xf32>
    %c0_214 = arith.constant 0 : index
    %c0_215 = arith.constant 0 : index
    %313 = vector.load %arg29[%c0_214, %c0_215] : memref<1x128xf32, #tpu.memory_space<vmem>>, vector<1x128xf32>
    %cst_216 = arith.constant 9.99999974E-6 : f32
    %314 = vector.broadcast %cst_216 : f32 to vector<8x128xf32>
    %315 = arith.addf %312, %314 : vector<8x128xf32>
    %316 = math.rsqrt %315 : vector<8x128xf32>
    %317 = vector.broadcast %313 : vector<1x128xf32> to vector<8x128xf32>
    %318 = arith.mulf %317, %316 : vector<8x128xf32>
    %319 = arith.subf %294, %308 : vector<8x128xf32>
    %320 = arith.mulf %319, %318 : vector<8x128xf32>
    %c0_217 = arith.constant 0 : index
    %c0_218 = arith.constant 0 : index
    %321 = vector.load %arg30[%c0_217, %c0_218] : memref<1x128xf32, #tpu.memory_space<vmem>>, vector<1x128xf32>
    %322 = vector.broadcast %321 : vector<1x128xf32> to vector<8x128xf32>
    %323 = arith.addf %320, %322 : vector<8x128xf32>
    %cst_219 = arith.constant 0.000000e+00 : f32
    %324 = vector.broadcast %cst_219 : f32 to vector<8x128xf32>
    %325 = arith.cmpf oge, %323, %324 : vector<8x128xf32>
    %cst_220 = arith.constant 0.00999999977 : f32
    %326 = vector.broadcast %cst_220 : f32 to vector<8x128xf32>
    %327 = arith.mulf %326, %323 : vector<8x128xf32>
    %328 = arith.select %325, %323, %327 : vector<8x128xi1>, vector<8x128xf32>
    %329 = arith.truncf %328 : vector<8x128xf32> to vector<8x128xbf16>
    %c0_221 = arith.constant 0 : index
    %c0_222 = arith.constant 0 : index
    %c0_223 = arith.constant 0 : index
    %330 = vector.load %arg5[%c0_221, %c0_222, %c0_223] : memref<3x8x8xbf16, #tpu.memory_space<vmem>>, vector<1x8x8xbf16>
    %331 = vector.shape_cast %330 : vector<1x8x8xbf16> to vector<8x8xbf16>
    %cst_224 = arith.constant dense<0.000000e+00> : vector<8x128xf32>
    %332 = tpu.matmul %331, %329, %cst_224 {dimension_numbers = #tpu.dot_dimension_numbers<[1], [0], [0], [1], [0, 0, 1, 1], [], []>} : vector<8x8xbf16>, vector<8x128xbf16>, vector<8x128xf32> -> vector<8x128xf32>
    %333 = arith.truncf %332 : vector<8x128xf32> to vector<8x128xbf16>
    %c0_225 = arith.constant 0 : index
    %c0_226 = arith.constant 0 : index
    %c0_227 = arith.constant 0 : index
    %334 = vector.load %arg31[%c0_225, %c0_226, %c0_227] : memref<3x128x128xbf16, #tpu.memory_space<vmem>>, vector<1x128x128xbf16>
    %335 = vector.shape_cast %334 : vector<1x128x128xbf16> to vector<128x128xbf16>
    %cst_228 = arith.constant dense<0.000000e+00> : vector<8x128xf32>
    %336 = tpu.matmul %333, %335, %cst_228 {dimension_numbers = #tpu.dot_dimension_numbers<[1], [0], [0], [1], [0, 0, 1, 1], [], []>} : vector<8x128xbf16>, vector<128x128xbf16>, vector<8x128xf32> -> vector<8x128xf32>
    %c1_229 = arith.constant 1 : index
    %c0_230 = arith.constant 0 : index
    %c0_231 = arith.constant 0 : index
    %337 = vector.load %arg5[%c1_229, %c0_230, %c0_231] : memref<3x8x8xbf16, #tpu.memory_space<vmem>>, vector<1x8x8xbf16>
    %338 = vector.shape_cast %337 : vector<1x8x8xbf16> to vector<8x8xbf16>
    %cst_232 = arith.constant dense<0.000000e+00> : vector<8x128xf32>
    %339 = tpu.matmul %338, %329, %cst_232 {dimension_numbers = #tpu.dot_dimension_numbers<[1], [0], [0], [1], [0, 0, 1, 1], [], []>} : vector<8x8xbf16>, vector<8x128xbf16>, vector<8x128xf32> -> vector<8x128xf32>
    %340 = arith.truncf %339 : vector<8x128xf32> to vector<8x128xbf16>
    %c1_233 = arith.constant 1 : index
    %c0_234 = arith.constant 0 : index
    %c0_235 = arith.constant 0 : index
    %341 = vector.load %arg31[%c1_233, %c0_234, %c0_235] : memref<3x128x128xbf16, #tpu.memory_space<vmem>>, vector<1x128x128xbf16>
    %342 = vector.shape_cast %341 : vector<1x128x128xbf16> to vector<128x128xbf16>
    %cst_236 = arith.constant dense<0.000000e+00> : vector<8x128xf32>
    %343 = tpu.matmul %340, %342, %cst_236 {dimension_numbers = #tpu.dot_dimension_numbers<[1], [0], [0], [1], [0, 0, 1, 1], [], []>} : vector<8x128xbf16>, vector<128x128xbf16>, vector<8x128xf32> -> vector<8x128xf32>
    %344 = arith.addf %336, %343 : vector<8x128xf32>
    %c2_237 = arith.constant 2 : index
    %c0_238 = arith.constant 0 : index
    %c0_239 = arith.constant 0 : index
    %345 = vector.load %arg5[%c2_237, %c0_238, %c0_239] : memref<3x8x8xbf16, #tpu.memory_space<vmem>>, vector<1x8x8xbf16>
    %346 = vector.shape_cast %345 : vector<1x8x8xbf16> to vector<8x8xbf16>
    %cst_240 = arith.constant dense<0.000000e+00> : vector<8x128xf32>
    %347 = tpu.matmul %346, %329, %cst_240 {dimension_numbers = #tpu.dot_dimension_numbers<[1], [0], [0], [1], [0, 0, 1, 1], [], []>} : vector<8x8xbf16>, vector<8x128xbf16>, vector<8x128xf32> -> vector<8x128xf32>
    %348 = arith.truncf %347 : vector<8x128xf32> to vector<8x128xbf16>
    %c2_241 = arith.constant 2 : index
    %c0_242 = arith.constant 0 : index
    %c0_243 = arith.constant 0 : index
    %349 = vector.load %arg31[%c2_241, %c0_242, %c0_243] : memref<3x128x128xbf16, #tpu.memory_space<vmem>>, vector<1x128x128xbf16>
    %350 = vector.shape_cast %349 : vector<1x128x128xbf16> to vector<128x128xbf16>
    %cst_244 = arith.constant dense<0.000000e+00> : vector<8x128xf32>
    %351 = tpu.matmul %348, %350, %cst_244 {dimension_numbers = #tpu.dot_dimension_numbers<[1], [0], [0], [1], [0, 0, 1, 1], [], []>} : vector<8x128xbf16>, vector<128x128xbf16>, vector<8x128xf32> -> vector<8x128xf32>
    %352 = arith.addf %344, %351 : vector<8x128xf32>
    %c0_245 = arith.constant 0 : index
    %c0_246 = arith.constant 0 : index
    %353 = vector.load %arg32[%c0_245, %c0_246] : memref<1x128xf32, #tpu.memory_space<vmem>>, vector<1x128xf32>
    %354 = vector.broadcast %353 : vector<1x128xf32> to vector<8x128xf32>
    %355 = arith.addf %352, %354 : vector<8x128xf32>
    %c0_247 = arith.constant 0 : index
    %c0_248 = arith.constant 0 : index
    %356 = vector.load %arg8[%c0_247, %c0_248] : memref<8x8xf32, #tpu.memory_space<vmem>>, vector<8x8xf32>
    %cst_249 = arith.constant dense<0.000000e+00> : vector<8x128xf32>
    %357 = tpu.matmul %356, %355, %cst_249 {dimension_numbers = #tpu.dot_dimension_numbers<[1], [0], [0], [1], [0, 0, 1, 1], [], []>} : vector<8x8xf32>, vector<8x128xf32>, vector<8x128xf32> -> vector<8x128xf32>
    %358 = arith.mulf %355, %355 : vector<8x128xf32>
    %cst_250 = arith.constant dense<0.000000e+00> : vector<8x128xf32>
    %359 = tpu.matmul %356, %358, %cst_250 {dimension_numbers = #tpu.dot_dimension_numbers<[1], [0], [0], [1], [0, 0, 1, 1], [], []>} : vector<8x8xf32>, vector<8x128xf32>, vector<8x128xf32> -> vector<8x128xf32>
    %c32_i32_251 = arith.constant 32 : i32
    %360 = tpu.dynamic_rotate %357 by %c32_i32_251 dim 1 : vector<8x128xf32>, i32 -> vector<8x128xf32>
    %361 = arith.addf %357, %360 : vector<8x128xf32>
    %c32_i32_252 = arith.constant 32 : i32
    %362 = tpu.dynamic_rotate %359 by %c32_i32_252 dim 1 : vector<8x128xf32>, i32 -> vector<8x128xf32>
    %363 = arith.addf %359, %362 : vector<8x128xf32>
    %c64_i32_253 = arith.constant 64 : i32
    %364 = tpu.dynamic_rotate %361 by %c64_i32_253 dim 1 : vector<8x128xf32>, i32 -> vector<8x128xf32>
    %365 = arith.addf %361, %364 : vector<8x128xf32>
    %c64_i32_254 = arith.constant 64 : i32
    %366 = tpu.dynamic_rotate %363 by %c64_i32_254 dim 1 : vector<8x128xf32>, i32 -> vector<8x128xf32>
    %367 = arith.addf %363, %366 : vector<8x128xf32>
    %cst_255 = arith.constant 2.500000e-01 : f32
    %368 = vector.broadcast %cst_255 : f32 to vector<8x128xf32>
    %369 = arith.mulf %365, %368 : vector<8x128xf32>
    %cst_256 = arith.constant 2.500000e-01 : f32
    %370 = vector.broadcast %cst_256 : f32 to vector<8x128xf32>
    %371 = arith.mulf %367, %370 : vector<8x128xf32>
    %372 = arith.mulf %369, %369 : vector<8x128xf32>
    %373 = arith.subf %371, %372 : vector<8x128xf32>
    %c0_257 = arith.constant 0 : index
    %c0_258 = arith.constant 0 : index
    %374 = vector.load %arg33[%c0_257, %c0_258] : memref<1x128xf32, #tpu.memory_space<vmem>>, vector<1x128xf32>
    %cst_259 = arith.constant 9.99999974E-6 : f32
    %375 = vector.broadcast %cst_259 : f32 to vector<8x128xf32>
    %376 = arith.addf %373, %375 : vector<8x128xf32>
    %377 = math.rsqrt %376 : vector<8x128xf32>
    %378 = vector.broadcast %374 : vector<1x128xf32> to vector<8x128xf32>
    %379 = arith.mulf %378, %377 : vector<8x128xf32>
    %380 = arith.subf %355, %369 : vector<8x128xf32>
    %381 = arith.mulf %380, %379 : vector<8x128xf32>
    %c0_260 = arith.constant 0 : index
    %c0_261 = arith.constant 0 : index
    %382 = vector.load %arg34[%c0_260, %c0_261] : memref<1x128xf32, #tpu.memory_space<vmem>>, vector<1x128xf32>
    %383 = vector.broadcast %382 : vector<1x128xf32> to vector<8x128xf32>
    %384 = arith.addf %381, %383 : vector<8x128xf32>
    %cst_262 = arith.constant 0.000000e+00 : f32
    %385 = vector.broadcast %cst_262 : f32 to vector<8x128xf32>
    %386 = arith.cmpf oge, %384, %385 : vector<8x128xf32>
    %cst_263 = arith.constant 0.00999999977 : f32
    %387 = vector.broadcast %cst_263 : f32 to vector<8x128xf32>
    %388 = arith.mulf %387, %384 : vector<8x128xf32>
    %389 = arith.select %386, %384, %388 : vector<8x128xi1>, vector<8x128xf32>
    %390 = arith.truncf %389 : vector<8x128xf32> to vector<8x128xbf16>
    %c0_264 = arith.constant 0 : index
    %c0_265 = arith.constant 0 : index
    %c0_266 = arith.constant 0 : index
    %391 = vector.load %arg35[%c0_264, %c0_265, %c0_266] : memref<2x128x128xbf16, #tpu.memory_space<vmem>>, vector<1x128x128xbf16>
    %392 = vector.shape_cast %391 : vector<1x128x128xbf16> to vector<128x128xbf16>
    %cst_267 = arith.constant dense<0.000000e+00> : vector<8x128xf32>
    %393 = tpu.matmul %390, %392, %cst_267 {dimension_numbers = #tpu.dot_dimension_numbers<[1], [0], [0], [1], [0, 0, 1, 1], [], []>} : vector<8x128xbf16>, vector<128x128xbf16>, vector<8x128xf32> -> vector<8x128xf32>
    %c1_268 = arith.constant 1 : index
    %c0_269 = arith.constant 0 : index
    %c0_270 = arith.constant 0 : index
    %394 = vector.load %arg35[%c1_268, %c0_269, %c0_270] : memref<2x128x128xbf16, #tpu.memory_space<vmem>>, vector<1x128x128xbf16>
    %395 = vector.shape_cast %394 : vector<1x128x128xbf16> to vector<128x128xbf16>
    %cst_271 = arith.constant dense<0.000000e+00> : vector<8x128xf32>
    %396 = tpu.matmul %390, %395, %cst_271 {dimension_numbers = #tpu.dot_dimension_numbers<[1], [0], [0], [1], [0, 0, 1, 1], [], []>} : vector<8x128xbf16>, vector<128x128xbf16>, vector<8x128xf32> -> vector<8x128xf32>
    %c0_272 = arith.constant 0 : index
    %c0_273 = arith.constant 0 : index
    %c0_274 = arith.constant 0 : index
    %397 = vector.load %arg9[%c0_272, %c0_273, %c0_274] : memref<2x16x8xf32, #tpu.memory_space<vmem>>, vector<1x16x8xf32>
    %398 = vector.shape_cast %397 : vector<1x16x8xf32> to vector<16x8xf32>
    %cst_275 = arith.constant dense<0.000000e+00> : vector<16x128xf32>
    %399 = tpu.matmul %398, %393, %cst_275 {dimension_numbers = #tpu.dot_dimension_numbers<[1], [0], [0], [1], [0, 0, 1, 1], [], []>} : vector<16x8xf32>, vector<8x128xf32>, vector<16x128xf32> -> vector<16x128xf32>
    %c1_276 = arith.constant 1 : index
    %c0_277 = arith.constant 0 : index
    %c0_278 = arith.constant 0 : index
    %400 = vector.load %arg9[%c1_276, %c0_277, %c0_278] : memref<2x16x8xf32, #tpu.memory_space<vmem>>, vector<1x16x8xf32>
    %401 = vector.shape_cast %400 : vector<1x16x8xf32> to vector<16x8xf32>
    %cst_279 = arith.constant dense<0.000000e+00> : vector<16x128xf32>
    %402 = tpu.matmul %401, %396, %cst_279 {dimension_numbers = #tpu.dot_dimension_numbers<[1], [0], [0], [1], [0, 0, 1, 1], [], []>} : vector<16x8xf32>, vector<8x128xf32>, vector<16x128xf32> -> vector<16x128xf32>
    %403 = arith.addf %399, %402 : vector<16x128xf32>
    %c0_280 = arith.constant 0 : index
    %c0_281 = arith.constant 0 : index
    %404 = vector.load %arg36[%c0_280, %c0_281] : memref<1x128xf32, #tpu.memory_space<vmem>>, vector<1x128xf32>
    %405 = vector.broadcast %404 : vector<1x128xf32> to vector<16x128xf32>
    %406 = arith.addf %403, %405 : vector<16x128xf32>
    %407 = arith.truncf %406 : vector<16x128xf32> to vector<16x128xbf16>
    %408 = arith.truncf %267 : vector<16x128xf32> to vector<16x128xbf16>
    %c0_282 = arith.constant 0 : index
    %c0_283 = arith.constant 0 : index
    %c0_284 = arith.constant 0 : index
    %409 = vector.load %arg3[%c0_282, %c0_283, %c0_284] : memref<3x16x16xbf16, #tpu.memory_space<vmem>>, vector<1x16x16xbf16>
    %410 = vector.shape_cast %409 : vector<1x16x16xbf16> to vector<16x16xbf16>
    %cst_285 = arith.constant dense<0.000000e+00> : vector<16x128xf32>
    %411 = tpu.matmul %410, %407, %cst_285 {dimension_numbers = #tpu.dot_dimension_numbers<[1], [0], [0], [1], [0, 0, 1, 1], [], []>} : vector<16x16xbf16>, vector<16x128xbf16>, vector<16x128xf32> -> vector<16x128xf32>
    %412 = arith.truncf %411 : vector<16x128xf32> to vector<16x128xbf16>
    %c0_286 = arith.constant 0 : index
    %c0_287 = arith.constant 0 : index
    %c0_288 = arith.constant 0 : index
    %413 = vector.load %arg37[%c0_286, %c0_287, %c0_288] : memref<3x128x128xbf16, #tpu.memory_space<vmem>>, vector<1x128x128xbf16>
    %414 = vector.shape_cast %413 : vector<1x128x128xbf16> to vector<128x128xbf16>
    %cst_289 = arith.constant dense<0.000000e+00> : vector<16x128xf32>
    %415 = tpu.matmul %412, %414, %cst_289 {dimension_numbers = #tpu.dot_dimension_numbers<[1], [0], [0], [1], [0, 0, 1, 1], [], []>} : vector<16x128xbf16>, vector<128x128xbf16>, vector<16x128xf32> -> vector<16x128xf32>
    %cst_290 = arith.constant dense<0.000000e+00> : vector<16x128xf32>
    %416 = tpu.matmul %410, %408, %cst_290 {dimension_numbers = #tpu.dot_dimension_numbers<[1], [0], [0], [1], [0, 0, 1, 1], [], []>} : vector<16x16xbf16>, vector<16x128xbf16>, vector<16x128xf32> -> vector<16x128xf32>
    %417 = arith.truncf %416 : vector<16x128xf32> to vector<16x128xbf16>
    %c0_291 = arith.constant 0 : index
    %c0_292 = arith.constant 0 : index
    %c0_293 = arith.constant 0 : index
    %418 = vector.load %arg38[%c0_291, %c0_292, %c0_293] : memref<3x128x128xbf16, #tpu.memory_space<vmem>>, vector<1x128x128xbf16>
    %419 = vector.shape_cast %418 : vector<1x128x128xbf16> to vector<128x128xbf16>
    %cst_294 = arith.constant dense<0.000000e+00> : vector<16x128xf32>
    %420 = tpu.matmul %417, %419, %cst_294 {dimension_numbers = #tpu.dot_dimension_numbers<[1], [0], [0], [1], [0, 0, 1, 1], [], []>} : vector<16x128xbf16>, vector<128x128xbf16>, vector<16x128xf32> -> vector<16x128xf32>
    %421 = arith.addf %415, %420 : vector<16x128xf32>
    %c1_295 = arith.constant 1 : index
    %c0_296 = arith.constant 0 : index
    %c0_297 = arith.constant 0 : index
    %422 = vector.load %arg3[%c1_295, %c0_296, %c0_297] : memref<3x16x16xbf16, #tpu.memory_space<vmem>>, vector<1x16x16xbf16>
    %423 = vector.shape_cast %422 : vector<1x16x16xbf16> to vector<16x16xbf16>
    %cst_298 = arith.constant dense<0.000000e+00> : vector<16x128xf32>
    %424 = tpu.matmul %423, %407, %cst_298 {dimension_numbers = #tpu.dot_dimension_numbers<[1], [0], [0], [1], [0, 0, 1, 1], [], []>} : vector<16x16xbf16>, vector<16x128xbf16>, vector<16x128xf32> -> vector<16x128xf32>
    %425 = arith.truncf %424 : vector<16x128xf32> to vector<16x128xbf16>
    %c1_299 = arith.constant 1 : index
    %c0_300 = arith.constant 0 : index
    %c0_301 = arith.constant 0 : index
    %426 = vector.load %arg37[%c1_299, %c0_300, %c0_301] : memref<3x128x128xbf16, #tpu.memory_space<vmem>>, vector<1x128x128xbf16>
    %427 = vector.shape_cast %426 : vector<1x128x128xbf16> to vector<128x128xbf16>
    %cst_302 = arith.constant dense<0.000000e+00> : vector<16x128xf32>
    %428 = tpu.matmul %425, %427, %cst_302 {dimension_numbers = #tpu.dot_dimension_numbers<[1], [0], [0], [1], [0, 0, 1, 1], [], []>} : vector<16x128xbf16>, vector<128x128xbf16>, vector<16x128xf32> -> vector<16x128xf32>
    %429 = arith.addf %421, %428 : vector<16x128xf32>
    %cst_303 = arith.constant dense<0.000000e+00> : vector<16x128xf32>
    %430 = tpu.matmul %423, %408, %cst_303 {dimension_numbers = #tpu.dot_dimension_numbers<[1], [0], [0], [1], [0, 0, 1, 1], [], []>} : vector<16x16xbf16>, vector<16x128xbf16>, vector<16x128xf32> -> vector<16x128xf32>
    %431 = arith.truncf %430 : vector<16x128xf32> to vector<16x128xbf16>
    %c1_304 = arith.constant 1 : index
    %c0_305 = arith.constant 0 : index
    %c0_306 = arith.constant 0 : index
    %432 = vector.load %arg38[%c1_304, %c0_305, %c0_306] : memref<3x128x128xbf16, #tpu.memory_space<vmem>>, vector<1x128x128xbf16>
    %433 = vector.shape_cast %432 : vector<1x128x128xbf16> to vector<128x128xbf16>
    %cst_307 = arith.constant dense<0.000000e+00> : vector<16x128xf32>
    %434 = tpu.matmul %431, %433, %cst_307 {dimension_numbers = #tpu.dot_dimension_numbers<[1], [0], [0], [1], [0, 0, 1, 1], [], []>} : vector<16x128xbf16>, vector<128x128xbf16>, vector<16x128xf32> -> vector<16x128xf32>
    %435 = arith.addf %429, %434 : vector<16x128xf32>
    %c2_308 = arith.constant 2 : index
    %c0_309 = arith.constant 0 : index
    %c0_310 = arith.constant 0 : index
    %436 = vector.load %arg3[%c2_308, %c0_309, %c0_310] : memref<3x16x16xbf16, #tpu.memory_space<vmem>>, vector<1x16x16xbf16>
    %437 = vector.shape_cast %436 : vector<1x16x16xbf16> to vector<16x16xbf16>
    %cst_311 = arith.constant dense<0.000000e+00> : vector<16x128xf32>
    %438 = tpu.matmul %437, %407, %cst_311 {dimension_numbers = #tpu.dot_dimension_numbers<[1], [0], [0], [1], [0, 0, 1, 1], [], []>} : vector<16x16xbf16>, vector<16x128xbf16>, vector<16x128xf32> -> vector<16x128xf32>
    %439 = arith.truncf %438 : vector<16x128xf32> to vector<16x128xbf16>
    %c2_312 = arith.constant 2 : index
    %c0_313 = arith.constant 0 : index
    %c0_314 = arith.constant 0 : index
    %440 = vector.load %arg37[%c2_312, %c0_313, %c0_314] : memref<3x128x128xbf16, #tpu.memory_space<vmem>>, vector<1x128x128xbf16>
    %441 = vector.shape_cast %440 : vector<1x128x128xbf16> to vector<128x128xbf16>
    %cst_315 = arith.constant dense<0.000000e+00> : vector<16x128xf32>
    %442 = tpu.matmul %439, %441, %cst_315 {dimension_numbers = #tpu.dot_dimension_numbers<[1], [0], [0], [1], [0, 0, 1, 1], [], []>} : vector<16x128xbf16>, vector<128x128xbf16>, vector<16x128xf32> -> vector<16x128xf32>
    %443 = arith.addf %435, %442 : vector<16x128xf32>
    %cst_316 = arith.constant dense<0.000000e+00> : vector<16x128xf32>
    %444 = tpu.matmul %437, %408, %cst_316 {dimension_numbers = #tpu.dot_dimension_numbers<[1], [0], [0], [1], [0, 0, 1, 1], [], []>} : vector<16x16xbf16>, vector<16x128xbf16>, vector<16x128xf32> -> vector<16x128xf32>
    %445 = arith.truncf %444 : vector<16x128xf32> to vector<16x128xbf16>
    %c2_317 = arith.constant 2 : index
    %c0_318 = arith.constant 0 : index
    %c0_319 = arith.constant 0 : index
    %446 = vector.load %arg38[%c2_317, %c0_318, %c0_319] : memref<3x128x128xbf16, #tpu.memory_space<vmem>>, vector<1x128x128xbf16>
    %447 = vector.shape_cast %446 : vector<1x128x128xbf16> to vector<128x128xbf16>
    %cst_320 = arith.constant dense<0.000000e+00> : vector<16x128xf32>
    %448 = tpu.matmul %445, %447, %cst_320 {dimension_numbers = #tpu.dot_dimension_numbers<[1], [0], [0], [1], [0, 0, 1, 1], [], []>} : vector<16x128xbf16>, vector<128x128xbf16>, vector<16x128xf32> -> vector<16x128xf32>
    %449 = arith.addf %443, %448 : vector<16x128xf32>
    %c0_321 = arith.constant 0 : index
    %c0_322 = arith.constant 0 : index
    %450 = vector.load %arg39[%c0_321, %c0_322] : memref<1x128xf32, #tpu.memory_space<vmem>>, vector<1x128xf32>
    %451 = vector.broadcast %450 : vector<1x128xf32> to vector<16x128xf32>
    %452 = arith.addf %449, %451 : vector<16x128xf32>
    %c0_323 = arith.constant 0 : index
    %c0_324 = arith.constant 0 : index
    %453 = vector.load %arg7[%c0_323, %c0_324] : memref<16x16xf32, #tpu.memory_space<vmem>>, vector<16x16xf32>
    %cst_325 = arith.constant dense<0.000000e+00> : vector<16x128xf32>
    %454 = tpu.matmul %453, %452, %cst_325 {dimension_numbers = #tpu.dot_dimension_numbers<[1], [0], [0], [1], [0, 0, 1, 1], [], []>} : vector<16x16xf32>, vector<16x128xf32>, vector<16x128xf32> -> vector<16x128xf32>
    %455 = arith.mulf %452, %452 : vector<16x128xf32>
    %cst_326 = arith.constant dense<0.000000e+00> : vector<16x128xf32>
    %456 = tpu.matmul %453, %455, %cst_326 {dimension_numbers = #tpu.dot_dimension_numbers<[1], [0], [0], [1], [0, 0, 1, 1], [], []>} : vector<16x16xf32>, vector<16x128xf32>, vector<16x128xf32> -> vector<16x128xf32>
    %c16_i32_327 = arith.constant 16 : i32
    %457 = tpu.dynamic_rotate %454 by %c16_i32_327 dim 1 : vector<16x128xf32>, i32 -> vector<16x128xf32>
    %458 = arith.addf %454, %457 : vector<16x128xf32>
    %c16_i32_328 = arith.constant 16 : i32
    %459 = tpu.dynamic_rotate %456 by %c16_i32_328 dim 1 : vector<16x128xf32>, i32 -> vector<16x128xf32>
    %460 = arith.addf %456, %459 : vector<16x128xf32>
    %c32_i32_329 = arith.constant 32 : i32
    %461 = tpu.dynamic_rotate %458 by %c32_i32_329 dim 1 : vector<16x128xf32>, i32 -> vector<16x128xf32>
    %462 = arith.addf %458, %461 : vector<16x128xf32>
    %c32_i32_330 = arith.constant 32 : i32
    %463 = tpu.dynamic_rotate %460 by %c32_i32_330 dim 1 : vector<16x128xf32>, i32 -> vector<16x128xf32>
    %464 = arith.addf %460, %463 : vector<16x128xf32>
    %c64_i32_331 = arith.constant 64 : i32
    %465 = tpu.dynamic_rotate %462 by %c64_i32_331 dim 1 : vector<16x128xf32>, i32 -> vector<16x128xf32>
    %466 = arith.addf %462, %465 : vector<16x128xf32>
    %c64_i32_332 = arith.constant 64 : i32
    %467 = tpu.dynamic_rotate %464 by %c64_i32_332 dim 1 : vector<16x128xf32>, i32 -> vector<16x128xf32>
    %468 = arith.addf %464, %467 : vector<16x128xf32>
    %cst_333 = arith.constant 1.250000e-01 : f32
    %469 = vector.broadcast %cst_333 : f32 to vector<16x128xf32>
    %470 = arith.mulf %466, %469 : vector<16x128xf32>
    %cst_334 = arith.constant 1.250000e-01 : f32
    %471 = vector.broadcast %cst_334 : f32 to vector<16x128xf32>
    %472 = arith.mulf %468, %471 : vector<16x128xf32>
    %473 = arith.mulf %470, %470 : vector<16x128xf32>
    %474 = arith.subf %472, %473 : vector<16x128xf32>
    %c0_335 = arith.constant 0 : index
    %c0_336 = arith.constant 0 : index
    %475 = vector.load %arg40[%c0_335, %c0_336] : memref<1x128xf32, #tpu.memory_space<vmem>>, vector<1x128xf32>
    %cst_337 = arith.constant 9.99999974E-6 : f32
    %476 = vector.broadcast %cst_337 : f32 to vector<16x128xf32>
    %477 = arith.addf %474, %476 : vector<16x128xf32>
    %478 = math.rsqrt %477 : vector<16x128xf32>
    %479 = vector.broadcast %475 : vector<1x128xf32> to vector<16x128xf32>
    %480 = arith.mulf %479, %478 : vector<16x128xf32>
    %481 = arith.subf %452, %470 : vector<16x128xf32>
    %482 = arith.mulf %481, %480 : vector<16x128xf32>
    %c0_338 = arith.constant 0 : index
    %c0_339 = arith.constant 0 : index
    %483 = vector.load %arg41[%c0_338, %c0_339] : memref<1x128xf32, #tpu.memory_space<vmem>>, vector<1x128xf32>
    %484 = vector.broadcast %483 : vector<1x128xf32> to vector<16x128xf32>
    %485 = arith.addf %482, %484 : vector<16x128xf32>
    %cst_340 = arith.constant 0.000000e+00 : f32
    %486 = vector.broadcast %cst_340 : f32 to vector<16x128xf32>
    %487 = arith.cmpf oge, %485, %486 : vector<16x128xf32>
    %cst_341 = arith.constant 0.00999999977 : f32
    %488 = vector.broadcast %cst_341 : f32 to vector<16x128xf32>
    %489 = arith.mulf %488, %485 : vector<16x128xf32>
    %490 = arith.select %487, %485, %489 : vector<16x128xi1>, vector<16x128xf32>
    %491 = arith.truncf %490 : vector<16x128xf32> to vector<16x128xbf16>
    %c0_342 = arith.constant 0 : index
    %c0_343 = arith.constant 0 : index
    %c0_344 = arith.constant 0 : index
    %492 = vector.load %arg3[%c0_342, %c0_343, %c0_344] : memref<3x16x16xbf16, #tpu.memory_space<vmem>>, vector<1x16x16xbf16>
    %493 = vector.shape_cast %492 : vector<1x16x16xbf16> to vector<16x16xbf16>
    %cst_345 = arith.constant dense<0.000000e+00> : vector<16x128xf32>
    %494 = tpu.matmul %493, %491, %cst_345 {dimension_numbers = #tpu.dot_dimension_numbers<[1], [0], [0], [1], [0, 0, 1, 1], [], []>} : vector<16x16xbf16>, vector<16x128xbf16>, vector<16x128xf32> -> vector<16x128xf32>
    %495 = arith.truncf %494 : vector<16x128xf32> to vector<16x128xbf16>
    %c0_346 = arith.constant 0 : index
    %c0_347 = arith.constant 0 : index
    %c0_348 = arith.constant 0 : index
    %496 = vector.load %arg42[%c0_346, %c0_347, %c0_348] : memref<3x128x128xbf16, #tpu.memory_space<vmem>>, vector<1x128x128xbf16>
    %497 = vector.shape_cast %496 : vector<1x128x128xbf16> to vector<128x128xbf16>
    %cst_349 = arith.constant dense<0.000000e+00> : vector<16x128xf32>
    %498 = tpu.matmul %495, %497, %cst_349 {dimension_numbers = #tpu.dot_dimension_numbers<[1], [0], [0], [1], [0, 0, 1, 1], [], []>} : vector<16x128xbf16>, vector<128x128xbf16>, vector<16x128xf32> -> vector<16x128xf32>
    %c1_350 = arith.constant 1 : index
    %c0_351 = arith.constant 0 : index
    %c0_352 = arith.constant 0 : index
    %499 = vector.load %arg3[%c1_350, %c0_351, %c0_352] : memref<3x16x16xbf16, #tpu.memory_space<vmem>>, vector<1x16x16xbf16>
    %500 = vector.shape_cast %499 : vector<1x16x16xbf16> to vector<16x16xbf16>
    %cst_353 = arith.constant dense<0.000000e+00> : vector<16x128xf32>
    %501 = tpu.matmul %500, %491, %cst_353 {dimension_numbers = #tpu.dot_dimension_numbers<[1], [0], [0], [1], [0, 0, 1, 1], [], []>} : vector<16x16xbf16>, vector<16x128xbf16>, vector<16x128xf32> -> vector<16x128xf32>
    %502 = arith.truncf %501 : vector<16x128xf32> to vector<16x128xbf16>
    %c1_354 = arith.constant 1 : index
    %c0_355 = arith.constant 0 : index
    %c0_356 = arith.constant 0 : index
    %503 = vector.load %arg42[%c1_354, %c0_355, %c0_356] : memref<3x128x128xbf16, #tpu.memory_space<vmem>>, vector<1x128x128xbf16>
    %504 = vector.shape_cast %503 : vector<1x128x128xbf16> to vector<128x128xbf16>
    %cst_357 = arith.constant dense<0.000000e+00> : vector<16x128xf32>
    %505 = tpu.matmul %502, %504, %cst_357 {dimension_numbers = #tpu.dot_dimension_numbers<[1], [0], [0], [1], [0, 0, 1, 1], [], []>} : vector<16x128xbf16>, vector<128x128xbf16>, vector<16x128xf32> -> vector<16x128xf32>
    %506 = arith.addf %498, %505 : vector<16x128xf32>
    %c2_358 = arith.constant 2 : index
    %c0_359 = arith.constant 0 : index
    %c0_360 = arith.constant 0 : index
    %507 = vector.load %arg3[%c2_358, %c0_359, %c0_360] : memref<3x16x16xbf16, #tpu.memory_space<vmem>>, vector<1x16x16xbf16>
    %508 = vector.shape_cast %507 : vector<1x16x16xbf16> to vector<16x16xbf16>
    %cst_361 = arith.constant dense<0.000000e+00> : vector<16x128xf32>
    %509 = tpu.matmul %508, %491, %cst_361 {dimension_numbers = #tpu.dot_dimension_numbers<[1], [0], [0], [1], [0, 0, 1, 1], [], []>} : vector<16x16xbf16>, vector<16x128xbf16>, vector<16x128xf32> -> vector<16x128xf32>
    %510 = arith.truncf %509 : vector<16x128xf32> to vector<16x128xbf16>
    %c2_362 = arith.constant 2 : index
    %c0_363 = arith.constant 0 : index
    %c0_364 = arith.constant 0 : index
    %511 = vector.load %arg42[%c2_362, %c0_363, %c0_364] : memref<3x128x128xbf16, #tpu.memory_space<vmem>>, vector<1x128x128xbf16>
    %512 = vector.shape_cast %511 : vector<1x128x128xbf16> to vector<128x128xbf16>
    %cst_365 = arith.constant dense<0.000000e+00> : vector<16x128xf32>
    %513 = tpu.matmul %510, %512, %cst_365 {dimension_numbers = #tpu.dot_dimension_numbers<[1], [0], [0], [1], [0, 0, 1, 1], [], []>} : vector<16x128xbf16>, vector<128x128xbf16>, vector<16x128xf32> -> vector<16x128xf32>
    %514 = arith.addf %506, %513 : vector<16x128xf32>
    %c0_366 = arith.constant 0 : index
    %c0_367 = arith.constant 0 : index
    %515 = vector.load %arg43[%c0_366, %c0_367] : memref<1x128xf32, #tpu.memory_space<vmem>>, vector<1x128xf32>
    %516 = vector.broadcast %515 : vector<1x128xf32> to vector<16x128xf32>
    %517 = arith.addf %514, %516 : vector<16x128xf32>
    %c0_368 = arith.constant 0 : index
    %c0_369 = arith.constant 0 : index
    %518 = vector.load %arg7[%c0_368, %c0_369] : memref<16x16xf32, #tpu.memory_space<vmem>>, vector<16x16xf32>
    %cst_370 = arith.constant dense<0.000000e+00> : vector<16x128xf32>
    %519 = tpu.matmul %518, %517, %cst_370 {dimension_numbers = #tpu.dot_dimension_numbers<[1], [0], [0], [1], [0, 0, 1, 1], [], []>} : vector<16x16xf32>, vector<16x128xf32>, vector<16x128xf32> -> vector<16x128xf32>
    %520 = arith.mulf %517, %517 : vector<16x128xf32>
    %cst_371 = arith.constant dense<0.000000e+00> : vector<16x128xf32>
    %521 = tpu.matmul %518, %520, %cst_371 {dimension_numbers = #tpu.dot_dimension_numbers<[1], [0], [0], [1], [0, 0, 1, 1], [], []>} : vector<16x16xf32>, vector<16x128xf32>, vector<16x128xf32> -> vector<16x128xf32>
    %c16_i32_372 = arith.constant 16 : i32
    %522 = tpu.dynamic_rotate %519 by %c16_i32_372 dim 1 : vector<16x128xf32>, i32 -> vector<16x128xf32>
    %523 = arith.addf %519, %522 : vector<16x128xf32>
    %c16_i32_373 = arith.constant 16 : i32
    %524 = tpu.dynamic_rotate %521 by %c16_i32_373 dim 1 : vector<16x128xf32>, i32 -> vector<16x128xf32>
    %525 = arith.addf %521, %524 : vector<16x128xf32>
    %c32_i32_374 = arith.constant 32 : i32
    %526 = tpu.dynamic_rotate %523 by %c32_i32_374 dim 1 : vector<16x128xf32>, i32 -> vector<16x128xf32>
    %527 = arith.addf %523, %526 : vector<16x128xf32>
    %c32_i32_375 = arith.constant 32 : i32
    %528 = tpu.dynamic_rotate %525 by %c32_i32_375 dim 1 : vector<16x128xf32>, i32 -> vector<16x128xf32>
    %529 = arith.addf %525, %528 : vector<16x128xf32>
    %c64_i32_376 = arith.constant 64 : i32
    %530 = tpu.dynamic_rotate %527 by %c64_i32_376 dim 1 : vector<16x128xf32>, i32 -> vector<16x128xf32>
    %531 = arith.addf %527, %530 : vector<16x128xf32>
    %c64_i32_377 = arith.constant 64 : i32
    %532 = tpu.dynamic_rotate %529 by %c64_i32_377 dim 1 : vector<16x128xf32>, i32 -> vector<16x128xf32>
    %533 = arith.addf %529, %532 : vector<16x128xf32>
    %cst_378 = arith.constant 1.250000e-01 : f32
    %534 = vector.broadcast %cst_378 : f32 to vector<16x128xf32>
    %535 = arith.mulf %531, %534 : vector<16x128xf32>
    %cst_379 = arith.constant 1.250000e-01 : f32
    %536 = vector.broadcast %cst_379 : f32 to vector<16x128xf32>
    %537 = arith.mulf %533, %536 : vector<16x128xf32>
    %538 = arith.mulf %535, %535 : vector<16x128xf32>
    %539 = arith.subf %537, %538 : vector<16x128xf32>
    %c0_380 = arith.constant 0 : index
    %c0_381 = arith.constant 0 : index
    %540 = vector.load %arg44[%c0_380, %c0_381] : memref<1x128xf32, #tpu.memory_space<vmem>>, vector<1x128xf32>
    %cst_382 = arith.constant 9.99999974E-6 : f32
    %541 = vector.broadcast %cst_382 : f32 to vector<16x128xf32>
    %542 = arith.addf %539, %541 : vector<16x128xf32>
    %543 = math.rsqrt %542 : vector<16x128xf32>
    %544 = vector.broadcast %540 : vector<1x128xf32> to vector<16x128xf32>
    %545 = arith.mulf %544, %543 : vector<16x128xf32>
    %546 = arith.subf %517, %535 : vector<16x128xf32>
    %547 = arith.mulf %546, %545 : vector<16x128xf32>
    %c0_383 = arith.constant 0 : index
    %c0_384 = arith.constant 0 : index
    %548 = vector.load %arg45[%c0_383, %c0_384] : memref<1x128xf32, #tpu.memory_space<vmem>>, vector<1x128xf32>
    %549 = vector.broadcast %548 : vector<1x128xf32> to vector<16x128xf32>
    %550 = arith.addf %547, %549 : vector<16x128xf32>
    %cst_385 = arith.constant 0.000000e+00 : f32
    %551 = vector.broadcast %cst_385 : f32 to vector<16x128xf32>
    %552 = arith.cmpf oge, %550, %551 : vector<16x128xf32>
    %cst_386 = arith.constant 0.00999999977 : f32
    %553 = vector.broadcast %cst_386 : f32 to vector<16x128xf32>
    %554 = arith.mulf %553, %550 : vector<16x128xf32>
    %555 = arith.select %552, %550, %554 : vector<16x128xi1>, vector<16x128xf32>
    %556 = arith.truncf %555 : vector<16x128xf32> to vector<16x128xbf16>
    %c0_387 = arith.constant 0 : index
    %c0_388 = arith.constant 0 : index
    %c0_389 = arith.constant 0 : index
    %557 = vector.load %arg46[%c0_387, %c0_388, %c0_389] : memref<2x128x128xbf16, #tpu.memory_space<vmem>>, vector<1x128x128xbf16>
    %558 = vector.shape_cast %557 : vector<1x128x128xbf16> to vector<128x128xbf16>
    %cst_390 = arith.constant dense<0.000000e+00> : vector<16x128xf32>
    %559 = tpu.matmul %556, %558, %cst_390 {dimension_numbers = #tpu.dot_dimension_numbers<[1], [0], [0], [1], [0, 0, 1, 1], [], []>} : vector<16x128xbf16>, vector<128x128xbf16>, vector<16x128xf32> -> vector<16x128xf32>
    %c1_391 = arith.constant 1 : index
    %c0_392 = arith.constant 0 : index
    %c0_393 = arith.constant 0 : index
    %560 = vector.load %arg46[%c1_391, %c0_392, %c0_393] : memref<2x128x128xbf16, #tpu.memory_space<vmem>>, vector<1x128x128xbf16>
    %561 = vector.shape_cast %560 : vector<1x128x128xbf16> to vector<128x128xbf16>
    %cst_394 = arith.constant dense<0.000000e+00> : vector<16x128xf32>
    %562 = tpu.matmul %556, %561, %cst_394 {dimension_numbers = #tpu.dot_dimension_numbers<[1], [0], [0], [1], [0, 0, 1, 1], [], []>} : vector<16x128xbf16>, vector<128x128xbf16>, vector<16x128xf32> -> vector<16x128xf32>
    %c0_395 = arith.constant 0 : index
    %c0_396 = arith.constant 0 : index
    %c0_397 = arith.constant 0 : index
    %563 = vector.load %arg10[%c0_395, %c0_396, %c0_397] : memref<2x32x16xf32, #tpu.memory_space<vmem>>, vector<1x32x16xf32>
    %564 = vector.shape_cast %563 : vector<1x32x16xf32> to vector<32x16xf32>
    %cst_398 = arith.constant dense<0.000000e+00> : vector<32x128xf32>
    %565 = tpu.matmul %564, %559, %cst_398 {dimension_numbers = #tpu.dot_dimension_numbers<[1], [0], [0], [1], [0, 0, 1, 1], [], []>} : vector<32x16xf32>, vector<16x128xf32>, vector<32x128xf32> -> vector<32x128xf32>
    %c1_399 = arith.constant 1 : index
    %c0_400 = arith.constant 0 : index
    %c0_401 = arith.constant 0 : index
    %566 = vector.load %arg10[%c1_399, %c0_400, %c0_401] : memref<2x32x16xf32, #tpu.memory_space<vmem>>, vector<1x32x16xf32>
    %567 = vector.shape_cast %566 : vector<1x32x16xf32> to vector<32x16xf32>
    %cst_402 = arith.constant dense<0.000000e+00> : vector<32x128xf32>
    %568 = tpu.matmul %567, %562, %cst_402 {dimension_numbers = #tpu.dot_dimension_numbers<[1], [0], [0], [1], [0, 0, 1, 1], [], []>} : vector<32x16xf32>, vector<16x128xf32>, vector<32x128xf32> -> vector<32x128xf32>
    %569 = arith.addf %565, %568 : vector<32x128xf32>
    %c0_403 = arith.constant 0 : index
    %c0_404 = arith.constant 0 : index
    %570 = vector.load %arg47[%c0_403, %c0_404] : memref<1x128xf32, #tpu.memory_space<vmem>>, vector<1x128xf32>
    %571 = vector.broadcast %570 : vector<1x128xf32> to vector<32x128xf32>
    %572 = arith.addf %569, %571 : vector<32x128xf32>
    %573 = arith.truncf %572 : vector<32x128xf32> to vector<32x128xbf16>
    %574 = arith.truncf %137 : vector<32x128xf32> to vector<32x128xbf16>
    %c0_405 = arith.constant 0 : index
    %c0_406 = arith.constant 0 : index
    %c0_407 = arith.constant 0 : index
    %575 = vector.load %arg1[%c0_405, %c0_406, %c0_407] : memref<3x32x32xbf16, #tpu.memory_space<vmem>>, vector<1x32x32xbf16>
    %576 = vector.shape_cast %575 : vector<1x32x32xbf16> to vector<32x32xbf16>
    %cst_408 = arith.constant dense<0.000000e+00> : vector<32x128xf32>
    %577 = tpu.matmul %576, %573, %cst_408 {dimension_numbers = #tpu.dot_dimension_numbers<[1], [0], [0], [1], [0, 0, 1, 1], [], []>} : vector<32x32xbf16>, vector<32x128xbf16>, vector<32x128xf32> -> vector<32x128xf32>
    %578 = arith.truncf %577 : vector<32x128xf32> to vector<32x128xbf16>
    %c0_409 = arith.constant 0 : index
    %c0_410 = arith.constant 0 : index
    %c0_411 = arith.constant 0 : index
    %579 = vector.load %arg48[%c0_409, %c0_410, %c0_411] : memref<3x128x128xbf16, #tpu.memory_space<vmem>>, vector<1x128x128xbf16>
    %580 = vector.shape_cast %579 : vector<1x128x128xbf16> to vector<128x128xbf16>
    %cst_412 = arith.constant dense<0.000000e+00> : vector<32x128xf32>
    %581 = tpu.matmul %578, %580, %cst_412 {dimension_numbers = #tpu.dot_dimension_numbers<[1], [0], [0], [1], [0, 0, 1, 1], [], []>} : vector<32x128xbf16>, vector<128x128xbf16>, vector<32x128xf32> -> vector<32x128xf32>
    %cst_413 = arith.constant dense<0.000000e+00> : vector<32x128xf32>
    %582 = tpu.matmul %576, %574, %cst_413 {dimension_numbers = #tpu.dot_dimension_numbers<[1], [0], [0], [1], [0, 0, 1, 1], [], []>} : vector<32x32xbf16>, vector<32x128xbf16>, vector<32x128xf32> -> vector<32x128xf32>
    %583 = arith.truncf %582 : vector<32x128xf32> to vector<32x128xbf16>
    %c0_414 = arith.constant 0 : index
    %c0_415 = arith.constant 0 : index
    %c0_416 = arith.constant 0 : index
    %584 = vector.load %arg49[%c0_414, %c0_415, %c0_416] : memref<3x128x128xbf16, #tpu.memory_space<vmem>>, vector<1x128x128xbf16>
    %585 = vector.shape_cast %584 : vector<1x128x128xbf16> to vector<128x128xbf16>
    %cst_417 = arith.constant dense<0.000000e+00> : vector<32x128xf32>
    %586 = tpu.matmul %583, %585, %cst_417 {dimension_numbers = #tpu.dot_dimension_numbers<[1], [0], [0], [1], [0, 0, 1, 1], [], []>} : vector<32x128xbf16>, vector<128x128xbf16>, vector<32x128xf32> -> vector<32x128xf32>
    %587 = arith.addf %581, %586 : vector<32x128xf32>
    %c1_418 = arith.constant 1 : index
    %c0_419 = arith.constant 0 : index
    %c0_420 = arith.constant 0 : index
    %588 = vector.load %arg1[%c1_418, %c0_419, %c0_420] : memref<3x32x32xbf16, #tpu.memory_space<vmem>>, vector<1x32x32xbf16>
    %589 = vector.shape_cast %588 : vector<1x32x32xbf16> to vector<32x32xbf16>
    %cst_421 = arith.constant dense<0.000000e+00> : vector<32x128xf32>
    %590 = tpu.matmul %589, %573, %cst_421 {dimension_numbers = #tpu.dot_dimension_numbers<[1], [0], [0], [1], [0, 0, 1, 1], [], []>} : vector<32x32xbf16>, vector<32x128xbf16>, vector<32x128xf32> -> vector<32x128xf32>
    %591 = arith.truncf %590 : vector<32x128xf32> to vector<32x128xbf16>
    %c1_422 = arith.constant 1 : index
    %c0_423 = arith.constant 0 : index
    %c0_424 = arith.constant 0 : index
    %592 = vector.load %arg48[%c1_422, %c0_423, %c0_424] : memref<3x128x128xbf16, #tpu.memory_space<vmem>>, vector<1x128x128xbf16>
    %593 = vector.shape_cast %592 : vector<1x128x128xbf16> to vector<128x128xbf16>
    %cst_425 = arith.constant dense<0.000000e+00> : vector<32x128xf32>
    %594 = tpu.matmul %591, %593, %cst_425 {dimension_numbers = #tpu.dot_dimension_numbers<[1], [0], [0], [1], [0, 0, 1, 1], [], []>} : vector<32x128xbf16>, vector<128x128xbf16>, vector<32x128xf32> -> vector<32x128xf32>
    %595 = arith.addf %587, %594 : vector<32x128xf32>
    %cst_426 = arith.constant dense<0.000000e+00> : vector<32x128xf32>
    %596 = tpu.matmul %589, %574, %cst_426 {dimension_numbers = #tpu.dot_dimension_numbers<[1], [0], [0], [1], [0, 0, 1, 1], [], []>} : vector<32x32xbf16>, vector<32x128xbf16>, vector<32x128xf32> -> vector<32x128xf32>
    %597 = arith.truncf %596 : vector<32x128xf32> to vector<32x128xbf16>
    %c1_427 = arith.constant 1 : index
    %c0_428 = arith.constant 0 : index
    %c0_429 = arith.constant 0 : index
    %598 = vector.load %arg49[%c1_427, %c0_428, %c0_429] : memref<3x128x128xbf16, #tpu.memory_space<vmem>>, vector<1x128x128xbf16>
    %599 = vector.shape_cast %598 : vector<1x128x128xbf16> to vector<128x128xbf16>
    %cst_430 = arith.constant dense<0.000000e+00> : vector<32x128xf32>
    %600 = tpu.matmul %597, %599, %cst_430 {dimension_numbers = #tpu.dot_dimension_numbers<[1], [0], [0], [1], [0, 0, 1, 1], [], []>} : vector<32x128xbf16>, vector<128x128xbf16>, vector<32x128xf32> -> vector<32x128xf32>
    %601 = arith.addf %595, %600 : vector<32x128xf32>
    %c2_431 = arith.constant 2 : index
    %c0_432 = arith.constant 0 : index
    %c0_433 = arith.constant 0 : index
    %602 = vector.load %arg1[%c2_431, %c0_432, %c0_433] : memref<3x32x32xbf16, #tpu.memory_space<vmem>>, vector<1x32x32xbf16>
    %603 = vector.shape_cast %602 : vector<1x32x32xbf16> to vector<32x32xbf16>
    %cst_434 = arith.constant dense<0.000000e+00> : vector<32x128xf32>
    %604 = tpu.matmul %603, %573, %cst_434 {dimension_numbers = #tpu.dot_dimension_numbers<[1], [0], [0], [1], [0, 0, 1, 1], [], []>} : vector<32x32xbf16>, vector<32x128xbf16>, vector<32x128xf32> -> vector<32x128xf32>
    %605 = arith.truncf %604 : vector<32x128xf32> to vector<32x128xbf16>
    %c2_435 = arith.constant 2 : index
    %c0_436 = arith.constant 0 : index
    %c0_437 = arith.constant 0 : index
    %606 = vector.load %arg48[%c2_435, %c0_436, %c0_437] : memref<3x128x128xbf16, #tpu.memory_space<vmem>>, vector<1x128x128xbf16>
    %607 = vector.shape_cast %606 : vector<1x128x128xbf16> to vector<128x128xbf16>
    %cst_438 = arith.constant dense<0.000000e+00> : vector<32x128xf32>
    %608 = tpu.matmul %605, %607, %cst_438 {dimension_numbers = #tpu.dot_dimension_numbers<[1], [0], [0], [1], [0, 0, 1, 1], [], []>} : vector<32x128xbf16>, vector<128x128xbf16>, vector<32x128xf32> -> vector<32x128xf32>
    %609 = arith.addf %601, %608 : vector<32x128xf32>
    %cst_439 = arith.constant dense<0.000000e+00> : vector<32x128xf32>
    %610 = tpu.matmul %603, %574, %cst_439 {dimension_numbers = #tpu.dot_dimension_numbers<[1], [0], [0], [1], [0, 0, 1, 1], [], []>} : vector<32x32xbf16>, vector<32x128xbf16>, vector<32x128xf32> -> vector<32x128xf32>
    %611 = arith.truncf %610 : vector<32x128xf32> to vector<32x128xbf16>
    %c2_440 = arith.constant 2 : index
    %c0_441 = arith.constant 0 : index
    %c0_442 = arith.constant 0 : index
    %612 = vector.load %arg49[%c2_440, %c0_441, %c0_442] : memref<3x128x128xbf16, #tpu.memory_space<vmem>>, vector<1x128x128xbf16>
    %613 = vector.shape_cast %612 : vector<1x128x128xbf16> to vector<128x128xbf16>
    %cst_443 = arith.constant dense<0.000000e+00> : vector<32x128xf32>
    %614 = tpu.matmul %611, %613, %cst_443 {dimension_numbers = #tpu.dot_dimension_numbers<[1], [0], [0], [1], [0, 0, 1, 1], [], []>} : vector<32x128xbf16>, vector<128x128xbf16>, vector<32x128xf32> -> vector<32x128xf32>
    %615 = arith.addf %609, %614 : vector<32x128xf32>
    %c0_444 = arith.constant 0 : index
    %c0_445 = arith.constant 0 : index
    %616 = vector.load %arg50[%c0_444, %c0_445] : memref<1x128xf32, #tpu.memory_space<vmem>>, vector<1x128xf32>
    %617 = vector.broadcast %616 : vector<1x128xf32> to vector<32x128xf32>
    %618 = arith.addf %615, %617 : vector<32x128xf32>
    %c0_446 = arith.constant 0 : index
    %c0_447 = arith.constant 0 : index
    %619 = vector.load %arg6[%c0_446, %c0_447] : memref<32x32xf32, #tpu.memory_space<vmem>>, vector<32x32xf32>
    %cst_448 = arith.constant dense<0.000000e+00> : vector<32x128xf32>
    %620 = tpu.matmul %619, %618, %cst_448 {dimension_numbers = #tpu.dot_dimension_numbers<[1], [0], [0], [1], [0, 0, 1, 1], [], []>} : vector<32x32xf32>, vector<32x128xf32>, vector<32x128xf32> -> vector<32x128xf32>
    %621 = arith.mulf %618, %618 : vector<32x128xf32>
    %cst_449 = arith.constant dense<0.000000e+00> : vector<32x128xf32>
    %622 = tpu.matmul %619, %621, %cst_449 {dimension_numbers = #tpu.dot_dimension_numbers<[1], [0], [0], [1], [0, 0, 1, 1], [], []>} : vector<32x32xf32>, vector<32x128xf32>, vector<32x128xf32> -> vector<32x128xf32>
    %c8_i32_450 = arith.constant 8 : i32
    %623 = tpu.dynamic_rotate %620 by %c8_i32_450 dim 1 : vector<32x128xf32>, i32 -> vector<32x128xf32>
    %624 = arith.addf %620, %623 : vector<32x128xf32>
    %c8_i32_451 = arith.constant 8 : i32
    %625 = tpu.dynamic_rotate %622 by %c8_i32_451 dim 1 : vector<32x128xf32>, i32 -> vector<32x128xf32>
    %626 = arith.addf %622, %625 : vector<32x128xf32>
    %c16_i32_452 = arith.constant 16 : i32
    %627 = tpu.dynamic_rotate %624 by %c16_i32_452 dim 1 : vector<32x128xf32>, i32 -> vector<32x128xf32>
    %628 = arith.addf %624, %627 : vector<32x128xf32>
    %c16_i32_453 = arith.constant 16 : i32
    %629 = tpu.dynamic_rotate %626 by %c16_i32_453 dim 1 : vector<32x128xf32>, i32 -> vector<32x128xf32>
    %630 = arith.addf %626, %629 : vector<32x128xf32>
    %c32_i32_454 = arith.constant 32 : i32
    %631 = tpu.dynamic_rotate %628 by %c32_i32_454 dim 1 : vector<32x128xf32>, i32 -> vector<32x128xf32>
    %632 = arith.addf %628, %631 : vector<32x128xf32>
    %c32_i32_455 = arith.constant 32 : i32
    %633 = tpu.dynamic_rotate %630 by %c32_i32_455 dim 1 : vector<32x128xf32>, i32 -> vector<32x128xf32>
    %634 = arith.addf %630, %633 : vector<32x128xf32>
    %c64_i32_456 = arith.constant 64 : i32
    %635 = tpu.dynamic_rotate %632 by %c64_i32_456 dim 1 : vector<32x128xf32>, i32 -> vector<32x128xf32>
    %636 = arith.addf %632, %635 : vector<32x128xf32>
    %c64_i32_457 = arith.constant 64 : i32
    %637 = tpu.dynamic_rotate %634 by %c64_i32_457 dim 1 : vector<32x128xf32>, i32 -> vector<32x128xf32>
    %638 = arith.addf %634, %637 : vector<32x128xf32>
    %cst_458 = arith.constant 6.250000e-02 : f32
    %639 = vector.broadcast %cst_458 : f32 to vector<32x128xf32>
    %640 = arith.mulf %636, %639 : vector<32x128xf32>
    %cst_459 = arith.constant 6.250000e-02 : f32
    %641 = vector.broadcast %cst_459 : f32 to vector<32x128xf32>
    %642 = arith.mulf %638, %641 : vector<32x128xf32>
    %643 = arith.mulf %640, %640 : vector<32x128xf32>
    %644 = arith.subf %642, %643 : vector<32x128xf32>
    %c0_460 = arith.constant 0 : index
    %c0_461 = arith.constant 0 : index
    %645 = vector.load %arg51[%c0_460, %c0_461] : memref<1x128xf32, #tpu.memory_space<vmem>>, vector<1x128xf32>
    %cst_462 = arith.constant 9.99999974E-6 : f32
    %646 = vector.broadcast %cst_462 : f32 to vector<32x128xf32>
    %647 = arith.addf %644, %646 : vector<32x128xf32>
    %648 = math.rsqrt %647 : vector<32x128xf32>
    %649 = vector.broadcast %645 : vector<1x128xf32> to vector<32x128xf32>
    %650 = arith.mulf %649, %648 : vector<32x128xf32>
    %651 = arith.subf %618, %640 : vector<32x128xf32>
    %652 = arith.mulf %651, %650 : vector<32x128xf32>
    %c0_463 = arith.constant 0 : index
    %c0_464 = arith.constant 0 : index
    %653 = vector.load %arg52[%c0_463, %c0_464] : memref<1x128xf32, #tpu.memory_space<vmem>>, vector<1x128xf32>
    %654 = vector.broadcast %653 : vector<1x128xf32> to vector<32x128xf32>
    %655 = arith.addf %652, %654 : vector<32x128xf32>
    %cst_465 = arith.constant 0.000000e+00 : f32
    %656 = vector.broadcast %cst_465 : f32 to vector<32x128xf32>
    %657 = arith.cmpf oge, %655, %656 : vector<32x128xf32>
    %cst_466 = arith.constant 0.00999999977 : f32
    %658 = vector.broadcast %cst_466 : f32 to vector<32x128xf32>
    %659 = arith.mulf %658, %655 : vector<32x128xf32>
    %660 = arith.select %657, %655, %659 : vector<32x128xi1>, vector<32x128xf32>
    %661 = arith.truncf %660 : vector<32x128xf32> to vector<32x128xbf16>
    %c0_467 = arith.constant 0 : index
    %c0_468 = arith.constant 0 : index
    %c0_469 = arith.constant 0 : index
    %662 = vector.load %arg1[%c0_467, %c0_468, %c0_469] : memref<3x32x32xbf16, #tpu.memory_space<vmem>>, vector<1x32x32xbf16>
    %663 = vector.shape_cast %662 : vector<1x32x32xbf16> to vector<32x32xbf16>
    %cst_470 = arith.constant dense<0.000000e+00> : vector<32x128xf32>
    %664 = tpu.matmul %663, %661, %cst_470 {dimension_numbers = #tpu.dot_dimension_numbers<[1], [0], [0], [1], [0, 0, 1, 1], [], []>} : vector<32x32xbf16>, vector<32x128xbf16>, vector<32x128xf32> -> vector<32x128xf32>
    %665 = arith.truncf %664 : vector<32x128xf32> to vector<32x128xbf16>
    %c0_471 = arith.constant 0 : index
    %c0_472 = arith.constant 0 : index
    %c0_473 = arith.constant 0 : index
    %666 = vector.load %arg53[%c0_471, %c0_472, %c0_473] : memref<3x128x128xbf16, #tpu.memory_space<vmem>>, vector<1x128x128xbf16>
    %667 = vector.shape_cast %666 : vector<1x128x128xbf16> to vector<128x128xbf16>
    %cst_474 = arith.constant dense<0.000000e+00> : vector<32x128xf32>
    %668 = tpu.matmul %665, %667, %cst_474 {dimension_numbers = #tpu.dot_dimension_numbers<[1], [0], [0], [1], [0, 0, 1, 1], [], []>} : vector<32x128xbf16>, vector<128x128xbf16>, vector<32x128xf32> -> vector<32x128xf32>
    %c1_475 = arith.constant 1 : index
    %c0_476 = arith.constant 0 : index
    %c0_477 = arith.constant 0 : index
    %669 = vector.load %arg1[%c1_475, %c0_476, %c0_477] : memref<3x32x32xbf16, #tpu.memory_space<vmem>>, vector<1x32x32xbf16>
    %670 = vector.shape_cast %669 : vector<1x32x32xbf16> to vector<32x32xbf16>
    %cst_478 = arith.constant dense<0.000000e+00> : vector<32x128xf32>
    %671 = tpu.matmul %670, %661, %cst_478 {dimension_numbers = #tpu.dot_dimension_numbers<[1], [0], [0], [1], [0, 0, 1, 1], [], []>} : vector<32x32xbf16>, vector<32x128xbf16>, vector<32x128xf32> -> vector<32x128xf32>
    %672 = arith.truncf %671 : vector<32x128xf32> to vector<32x128xbf16>
    %c1_479 = arith.constant 1 : index
    %c0_480 = arith.constant 0 : index
    %c0_481 = arith.constant 0 : index
    %673 = vector.load %arg53[%c1_479, %c0_480, %c0_481] : memref<3x128x128xbf16, #tpu.memory_space<vmem>>, vector<1x128x128xbf16>
    %674 = vector.shape_cast %673 : vector<1x128x128xbf16> to vector<128x128xbf16>
    %cst_482 = arith.constant dense<0.000000e+00> : vector<32x128xf32>
    %675 = tpu.matmul %672, %674, %cst_482 {dimension_numbers = #tpu.dot_dimension_numbers<[1], [0], [0], [1], [0, 0, 1, 1], [], []>} : vector<32x128xbf16>, vector<128x128xbf16>, vector<32x128xf32> -> vector<32x128xf32>
    %676 = arith.addf %668, %675 : vector<32x128xf32>
    %c2_483 = arith.constant 2 : index
    %c0_484 = arith.constant 0 : index
    %c0_485 = arith.constant 0 : index
    %677 = vector.load %arg1[%c2_483, %c0_484, %c0_485] : memref<3x32x32xbf16, #tpu.memory_space<vmem>>, vector<1x32x32xbf16>
    %678 = vector.shape_cast %677 : vector<1x32x32xbf16> to vector<32x32xbf16>
    %cst_486 = arith.constant dense<0.000000e+00> : vector<32x128xf32>
    %679 = tpu.matmul %678, %661, %cst_486 {dimension_numbers = #tpu.dot_dimension_numbers<[1], [0], [0], [1], [0, 0, 1, 1], [], []>} : vector<32x32xbf16>, vector<32x128xbf16>, vector<32x128xf32> -> vector<32x128xf32>
    %680 = arith.truncf %679 : vector<32x128xf32> to vector<32x128xbf16>
    %c2_487 = arith.constant 2 : index
    %c0_488 = arith.constant 0 : index
    %c0_489 = arith.constant 0 : index
    %681 = vector.load %arg53[%c2_487, %c0_488, %c0_489] : memref<3x128x128xbf16, #tpu.memory_space<vmem>>, vector<1x128x128xbf16>
    %682 = vector.shape_cast %681 : vector<1x128x128xbf16> to vector<128x128xbf16>
    %cst_490 = arith.constant dense<0.000000e+00> : vector<32x128xf32>
    %683 = tpu.matmul %680, %682, %cst_490 {dimension_numbers = #tpu.dot_dimension_numbers<[1], [0], [0], [1], [0, 0, 1, 1], [], []>} : vector<32x128xbf16>, vector<128x128xbf16>, vector<32x128xf32> -> vector<32x128xf32>
    %684 = arith.addf %676, %683 : vector<32x128xf32>
    %c0_491 = arith.constant 0 : index
    %c0_492 = arith.constant 0 : index
    %685 = vector.load %arg54[%c0_491, %c0_492] : memref<1x128xf32, #tpu.memory_space<vmem>>, vector<1x128xf32>
    %686 = vector.broadcast %685 : vector<1x128xf32> to vector<32x128xf32>
    %687 = arith.addf %684, %686 : vector<32x128xf32>
    %c0_493 = arith.constant 0 : index
    %c0_494 = arith.constant 0 : index
    %688 = vector.load %arg6[%c0_493, %c0_494] : memref<32x32xf32, #tpu.memory_space<vmem>>, vector<32x32xf32>
    %cst_495 = arith.constant dense<0.000000e+00> : vector<32x128xf32>
    %689 = tpu.matmul %688, %687, %cst_495 {dimension_numbers = #tpu.dot_dimension_numbers<[1], [0], [0], [1], [0, 0, 1, 1], [], []>} : vector<32x32xf32>, vector<32x128xf32>, vector<32x128xf32> -> vector<32x128xf32>
    %690 = arith.mulf %687, %687 : vector<32x128xf32>
    %cst_496 = arith.constant dense<0.000000e+00> : vector<32x128xf32>
    %691 = tpu.matmul %688, %690, %cst_496 {dimension_numbers = #tpu.dot_dimension_numbers<[1], [0], [0], [1], [0, 0, 1, 1], [], []>} : vector<32x32xf32>, vector<32x128xf32>, vector<32x128xf32> -> vector<32x128xf32>
    %c8_i32_497 = arith.constant 8 : i32
    %692 = tpu.dynamic_rotate %689 by %c8_i32_497 dim 1 : vector<32x128xf32>, i32 -> vector<32x128xf32>
    %693 = arith.addf %689, %692 : vector<32x128xf32>
    %c8_i32_498 = arith.constant 8 : i32
    %694 = tpu.dynamic_rotate %691 by %c8_i32_498 dim 1 : vector<32x128xf32>, i32 -> vector<32x128xf32>
    %695 = arith.addf %691, %694 : vector<32x128xf32>
    %c16_i32_499 = arith.constant 16 : i32
    %696 = tpu.dynamic_rotate %693 by %c16_i32_499 dim 1 : vector<32x128xf32>, i32 -> vector<32x128xf32>
    %697 = arith.addf %693, %696 : vector<32x128xf32>
    %c16_i32_500 = arith.constant 16 : i32
    %698 = tpu.dynamic_rotate %695 by %c16_i32_500 dim 1 : vector<32x128xf32>, i32 -> vector<32x128xf32>
    %699 = arith.addf %695, %698 : vector<32x128xf32>
    %c32_i32_501 = arith.constant 32 : i32
    %700 = tpu.dynamic_rotate %697 by %c32_i32_501 dim 1 : vector<32x128xf32>, i32 -> vector<32x128xf32>
    %701 = arith.addf %697, %700 : vector<32x128xf32>
    %c32_i32_502 = arith.constant 32 : i32
    %702 = tpu.dynamic_rotate %699 by %c32_i32_502 dim 1 : vector<32x128xf32>, i32 -> vector<32x128xf32>
    %703 = arith.addf %699, %702 : vector<32x128xf32>
    %c64_i32_503 = arith.constant 64 : i32
    %704 = tpu.dynamic_rotate %701 by %c64_i32_503 dim 1 : vector<32x128xf32>, i32 -> vector<32x128xf32>
    %705 = arith.addf %701, %704 : vector<32x128xf32>
    %c64_i32_504 = arith.constant 64 : i32
    %706 = tpu.dynamic_rotate %703 by %c64_i32_504 dim 1 : vector<32x128xf32>, i32 -> vector<32x128xf32>
    %707 = arith.addf %703, %706 : vector<32x128xf32>
    %cst_505 = arith.constant 6.250000e-02 : f32
    %708 = vector.broadcast %cst_505 : f32 to vector<32x128xf32>
    %709 = arith.mulf %705, %708 : vector<32x128xf32>
    %cst_506 = arith.constant 6.250000e-02 : f32
    %710 = vector.broadcast %cst_506 : f32 to vector<32x128xf32>
    %711 = arith.mulf %707, %710 : vector<32x128xf32>
    %712 = arith.mulf %709, %709 : vector<32x128xf32>
    %713 = arith.subf %711, %712 : vector<32x128xf32>
    %c0_507 = arith.constant 0 : index
    %c0_508 = arith.constant 0 : index
    %714 = vector.load %arg55[%c0_507, %c0_508] : memref<1x128xf32, #tpu.memory_space<vmem>>, vector<1x128xf32>
    %cst_509 = arith.constant 9.99999974E-6 : f32
    %715 = vector.broadcast %cst_509 : f32 to vector<32x128xf32>
    %716 = arith.addf %713, %715 : vector<32x128xf32>
    %717 = math.rsqrt %716 : vector<32x128xf32>
    %718 = vector.broadcast %714 : vector<1x128xf32> to vector<32x128xf32>
    %719 = arith.mulf %718, %717 : vector<32x128xf32>
    %720 = arith.subf %687, %709 : vector<32x128xf32>
    %721 = arith.mulf %720, %719 : vector<32x128xf32>
    %c0_510 = arith.constant 0 : index
    %c0_511 = arith.constant 0 : index
    %722 = vector.load %arg56[%c0_510, %c0_511] : memref<1x128xf32, #tpu.memory_space<vmem>>, vector<1x128xf32>
    %723 = vector.broadcast %722 : vector<1x128xf32> to vector<32x128xf32>
    %724 = arith.addf %721, %723 : vector<32x128xf32>
    %cst_512 = arith.constant 0.000000e+00 : f32
    %725 = vector.broadcast %cst_512 : f32 to vector<32x128xf32>
    %726 = arith.cmpf oge, %724, %725 : vector<32x128xf32>
    %cst_513 = arith.constant 0.00999999977 : f32
    %727 = vector.broadcast %cst_513 : f32 to vector<32x128xf32>
    %728 = arith.mulf %727, %724 : vector<32x128xf32>
    %729 = arith.select %726, %724, %728 : vector<32x128xi1>, vector<32x128xf32>
    %730 = arith.truncf %729 : vector<32x128xf32> to vector<32x128xbf16>
    %c0_514 = arith.constant 0 : index
    %c0_515 = arith.constant 0 : index
    %c0_516 = arith.constant 0 : index
    %731 = vector.load %arg57[%c0_514, %c0_515, %c0_516] : memref<1x128x128xbf16, #tpu.memory_space<vmem>>, vector<1x128x128xbf16>
    %732 = vector.shape_cast %731 : vector<1x128x128xbf16> to vector<128x128xbf16>
    %cst_517 = arith.constant dense<0.000000e+00> : vector<32x128xf32>
    %733 = tpu.matmul %730, %732, %cst_517 {dimension_numbers = #tpu.dot_dimension_numbers<[1], [0], [0], [1], [0, 0, 1, 1], [], []>} : vector<32x128xbf16>, vector<128x128xbf16>, vector<32x128xf32> -> vector<32x128xf32>
    %c0_518 = arith.constant 0 : index
    %c0_519 = arith.constant 0 : index
    %734 = vector.load %arg58[%c0_518, %c0_519] : memref<1x128xf32, #tpu.memory_space<vmem>>, vector<1x128xf32>
    %735 = vector.broadcast %734 : vector<1x128xf32> to vector<32x128xf32>
    %736 = arith.addf %733, %735 : vector<32x128xf32>
    %c0_520 = arith.constant 0 : index
    %c0_521 = arith.constant 0 : index
    %737 = vector.load %arg59[%c0_520, %c0_521] : memref<32x128xf32, #tpu.memory_space<vmem>>, vector<32x128xf32>
    tpu.vector_store %arg59[%c0_520, %c0_521], %736 {strides = array<i32>} : memref<32x128xf32, #tpu.memory_space<vmem>>, vector<32x128xf32>,
    return
  }
}

</mosaic_0001>

<llo_original>
// kernel: forward.1
$region0: #{forward.1}
  #allocation0 [shape = 'u32[]', space=smem, size = 0x4, offset = 0x4, fixed_abs, tag = 'smem constant byte address 0x4 - core index']
  #allocation1 [shape = 'u32[144,128]{1,0:T(1,128)}', space=vmem, size = 0x12000, scoped, tag = 'internal scratch']
  %s0 = inlined_call_operand.smem [shape: u32[60], index: -1, kind: input, shape index: {}]
  %s1 = sld [smem:[%s0]]
  %s2 = scalar_lea.smem %s0, 1
  %s3 = sld [smem:[%s2]]
  %s4 = scalar_lea.smem %s0, 2
  %s5 = sld [smem:[%s4]]
  %s6 = scalar_lea.smem %s0, 3
  %s7 = sld [smem:[%s6]]
  %s8 = scalar_lea.smem %s0, 4
  %s9 = sld [smem:[%s8]]
  %s10 = scalar_lea.smem %s0, 5
  %s11 = sld [smem:[%s10]]
  %s12 = scalar_lea.smem %s0, 6
  %s13 = sld [smem:[%s12]]
  %s14 = scalar_lea.smem %s0, 7
  %s15 = sld [smem:[%s14]]
  %s16 = scalar_lea.smem %s0, 8
  %s17 = sld [smem:[%s16]]
  %s18 = scalar_lea.smem %s0, 9
  %s19 = sld [smem:[%s18]]
  %s20 = scalar_lea.smem %s0, 10
  %s21 = sld [smem:[%s20]]
  %s22 = scalar_lea.smem %s0, 11
  %s23 = sld [smem:[%s22]]
  %s24 = scalar_lea.smem %s0, 12
  %s25 = sld [smem:[%s24]]
  %s26 = scalar_lea.smem %s0, 13
  %s27 = sld [smem:[%s26]]
  %s28 = scalar_lea.smem %s0, 14
  %s29 = sld [smem:[%s28]]
  %s30 = scalar_lea.smem %s0, 15
  %s31 = sld [smem:[%s30]]
  %s32 = scalar_lea.smem %s0, 16
  %s33 = sld [smem:[%s32]]
  %s34 = scalar_lea.smem %s0, 17
  %s35 = sld [smem:[%s34]]
  %s36 = scalar_lea.smem %s0, 18
  %s37 = sld [smem:[%s36]]
  %s38 = scalar_lea.smem %s0, 19
  %s39 = sld [smem:[%s38]]
  %s40 = scalar_lea.smem %s0, 20
  %s41 = sld [smem:[%s40]]
  %s42 = scalar_lea.smem %s0, 21
  %s43 = sld [smem:[%s42]]
  %s44 = scalar_lea.smem %s0, 22
  %s45 = sld [smem:[%s44]]
  %s46 = scalar_lea.smem %s0, 23
  %s47 = sld [smem:[%s46]]
  %s48 = scalar_lea.smem %s0, 24
  %s49 = sld [smem:[%s48]]
  %s50 = scalar_lea.smem %s0, 25
  %s51 = sld [smem:[%s50]]
  %s52 = scalar_lea.smem %s0, 26
  %s53 = sld [smem:[%s52]]
  %s54 = scalar_lea.smem %s0, 27
  %s55 = sld [smem:[%s54]]
  %s56 = scalar_lea.smem %s0, 28
  %s57 = sld [smem:[%s56]]
  %s58 = scalar_lea.smem %s0, 29
  %s59 = sld [smem:[%s58]]
  %s60 = scalar_lea.smem %s0, 30
  %s61 = sld [smem:[%s60]]
  %s62 = scalar_lea.smem %s0, 31
  %s63 = sld [smem:[%s62]]
  %s64 = scalar_lea.smem %s0, 32
  %s65 = sld [smem:[%s64]]
  %s66 = scalar_lea.smem %s0, 33
  %s67 = sld [smem:[%s66]]
  %s68 = scalar_lea.smem %s0, 34
  %s69 = sld [smem:[%s68]]
  %s70 = scalar_lea.smem %s0, 35
  %s71 = sld [smem:[%s70]]
  %s72 = scalar_lea.smem %s0, 36
  %s73 = sld [smem:[%s72]]
  %s74 = scalar_lea.smem %s0, 37
  %s75 = sld [smem:[%s74]]
  %s76 = scalar_lea.smem %s0, 38
  %s77 = sld [smem:[%s76]]
  %s78 = scalar_lea.smem %s0, 39
  %s79 = sld [smem:[%s78]]
  %s80 = scalar_lea.smem %s0, 40
  %s81 = sld [smem:[%s80]]
  %s82 = scalar_lea.smem %s0, 41
  %s83 = sld [smem:[%s82]]
  %s84 = scalar_lea.smem %s0, 42
  %s85 = sld [smem:[%s84]]
  %s86 = scalar_lea.smem %s0, 43
  %s87 = sld [smem:[%s86]]
  %s88 = scalar_lea.smem %s0, 44
  %s89 = sld [smem:[%s88]]
  %s90 = scalar_lea.smem %s0, 45
  %s91 = sld [smem:[%s90]]
  %s92 = scalar_lea.smem %s0, 46
  %s93 = sld [smem:[%s92]]
  %s94 = scalar_lea.smem %s0, 47
  %s95 = sld [smem:[%s94]]
  %s96 = scalar_lea.smem %s0, 48
  %s97 = sld [smem:[%s96]]
  %s98 = scalar_lea.smem %s0, 49
  %s99 = sld [smem:[%s98]]
  %s100 = scalar_lea.smem %s0, 50
  %s101 = sld [smem:[%s100]]
  %s102 = scalar_lea.smem %s0, 51
  %s103 = sld [smem:[%s102]]
  %s104 = scalar_lea.smem %s0, 52
  %s105 = sld [smem:[%s104]]
  %s106 = scalar_lea.smem %s0, 53
  %s107 = sld [smem:[%s106]]
  %s108 = scalar_lea.smem %s0, 54
  %s109 = sld [smem:[%s108]]
  %s110 = scalar_lea.smem %s0, 55
  %s111 = sld [smem:[%s110]]
  %s112 = scalar_lea.smem %s0, 56
  %s113 = sld [smem:[%s112]]
  %s114 = scalar_lea.smem %s0, 57
  %s115 = sld [smem:[%s114]]
  %s116 = scalar_lea.smem %s0, 58
  %s117 = sld [smem:[%s116]]
  %s118 = scalar_lea.smem %s0, 59
  %s119 = sld [smem:[%s118]]
  %s120 = sld [smem:[#allocation0]]
  $region342: #{forward.1} parent=0
    _
  %s122 = ssub.s32 1, %s120
  %s123 = scalar_select 0, %s122, %s120
  $region1: #{forward.1} parent=0
    #allocation2 [shape = 'u8[24576]{0}', space=vmem, size = 0x6000, scoped, tag = 'input window, operand 1, single buffered']
    #allocation3 [shape = 's32[1]{0}', space=sflag, size = 0x4, scoped, tag = 'scoped memory for forward.1']
    #allocation4 [shape = 'u8[12288]{0}', space=vmem, size = 0x3000, scoped, tag = 'input window, operand 2, single buffered']
    #allocation5 [shape = 's32[1]{0}', space=sflag, size = 0x4, scoped, tag = 'scoped memory for forward.1']
    #allocation6 [shape = 'u8[12288]{0}', space=vmem, size = 0x3000, scoped, tag = 'input window, operand 3, single buffered']
    #allocation7 [shape = 'u8[6144]{0}', space=vmem, size = 0x1800, scoped, tag = 'input window, operand 4, single buffered']
    #allocation8 [shape = 's32[1]{0}', space=sflag, size = 0x4, scoped, tag = 'scoped memory for forward.1']
    #allocation9 [shape = 'u8[6144]{0}', space=vmem, size = 0x1800, scoped, tag = 'input window, operand 5, single buffered']
    #allocation10 [shape = 'u8[16384]{0}', space=vmem, size = 0x4000, scoped, tag = 'input window, operand 6, single buffered']
    #allocation11 [shape = 's32[1]{0}', space=sflag, size = 0x4, scoped, tag = 'scoped memory for forward.1']
    #allocation12 [shape = 'u8[8192]{0}', space=vmem, size = 0x2000, scoped, tag = 'input window, operand 7, single buffered']
    #allocation13 [shape = 'u8[4096]{0}', space=vmem, size = 0x1000, scoped, tag = 'input window, operand 8, single buffered']
    #allocation14 [shape = 's32[1]{0}', space=sflag, size = 0x4, scoped, tag = 'scoped memory for forward.1']
    #allocation15 [shape = 'u8[49152]{0}', space=vmem, size = 0xc000, scoped, tag = 'input window, operand 11, single buffered']
    #allocation16 [shape = 'u8[512]{0}', space=vmem, size = 0x400, scoped, tag = 'input window, operand 17, single buffered']
    #allocation17 [shape = 's32[1]{0}', space=sflag, size = 0x4, scoped, tag = 'scoped memory for forward.1']
    #allocation18 [shape = 'u8[512]{0}', space=vmem, size = 0x400, scoped, tag = 'input window, operand 18, single buffered']
    #allocation19 [shape = 'u8[512]{0}', space=vmem, size = 0x400, scoped, tag = 'input window, operand 20, single buffered']
    #allocation20 [shape = 's32[1]{0}', space=sflag, size = 0x4, scoped, tag = 'scoped memory for forward.1']
    #allocation21 [shape = 'u8[512]{0}', space=vmem, size = 0x400, scoped, tag = 'input window, operand 21, single buffered']
    #allocation22 [shape = 'u8[512]{0}', space=vmem, size = 0x400, scoped, tag = 'input window, operand 22, single buffered']
    #allocation23 [shape = 's32[1]{0}', space=sflag, size = 0x4, scoped, tag = 'scoped memory for forward.1']
    #allocation24 [shape = 'u8[98304]{0}', space=vmem, size = 0x18000, scoped, tag = 'input window, operand 27, single buffered']
    #allocation25 [shape = 'u8[98304]{0}', space=vmem, size = 0x18000, scoped, tag = 'input window, operand 31, single buffered']
    #allocation26 [shape = 's32[1]{0}', space=sflag, size = 0x4, scoped, tag = 'scoped memory for forward.1']
    #allocation27 [shape = 'u8[65536]{0}', space=vmem, size = 0x10000, scoped, tag = 'input window, operand 35, single buffered']
    #allocation28 [shape = 'u8[98304]{0}', space=vmem, size = 0x18000, scoped, tag = 'input window, operand 37, single buffered']
    #allocation29 [shape = 's32[1]{0}', space=sflag, size = 0x4, scoped, tag = 'scoped memory for forward.1']
    #allocation30 [shape = 'u8[98304]{0}', space=vmem, size = 0x18000, scoped, tag = 'input window, operand 38, single buffered']
    #allocation31 [shape = 'u8[98304]{0}', space=vmem, size = 0x18000, scoped, tag = 'input window, operand 42, single buffered']
    #allocation32 [shape = 's32[1]{0}', space=sflag, size = 0x4, scoped, tag = 'scoped memory for forward.1']
    #allocation33 [shape = 'u8[65536]{0}', space=vmem, size = 0x10000, scoped, tag = 'input window, operand 46, single buffered']
    #allocation34 [shape = 'u8[98304]{0}', space=vmem, size = 0x18000, scoped, tag = 'input window, operand 48, single buffered']
    #allocation35 [shape = 's32[1]{0}', space=sflag, size = 0x4, scoped, tag = 'scoped memory for forward.1']
    #allocation36 [shape = 'u8[98304]{0}', space=vmem, size = 0x18000, scoped, tag = 'input window, operand 49, single buffered']
    #allocation37 [shape = 'u8[98304]{0}', space=vmem, size = 0x18000, scoped, tag = 'input window, operand 53, single buffered']
    #allocation38 [shape = 's32[1]{0}', space=sflag, size = 0x4, scoped, tag = 'scoped memory for forward.1']
    %124 = vsyncpa [#allocation3], 0
    %125 = vsyncpa [#allocation5], 0
    %126 = vsyncpa [#allocation8], 0
    %127 = vsyncpa [#allocation11], 0
    %128 = vsyncpa [#allocation14], 0
    %129 = vsyncpa [#allocation17], 0
    %130 = vsyncpa [#allocation20], 0
    %131 = vsyncpa [#allocation23], 0
    %132 = vsyncpa [#allocation26], 0
    %133 = vsyncpa [#allocation29], 0
    %134 = vsyncpa [#allocation32], 0
    %135 = vsyncpa [#allocation35], 0
    %136 = vsyncpa [#allocation38], 0
    // Predicated region
    $region2: #{forward.1} parent=1 // pred_check
      _
    $region3: #{forward.1} parent=1 // pred_check_branch
      %138 = sbr.rel (0) target = $region5
    $region4: #{forward.1} parent=1 // pred_region
      _
    $region5: #{forward.1} parent=1 // pred_fallthru
      _
    // Predicated region
    $region6: #{forward.1} parent=1 // pred_check
      _
    $region7: #{forward.1} parent=1 // pred_check_branch
      %140 = sbr.rel (0) target = $region9
    $region8: #{forward.1} parent=1 // pred_region
      %s142 = ssub.s32 768, 768
      %143 = vsyncadd [#allocation3], %s142
      %s144 = sshll.u32 [#allocation2], 4
      %s145 = int_to_ptr.vmem [resolvable:$true] %s144
      %150 = dma.hbm_to_vmem [thread:$0]  %s3, 768, %s145, [#allocation3], 64, 64, 4
    $region9: #{forward.1} parent=1 // pred_fallthru
      _
    // Predicated region
    $region10: #{forward.1} parent=1 // pred_check
      _
    $region11: #{forward.1} parent=1 // pred_check_branch
      %152 = sbr.rel (0) target = $region13
    $region12: #{forward.1} parent=1 // pred_region
      %s154 = ssub.s32 384, 384
      %155 = vsyncadd [#allocation5], %s154
      %s156 = sshll.u32 [#allocation4], 4
      %s157 = int_to_ptr.vmem [resolvable:$true] %s156
      %162 = dma.hbm_to_vmem [thread:$0]  %s5, 384, %s157, [#allocation5], 64, 64, 4
    $region13: #{forward.1} parent=1 // pred_fallthru
      _
    // Predicated region
    $region14: #{forward.1} parent=1 // pred_check
      _
    $region15: #{forward.1} parent=1 // pred_check_branch
      %164 = sbr.rel (0) target = $region17
    $region16: #{forward.1} parent=1 // pred_region
      %s166 = ssub.s32 384, 384
      %167 = vsyncadd [#allocation5], %s166
      %s168 = sshll.u32 [#allocation6], 4
      %s169 = int_to_ptr.vmem [resolvable:$true] %s168
      %174 = dma.hbm_to_vmem [thread:$0]  %s7, 384, %s169, [#allocation5], 64, 64, 4
    $region17: #{forward.1} parent=1 // pred_fallthru
      _
    // Predicated region
    $region18: #{forward.1} parent=1 // pred_check
      _
    $region19: #{forward.1} parent=1 // pred_check_branch
      %176 = sbr.rel (0) target = $region21
    $region20: #{forward.1} parent=1 // pred_region
      %s178 = ssub.s32 192, 192
      %179 = vsyncadd [#allocation8], %s178
      %s180 = sshll.u32 [#allocation7], 4
      %s181 = int_to_ptr.vmem [resolvable:$true] %s180
      %186 = dma.hbm_to_vmem [thread:$0]  %s9, 192, %s181, [#allocation8], 64, 64, 4
    $region21: #{forward.1} parent=1 // pred_fallthru
      _
    // Predicated region
    $region22: #{forward.1} parent=1 // pred_check
      _
    $region23: #{forward.1} parent=1 // pred_check_branch
      %188 = sbr.rel (0) target = $region25
    $region24: #{forward.1} parent=1 // pred_region
      %s190 = ssub.s32 192, 192
      %191 = vsyncadd [#allocation8], %s190
      %s192 = sshll.u32 [#allocation9], 4
      %s193 = int_to_ptr.vmem [resolvable:$true] %s192
      %198 = dma.hbm_to_vmem [thread:$0]  %s11, 192, %s193, [#allocation8], 64, 64, 4
    $region25: #{forward.1} parent=1 // pred_fallthru
      _
    // Predicated region
    $region26: #{forward.1} parent=1 // pred_check
      _
    $region27: #{forward.1} parent=1 // pred_check_branch
      %200 = sbr.rel (0) target = $region29
    $region28: #{forward.1} parent=1 // pred_region
      %s202 = ssub.s32 512, 512
      %203 = vsyncadd [#allocation11], %s202
      %s204 = sshll.u32 [#allocation10], 4
      %s205 = int_to_ptr.vmem [resolvable:$true] %s204
      %210 = dma.hbm_to_vmem [thread:$0]  %s13, 512, %s205, [#allocation11], 128, 128, 8
    $region29: #{forward.1} parent=1 // pred_fallthru
      _
    // Predicated region
    $region30: #{forward.1} parent=1 // pred_check
      _
    $region31: #{forward.1} parent=1 // pred_check_branch
      %212 = sbr.rel (0) target = $region33
    $region32: #{forward.1} parent=1 // pred_region
      %s214 = ssub.s32 256, 256
      %215 = vsyncadd [#allocation11], %s214
      %s216 = sshll.u32 [#allocation12], 4
      %s217 = int_to_ptr.vmem [resolvable:$true] %s216
      %222 = dma.hbm_to_vmem [thread:$0]  %s15, 256, %s217, [#allocation11], 128, 128, 8
    $region33: #{forward.1} parent=1 // pred_fallthru
      _
    // Predicated region
    $region34: #{forward.1} parent=1 // pred_check
      _
    $region35: #{forward.1} parent=1 // pred_check_branch
      %224 = sbr.rel (0) target = $region37
    $region36: #{forward.1} parent=1 // pred_region
      %s226 = ssub.s32 128, 128
      %227 = vsyncadd [#allocation14], %s226
      %s229 = sshll.u32 [#allocation13], 4
      %s230 = int_to_ptr.vmem [resolvable:$true] %s229
      %232 = dma.hbm_to_vmem [thread:$0]  %s17, 128, %s230, [#allocation14]
    $region37: #{forward.1} parent=1 // pred_fallthru
      _
    // Predicated region
    $region38: #{forward.1} parent=1 // pred_check
      _
    $region39: #{forward.1} parent=1 // pred_check_branch
      %234 = sbr.rel (0) target = $region41
    $region40: #{forward.1} parent=1 // pred_region
      _
    $region41: #{forward.1} parent=1 // pred_fallthru
      _
    // Predicated region
    $region42: #{forward.1} parent=1 // pred_check
      _
    $region43: #{forward.1} parent=1 // pred_check_branch
      %236 = sbr.rel (0) target = $region45
    $region44: #{forward.1} parent=1 // pred_region
      _
    $region45: #{forward.1} parent=1 // pred_fallthru
      _
    // Predicated region
    $region46: #{forward.1} parent=1 // pred_check
      _
    $region47: #{forward.1} parent=1 // pred_check_branch
      %238 = sbr.rel (0) target = $region49
    $region48: #{forward.1} parent=1 // pred_region
      %s240 = ssub.s32 1536, 1536
      %241 = vsyncadd [#allocation14], %s240
      %s242 = sshll.u32 [#allocation15], 4
      %s243 = int_to_ptr.vmem [resolvable:$true] %s242
      %248 = dma.hbm_to_vmem [thread:$0]  %s23, 1536, %s243, [#allocation14], 64, 64, 4
    $region49: #{forward.1} parent=1 // pred_fallthru
      _
    // Predicated region
    $region50: #{forward.1} parent=1 // pred_check
      _
    $region51: #{forward.1} parent=1 // pred_check_branch
      %250 = sbr.rel (0) target = $region53
    $region52: #{forward.1} parent=1 // pred_region
      _
    $region53: #{forward.1} parent=1 // pred_fallthru
      _
    // Predicated region
    $region54: #{forward.1} parent=1 // pred_check
      _
    $region55: #{forward.1} parent=1 // pred_check_branch
      %252 = sbr.rel (0) target = $region57
    $region56: #{forward.1} parent=1 // pred_region
      _
    $region57: #{forward.1} parent=1 // pred_fallthru
      _
    // Predicated region
    $region58: #{forward.1} parent=1 // pred_check
      _
    $region59: #{forward.1} parent=1 // pred_check_branch
      %254 = sbr.rel (0) target = $region61
    $region60: #{forward.1} parent=1 // pred_region
      _
    $region61: #{forward.1} parent=1 // pred_fallthru
      _
    // Predicated region
    $region62: #{forward.1} parent=1 // pred_check
      _
    $region63: #{forward.1} parent=1 // pred_check_branch
      %256 = sbr.rel (0) target = $region65
    $region64: #{forward.1} parent=1 // pred_region
      _
    $region65: #{forward.1} parent=1 // pred_fallthru
      _
    // Predicated region
    $region66: #{forward.1} parent=1 // pred_check
      _
    $region67: #{forward.1} parent=1 // pred_check_branch
      %258 = sbr.rel (0) target = $region69
    $region68: #{forward.1} parent=1 // pred_region
      _
    $region69: #{forward.1} parent=1 // pred_fallthru
      _
    // Predicated region
    $region70: #{forward.1} parent=1 // pred_check
      _
    $region71: #{forward.1} parent=1 // pred_check_branch
      %260 = sbr.rel (0) target = $region73
    $region72: #{forward.1} parent=1 // pred_region
      %s262 = ssub.s32 16, 16
      %263 = vsyncadd [#allocation17], %s262
      %s265 = sshll.u32 [#allocation16], 4
      %s266 = int_to_ptr.vmem [resolvable:$true] %s265
      %268 = dma.hbm_to_vmem [thread:$0]  %s35, 16, %s266, [#allocation17]
    $region73: #{forward.1} parent=1 // pred_fallthru
      _
    // Predicated region
    $region74: #{forward.1} parent=1 // pred_check
      _
    $region75: #{forward.1} parent=1 // pred_check_branch
      %270 = sbr.rel (0) target = $region77
    $region76: #{forward.1} parent=1 // pred_region
      %s272 = ssub.s32 16, 16
      %273 = vsyncadd [#allocation17], %s272
      %s275 = sshll.u32 [#allocation18], 4
      %s276 = int_to_ptr.vmem [resolvable:$true] %s275
      %278 = dma.hbm_to_vmem [thread:$0]  %s37, 16, %s276, [#allocation17]
    $region77: #{forward.1} parent=1 // pred_fallthru
      _
    // Predicated region
    $region78: #{forward.1} parent=1 // pred_check
      _
    $region79: #{forward.1} parent=1 // pred_check_branch
      %280 = sbr.rel (0) target = $region81
    $region80: #{forward.1} parent=1 // pred_region
      _
    $region81: #{forward.1} parent=1 // pred_fallthru
      _
    // Predicated region
    $region82: #{forward.1} parent=1 // pred_check
      _
    $region83: #{forward.1} parent=1 // pred_check_branch
      %282 = sbr.rel (0) target = $region85
    $region84: #{forward.1} parent=1 // pred_region
      %s284 = ssub.s32 16, 16
      %285 = vsyncadd [#allocation20], %s284
      %s287 = sshll.u32 [#allocation19], 4
      %s288 = int_to_ptr.vmem [resolvable:$true] %s287
      %290 = dma.hbm_to_vmem [thread:$0]  %s41, 16, %s288, [#allocation20]
    $region85: #{forward.1} parent=1 // pred_fallthru
      _
    // Predicated region
    $region86: #{forward.1} parent=1 // pred_check
      _
    $region87: #{forward.1} parent=1 // pred_check_branch
      %292 = sbr.rel (0) target = $region89
    $region88: #{forward.1} parent=1 // pred_region
      %s294 = ssub.s32 16, 16
      %295 = vsyncadd [#allocation20], %s294
      %s297 = sshll.u32 [#allocation21], 4
      %s298 = int_to_ptr.vmem [resolvable:$true] %s297
      %300 = dma.hbm_to_vmem [thread:$0]  %s43, 16, %s298, [#allocation20]
    $region89: #{forward.1} parent=1 // pred_fallthru
      _
    // Predicated region
    $region90: #{forward.1} parent=1 // pred_check
      _
    $region91: #{forward.1} parent=1 // pred_check_branch
      %302 = sbr.rel (0) target = $region93
    $region92: #{forward.1} parent=1 // pred_region
      %s304 = ssub.s32 16, 16
      %305 = vsyncadd [#allocation23], %s304
      %s307 = sshll.u32 [#allocation22], 4
      %s308 = int_to_ptr.vmem [resolvable:$true] %s307
      %310 = dma.hbm_to_vmem [thread:$0]  %s45, 16, %s308, [#allocation23]
    $region93: #{forward.1} parent=1 // pred_fallthru
      _
    // Predicated region
    $region94: #{forward.1} parent=1 // pred_check
      _
    $region95: #{forward.1} parent=1 // pred_check_branch
      %312 = sbr.rel (0) target = $region97
    $region96: #{forward.1} parent=1 // pred_region
      _
    $region97: #{forward.1} parent=1 // pred_fallthru
      _
    // Predicated region
    $region98: #{forward.1} parent=1 // pred_check
      _
    $region99: #{forward.1} parent=1 // pred_check_branch
      %314 = sbr.rel (0) target = $region101
    $region100: #{forward.1} parent=1 // pred_region
      _
    $region101: #{forward.1} parent=1 // pred_fallthru
      _
    // Predicated region
    $region102: #{forward.1} parent=1 // pred_check
      _
    $region103: #{forward.1} parent=1 // pred_check_branch
      %316 = sbr.rel (0) target = $region105
    $region104: #{forward.1} parent=1 // pred_region
      _
    $region105: #{forward.1} parent=1 // pred_fallthru
      _
    // Predicated region
    $region106: #{forward.1} parent=1 // pred_check
      _
    $region107: #{forward.1} parent=1 // pred_check_branch
      %318 = sbr.rel (0) target = $region109
    $region108: #{forward.1} parent=1 // pred_region
      _
    $region109: #{forward.1} parent=1 // pred_fallthru
      _
    // Predicated region
    $region110: #{forward.1} parent=1 // pred_check
      _
    $region111: #{forward.1} parent=1 // pred_check_branch
      %320 = sbr.rel (0) target = $region113
    $region112: #{forward.1} parent=1 // pred_region
      %s322 = ssub.s32 3072, 3072
      %323 = vsyncadd [#allocation23], %s322
      %s324 = sshll.u32 [#allocation24], 4
      %s325 = int_to_ptr.vmem [resolvable:$true] %s324
      %330 = dma.hbm_to_vmem [thread:$0]  %s55, 3072, %s325, [#allocation23], 64, 64, 4
    $region113: #{forward.1} parent=1 // pred_fallthru
      _
    // Predicated region
    $region114: #{forward.1} parent=1 // pred_check
      _
    $region115: #{forward.1} parent=1 // pred_check_branch
      %332 = sbr.rel (0) target = $region117
    $region116: #{forward.1} parent=1 // pred_region
      _
    $region117: #{forward.1} parent=1 // pred_fallthru
      _
    // Predicated region
    $region118: #{forward.1} parent=1 // pred_check
      _
    $region119: #{forward.1} parent=1 // pred_check_branch
      %334 = sbr.rel (0) target = $region121
    $region120: #{forward.1} parent=1 // pred_region
      _
    $region121: #{forward.1} parent=1 // pred_fallthru
      _
    // Predicated region
    $region122: #{forward.1} parent=1 // pred_check
      _
    $region123: #{forward.1} parent=1 // pred_check_branch
      %336 = sbr.rel (0) target = $region125
    $region124: #{forward.1} parent=1 // pred_region
      _
    $region125: #{forward.1} parent=1 // pred_fallthru
      _
    // Predicated region
    $region126: #{forward.1} parent=1 // pred_check
      _
    $region127: #{forward.1} parent=1 // pred_check_branch
      %338 = sbr.rel (0) target = $region129
    $region128: #{forward.1} parent=1 // pred_region
      %s340 = ssub.s32 3072, 3072
      %341 = vsyncadd [#allocation26], %s340
      %s342 = sshll.u32 [#allocation25], 4
      %s343 = int_to_ptr.vmem [resolvable:$true] %s342
      %348 = dma.hbm_to_vmem [thread:$0]  %s63, 3072, %s343, [#allocation26], 64, 64, 4
    $region129: #{forward.1} parent=1 // pred_fallthru
      _
    // Predicated region
    $region130: #{forward.1} parent=1 // pred_check
      _
    $region131: #{forward.1} parent=1 // pred_check_branch
      %350 = sbr.rel (0) target = $region133
    $region132: #{forward.1} parent=1 // pred_region
      _
    $region133: #{forward.1} parent=1 // pred_fallthru
      _
    // Predicated region
    $region134: #{forward.1} parent=1 // pred_check
      _
    $region135: #{forward.1} parent=1 // pred_check_branch
      %352 = sbr.rel (0) target = $region137
    $region136: #{forward.1} parent=1 // pred_region
      _
    $region137: #{forward.1} parent=1 // pred_fallthru
      _
    // Predicated region
    $region138: #{forward.1} parent=1 // pred_check
      _
    $region139: #{forward.1} parent=1 // pred_check_branch
      %354 = sbr.rel (0) target = $region141
    $region140: #{forward.1} parent=1 // pred_region
      _
    $region141: #{forward.1} parent=1 // pred_fallthru
      _
    // Predicated region
    $region142: #{forward.1} parent=1 // pred_check
      _
    $region143: #{forward.1} parent=1 // pred_check_branch
      %356 = sbr.rel (0) target = $region145
    $region144: #{forward.1} parent=1 // pred_region
      %s358 = ssub.s32 2048, 2048
      %359 = vsyncadd [#allocation26], %s358
      %s360 = sshll.u32 [#allocation27], 4
      %s361 = int_to_ptr.vmem [resolvable:$true] %s360
      %366 = dma.hbm_to_vmem [thread:$0]  %s71, 2048, %s361, [#allocation26], 64, 64, 4
    $region145: #{forward.1} parent=1 // pred_fallthru
      _
    // Predicated region
    $region146: #{forward.1} parent=1 // pred_check
      _
    $region147: #{forward.1} parent=1 // pred_check_branch
      %368 = sbr.rel (0) target = $region149
    $region148: #{forward.1} parent=1 // pred_region
      _
    $region149: #{forward.1} parent=1 // pred_fallthru
      _
    // Predicated region
    $region150: #{forward.1} parent=1 // pred_check
      _
    $region151: #{forward.1} parent=1 // pred_check_branch
      %370 = sbr.rel (0) target = $region153
    $region152: #{forward.1} parent=1 // pred_region
      %s372 = ssub.s32 3072, 3072
      %373 = vsyncadd [#allocation29], %s372
      %s374 = sshll.u32 [#allocation28], 4
      %s375 = int_to_ptr.vmem [resolvable:$true] %s374
      %380 = dma.hbm_to_vmem [thread:$0]  %s75, 3072, %s375, [#allocation29], 64, 64, 4
    $region153: #{forward.1} parent=1 // pred_fallthru
      _
    // Predicated region
    $region154: #{forward.1} parent=1 // pred_check
      _
    $region155: #{forward.1} parent=1 // pred_check_branch
      %382 = sbr.rel (0) target = $region157
    $region156: #{forward.1} parent=1 // pred_region
      %s384 = ssub.s32 3072, 3072
      %385 = vsyncadd [#allocation29], %s384
      %s386 = sshll.u32 [#allocation30], 4
      %s387 = int_to_ptr.vmem [resolvable:$true] %s386
      %392 = dma.hbm_to_vmem [thread:$0]  %s77, 3072, %s387, [#allocation29], 64, 64, 4
    $region157: #{forward.1} parent=1 // pred_fallthru
      _
    // Predicated region
    $region158: #{forward.1} parent=1 // pred_check
      _
    $region159: #{forward.1} parent=1 // pred_check_branch
      %394 = sbr.rel (0) target = $region161
    $region160: #{forward.1} parent=1 // pred_region
      _
    $region161: #{forward.1} parent=1 // pred_fallthru
      _
    // Predicated region
    $region162: #{forward.1} parent=1 // pred_check
      _
    $region163: #{forward.1} parent=1 // pred_check_branch
      %396 = sbr.rel (0) target = $region165
    $region164: #{forward.1} parent=1 // pred_region
      _
    $region165: #{forward.1} parent=1 // pred_fallthru
      _
    // Predicated region
    $region166: #{forward.1} parent=1 // pred_check
      _
    $region167: #{forward.1} parent=1 // pred_check_branch
      %398 = sbr.rel (0) target = $region169
    $region168: #{forward.1} parent=1 // pred_region
      _
    $region169: #{forward.1} parent=1 // pred_fallthru
      _
    // Predicated region
    $region170: #{forward.1} parent=1 // pred_check
      _
    $region171: #{forward.1} parent=1 // pred_check_branch
      %400 = sbr.rel (0) target = $region173
    $region172: #{forward.1} parent=1 // pred_region
      %s402 = ssub.s32 3072, 3072
      %403 = vsyncadd [#allocation32], %s402
      %s404 = sshll.u32 [#allocation31], 4
      %s405 = int_to_ptr.vmem [resolvable:$true] %s404
      %410 = dma.hbm_to_vmem [thread:$0]  %s85, 3072, %s405, [#allocation32], 64, 64, 4
    $region173: #{forward.1} parent=1 // pred_fallthru
      _
    // Predicated region
    $region174: #{forward.1} parent=1 // pred_check
      _
    $region175: #{forward.1} parent=1 // pred_check_branch
      %412 = sbr.rel (0) target = $region177
    $region176: #{forward.1} parent=1 // pred_region
      _
    $region177: #{forward.1} parent=1 // pred_fallthru
      _
    // Predicated region
    $region178: #{forward.1} parent=1 // pred_check
      _
    $region179: #{forward.1} parent=1 // pred_check_branch
      %414 = sbr.rel (0) target = $region181
    $region180: #{forward.1} parent=1 // pred_region
      _
    $region181: #{forward.1} parent=1 // pred_fallthru
      _
    // Predicated region
    $region182: #{forward.1} parent=1 // pred_check
      _
    $region183: #{forward.1} parent=1 // pred_check_branch
      %416 = sbr.rel (0) target = $region185
    $region184: #{forward.1} parent=1 // pred_region
      _
    $region185: #{forward.1} parent=1 // pred_fallthru
      _
    // Predicated region
    $region186: #{forward.1} parent=1 // pred_check
      _
    $region187: #{forward.1} parent=1 // pred_check_branch
      %418 = sbr.rel (0) target = $region189
    $region188: #{forward.1} parent=1 // pred_region
      %s420 = ssub.s32 2048, 2048
      %421 = vsyncadd [#allocation32], %s420
      %s422 = sshll.u32 [#allocation33], 4
      %s423 = int_to_ptr.vmem [resolvable:$true] %s422
      %428 = dma.hbm_to_vmem [thread:$0]  %s93, 2048, %s423, [#allocation32], 64, 64, 4
    $region189: #{forward.1} parent=1 // pred_fallthru
      _
    // Predicated region
    $region190: #{forward.1} parent=1 // pred_check
      _
    $region191: #{forward.1} parent=1 // pred_check_branch
      %430 = sbr.rel (0) target = $region193
    $region192: #{forward.1} parent=1 // pred_region
      _
    $region193: #{forward.1} parent=1 // pred_fallthru
      _
    // Predicated region
    $region194: #{forward.1} parent=1 // pred_check
      _
    $region195: #{forward.1} parent=1 // pred_check_branch
      %432 = sbr.rel (0) target = $region197
    $region196: #{forward.1} parent=1 // pred_region
      %s434 = ssub.s32 3072, 3072
      %435 = vsyncadd [#allocation35], %s434
      %s436 = sshll.u32 [#allocation34], 4
      %s437 = int_to_ptr.vmem [resolvable:$true] %s436
      %442 = dma.hbm_to_vmem [thread:$0]  %s97, 3072, %s437, [#allocation35], 64, 64, 4
    $region197: #{forward.1} parent=1 // pred_fallthru
      _
    // Predicated region
    $region198: #{forward.1} parent=1 // pred_check
      _
    $region199: #{forward.1} parent=1 // pred_check_branch
      %444 = sbr.rel (0) target = $region201
    $region200: #{forward.1} parent=1 // pred_region
      %s446 = ssub.s32 3072, 3072
      %447 = vsyncadd [#allocation35], %s446
      %s448 = sshll.u32 [#allocation36], 4
      %s449 = int_to_ptr.vmem [resolvable:$true] %s448
      %454 = dma.hbm_to_vmem [thread:$0]  %s99, 3072, %s449, [#allocation35], 64, 64, 4
    $region201: #{forward.1} parent=1 // pred_fallthru
      _
    // Predicated region
    $region202: #{forward.1} parent=1 // pred_check
      _
    $region203: #{forward.1} parent=1 // pred_check_branch
      %456 = sbr.rel (0) target = $region205
    $region204: #{forward.1} parent=1 // pred_region
      _
    $region205: #{forward.1} parent=1 // pred_fallthru
      _
    // Predicated region
    $region206: #{forward.1} parent=1 // pred_check
      _
    $region207: #{forward.1} parent=1 // pred_check_branch
      %458 = sbr.rel (0) target = $region209
    $region208: #{forward.1} parent=1 // pred_region
      _
    $region209: #{forward.1} parent=1 // pred_fallthru
      _
    // Predicated region
    $region210: #{forward.1} parent=1 // pred_check
      _
    $region211: #{forward.1} parent=1 // pred_check_branch
      %460 = sbr.rel (0) target = $region213
    $region212: #{forward.1} parent=1 // pred_region
      _
    $region213: #{forward.1} parent=1 // pred_fallthru
      _
    // Predicated region
    $region214: #{forward.1} parent=1 // pred_check
      _
    $region215: #{forward.1} parent=1 // pred_check_branch
      %462 = sbr.rel (0) target = $region217
    $region216: #{forward.1} parent=1 // pred_region
      %s464 = ssub.s32 3072, 3072
      %465 = vsyncadd [#allocation38], %s464
      %s466 = sshll.u32 [#allocation37], 4
      %s467 = int_to_ptr.vmem [resolvable:$true] %s466
      %472 = dma.hbm_to_vmem [thread:$0]  %s107, 3072, %s467, [#allocation38], 64, 64, 4
    $region217: #{forward.1} parent=1 // pred_fallthru
      _
    // Predicated region
    $region218: #{forward.1} parent=1 // pred_check
      _
    $region219: #{forward.1} parent=1 // pred_check_branch
      %474 = sbr.rel (0) target = $region221
    $region220: #{forward.1} parent=1 // pred_region
      _
    $region221: #{forward.1} parent=1 // pred_fallthru
      _
    // Predicated region
    $region222: #{forward.1} parent=1 // pred_check
      _
    $region223: #{forward.1} parent=1 // pred_check_branch
      %476 = sbr.rel (0) target = $region225
    $region224: #{forward.1} parent=1 // pred_region
      _
    $region225: #{forward.1} parent=1 // pred_fallthru
      _
    // Predicated region
    $region226: #{forward.1} parent=1 // pred_check
      _
    $region227: #{forward.1} parent=1 // pred_check_branch
      %478 = sbr.rel (0) target = $region229
    $region228: #{forward.1} parent=1 // pred_region
      _
    $region229: #{forward.1} parent=1 // pred_fallthru
      _
    // Predicated region
    $region230: #{forward.1} parent=1 // pred_check
      _
    $region231: #{forward.1} parent=1 // pred_check_branch
      %480 = sbr.rel (0) target = $region233
    $region232: #{forward.1} parent=1 // pred_region
      _
    $region233: #{forward.1} parent=1 // pred_fallthru
      _
    // Predicated region
    $region234: #{forward.1} parent=1 // pred_check
      _
    $region235: #{forward.1} parent=1 // pred_check_branch
      %482 = sbr.rel (0) target = $region237
    $region236: #{forward.1} parent=1 // pred_region
      _
    $region237: #{forward.1} parent=1 // pred_fallthru
      _
    // Predicated region
    $region238: #{forward.1} parent=1 // pred_check
      _
    $region239: #{forward.1} parent=1 // pred_check_branch
      %484 = sbr.rel (0) target = $region241
    $region240: #{forward.1} parent=1 // pred_region
      %485 = dma.done [#allocation3], 768
    $region241: #{forward.1} parent=1 // pred_fallthru
      _
    // Predicated region
    $region242: #{forward.1} parent=1 // pred_check
      _
    $region243: #{forward.1} parent=1 // pred_check_branch
      %487 = sbr.rel (0) target = $region245
    $region244: #{forward.1} parent=1 // pred_region
      %488 = dma.done [#allocation5], 384
    $region245: #{forward.1} parent=1 // pred_fallthru
      _
    // Predicated region
    $region246: #{forward.1} parent=1 // pred_check
      _
    $region247: #{forward.1} parent=1 // pred_check_branch
      %490 = sbr.rel (0) target = $region249
    $region248: #{forward.1} parent=1 // pred_region
      %491 = dma.done [#allocation5], 384
    $region249: #{forward.1} parent=1 // pred_fallthru
      _
    // Predicated region
    $region250: #{forward.1} parent=1 // pred_check
      _
    $region251: #{forward.1} parent=1 // pred_check_branch
      %493 = sbr.rel (0) target = $region253
    $region252: #{forward.1} parent=1 // pred_region
      %494 = dma.done [#allocation8], 192
    $region253: #{forward.1} parent=1 // pred_fallthru
      _
    // Predicated region
    $region254: #{forward.1} parent=1 // pred_check
      _
    $region255: #{forward.1} parent=1 // pred_check_branch
      %496 = sbr.rel (0) target = $region257
    $region256: #{forward.1} parent=1 // pred_region
      %497 = dma.done [#allocation8], 192
    $region257: #{forward.1} parent=1 // pred_fallthru
      _
    // Predicated region
    $region258: #{forward.1} parent=1 // pred_check
      _
    $region259: #{forward.1} parent=1 // pred_check_branch
      %499 = sbr.rel (0) target = $region261
    $region260: #{forward.1} parent=1 // pred_region
      %500 = dma.done [#allocation11], 512
    $region261: #{forward.1} parent=1 // pred_fallthru
      _
    // Predicated region
    $region262: #{forward.1} parent=1 // pred_check
      _
    $region263: #{forward.1} parent=1 // pred_check_branch
      %502 = sbr.rel (0) target = $region265
    $region264: #{forward.1} parent=1 // pred_region
      %503 = dma.done [#allocation11], 256
    $region265: #{forward.1} parent=1 // pred_fallthru
      _
    // Predicated region
    $region266: #{forward.1} parent=1 // pred_check
      _
    $region267: #{forward.1} parent=1 // pred_check_branch
      %505 = sbr.rel (0) target = $region269
    $region268: #{forward.1} parent=1 // pred_region
      %506 = dma.done [#allocation14], 128
    $region269: #{forward.1} parent=1 // pred_fallthru
      _
    // Predicated region
    $region270: #{forward.1} parent=1 // pred_check
      _
    $region271: #{forward.1} parent=1 // pred_check_branch
      %508 = sbr.rel (0) target = $region273
    $region272: #{forward.1} parent=1 // pred_region
      %509 = dma.done [#allocation14], 1536
    $region273: #{forward.1} parent=1 // pred_fallthru
      _
    // Predicated region
    $region274: #{forward.1} parent=1 // pred_check
      _
    $region275: #{forward.1} parent=1 // pred_check_branch
      %511 = sbr.rel (0) target = $region277
    $region276: #{forward.1} parent=1 // pred_region
      %512 = dma.done [#allocation17], 16
    $region277: #{forward.1} parent=1 // pred_fallthru
      _
    // Predicated region
    $region278: #{forward.1} parent=1 // pred_check
      _
    $region279: #{forward.1} parent=1 // pred_check_branch
      %514 = sbr.rel (0) target = $region281
    $region280: #{forward.1} parent=1 // pred_region
      %515 = dma.done [#allocation17], 16
    $region281: #{forward.1} parent=1 // pred_fallthru
      _
    // Predicated region
    $region282: #{forward.1} parent=1 // pred_check
      _
    $region283: #{forward.1} parent=1 // pred_check_branch
      %517 = sbr.rel (0) target = $region285
    $region284: #{forward.1} parent=1 // pred_region
      %518 = dma.done [#allocation20], 16
    $region285: #{forward.1} parent=1 // pred_fallthru
      _
    // Predicated region
    $region286: #{forward.1} parent=1 // pred_check
      _
    $region287: #{forward.1} parent=1 // pred_check_branch
      %520 = sbr.rel (0) target = $region289
    $region288: #{forward.1} parent=1 // pred_region
      %521 = dma.done [#allocation20], 16
    $region289: #{forward.1} parent=1 // pred_fallthru
      _
    // Predicated region
    $region290: #{forward.1} parent=1 // pred_check
      _
    $region291: #{forward.1} parent=1 // pred_check_branch
      %523 = sbr.rel (0) target = $region293
    $region292: #{forward.1} parent=1 // pred_region
      %524 = dma.done [#allocation23], 16
    $region293: #{forward.1} parent=1 // pred_fallthru
      _
    // Predicated region
    $region294: #{forward.1} parent=1 // pred_check
      _
    $region295: #{forward.1} parent=1 // pred_check_branch
      %526 = sbr.rel (0) target = $region297
    $region296: #{forward.1} parent=1 // pred_region
      %527 = dma.done [#allocation23], 3072
    $region297: #{forward.1} parent=1 // pred_fallthru
      _
    // Predicated region
    $region298: #{forward.1} parent=1 // pred_check
      _
    $region299: #{forward.1} parent=1 // pred_check_branch
      %529 = sbr.rel (0) target = $region301
    $region300: #{forward.1} parent=1 // pred_region
      %530 = dma.done [#allocation26], 3072
    $region301: #{forward.1} parent=1 // pred_fallthru
      _
    // Predicated region
    $region302: #{forward.1} parent=1 // pred_check
      _
    $region303: #{forward.1} parent=1 // pred_check_branch
      %532 = sbr.rel (0) target = $region305
    $region304: #{forward.1} parent=1 // pred_region
      %533 = dma.done [#allocation26], 2048
    $region305: #{forward.1} parent=1 // pred_fallthru
      _
    // Predicated region
    $region306: #{forward.1} parent=1 // pred_check
      _
    $region307: #{forward.1} parent=1 // pred_check_branch
      %535 = sbr.rel (0) target = $region309
    $region308: #{forward.1} parent=1 // pred_region
      %536 = dma.done [#allocation29], 3072
    $region309: #{forward.1} parent=1 // pred_fallthru
      _
    // Predicated region
    $region310: #{forward.1} parent=1 // pred_check
      _
    $region311: #{forward.1} parent=1 // pred_check_branch
      %538 = sbr.rel (0) target = $region313
    $region312: #{forward.1} parent=1 // pred_region
      %539 = dma.done [#allocation29], 3072
    $region313: #{forward.1} parent=1 // pred_fallthru
      _
    // Predicated region
    $region314: #{forward.1} parent=1 // pred_check
      _
    $region315: #{forward.1} parent=1 // pred_check_branch
      %541 = sbr.rel (0) target = $region317
    $region316: #{forward.1} parent=1 // pred_region
      %542 = dma.done [#allocation32], 3072
    $region317: #{forward.1} parent=1 // pred_fallthru
      _
    // Predicated region
    $region318: #{forward.1} parent=1 // pred_check
      _
    $region319: #{forward.1} parent=1 // pred_check_branch
      %544 = sbr.rel (0) target = $region321
    $region320: #{forward.1} parent=1 // pred_region
      %545 = dma.done [#allocation32], 2048
    $region321: #{forward.1} parent=1 // pred_fallthru
      _
    // Predicated region
    $region322: #{forward.1} parent=1 // pred_check
      _
    $region323: #{forward.1} parent=1 // pred_check_branch
      %547 = sbr.rel (0) target = $region325
    $region324: #{forward.1} parent=1 // pred_region
      %548 = dma.done [#allocation35], 3072
    $region325: #{forward.1} parent=1 // pred_fallthru
      _
    // Predicated region
    $region326: #{forward.1} parent=1 // pred_check
      _
    $region327: #{forward.1} parent=1 // pred_check_branch
      %550 = sbr.rel (0) target = $region329
    $region328: #{forward.1} parent=1 // pred_region
      %551 = dma.done [#allocation35], 3072
    $region329: #{forward.1} parent=1 // pred_fallthru
      _
    // Predicated region
    $region330: #{forward.1} parent=1 // pred_check
      _
    $region331: #{forward.1} parent=1 // pred_check_branch
      %553 = sbr.rel (0) target = $region333
    $region332: #{forward.1} parent=1 // pred_region
      %554 = dma.done [#allocation38], 3072
    $region333: #{forward.1} parent=1 // pred_fallthru
      _
    %v556 = vld [vmem:[%s1] sm:$0xf]
    %v557 = vld [vmem:[%s1 + $0x4] sm:$0xf]
    %v558 = vld [vmem:[%s1 + $0x8] sm:$0xf]
    %v559 = vld [vmem:[%s1 + $0xc] sm:$0xf]
    %v560 = vld [vmem:[#allocation2] sm:$0xf]
    %v561 = vld [vmem:[#allocation2 + $0x4] sm:$0xf]
    %v562 = vld [vmem:[#allocation2 + $0x8] sm:$0xf]
    %v563 = vld [vmem:[#allocation2 + $0xc] sm:$0xf]
    %v568 = vunpack.c.l.b16 %v560
    %v569 = vunpack.c.l.b16 %v561
    %v570 = vunpack.c.l.b16 %v562
    %v571 = vunpack.c.l.b16 %v563
    %v572 = vpack.c.b16 %v569, %v568
    %v573 = vpack.c.b16 %v571, %v570
    %v578 = vunpack.c.l.b16 %v556
    %v579 = vunpack.c.l.b16 %v557
    %v580 = vunpack.c.l.b16 %v558
    %v581 = vunpack.c.l.b16 %v559
    %v582 = vpack.c.b16 %v579, %v578
    %v583 = vpack.c.b16 %v581, %v580
    %vm586 = vcmask 261120
    %v588 = vsel %vm586, %v572, 0
    %v591 = vsel %vm586, %v573, 0
    %593 = vmatprep.subr.bf16.mxu0 0
    %594 = vmatpush1.bf16.msra.mxu0 0
    %595 = vmatprep.subr.bf16.mxu0 0
    %596 = vmatpush1.bf16.msra.mxu0 0
    %597 = vmatprep.subr.bf16.mxu0 0
    %598 = vmatpush1.bf16.msra.mxu0 0
    %599 = vmatprep.subr.bf16.mxu0 0
    %600 = vmatpush1.bf16.msra.mxu0 0
    %601 = vmatprep.subr.bf16.mxu0 0
    %602 = vmatpush1.bf16.msra.mxu0 0
    %603 = vmatprep.subr.bf16.mxu0 0
    %604 = vmatpush1.bf16.msra.mxu0 0
    %605 = vmatprep.subr.bf16.mxu0 0
    %606 = vmatpush1.bf16.msra.mxu0 %v583
    %607 = vmatprep.subr.bf16.mxu0 0
    %608 = vmatpush1.bf16.msra.mxu0 %v582
    %609 = vmatprep.subr.bf16.mxu0 0
    %610 = vmatpush2.bf16.msra.mxu0 0
    %611 = vmatprep.subr.bf16.mxu0 0
    %612 = vmatpush2.bf16.msra.mxu0 0
    %613 = vmatprep.subr.bf16.mxu0 0
    %614 = vmatpush2.bf16.msra.mxu0 0
    %615 = vmatprep.subr.bf16.mxu0 0
    %616 = vmatpush2.bf16.msra.mxu0 0
    %617 = vmatprep.subr.bf16.mxu0 0
    %618 = vmatpush2.bf16.msra.mxu0 0
    %619 = vmatprep.subr.bf16.mxu0 0
    %620 = vmatpush2.bf16.msra.mxu0 0
    %621 = vmatprep.subr.bf16.mxu0 0
    %622 = vmatpush2.bf16.msra.mxu0 0
    %623 = vmatprep.subr.bf16.mxu0 0
    %624 = vmatpush2.bf16.msra.mxu0 0
    %625 = vmatprep.mubr.bf16.mxu0 0
    %626 = vmatmul.mubr.bf16.gmra.mxu0 %v588
    %v627 = vpop.f32.mrf.mxu0
    %v628 = vadd.f32 0.0, %v627
    %v629 = vpop.f32.mrf.mxu0
    %v630 = vpop.f32.mrf.mxu0
    %v631 = vadd.f32 0.0, %v630
    %v632 = vpop.f32.mrf.mxu0
    %633 = vmatprep.mubr.bf16.mxu0 0
    %634 = vmatmul.mubr.bf16.gmra.mxu0 %v591
    %v635 = vpop.f32.mrf.mxu0
    %v636 = vadd.f32 0.0, %v635
    %v637 = vpop.f32.mrf.mxu0
    %v638 = vpop.f32.mrf.mxu0
    %v639 = vadd.f32 0.0, %v638
    %v640 = vpop.f32.mrf.mxu0
    %641 = vdwg.mxu0
    %v642 = vpack.c.bf16 %v631, %v628
    %v643 = vpack.c.bf16 %v639, %v636
    %v644 = vld [vmem:[#allocation15] sm:$0xf]
    %v645 = vld [vmem:[#allocation15 + $0x4] sm:$0xf]
    %v646 = vld [vmem:[#allocation15 + $0x8] sm:$0xf]
    %v647 = vld [vmem:[#allocation15 + $0xc] sm:$0xf]
    %v648 = vld [vmem:[#allocation15 + $0x10] sm:$0xf]
    %v649 = vld [vmem:[#allocation15 + $0x14] sm:$0xf]
    %v650 = vld [vmem:[#allocation15 + $0x18] sm:$0xf]
    %v651 = vld [vmem:[#allocation15 + $0x1c] sm:$0xf]
    %s652 = scalar_lea.vmem [#allocation2], 16
    %v653 = vld [vmem:[%s652] sm:$0xf]
    %v654 = vld [vmem:[%s652 + $0x4] sm:$0xf]
    %v655 = vld [vmem:[%s652 + $0x8] sm:$0xf]
    %v656 = vld [vmem:[%s652 + $0xc] sm:$0xf]
    %v661 = vunpack.c.l.b16 %v653
    %v662 = vunpack.c.l.b16 %v654
    %v663 = vunpack.c.l.b16 %v655
    %v664 = vunpack.c.l.b16 %v656
    %v665 = vpack.c.b16 %v662, %v661
    %v666 = vpack.c.b16 %v664, %v663
    %v668 = vsel %vm586, %v665, 0
    %v671 = vsel %vm586, %v666, 0
    %673 = vmatprep.subr.bf16.mxu0 0
    %674 = vmatpush1.bf16.msra.mxu0 0
    %675 = vmatprep.subr.bf16.mxu0 0
    %676 = vmatpush1.bf16.msra.mxu0 0
    %677 = vmatprep.subr.bf16.mxu0 0
    %678 = vmatpush1.bf16.msra.mxu0 0
    %679 = vmatprep.subr.bf16.mxu0 0
    %680 = vmatpush1.bf16.msra.mxu0 0
    %681 = vmatprep.subr.bf16.mxu0 0
    %682 = vmatpush1.bf16.msra.mxu0 0
    %683 = vmatprep.subr.bf16.mxu0 0
    %684 = vmatpush1.bf16.msra.mxu0 0
    %685 = vmatprep.subr.bf16.mxu0 0
    %686 = vmatpush1.bf16.msra.mxu0 %v583
    %687 = vmatprep.subr.bf16.mxu0 0
    %688 = vmatpush1.bf16.msra.mxu0 %v582
    %689 = vmatprep.subr.bf16.mxu0 0
    %690 = vmatpush2.bf16.msra.mxu0 0
    %691 = vmatprep.subr.bf16.mxu0 0
    %692 = vmatpush2.bf16.msra.mxu0 0
    %693 = vmatprep.subr.bf16.mxu0 0
    %694 = vmatpush2.bf16.msra.mxu0 0
    %695 = vmatprep.subr.bf16.mxu0 0
    %696 = vmatpush2.bf16.msra.mxu0 0
    %697 = vmatprep.subr.bf16.mxu0 0
    %698 = vmatpush2.bf16.msra.mxu0 0
    %699 = vmatprep.subr.bf16.mxu0 0
    %700 = vmatpush2.bf16.msra.mxu0 0
    %701 = vmatprep.subr.bf16.mxu0 0
    %702 = vmatpush2.bf16.msra.mxu0 0
    %703 = vmatprep.subr.bf16.mxu0 0
    %704 = vmatpush2.bf16.msra.mxu0 0
    %705 = vmatprep.mubr.bf16.mxu0 0
    %706 = vmatmul.mubr.bf16.gmra.mxu0 %v668
    %v707 = vpop.f32.mrf.mxu0
    %v708 = vadd.f32 0.0, %v707
    %v709 = vpop.f32.mrf.mxu0
    %v710 = vpop.f32.mrf.mxu0
    %v711 = vadd.f32 0.0, %v710
    %v712 = vpop.f32.mrf.mxu0
    %713 = vmatprep.mubr.bf16.mxu0 0
    %714 = vmatmul.mubr.bf16.gmra.mxu0 %v671
    %v715 = vpop.f32.mrf.mxu0
    %v716 = vadd.f32 0.0, %v715
    %v717 = vpop.f32.mrf.mxu0
    %v718 = vpop.f32.mrf.mxu0
    %v719 = vadd.f32 0.0, %v718
    %v720 = vpop.f32.mrf.mxu0
    %721 = vdwg.mxu0
    %v722 = vpack.c.bf16 %v711, %v708
    %v723 = vpack.c.bf16 %v719, %v716
    %s724 = scalar_lea.vmem [#allocation15], 32
    %v725 = vld [vmem:[%s724] sm:$0xf]
    %v726 = vld [vmem:[%s724 + $0x4] sm:$0xf]
    %v727 = vld [vmem:[%s724 + $0x8] sm:$0xf]
    %v728 = vld [vmem:[%s724 + $0xc] sm:$0xf]
    %v729 = vld [vmem:[%s724 + $0x10] sm:$0xf]
    %v730 = vld [vmem:[%s724 + $0x14] sm:$0xf]
    %v731 = vld [vmem:[%s724 + $0x18] sm:$0xf]
    %v732 = vld [vmem:[%s724 + $0x1c] sm:$0xf]
    %v741 = vunpack.c.l.b16 %v725
    %v742 = vunpack.c.l.b16 %v726
    %v743 = vunpack.c.l.b16 %v727
    %v744 = vunpack.c.l.b16 %v728
    %v745 = vunpack.c.l.b16 %v729
    %v746 = vunpack.c.l.b16 %v730
    %v747 = vunpack.c.l.b16 %v731
    %v748 = vunpack.c.l.b16 %v732
    %v749 = vpack.c.b16 %v742, %v741
    %v750 = vpack.c.b16 %v744, %v743
    %v751 = vpack.c.b16 %v746, %v745
    %v752 = vpack.c.b16 %v748, %v747
    %vm757 = vcmask 523264
    %v759 = vsel %vm757, %v722, 0
    %v762 = vsel %vm757, %v723, 0
    %764 = vmatprep.subr.bf16.mxu0 0
    %765 = vmatpush1.bf16.msra.mxu0 0
    %766 = vmatprep.subr.bf16.mxu0 0
    %767 = vmatpush1.bf16.msra.mxu0 0
    %768 = vmatprep.subr.bf16.mxu0 0
    %769 = vmatpush1.bf16.msra.mxu0 0
    %770 = vmatprep.subr.bf16.mxu0 0
    %771 = vmatpush1.bf16.msra.mxu0 0
    %772 = vmatprep.subr.bf16.mxu0 0
    %773 = vmatpush1.bf16.msra.mxu0 %v752
    %774 = vmatprep.subr.bf16.mxu0 0
    %775 = vmatpush1.bf16.msra.mxu0 %v751
    %776 = vmatprep.subr.bf16.mxu0 0
    %777 = vmatpush1.bf16.msra.mxu0 %v750
    %778 = vmatprep.subr.bf16.mxu0 0
    %779 = vmatpush1.bf16.msra.mxu0 %v749
    %780 = vmatprep.subr.bf16.mxu0 0
    %781 = vmatpush2.bf16.msra.mxu0 0
    %782 = vmatprep.subr.bf16.mxu0 0
    %783 = vmatpush2.bf16.msra.mxu0 0
    %784 = vmatprep.subr.bf16.mxu0 0
    %785 = vmatpush2.bf16.msra.mxu0 0
    %786 = vmatprep.subr.bf16.mxu0 0
    %787 = vmatpush2.bf16.msra.mxu0 0
    %788 = vmatprep.subr.bf16.mxu0 0
    %789 = vmatpush2.bf16.msra.mxu0 0
    %790 = vmatprep.subr.bf16.mxu0 0
    %791 = vmatpush2.bf16.msra.mxu0 0
    %792 = vmatprep.subr.bf16.mxu0 0
    %793 = vmatpush2.bf16.msra.mxu0 0
    %794 = vmatprep.subr.bf16.mxu0 0
    %795 = vmatpush2.bf16.msra.mxu0 0
    %796 = vmatprep.mubr.bf16.mxu0 0
    %797 = vmatmul.mubr.bf16.gmra.mxu0 %v759
    %v798 = vpop.f32.mrf.mxu0
    %v799 = vadd.f32 0.0, %v798
    %v800 = vpop.f32.mrf.mxu0
    %v801 = vpop.f32.mrf.mxu0
    %v802 = vadd.f32 0.0, %v801
    %v803 = vpop.f32.mrf.mxu0
    %804 = vmatprep.mubr.bf16.mxu0 0
    %805 = vmatmul.mubr.bf16.gmra.mxu0 %v762
    %v806 = vpop.f32.mrf.mxu0
    %v807 = vadd.f32 0.0, %v806
    %v808 = vpop.f32.mrf.mxu0
    %v809 = vpop.f32.mrf.mxu0
    %v810 = vadd.f32 0.0, %v809
    %v811 = vpop.f32.mrf.mxu0
    %812 = vdwg.mxu0
    %v821 = vunpack.c.l.b16 %v644
    %v822 = vunpack.c.l.b16 %v645
    %v823 = vunpack.c.l.b16 %v646
    %v824 = vunpack.c.l.b16 %v647
    %v825 = vunpack.c.l.b16 %v648
    %v826 = vunpack.c.l.b16 %v649
    %v827 = vunpack.c.l.b16 %v650
    %v828 = vunpack.c.l.b16 %v651
    %v829 = vpack.c.b16 %v822, %v821
    %v830 = vpack.c.b16 %v824, %v823
    %v831 = vpack.c.b16 %v826, %v825
    %v832 = vpack.c.b16 %v828, %v827
    %v838 = vsel %vm757, %v642, 0
    %v841 = vsel %vm757, %v643, 0
    %843 = vmatprep.subr.bf16.mxu0 0
    %844 = vmatpush1.bf16.msra.mxu0 0
    %845 = vmatprep.subr.bf16.mxu0 0
    %846 = vmatpush1.bf16.msra.mxu0 0
    %847 = vmatprep.subr.bf16.mxu0 0
    %848 = vmatpush1.bf16.msra.mxu0 0
    %849 = vmatprep.subr.bf16.mxu0 0
    %850 = vmatpush1.bf16.msra.mxu0 0
    %851 = vmatprep.subr.bf16.mxu0 0
    %852 = vmatpush1.bf16.msra.mxu0 %v832
    %853 = vmatprep.subr.bf16.mxu0 0
    %854 = vmatpush1.bf16.msra.mxu0 %v831
    %855 = vmatprep.subr.bf16.mxu0 0
    %856 = vmatpush1.bf16.msra.mxu0 %v830
    %857 = vmatprep.subr.bf16.mxu0 0
    %858 = vmatpush1.bf16.msra.mxu0 %v829
    %859 = vmatprep.subr.bf16.mxu0 0
    %860 = vmatpush2.bf16.msra.mxu0 0
    %861 = vmatprep.subr.bf16.mxu0 0
    %862 = vmatpush2.bf16.msra.mxu0 0
    %863 = vmatprep.subr.bf16.mxu0 0
    %864 = vmatpush2.bf16.msra.mxu0 0
    %865 = vmatprep.subr.bf16.mxu0 0
    %866 = vmatpush2.bf16.msra.mxu0 0
    %867 = vmatprep.subr.bf16.mxu0 0
    %868 = vmatpush2.bf16.msra.mxu0 0
    %869 = vmatprep.subr.bf16.mxu0 0
    %870 = vmatpush2.bf16.msra.mxu0 0
    %871 = vmatprep.subr.bf16.mxu0 0
    %872 = vmatpush2.bf16.msra.mxu0 0
    %873 = vmatprep.subr.bf16.mxu0 0
    %874 = vmatpush2.bf16.msra.mxu0 0
    %875 = vmatprep.mubr.bf16.mxu0 0
    %876 = vmatmul.mubr.bf16.gmra.mxu0 %v838
    %v877 = vpop.f32.mrf.mxu0
    %v878 = vadd.f32 %v799, %v877
    %v879 = vpop.f32.mrf.mxu0
    %v880 = vpop.f32.mrf.mxu0
    %v881 = vadd.f32 %v802, %v880
    %v882 = vpop.f32.mrf.mxu0
    %883 = vmatprep.mubr.bf16.mxu0 0
    %884 = vmatmul.mubr.bf16.gmra.mxu0 %v841
    %v885 = vpop.f32.mrf.mxu0
    %v886 = vadd.f32 %v807, %v885
    %v887 = vpop.f32.mrf.mxu0
    %v888 = vpop.f32.mrf.mxu0
    %v889 = vadd.f32 %v810, %v888
    %v890 = vpop.f32.mrf.mxu0
    %891 = vdwg.mxu0
    %s892 = scalar_lea.vmem [#allocation2], 32
    %v893 = vld [vmem:[%s892] sm:$0xf]
    %v894 = vld [vmem:[%s892 + $0x4] sm:$0xf]
    %v895 = vld [vmem:[%s892 + $0x8] sm:$0xf]
    %v896 = vld [vmem:[%s892 + $0xc] sm:$0xf]
    %v901 = vunpack.c.l.b16 %v893
    %v902 = vunpack.c.l.b16 %v894
    %v903 = vunpack.c.l.b16 %v895
    %v904 = vunpack.c.l.b16 %v896
    %v905 = vpack.c.b16 %v902, %v901
    %v906 = vpack.c.b16 %v904, %v903
    %v908 = vsel %vm586, %v905, 0
    %v911 = vsel %vm586, %v906, 0
    %913 = vmatprep.subr.bf16.mxu0 0
    %914 = vmatpush1.bf16.msra.mxu0 0
    %915 = vmatprep.subr.bf16.mxu0 0
    %916 = vmatpush1.bf16.msra.mxu0 0
    %917 = vmatprep.subr.bf16.mxu0 0
    %918 = vmatpush1.bf16.msra.mxu0 0
    %919 = vmatprep.subr.bf16.mxu0 0
    %920 = vmatpush1.bf16.msra.mxu0 0
    %921 = vmatprep.subr.bf16.mxu0 0
    %922 = vmatpush1.bf16.msra.mxu0 0
    %923 = vmatprep.subr.bf16.mxu0 0
    %924 = vmatpush1.bf16.msra.mxu0 0
    %925 = vmatprep.subr.bf16.mxu0 0
    %926 = vmatpush1.bf16.msra.mxu0 %v583
    %927 = vmatprep.subr.bf16.mxu0 0
    %928 = vmatpush1.bf16.msra.mxu0 %v582
    %929 = vmatprep.subr.bf16.mxu0 0
    %930 = vmatpush2.bf16.msra.mxu0 0
    %931 = vmatprep.subr.bf16.mxu0 0
    %932 = vmatpush2.bf16.msra.mxu0 0
    %933 = vmatprep.subr.bf16.mxu0 0
    %934 = vmatpush2.bf16.msra.mxu0 0
    %935 = vmatprep.subr.bf16.mxu0 0
    %936 = vmatpush2.bf16.msra.mxu0 0
    %937 = vmatprep.subr.bf16.mxu0 0
    %938 = vmatpush2.bf16.msra.mxu0 0
    %939 = vmatprep.subr.bf16.mxu0 0
    %940 = vmatpush2.bf16.msra.mxu0 0
    %941 = vmatprep.subr.bf16.mxu0 0
    %942 = vmatpush2.bf16.msra.mxu0 0
    %943 = vmatprep.subr.bf16.mxu0 0
    %944 = vmatpush2.bf16.msra.mxu0 0
    %945 = vmatprep.mubr.bf16.mxu0 0
    %946 = vmatmul.mubr.bf16.gmra.mxu0 %v908
    %v947 = vpop.f32.mrf.mxu0
    %v948 = vadd.f32 0.0, %v947
    %v949 = vpop.f32.mrf.mxu0
    %v950 = vpop.f32.mrf.mxu0
    %v951 = vadd.f32 0.0, %v950
    %v952 = vpop.f32.mrf.mxu0
    %953 = vmatprep.mubr.bf16.mxu0 0
    %954 = vmatmul.mubr.bf16.gmra.mxu0 %v911
    %v955 = vpop.f32.mrf.mxu0
    %v956 = vadd.f32 0.0, %v955
    %v957 = vpop.f32.mrf.mxu0
    %v958 = vpop.f32.mrf.mxu0
    %v959 = vadd.f32 0.0, %v958
    %v960 = vpop.f32.mrf.mxu0
    %961 = vdwg.mxu0
    %v962 = vpack.c.bf16 %v951, %v948
    %v963 = vpack.c.bf16 %v959, %v956
    %s964 = scalar_lea.vmem [#allocation15], 64
    %v965 = vld [vmem:[%s964] sm:$0xf]
    %v966 = vld [vmem:[%s964 + $0x4] sm:$0xf]
    %v967 = vld [vmem:[%s964 + $0x8] sm:$0xf]
    %v968 = vld [vmem:[%s964 + $0xc] sm:$0xf]
    %v969 = vld [vmem:[%s964 + $0x10] sm:$0xf]
    %v970 = vld [vmem:[%s964 + $0x14] sm:$0xf]
    %v971 = vld [vmem:[%s964 + $0x18] sm:$0xf]
    %v972 = vld [vmem:[%s964 + $0x1c] sm:$0xf]
    %v981 = vunpack.c.l.b16 %v965
    %v982 = vunpack.c.l.b16 %v966
    %v983 = vunpack.c.l.b16 %v967
    %v984 = vunpack.c.l.b16 %v968
    %v985 = vunpack.c.l.b16 %v969
    %v986 = vunpack.c.l.b16 %v970
    %v987 = vunpack.c.l.b16 %v971
    %v988 = vunpack.c.l.b16 %v972
    %v989 = vpack.c.b16 %v982, %v981
    %v990 = vpack.c.b16 %v984, %v983
    %v991 = vpack.c.b16 %v986, %v985
    %v992 = vpack.c.b16 %v988, %v987
    %v998 = vsel %vm757, %v962, 0
    %v1001 = vsel %vm757, %v963, 0
    %1003 = vmatprep.subr.bf16.mxu0 0
    %1004 = vmatpush1.bf16.msra.mxu0 0
    %1005 = vmatprep.subr.bf16.mxu0 0
    %1006 = vmatpush1.bf16.msra.mxu0 0
    %1007 = vmatprep.subr.bf16.mxu0 0
    %1008 = vmatpush1.bf16.msra.mxu0 0
    %1009 = vmatprep.subr.bf16.mxu0 0
    %1010 = vmatpush1.bf16.msra.mxu0 0
    %1011 = vmatprep.subr.bf16.mxu0 0
    %1012 = vmatpush1.bf16.msra.mxu0 %v992
    %1013 = vmatprep.subr.bf16.mxu0 0
    %1014 = vmatpush1.bf16.msra.mxu0 %v991
    %1015 = vmatprep.subr.bf16.mxu0 0
    %1016 = vmatpush1.bf16.msra.mxu0 %v990
    %1017 = vmatprep.subr.bf16.mxu0 0
    %1018 = vmatpush1.bf16.msra.mxu0 %v989
    %1019 = vmatprep.subr.bf16.mxu0 0
    %1020 = vmatpush2.bf16.msra.mxu0 0
    %1021 = vmatprep.subr.bf16.mxu0 0
    %1022 = vmatpush2.bf16.msra.mxu0 0
    %1023 = vmatprep.subr.bf16.mxu0 0
    %1024 = vmatpush2.bf16.msra.mxu0 0
    %1025 = vmatprep.subr.bf16.mxu0 0
    %1026 = vmatpush2.bf16.msra.mxu0 0
    %1027 = vmatprep.subr.bf16.mxu0 0
    %1028 = vmatpush2.bf16.msra.mxu0 0
    %1029 = vmatprep.subr.bf16.mxu0 0
    %1030 = vmatpush2.bf16.msra.mxu0 0
    %1031 = vmatprep.subr.bf16.mxu0 0
    %1032 = vmatpush2.bf16.msra.mxu0 0
    %1033 = vmatprep.subr.bf16.mxu0 0
    %1034 = vmatpush2.bf16.msra.mxu0 0
    %1035 = vmatprep.mubr.bf16.mxu0 0
    %1036 = vmatmul.mubr.bf16.gmra.mxu0 %v998
    %v1037 = vpop.f32.mrf.mxu0
    %v1038 = vadd.f32 0.0, %v1037
    %v1039 = vpop.f32.mrf.mxu0
    %v1040 = vpop.f32.mrf.mxu0
    %v1041 = vadd.f32 0.0, %v1040
    %v1042 = vpop.f32.mrf.mxu0
    %1043 = vmatprep.mubr.bf16.mxu0 0
    %1044 = vmatmul.mubr.bf16.gmra.mxu0 %v1001
    %v1045 = vpop.f32.mrf.mxu0
    %v1046 = vadd.f32 0.0, %v1045
    %v1047 = vpop.f32.mrf.mxu0
    %v1048 = vpop.f32.mrf.mxu0
    %v1049 = vadd.f32 0.0, %v1048
    %v1050 = vpop.f32.mrf.mxu0
    %1051 = vdwg.mxu0
    %v1052 = vadd.f32 %v878, %v1038
    %v1053 = vadd.f32 %v881, %v1041
    %v1054 = vadd.f32 %v886, %v1046
    %v1055 = vadd.f32 %v889, %v1049
    %v1056 = vld [vmem:[%s25] sm:$0x1]
    %v1058 = vlaneseq
    %v1059 = vshrl.u32 %v1058, 7
    %v1060 = vsub.s32 0, %v1059
    %v1061 = vrot.slane %v1056, %v1060
    %v1063 = vadd.f32 %v1052, %v1061
    %v1064 = vadd.f32 %v1053, %v1061
    %v1065 = vadd.f32 %v1054, %v1061
    %v1066 = vadd.f32 %v1055, %v1061
    %v1067 = vld [vmem:[#allocation10] sm:$0xff]
    %v1068 = vld [vmem:[#allocation10 + $0x8] sm:$0xff]
    %v1069 = vld [vmem:[#allocation10 + $0x10] sm:$0xff]
    %v1070 = vld [vmem:[#allocation10 + $0x18] sm:$0xff]
    %v1072 = vsel %vm586, %v1067, 0
    %v1075 = vsel %vm586, %v1068, 0
    %v1078 = vsel %vm586, %v1069, 0
    %v1081 = vsel %vm586, %v1070, 0
    %1083 = vmatprep.subr.mxu0 0.0
    %1084 = vmatpush1.msra.mxu0 0.0
    %1085 = vmatprep.subr.mxu0 0.0
    %1086 = vmatpush1.msra.mxu0 0.0
    %1087 = vmatprep.subr.mxu0 0.0
    %1088 = vmatpush1.msra.mxu0 0.0
    %1089 = vmatprep.subr.mxu0 0.0
    %1090 = vmatpush1.msra.mxu0 0.0
    %1091 = vmatprep.subr.mxu0 0.0
    %1092 = vmatpush1.msra.mxu0 0.0
    %1093 = vmatprep.subr.mxu0 0.0
    %1094 = vmatpush1.msra.mxu0 0.0
    %1095 = vmatprep.subr.mxu0 0.0
    %1096 = vmatpush1.msra.mxu0 0.0
    %1097 = vmatprep.subr.mxu0 0.0
    %1098 = vmatpush1.msra.mxu0 0.0
    %1099 = vmatprep.subr.mxu0 0.0
    %1100 = vmatpush1.msra.mxu0 0.0
    %1101 = vmatprep.subr.mxu0 0.0
    %1102 = vmatpush1.msra.mxu0 0.0
    %1103 = vmatprep.subr.mxu0 0.0
    %1104 = vmatpush1.msra.mxu0 0.0
    %1105 = vmatprep.subr.mxu0 0.0
    %1106 = vmatpush1.msra.mxu0 0.0
    %1107 = vmatprep.subr.mxu0 0.0
    %1108 = vmatpush1.msra.mxu0 %v1066
    %1109 = vmatprep.subr.mxu0 0.0
    %1110 = vmatpush1.msra.mxu0 %v1065
    %1111 = vmatprep.subr.mxu0 0.0
    %1112 = vmatpush1.msra.mxu0 %v1064
    %1113 = vmatprep.subr.mxu0 0.0
    %1114 = vmatpush1.msra.mxu0 %v1063
    %1115 = vmatprep.subr.mxu0 0.0
    %1116 = vmatpush2.msra.mxu0 0.0
    %1117 = vmatprep.subr.mxu0 0.0
    %1118 = vmatpush2.msra.mxu0 0.0
    %1119 = vmatprep.subr.mxu0 0.0
    %1120 = vmatpush2.msra.mxu0 0.0
    %1121 = vmatprep.subr.mxu0 0.0
    %1122 = vmatpush2.msra.mxu0 0.0
    %1123 = vmatprep.subr.mxu0 0.0
    %1124 = vmatpush2.msra.mxu0 0.0
    %1125 = vmatprep.subr.mxu0 0.0
    %1126 = vmatpush2.msra.mxu0 0.0
    %1127 = vmatprep.subr.mxu0 0.0
    %1128 = vmatpush2.msra.mxu0 0.0
    %1129 = vmatprep.subr.mxu0 0.0
    %1130 = vmatpush2.msra.mxu0 0.0
    %1131 = vmatprep.subr.mxu0 0.0
    %1132 = vmatpush2.msra.mxu0 0.0
    %1133 = vmatprep.subr.mxu0 0.0
    %1134 = vmatpush2.msra.mxu0 0.0
    %1135 = vmatprep.subr.mxu0 0.0
    %1136 = vmatpush2.msra.mxu0 0.0
    %1137 = vmatprep.subr.mxu0 0.0
    %1138 = vmatpush2.msra.mxu0 0.0
    %1139 = vmatprep.subr.mxu0 0.0
    %1140 = vmatpush2.msra.mxu0 0.0
    %1141 = vmatprep.subr.mxu0 0.0
    %1142 = vmatpush2.msra.mxu0 0.0
    %1143 = vmatprep.subr.mxu0 0.0
    %1144 = vmatpush2.msra.mxu0 0.0
    %1145 = vmatprep.subr.mxu0 0.0
    %1146 = vmatpush2.msra.mxu0 0.0
    %1147 = vmatprep.mubr.f32.mxu0 0.0
    %1148 = vmatmul.mubr.f32.gmra.mxu0 %v1072
    %v1149 = vpop.f32.mrf.mxu0
    %v1150 = vadd.f32 0.0, %v1149
    %v1151 = vpop.f32.mrf.mxu0
    %1152 = vmatprep.mubr.f32.mxu0 0.0
    %1153 = vmatmul.mubr.f32.gmra.mxu0 %v1075
    %v1154 = vpop.f32.mrf.mxu0
    %v1155 = vadd.f32 0.0, %v1154
    %v1156 = vpop.f32.mrf.mxu0
    %1157 = vmatprep.mubr.f32.mxu0 0.0
    %1158 = vmatmul.mubr.f32.gmra.mxu0 %v1078
    %v1159 = vpop.f32.mrf.mxu0
    %v1160 = vadd.f32 0.0, %v1159
    %v1161 = vpop.f32.mrf.mxu0
    %1162 = vmatprep.mubr.f32.mxu0 0.0
    %1163 = vmatmul.mubr.f32.gmra.mxu0 %v1081
    %v1164 = vpop.f32.mrf.mxu0
    %v1165 = vadd.f32 0.0, %v1164
    %v1166 = vpop.f32.mrf.mxu0
    %1167 = vdwg.mxu0
    %v1168 = vmul.f32 %v1063, %v1063
    %v1169 = vmul.f32 %v1064, %v1064
    %v1170 = vmul.f32 %v1065, %v1065
    %v1171 = vmul.f32 %v1066, %v1066
    %1172 = vmatprep.subr.mxu0 0.0
    %1173 = vmatpush1.msra.mxu0 0.0
    %1174 = vmatprep.subr.mxu0 0.0
    %1175 = vmatpush1.msra.mxu0 0.0
    %1176 = vmatprep.subr.mxu0 0.0
    %1177 = vmatpush1.msra.mxu0 0.0
    %1178 = vmatprep.subr.mxu0 0.0
    %1179 = vmatpush1.msra.mxu0 0.0
    %1180 = vmatprep.subr.mxu0 0.0
    %1181 = vmatpush1.msra.mxu0 0.0
    %1182 = vmatprep.subr.mxu0 0.0
    %1183 = vmatpush1.msra.mxu0 0.0
    %1184 = vmatprep.subr.mxu0 0.0
    %1185 = vmatpush1.msra.mxu0 0.0
    %1186 = vmatprep.subr.mxu0 0.0
    %1187 = vmatpush1.msra.mxu0 0.0
    %1188 = vmatprep.subr.mxu0 0.0
    %1189 = vmatpush1.msra.mxu0 0.0
    %1190 = vmatprep.subr.mxu0 0.0
    %1191 = vmatpush1.msra.mxu0 0.0
    %1192 = vmatprep.subr.mxu0 0.0
    %1193 = vmatpush1.msra.mxu0 0.0
    %1194 = vmatprep.subr.mxu0 0.0
    %1195 = vmatpush1.msra.mxu0 0.0
    %1196 = vmatprep.subr.mxu0 0.0
    %1197 = vmatpush1.msra.mxu0 %v1171
    %1198 = vmatprep.subr.mxu0 0.0
    %1199 = vmatpush1.msra.mxu0 %v1170
    %1200 = vmatprep.subr.mxu0 0.0
    %1201 = vmatpush1.msra.mxu0 %v1169
    %1202 = vmatprep.subr.mxu0 0.0
    %1203 = vmatpush1.msra.mxu0 %v1168
    %1204 = vmatprep.subr.mxu0 0.0
    %1205 = vmatpush2.msra.mxu0 0.0
    %1206 = vmatprep.subr.mxu0 0.0
    %1207 = vmatpush2.msra.mxu0 0.0
    %1208 = vmatprep.subr.mxu0 0.0
    %1209 = vmatpush2.msra.mxu0 0.0
    %1210 = vmatprep.subr.mxu0 0.0
    %1211 = vmatpush2.msra.mxu0 0.0
    %1212 = vmatprep.subr.mxu0 0.0
    %1213 = vmatpush2.msra.mxu0 0.0
    %1214 = vmatprep.subr.mxu0 0.0
    %1215 = vmatpush2.msra.mxu0 0.0
    %1216 = vmatprep.subr.mxu0 0.0
    %1217 = vmatpush2.msra.mxu0 0.0
    %1218 = vmatprep.subr.mxu0 0.0
    %1219 = vmatpush2.msra.mxu0 0.0
    %1220 = vmatprep.subr.mxu0 0.0
    %1221 = vmatpush2.msra.mxu0 0.0
    %1222 = vmatprep.subr.mxu0 0.0
    %1223 = vmatpush2.msra.mxu0 0.0
    %1224 = vmatprep.subr.mxu0 0.0
    %1225 = vmatpush2.msra.mxu0 0.0
    %1226 = vmatprep.subr.mxu0 0.0
    %1227 = vmatpush2.msra.mxu0 0.0
    %1228 = vmatprep.subr.mxu0 0.0
    %1229 = vmatpush2.msra.mxu0 0.0
    %1230 = vmatprep.subr.mxu0 0.0
    %1231 = vmatpush2.msra.mxu0 0.0
    %1232 = vmatprep.subr.mxu0 0.0
    %1233 = vmatpush2.msra.mxu0 0.0
    %1234 = vmatprep.subr.mxu0 0.0
    %1235 = vmatpush2.msra.mxu0 0.0
    %1236 = vmatprep.mubr.f32.mxu0 0.0
    %1237 = vmatmul.mubr.f32.gmra.mxu0 %v1072
    %v1238 = vpop.f32.mrf.mxu0
    %v1239 = vadd.f32 0.0, %v1238
    %v1240 = vpop.f32.mrf.mxu0
    %1241 = vmatprep.mubr.f32.mxu0 0.0
    %1242 = vmatmul.mubr.f32.gmra.mxu0 %v1075
    %v1243 = vpop.f32.mrf.mxu0
    %v1244 = vadd.f32 0.0, %v1243
    %v1245 = vpop.f32.mrf.mxu0
    %1246 = vmatprep.mubr.f32.mxu0 0.0
    %1247 = vmatmul.mubr.f32.gmra.mxu0 %v1078
    %v1248 = vpop.f32.mrf.mxu0
    %v1249 = vadd.f32 0.0, %v1248
    %v1250 = vpop.f32.mrf.mxu0
    %1251 = vmatprep.mubr.f32.mxu0 0.0
    %1252 = vmatmul.mubr.f32.gmra.mxu0 %v1081
    %v1253 = vpop.f32.mrf.mxu0
    %v1254 = vadd.f32 0.0, %v1253
    %v1255 = vpop.f32.mrf.mxu0
    %1256 = vdwg.mxu0
    %1257 = vrot.lane.b32.xlu0 %v1150, 8
    %v1258 = vpop.permute.xlu0 %1257
    %1259 = vrot.lane.b32.xlu0 %v1155, 8
    %v1260 = vpop.permute.xlu0 %1259
    %1261 = vrot.lane.b32.xlu0 %v1160, 8
    %v1262 = vpop.permute.xlu0 %1261
    %1263 = vrot.lane.b32.xlu0 %v1165, 8
    %v1264 = vpop.permute.xlu0 %1263
    %v1265 = vadd.f32 %v1150, %v1258
    %v1266 = vadd.f32 %v1155, %v1260
    %v1267 = vadd.f32 %v1160, %v1262
    %v1268 = vadd.f32 %v1165, %v1264
    %1269 = vrot.lane.b32.xlu0 %v1239, 8
    %v1270 = vpop.permute.xlu0 %1269
    %1271 = vrot.lane.b32.xlu0 %v1244, 8
    %v1272 = vpop.permute.xlu0 %1271
    %1273 = vrot.lane.b32.xlu0 %v1249, 8
    %v1274 = vpop.permute.xlu0 %1273
    %1275 = vrot.lane.b32.xlu0 %v1254, 8
    %v1276 = vpop.permute.xlu0 %1275
    %v1277 = vadd.f32 %v1239, %v1270
    %v1278 = vadd.f32 %v1244, %v1272
    %v1279 = vadd.f32 %v1249, %v1274
    %v1280 = vadd.f32 %v1254, %v1276
    %1281 = vrot.lane.b32.xlu0 %v1265, 16
    %v1282 = vpop.permute.xlu0 %1281
    %1283 = vrot.lane.b32.xlu0 %v1266, 16
    %v1284 = vpop.permute.xlu0 %1283
    %1285 = vrot.lane.b32.xlu0 %v1267, 16
    %v1286 = vpop.permute.xlu0 %1285
    %1287 = vrot.lane.b32.xlu0 %v1268, 16
    %v1288 = vpop.permute.xlu0 %1287
    %v1289 = vadd.f32 %v1265, %v1282
    %v1290 = vadd.f32 %v1266, %v1284
    %v1291 = vadd.f32 %v1267, %v1286
    %v1292 = vadd.f32 %v1268, %v1288
    %1293 = vrot.lane.b32.xlu0 %v1277, 16
    %v1294 = vpop.permute.xlu0 %1293
    %1295 = vrot.lane.b32.xlu0 %v1278, 16
    %v1296 = vpop.permute.xlu0 %1295
    %1297 = vrot.lane.b32.xlu0 %v1279, 16
    %v1298 = vpop.permute.xlu0 %1297
    %1299 = vrot.lane.b32.xlu0 %v1280, 16
    %v1300 = vpop.permute.xlu0 %1299
    %v1301 = vadd.f32 %v1277, %v1294
    %v1302 = vadd.f32 %v1278, %v1296
    %v1303 = vadd.f32 %v1279, %v1298
    %v1304 = vadd.f32 %v1280, %v1300
    %1305 = vrot.lane.b32.xlu0 %v1289, 32
    %v1306 = vpop.permute.xlu0 %1305
    %1307 = vrot.lane.b32.xlu0 %v1290, 32
    %v1308 = vpop.permute.xlu0 %1307
    %1309 = vrot.lane.b32.xlu0 %v1291, 32
    %v1310 = vpop.permute.xlu0 %1309
    %1311 = vrot.lane.b32.xlu0 %v1292, 32
    %v1312 = vpop.permute.xlu0 %1311
    %v1313 = vadd.f32 %v1289, %v1306
    %v1314 = vadd.f32 %v1290, %v1308
    %v1315 = vadd.f32 %v1291, %v1310
    %v1316 = vadd.f32 %v1292, %v1312
    %1317 = vrot.lane.b32.xlu0 %v1301, 32
    %v1318 = vpop.permute.xlu0 %1317
    %1319 = vrot.lane.b32.xlu0 %v1302, 32
    %v1320 = vpop.permute.xlu0 %1319
    %1321 = vrot.lane.b32.xlu0 %v1303, 32
    %v1322 = vpop.permute.xlu0 %1321
    %1323 = vrot.lane.b32.xlu0 %v1304, 32
    %v1324 = vpop.permute.xlu0 %1323
    %v1325 = vadd.f32 %v1301, %v1318
    %v1326 = vadd.f32 %v1302, %v1320
    %v1327 = vadd.f32 %v1303, %v1322
    %v1328 = vadd.f32 %v1304, %v1324
    %1329 = vrot.lane.b32.xlu0 %v1313, 64
    %v1330 = vpop.permute.xlu0 %1329
    %1331 = vrot.lane.b32.xlu0 %v1314, 64
    %v1332 = vpop.permute.xlu0 %1331
    %1333 = vrot.lane.b32.xlu0 %v1315, 64
    %v1334 = vpop.permute.xlu0 %1333
    %1335 = vrot.lane.b32.xlu0 %v1316, 64
    %v1336 = vpop.permute.xlu0 %1335
    %v1337 = vadd.f32 %v1313, %v1330
    %v1338 = vadd.f32 %v1314, %v1332
    %v1339 = vadd.f32 %v1315, %v1334
    %v1340 = vadd.f32 %v1316, %v1336
    %1341 = vrot.lane.b32.xlu0 %v1325, 64
    %v1342 = vpop.permute.xlu0 %1341
    %1343 = vrot.lane.b32.xlu0 %v1326, 64
    %v1344 = vpop.permute.xlu0 %1343
    %1345 = vrot.lane.b32.xlu0 %v1327, 64
    %v1346 = vpop.permute.xlu0 %1345
    %1347 = vrot.lane.b32.xlu0 %v1328, 64
    %v1348 = vpop.permute.xlu0 %1347
    %v1349 = vadd.f32 %v1325, %v1342
    %v1350 = vadd.f32 %v1326, %v1344
    %v1351 = vadd.f32 %v1327, %v1346
    %v1352 = vadd.f32 %v1328, %v1348
    %v1353 = vmul.f32 %v1337, 0.0625
    %v1354 = vmul.f32 %v1338, 0.0625
    %v1355 = vmul.f32 %v1339, 0.0625
    %v1356 = vmul.f32 %v1340, 0.0625
    %v1357 = vmul.f32 %v1349, 0.0625
    %v1358 = vmul.f32 %v1350, 0.0625
    %v1359 = vmul.f32 %v1351, 0.0625
    %v1360 = vmul.f32 %v1352, 0.0625
    %v1361 = vmul.f32 %v1353, %v1353
    %v1362 = vmul.f32 %v1354, %v1354
    %v1363 = vmul.f32 %v1355, %v1355
    %v1364 = vmul.f32 %v1356, %v1356
    %v1365 = vsub.f32 %v1357, %v1361
    %v1366 = vsub.f32 %v1358, %v1362
    %v1367 = vsub.f32 %v1359, %v1363
    %v1368 = vsub.f32 %v1360, %v1364
    %v1369 = vld [vmem:[%s27] sm:$0x1]
    %v1370 = vadd.f32 %v1365, 1e-05
    %v1371 = vadd.f32 %v1366, 1e-05
    %v1372 = vadd.f32 %v1367, 1e-05
    %v1373 = vadd.f32 %v1368, 1e-05
    %v1374 = vrsqrt.pop %v1370
    %v1375 = vrsqrt.pop %v1371
    %v1376 = vrsqrt.pop %v1372
    %v1377 = vrsqrt.pop %v1373
    %v1379 = vlaneseq
    %v1380 = vshrl.u32 %v1379, 7
    %v1381 = vsub.s32 0, %v1380
    %v1382 = vrot.slane %v1369, %v1381
    %v1384 = vmul.f32 %v1382, %v1374
    %v1385 = vmul.f32 %v1382, %v1375
    %v1386 = vmul.f32 %v1382, %v1376
    %v1387 = vmul.f32 %v1382, %v1377
    %v1388 = vsub.f32 %v1063, %v1353
    %v1389 = vsub.f32 %v1064, %v1354
    %v1390 = vsub.f32 %v1065, %v1355
    %v1391 = vsub.f32 %v1066, %v1356
    %v1392 = vmul.f32 %v1388, %v1384
    %v1393 = vmul.f32 %v1389, %v1385
    %v1394 = vmul.f32 %v1390, %v1386
    %v1395 = vmul.f32 %v1391, %v1387
    %v1396 = vld [vmem:[%s29] sm:$0x1]
    %v1398 = vlaneseq
    %v1399 = vshrl.u32 %v1398, 7
    %v1400 = vsub.s32 0, %v1399
    %v1401 = vrot.slane %v1396, %v1400
    %v1403 = vadd.f32 %v1392, %v1401
    %v1404 = vadd.f32 %v1393, %v1401
    %v1405 = vadd.f32 %v1394, %v1401
    %v1406 = vadd.f32 %v1395, %v1401
    %vm1407 = vcmp.ge.f32.partialorder %v1403, 0.0
    %vm1408 = vcmp.ge.f32.partialorder %v1404, 0.0
    %vm1409 = vcmp.ge.f32.partialorder %v1405, 0.0
    %vm1410 = vcmp.ge.f32.partialorder %v1406, 0.0
    %v1411 = vmul.f32 %v1403, 0.01
    %v1412 = vmul.f32 %v1404, 0.01
    %v1413 = vmul.f32 %v1405, 0.01
    %v1414 = vmul.f32 %v1406, 0.01
    %v1415 = vsel %vm1407, %v1403, %v1411
    %v1416 = vsel %vm1408, %v1404, %v1412
    %v1417 = vsel %vm1409, %v1405, %v1413
    %v1418 = vsel %vm1410, %v1406, %v1414
    %v1419 = vpack.c.bf16 %v1416, %v1415
    %v1420 = vpack.c.bf16 %v1418, %v1417
    %1421 = vmatprep.subr.bf16.mxu0 0
    %1422 = vmatpush1.bf16.msra.mxu0 0
    %1423 = vmatprep.subr.bf16.mxu0 0
    %1424 = vmatpush1.bf16.msra.mxu0 0
    %1425 = vmatprep.subr.bf16.mxu0 0
    %1426 = vmatpush1.bf16.msra.mxu0 0
    %1427 = vmatprep.subr.bf16.mxu0 0
    %1428 = vmatpush1.bf16.msra.mxu0 0
    %1429 = vmatprep.subr.bf16.mxu0 0
    %1430 = vmatpush1.bf16.msra.mxu0 0
    %1431 = vmatprep.subr.bf16.mxu0 0
    %1432 = vmatpush1.bf16.msra.mxu0 0
    %1433 = vmatprep.subr.bf16.mxu0 0
    %1434 = vmatpush1.bf16.msra.mxu0 %v1420
    %1435 = vmatprep.subr.bf16.mxu0 0
    %1436 = vmatpush1.bf16.msra.mxu0 %v1419
    %1437 = vmatprep.subr.bf16.mxu0 0
    %1438 = vmatpush2.bf16.msra.mxu0 0
    %1439 = vmatprep.subr.bf16.mxu0 0
    %1440 = vmatpush2.bf16.msra.mxu0 0
    %1441 = vmatprep.subr.bf16.mxu0 0
    %1442 = vmatpush2.bf16.msra.mxu0 0
    %1443 = vmatprep.subr.bf16.mxu0 0
    %1444 = vmatpush2.bf16.msra.mxu0 0
    %1445 = vmatprep.subr.bf16.mxu0 0
    %1446 = vmatpush2.bf16.msra.mxu0 0
    %1447 = vmatprep.subr.bf16.mxu0 0
    %1448 = vmatpush2.bf16.msra.mxu0 0
    %1449 = vmatprep.subr.bf16.mxu0 0
    %1450 = vmatpush2.bf16.msra.mxu0 0
    %1451 = vmatprep.subr.bf16.mxu0 0
    %1452 = vmatpush2.bf16.msra.mxu0 0
    %1453 = vmatprep.mubr.bf16.mxu0 0
    %1454 = vmatmul.mubr.bf16.gmra.mxu0 %v588
    %v1455 = vpop.f32.mrf.mxu0
    %v1456 = vadd.f32 0.0, %v1455
    %v1457 = vpop.f32.mrf.mxu0
    %v1458 = vpop.f32.mrf.mxu0
    %v1459 = vadd.f32 0.0, %v1458
    %v1460 = vpop.f32.mrf.mxu0
    %1461 = vmatprep.mubr.bf16.mxu0 0
    %1462 = vmatmul.mubr.bf16.gmra.mxu0 %v591
    %v1463 = vpop.f32.mrf.mxu0
    %v1464 = vadd.f32 0.0, %v1463
    %v1465 = vpop.f32.mrf.mxu0
    %v1466 = vpop.f32.mrf.mxu0
    %v1467 = vadd.f32 0.0, %v1466
    %v1468 = vpop.f32.mrf.mxu0
    %1469 = vdwg.mxu0
    %v1470 = vpack.c.bf16 %v1459, %v1456
    %v1471 = vpack.c.bf16 %v1467, %v1464
    %v1472 = vld [vmem:[%s31] sm:$0xf]
    %v1473 = vld [vmem:[%s31 + $0x4] sm:$0xf]
    %v1474 = vld [vmem:[%s31 + $0x8] sm:$0xf]
    %v1475 = vld [vmem:[%s31 + $0xc] sm:$0xf]
    %v1476 = vld [vmem:[%s31 + $0x10] sm:$0xf]
    %v1477 = vld [vmem:[%s31 + $0x14] sm:$0xf]
    %v1478 = vld [vmem:[%s31 + $0x18] sm:$0xf]
    %v1479 = vld [vmem:[%s31 + $0x1c] sm:$0xf]
    %v1480 = vld [vmem:[%s31 + $0x20] sm:$0xf]
    %v1481 = vld [vmem:[%s31 + $0x24] sm:$0xf]
    %v1482 = vld [vmem:[%s31 + $0x28] sm:$0xf]
    %v1483 = vld [vmem:[%s31 + $0x2c] sm:$0xf]
    %v1484 = vld [vmem:[%s31 + $0x30] sm:$0xf]
    %v1485 = vld [vmem:[%s31 + $0x34] sm:$0xf]
    %v1486 = vld [vmem:[%s31 + $0x38] sm:$0xf]
    %v1487 = vld [vmem:[%s31 + $0x3c] sm:$0xf]
    %1488 = vmatprep.subr.bf16.mxu0 0
    %1489 = vmatpush1.bf16.msra.mxu0 0
    %1490 = vmatprep.subr.bf16.mxu0 0
    %1491 = vmatpush1.bf16.msra.mxu0 0
    %1492 = vmatprep.subr.bf16.mxu0 0
    %1493 = vmatpush1.bf16.msra.mxu0 0
    %1494 = vmatprep.subr.bf16.mxu0 0
    %1495 = vmatpush1.bf16.msra.mxu0 0
    %1496 = vmatprep.subr.bf16.mxu0 0
    %1497 = vmatpush1.bf16.msra.mxu0 0
    %1498 = vmatprep.subr.bf16.mxu0 0
    %1499 = vmatpush1.bf16.msra.mxu0 0
    %1500 = vmatprep.subr.bf16.mxu0 0
    %1501 = vmatpush1.bf16.msra.mxu0 %v1420
    %1502 = vmatprep.subr.bf16.mxu0 0
    %1503 = vmatpush1.bf16.msra.mxu0 %v1419
    %1504 = vmatprep.subr.bf16.mxu0 0
    %1505 = vmatpush2.bf16.msra.mxu0 0
    %1506 = vmatprep.subr.bf16.mxu0 0
    %1507 = vmatpush2.bf16.msra.mxu0 0
    %1508 = vmatprep.subr.bf16.mxu0 0
    %1509 = vmatpush2.bf16.msra.mxu0 0
    %1510 = vmatprep.subr.bf16.mxu0 0
    %1511 = vmatpush2.bf16.msra.mxu0 0
    %1512 = vmatprep.subr.bf16.mxu0 0
    %1513 = vmatpush2.bf16.msra.mxu0 0
    %1514 = vmatprep.subr.bf16.mxu0 0
    %1515 = vmatpush2.bf16.msra.mxu0 0
    %1516 = vmatprep.subr.bf16.mxu0 0
    %1517 = vmatpush2.bf16.msra.mxu0 0
    %1518 = vmatprep.subr.bf16.mxu0 0
    %1519 = vmatpush2.bf16.msra.mxu0 0
    %1520 = vmatprep.mubr.bf16.mxu0 0
    %1521 = vmatmul.mubr.bf16.gmra.mxu0 %v668
    %v1522 = vpop.f32.mrf.mxu0
    %v1523 = vadd.f32 0.0, %v1522
    %v1524 = vpop.f32.mrf.mxu0
    %v1525 = vpop.f32.mrf.mxu0
    %v1526 = vadd.f32 0.0, %v1525
    %v1527 = vpop.f32.mrf.mxu0
    %1528 = vmatprep.mubr.bf16.mxu0 0
    %1529 = vmatmul.mubr.bf16.gmra.mxu0 %v671
    %v1530 = vpop.f32.mrf.mxu0
    %v1531 = vadd.f32 0.0, %v1530
    %v1532 = vpop.f32.mrf.mxu0
    %v1533 = vpop.f32.mrf.mxu0
    %v1534 = vadd.f32 0.0, %v1533
    %v1535 = vpop.f32.mrf.mxu0
    %1536 = vdwg.mxu0
    %v1537 = vpack.c.bf16 %v1526, %v1523
    %v1538 = vpack.c.bf16 %v1534, %v1531
    %s1539 = scalar_lea.vmem %s31, 64
    %v1540 = vld [vmem:[%s1539] sm:$0xf]
    %v1541 = vld [vmem:[%s1539 + $0x4] sm:$0xf]
    %v1542 = vld [vmem:[%s1539 + $0x8] sm:$0xf]
    %v1543 = vld [vmem:[%s1539 + $0xc] sm:$0xf]
    %v1544 = vld [vmem:[%s1539 + $0x10] sm:$0xf]
    %v1545 = vld [vmem:[%s1539 + $0x14] sm:$0xf]
    %v1546 = vld [vmem:[%s1539 + $0x18] sm:$0xf]
    %v1547 = vld [vmem:[%s1539 + $0x1c] sm:$0xf]
    %v1548 = vld [vmem:[%s1539 + $0x20] sm:$0xf]
    %v1549 = vld [vmem:[%s1539 + $0x24] sm:$0xf]
    %v1550 = vld [vmem:[%s1539 + $0x28] sm:$0xf]
    %v1551 = vld [vmem:[%s1539 + $0x2c] sm:$0xf]
    %v1552 = vld [vmem:[%s1539 + $0x30] sm:$0xf]
    %v1553 = vld [vmem:[%s1539 + $0x34] sm:$0xf]
    %v1554 = vld [vmem:[%s1539 + $0x38] sm:$0xf]
    %v1555 = vld [vmem:[%s1539 + $0x3c] sm:$0xf]
    %v1572 = vunpack.c.l.b16 %v1540
    %v1573 = vunpack.c.l.b16 %v1541
    %v1574 = vunpack.c.l.b16 %v1542
    %v1575 = vunpack.c.l.b16 %v1543
    %v1576 = vunpack.c.l.b16 %v1544
    %v1577 = vunpack.c.l.b16 %v1545
    %v1578 = vunpack.c.l.b16 %v1546
    %v1579 = vunpack.c.l.b16 %v1547
    %v1580 = vunpack.c.l.b16 %v1548
    %v1581 = vunpack.c.l.b16 %v1549
    %v1582 = vunpack.c.l.b16 %v1550
    %v1583 = vunpack.c.l.b16 %v1551
    %v1584 = vunpack.c.l.b16 %v1552
    %v1585 = vunpack.c.l.b16 %v1553
    %v1586 = vunpack.c.l.b16 %v1554
    %v1587 = vunpack.c.l.b16 %v1555
    %v1588 = vpack.c.b16 %v1573, %v1572
    %v1589 = vpack.c.b16 %v1575, %v1574
    %v1590 = vpack.c.b16 %v1577, %v1576
    %v1591 = vpack.c.b16 %v1579, %v1578
    %v1592 = vpack.c.b16 %v1581, %v1580
    %v1593 = vpack.c.b16 %v1583, %v1582
    %v1594 = vpack.c.b16 %v1585, %v1584
    %v1595 = vpack.c.b16 %v1587, %v1586
    %1604 = vmatprep.subr.bf16.mxu0 0
    %1605 = vmatpush1.bf16.msra.mxu0 %v1595
    %1606 = vmatprep.subr.bf16.mxu0 0
    %1607 = vmatpush1.bf16.msra.mxu0 %v1594
    %1608 = vmatprep.subr.bf16.mxu0 0
    %1609 = vmatpush1.bf16.msra.mxu0 %v1593
    %1610 = vmatprep.subr.bf16.mxu0 0
    %1611 = vmatpush1.bf16.msra.mxu0 %v1592
    %1612 = vmatprep.subr.bf16.mxu0 0
    %1613 = vmatpush1.bf16.msra.mxu0 %v1591
    %1614 = vmatprep.subr.bf16.mxu0 0
    %1615 = vmatpush1.bf16.msra.mxu0 %v1590
    %1616 = vmatprep.subr.bf16.mxu0 0
    %1617 = vmatpush1.bf16.msra.mxu0 %v1589
    %1618 = vmatprep.subr.bf16.mxu0 0
    %1619 = vmatpush1.bf16.msra.mxu0 %v1588
    %1620 = vmatprep.subr.bf16.mxu0 0
    %1621 = vmatpush2.bf16.msra.mxu0 0
    %1622 = vmatprep.subr.bf16.mxu0 0
    %1623 = vmatpush2.bf16.msra.mxu0 0
    %1624 = vmatprep.subr.bf16.mxu0 0
    %1625 = vmatpush2.bf16.msra.mxu0 0
    %1626 = vmatprep.subr.bf16.mxu0 0
    %1627 = vmatpush2.bf16.msra.mxu0 0
    %1628 = vmatprep.subr.bf16.mxu0 0
    %1629 = vmatpush2.bf16.msra.mxu0 0
    %1630 = vmatprep.subr.bf16.mxu0 0
    %1631 = vmatpush2.bf16.msra.mxu0 0
    %1632 = vmatprep.subr.bf16.mxu0 0
    %1633 = vmatpush2.bf16.msra.mxu0 0
    %1634 = vmatprep.subr.bf16.mxu0 0
    %1635 = vmatpush2.bf16.msra.mxu0 0
    %1636 = vmatprep.mubr.bf16.mxu0 0
    %1637 = vmatmul.mubr.bf16.gmra.mxu0 %v1537
    %v1638 = vpop.f32.mrf.mxu0
    %v1639 = vadd.f32 0.0, %v1638
    %v1640 = vpop.f32.mrf.mxu0
    %v1641 = vpop.f32.mrf.mxu0
    %v1642 = vadd.f32 0.0, %v1641
    %v1643 = vpop.f32.mrf.mxu0
    %1644 = vmatprep.mubr.bf16.mxu0 0
    %1645 = vmatmul.mubr.bf16.gmra.mxu0 %v1538
    %v1646 = vpop.f32.mrf.mxu0
    %v1647 = vadd.f32 0.0, %v1646
    %v1648 = vpop.f32.mrf.mxu0
    %v1649 = vpop.f32.mrf.mxu0
    %v1650 = vadd.f32 0.0, %v1649
    %v1651 = vpop.f32.mrf.mxu0
    %1652 = vdwg.mxu0
    %v1669 = vunpack.c.l.b16 %v1472
    %v1670 = vunpack.c.l.b16 %v1473
    %v1671 = vunpack.c.l.b16 %v1474
    %v1672 = vunpack.c.l.b16 %v1475
    %v1673 = vunpack.c.l.b16 %v1476
    %v1674 = vunpack.c.l.b16 %v1477
    %v1675 = vunpack.c.l.b16 %v1478
    %v1676 = vunpack.c.l.b16 %v1479
    %v1677 = vunpack.c.l.b16 %v1480
    %v1678 = vunpack.c.l.b16 %v1481
    %v1679 = vunpack.c.l.b16 %v1482
    %v1680 = vunpack.c.l.b16 %v1483
    %v1681 = vunpack.c.l.b16 %v1484
    %v1682 = vunpack.c.l.b16 %v1485
    %v1683 = vunpack.c.l.b16 %v1486
    %v1684 = vunpack.c.l.b16 %v1487
    %v1685 = vpack.c.b16 %v1670, %v1669
    %v1686 = vpack.c.b16 %v1672, %v1671
    %v1687 = vpack.c.b16 %v1674, %v1673
    %v1688 = vpack.c.b16 %v1676, %v1675
    %v1689 = vpack.c.b16 %v1678, %v1677
    %v1690 = vpack.c.b16 %v1680, %v1679
    %v1691 = vpack.c.b16 %v1682, %v1681
    %v1692 = vpack.c.b16 %v1684, %v1683
    %1701 = vmatprep.subr.bf16.mxu0 0
    %1702 = vmatpush1.bf16.msra.mxu0 %v1692
    %1703 = vmatprep.subr.bf16.mxu0 0
    %1704 = vmatpush1.bf16.msra.mxu0 %v1691
    %1705 = vmatprep.subr.bf16.mxu0 0
    %1706 = vmatpush1.bf16.msra.mxu0 %v1690
    %1707 = vmatprep.subr.bf16.mxu0 0
    %1708 = vmatpush1.bf16.msra.mxu0 %v1689
    %1709 = vmatprep.subr.bf16.mxu0 0
    %1710 = vmatpush1.bf16.msra.mxu0 %v1688
    %1711 = vmatprep.subr.bf16.mxu0 0
    %1712 = vmatpush1.bf16.msra.mxu0 %v1687
    %1713 = vmatprep.subr.bf16.mxu0 0
    %1714 = vmatpush1.bf16.msra.mxu0 %v1686
    %1715 = vmatprep.subr.bf16.mxu0 0
    %1716 = vmatpush1.bf16.msra.mxu0 %v1685
    %1717 = vmatprep.subr.bf16.mxu0 0
    %1718 = vmatpush2.bf16.msra.mxu0 0
    %1719 = vmatprep.subr.bf16.mxu0 0
    %1720 = vmatpush2.bf16.msra.mxu0 0
    %1721 = vmatprep.subr.bf16.mxu0 0
    %1722 = vmatpush2.bf16.msra.mxu0 0
    %1723 = vmatprep.subr.bf16.mxu0 0
    %1724 = vmatpush2.bf16.msra.mxu0 0
    %1725 = vmatprep.subr.bf16.mxu0 0
    %1726 = vmatpush2.bf16.msra.mxu0 0
    %1727 = vmatprep.subr.bf16.mxu0 0
    %1728 = vmatpush2.bf16.msra.mxu0 0
    %1729 = vmatprep.subr.bf16.mxu0 0
    %1730 = vmatpush2.bf16.msra.mxu0 0
    %1731 = vmatprep.subr.bf16.mxu0 0
    %1732 = vmatpush2.bf16.msra.mxu0 0
    %1733 = vmatprep.mubr.bf16.mxu0 0
    %1734 = vmatmul.mubr.bf16.gmra.mxu0 %v1470
    %v1735 = vpop.f32.mrf.mxu0
    %v1736 = vadd.f32 %v1639, %v1735
    %v1737 = vpop.f32.mrf.mxu0
    %v1738 = vpop.f32.mrf.mxu0
    %v1739 = vadd.f32 %v1642, %v1738
    %v1740 = vpop.f32.mrf.mxu0
    %1741 = vmatprep.mubr.bf16.mxu0 0
    %1742 = vmatmul.mubr.bf16.gmra.mxu0 %v1471
    %v1743 = vpop.f32.mrf.mxu0
    %v1744 = vadd.f32 %v1647, %v1743
    %v1745 = vpop.f32.mrf.mxu0
    %v1746 = vpop.f32.mrf.mxu0
    %v1747 = vadd.f32 %v1650, %v1746
    %v1748 = vpop.f32.mrf.mxu0
    %1749 = vdwg.mxu0
    %1750 = vmatprep.subr.bf16.mxu0 0
    %1751 = vmatpush1.bf16.msra.mxu0 0
    %1752 = vmatprep.subr.bf16.mxu0 0
    %1753 = vmatpush1.bf16.msra.mxu0 0
    %1754 = vmatprep.subr.bf16.mxu0 0
    %1755 = vmatpush1.bf16.msra.mxu0 0
    %1756 = vmatprep.subr.bf16.mxu0 0
    %1757 = vmatpush1.bf16.msra.mxu0 0
    %1758 = vmatprep.subr.bf16.mxu0 0
    %1759 = vmatpush1.bf16.msra.mxu0 0
    %1760 = vmatprep.subr.bf16.mxu0 0
    %1761 = vmatpush1.bf16.msra.mxu0 0
    %1762 = vmatprep.subr.bf16.mxu0 0
    %1763 = vmatpush1.bf16.msra.mxu0 %v1420
    %1764 = vmatprep.subr.bf16.mxu0 0
    %1765 = vmatpush1.bf16.msra.mxu0 %v1419
    %1766 = vmatprep.subr.bf16.mxu0 0
    %1767 = vmatpush2.bf16.msra.mxu0 0
    %1768 = vmatprep.subr.bf16.mxu0 0
    %1769 = vmatpush2.bf16.msra.mxu0 0
    %1770 = vmatprep.subr.bf16.mxu0 0
    %1771 = vmatpush2.bf16.msra.mxu0 0
    %1772 = vmatprep.subr.bf16.mxu0 0
    %1773 = vmatpush2.bf16.msra.mxu0 0
    %1774 = vmatprep.subr.bf16.mxu0 0
    %1775 = vmatpush2.bf16.msra.mxu0 0
    %1776 = vmatprep.subr.bf16.mxu0 0
    %1777 = vmatpush2.bf16.msra.mxu0 0
    %1778 = vmatprep.subr.bf16.mxu0 0
    %1779 = vmatpush2.bf16.msra.mxu0 0
    %1780 = vmatprep.subr.bf16.mxu0 0
    %1781 = vmatpush2.bf16.msra.mxu0 0
    %1782 = vmatprep.mubr.bf16.mxu0 0
    %1783 = vmatmul.mubr.bf16.gmra.mxu0 %v908
    %v1784 = vpop.f32.mrf.mxu0
    %v1785 = vadd.f32 0.0, %v1784
    %v1786 = vpop.f32.mrf.mxu0
    %v1787 = vpop.f32.mrf.mxu0
    %v1788 = vadd.f32 0.0, %v1787
    %v1789 = vpop.f32.mrf.mxu0
    %1790 = vmatprep.mubr.bf16.mxu0 0
    %1791 = vmatmul.mubr.bf16.gmra.mxu0 %v911
    %v1792 = vpop.f32.mrf.mxu0
    %v1793 = vadd.f32 0.0, %v1792
    %v1794 = vpop.f32.mrf.mxu0
    %v1795 = vpop.f32.mrf.mxu0
    %v1796 = vadd.f32 0.0, %v1795
    %v1797 = vpop.f32.mrf.mxu0
    %1798 = vdwg.mxu0
    %v1799 = vpack.c.bf16 %v1788, %v1785
    %v1800 = vpack.c.bf16 %v1796, %v1793
    %s1801 = scalar_lea.vmem %s31, 128
    %v1802 = vld [vmem:[%s1801] sm:$0xf]
    %v1803 = vld [vmem:[%s1801 + $0x4] sm:$0xf]
    %v1804 = vld [vmem:[%s1801 + $0x8] sm:$0xf]
    %v1805 = vld [vmem:[%s1801 + $0xc] sm:$0xf]
    %v1806 = vld [vmem:[%s1801 + $0x10] sm:$0xf]
    %v1807 = vld [vmem:[%s1801 + $0x14] sm:$0xf]
    %v1808 = vld [vmem:[%s1801 + $0x18] sm:$0xf]
    %v1809 = vld [vmem:[%s1801 + $0x1c] sm:$0xf]
    %v1810 = vld [vmem:[%s1801 + $0x20] sm:$0xf]
    %v1811 = vld [vmem:[%s1801 + $0x24] sm:$0xf]
    %v1812 = vld [vmem:[%s1801 + $0x28] sm:$0xf]
    %v1813 = vld [vmem:[%s1801 + $0x2c] sm:$0xf]
    %v1814 = vld [vmem:[%s1801 + $0x30] sm:$0xf]
    %v1815 = vld [vmem:[%s1801 + $0x34] sm:$0xf]
    %v1816 = vld [vmem:[%s1801 + $0x38] sm:$0xf]
    %v1817 = vld [vmem:[%s1801 + $0x3c] sm:$0xf]
    %v1834 = vunpack.c.l.b16 %v1802
    %v1835 = vunpack.c.l.b16 %v1803
    %v1836 = vunpack.c.l.b16 %v1804
    %v1837 = vunpack.c.l.b16 %v1805
    %v1838 = vunpack.c.l.b16 %v1806
    %v1839 = vunpack.c.l.b16 %v1807
    %v1840 = vunpack.c.l.b16 %v1808
    %v1841 = vunpack.c.l.b16 %v1809
    %v1842 = vunpack.c.l.b16 %v1810
    %v1843 = vunpack.c.l.b16 %v1811
    %v1844 = vunpack.c.l.b16 %v1812
    %v1845 = vunpack.c.l.b16 %v1813
    %v1846 = vunpack.c.l.b16 %v1814
    %v1847 = vunpack.c.l.b16 %v1815
    %v1848 = vunpack.c.l.b16 %v1816
    %v1849 = vunpack.c.l.b16 %v1817
    %v1850 = vpack.c.b16 %v1835, %v1834
    %v1851 = vpack.c.b16 %v1837, %v1836
    %v1852 = vpack.c.b16 %v1839, %v1838
    %v1853 = vpack.c.b16 %v1841, %v1840
    %v1854 = vpack.c.b16 %v1843, %v1842
    %v1855 = vpack.c.b16 %v1845, %v1844
    %v1856 = vpack.c.b16 %v1847, %v1846
    %v1857 = vpack.c.b16 %v1849, %v1848
    %1866 = vmatprep.subr.bf16.mxu0 0
    %1867 = vmatpush1.bf16.msra.mxu0 %v1857
    %1868 = vmatprep.subr.bf16.mxu0 0
    %1869 = vmatpush1.bf16.msra.mxu0 %v1856
    %1870 = vmatprep.subr.bf16.mxu0 0
    %1871 = vmatpush1.bf16.msra.mxu0 %v1855
    %1872 = vmatprep.subr.bf16.mxu0 0
    %1873 = vmatpush1.bf16.msra.mxu0 %v1854
    %1874 = vmatprep.subr.bf16.mxu0 0
    %1875 = vmatpush1.bf16.msra.mxu0 %v1853
    %1876 = vmatprep.subr.bf16.mxu0 0
    %1877 = vmatpush1.bf16.msra.mxu0 %v1852
    %1878 = vmatprep.subr.bf16.mxu0 0
    %1879 = vmatpush1.bf16.msra.mxu0 %v1851
    %1880 = vmatprep.subr.bf16.mxu0 0
    %1881 = vmatpush1.bf16.msra.mxu0 %v1850
    %1882 = vmatprep.subr.bf16.mxu0 0
    %1883 = vmatpush2.bf16.msra.mxu0 0
    %1884 = vmatprep.subr.bf16.mxu0 0
    %1885 = vmatpush2.bf16.msra.mxu0 0
    %1886 = vmatprep.subr.bf16.mxu0 0
    %1887 = vmatpush2.bf16.msra.mxu0 0
    %1888 = vmatprep.subr.bf16.mxu0 0
    %1889 = vmatpush2.bf16.msra.mxu0 0
    %1890 = vmatprep.subr.bf16.mxu0 0
    %1891 = vmatpush2.bf16.msra.mxu0 0
    %1892 = vmatprep.subr.bf16.mxu0 0
    %1893 = vmatpush2.bf16.msra.mxu0 0
    %1894 = vmatprep.subr.bf16.mxu0 0
    %1895 = vmatpush2.bf16.msra.mxu0 0
    %1896 = vmatprep.subr.bf16.mxu0 0
    %1897 = vmatpush2.bf16.msra.mxu0 0
    %1898 = vmatprep.mubr.bf16.mxu0 0
    %1899 = vmatmul.mubr.bf16.gmra.mxu0 %v1799
    %v1900 = vpop.f32.mrf.mxu0
    %v1901 = vadd.f32 0.0, %v1900
    %v1902 = vpop.f32.mrf.mxu0
    %v1903 = vpop.f32.mrf.mxu0
    %v1904 = vadd.f32 0.0, %v1903
    %v1905 = vpop.f32.mrf.mxu0
    %1906 = vmatprep.mubr.bf16.mxu0 0
    %1907 = vmatmul.mubr.bf16.gmra.mxu0 %v1800
    %v1908 = vpop.f32.mrf.mxu0
    %v1909 = vadd.f32 0.0, %v1908
    %v1910 = vpop.f32.mrf.mxu0
    %v1911 = vpop.f32.mrf.mxu0
    %v1912 = vadd.f32 0.0, %v1911
    %v1913 = vpop.f32.mrf.mxu0
    %1914 = vdwg.mxu0
    %v1915 = vadd.f32 %v1736, %v1901
    %v1916 = vadd.f32 %v1739, %v1904
    %v1917 = vadd.f32 %v1744, %v1909
    %v1918 = vadd.f32 %v1747, %v1912
    %v1919 = vld [vmem:[%s33] sm:$0x1]
    %v1921 = vlaneseq
    %v1922 = vshrl.u32 %v1921, 7
    %v1923 = vsub.s32 0, %v1922
    %v1924 = vrot.slane %v1919, %v1923
    %v1926 = vadd.f32 %v1915, %v1924
    %v1927 = vadd.f32 %v1916, %v1924
    %v1928 = vadd.f32 %v1917, %v1924
    %v1929 = vadd.f32 %v1918, %v1924
    %1930 = vmatprep.subr.mxu0 0.0
    %1931 = vmatpush1.msra.mxu0 0.0
    %1932 = vmatprep.subr.mxu0 0.0
    %1933 = vmatpush1.msra.mxu0 0.0
    %1934 = vmatprep.subr.mxu0 0.0
    %1935 = vmatpush1.msra.mxu0 0.0
    %1936 = vmatprep.subr.mxu0 0.0
    %1937 = vmatpush1.msra.mxu0 0.0
    %1938 = vmatprep.subr.mxu0 0.0
    %1939 = vmatpush1.msra.mxu0 0.0
    %1940 = vmatprep.subr.mxu0 0.0
    %1941 = vmatpush1.msra.mxu0 0.0
    %1942 = vmatprep.subr.mxu0 0.0
    %1943 = vmatpush1.msra.mxu0 0.0
    %1944 = vmatprep.subr.mxu0 0.0
    %1945 = vmatpush1.msra.mxu0 0.0
    %1946 = vmatprep.subr.mxu0 0.0
    %1947 = vmatpush1.msra.mxu0 0.0
    %1948 = vmatprep.subr.mxu0 0.0
    %1949 = vmatpush1.msra.mxu0 0.0
    %1950 = vmatprep.subr.mxu0 0.0
    %1951 = vmatpush1.msra.mxu0 0.0
    %1952 = vmatprep.subr.mxu0 0.0
    %1953 = vmatpush1.msra.mxu0 0.0
    %1954 = vmatprep.subr.mxu0 0.0
    %1955 = vmatpush1.msra.mxu0 %v1929
    %1956 = vmatprep.subr.mxu0 0.0
    %1957 = vmatpush1.msra.mxu0 %v1928
    %1958 = vmatprep.subr.mxu0 0.0
    %1959 = vmatpush1.msra.mxu0 %v1927
    %1960 = vmatprep.subr.mxu0 0.0
    %1961 = vmatpush1.msra.mxu0 %v1926
    %1962 = vmatprep.subr.mxu0 0.0
    %1963 = vmatpush2.msra.mxu0 0.0
    %1964 = vmatprep.subr.mxu0 0.0
    %1965 = vmatpush2.msra.mxu0 0.0
    %1966 = vmatprep.subr.mxu0 0.0
    %1967 = vmatpush2.msra.mxu0 0.0
    %1968 = vmatprep.subr.mxu0 0.0
    %1969 = vmatpush2.msra.mxu0 0.0
    %1970 = vmatprep.subr.mxu0 0.0
    %1971 = vmatpush2.msra.mxu0 0.0
    %1972 = vmatprep.subr.mxu0 0.0
    %1973 = vmatpush2.msra.mxu0 0.0
    %1974 = vmatprep.subr.mxu0 0.0
    %1975 = vmatpush2.msra.mxu0 0.0
    %1976 = vmatprep.subr.mxu0 0.0
    %1977 = vmatpush2.msra.mxu0 0.0
    %1978 = vmatprep.subr.mxu0 0.0
    %1979 = vmatpush2.msra.mxu0 0.0
    %1980 = vmatprep.subr.mxu0 0.0
    %1981 = vmatpush2.msra.mxu0 0.0
    %1982 = vmatprep.subr.mxu0 0.0
    %1983 = vmatpush2.msra.mxu0 0.0
    %1984 = vmatprep.subr.mxu0 0.0
    %1985 = vmatpush2.msra.mxu0 0.0
    %1986 = vmatprep.subr.mxu0 0.0
    %1987 = vmatpush2.msra.mxu0 0.0
    %1988 = vmatprep.subr.mxu0 0.0
    %1989 = vmatpush2.msra.mxu0 0.0
    %1990 = vmatprep.subr.mxu0 0.0
    %1991 = vmatpush2.msra.mxu0 0.0
    %1992 = vmatprep.subr.mxu0 0.0
    %1993 = vmatpush2.msra.mxu0 0.0
    %1994 = vmatprep.mubr.f32.mxu0 0.0
    %1995 = vmatmul.mubr.f32.gmra.mxu0 %v1072
    %v1996 = vpop.f32.mrf.mxu0
    %v1997 = vadd.f32 0.0, %v1996
    %v1998 = vpop.f32.mrf.mxu0
    %1999 = vmatprep.mubr.f32.mxu0 0.0
    %2000 = vmatmul.mubr.f32.gmra.mxu0 %v1075
    %v2001 = vpop.f32.mrf.mxu0
    %v2002 = vadd.f32 0.0, %v2001
    %v2003 = vpop.f32.mrf.mxu0
    %2004 = vmatprep.mubr.f32.mxu0 0.0
    %2005 = vmatmul.mubr.f32.gmra.mxu0 %v1078
    %v2006 = vpop.f32.mrf.mxu0
    %v2007 = vadd.f32 0.0, %v2006
    %v2008 = vpop.f32.mrf.mxu0
    %2009 = vmatprep.mubr.f32.mxu0 0.0
    %2010 = vmatmul.mubr.f32.gmra.mxu0 %v1081
    %v2011 = vpop.f32.mrf.mxu0
    %v2012 = vadd.f32 0.0, %v2011
    %v2013 = vpop.f32.mrf.mxu0
    %2014 = vdwg.mxu0
    %v2015 = vmul.f32 %v1926, %v1926
    %v2016 = vmul.f32 %v1927, %v1927
    %v2017 = vmul.f32 %v1928, %v1928
    %v2018 = vmul.f32 %v1929, %v1929
    %2019 = vmatprep.subr.mxu0 0.0
    %2020 = vmatpush1.msra.mxu0 0.0
    %2021 = vmatprep.subr.mxu0 0.0
    %2022 = vmatpush1.msra.mxu0 0.0
    %2023 = vmatprep.subr.mxu0 0.0
    %2024 = vmatpush1.msra.mxu0 0.0
    %2025 = vmatprep.subr.mxu0 0.0
    %2026 = vmatpush1.msra.mxu0 0.0
    %2027 = vmatprep.subr.mxu0 0.0
    %2028 = vmatpush1.msra.mxu0 0.0
    %2029 = vmatprep.subr.mxu0 0.0
    %2030 = vmatpush1.msra.mxu0 0.0
    %2031 = vmatprep.subr.mxu0 0.0
    %2032 = vmatpush1.msra.mxu0 0.0
    %2033 = vmatprep.subr.mxu0 0.0
    %2034 = vmatpush1.msra.mxu0 0.0
    %2035 = vmatprep.subr.mxu0 0.0
    %2036 = vmatpush1.msra.mxu0 0.0
    %2037 = vmatprep.subr.mxu0 0.0
    %2038 = vmatpush1.msra.mxu0 0.0
    %2039 = vmatprep.subr.mxu0 0.0
    %2040 = vmatpush1.msra.mxu0 0.0
    %2041 = vmatprep.subr.mxu0 0.0
    %2042 = vmatpush1.msra.mxu0 0.0
    %2043 = vmatprep.subr.mxu0 0.0
    %2044 = vmatpush1.msra.mxu0 %v2018
    %2045 = vmatprep.subr.mxu0 0.0
    %2046 = vmatpush1.msra.mxu0 %v2017
    %2047 = vmatprep.subr.mxu0 0.0
    %2048 = vmatpush1.msra.mxu0 %v2016
    %2049 = vmatprep.subr.mxu0 0.0
    %2050 = vmatpush1.msra.mxu0 %v2015
    %2051 = vmatprep.subr.mxu0 0.0
    %2052 = vmatpush2.msra.mxu0 0.0
    %2053 = vmatprep.subr.mxu0 0.0
    %2054 = vmatpush2.msra.mxu0 0.0
    %2055 = vmatprep.subr.mxu0 0.0
    %2056 = vmatpush2.msra.mxu0 0.0
    %2057 = vmatprep.subr.mxu0 0.0
    %2058 = vmatpush2.msra.mxu0 0.0
    %2059 = vmatprep.subr.mxu0 0.0
    %2060 = vmatpush2.msra.mxu0 0.0
    %2061 = vmatprep.subr.mxu0 0.0
    %2062 = vmatpush2.msra.mxu0 0.0
    %2063 = vmatprep.subr.mxu0 0.0
    %2064 = vmatpush2.msra.mxu0 0.0
    %2065 = vmatprep.subr.mxu0 0.0
    %2066 = vmatpush2.msra.mxu0 0.0
    %2067 = vmatprep.subr.mxu0 0.0
    %2068 = vmatpush2.msra.mxu0 0.0
    %2069 = vmatprep.subr.mxu0 0.0
    %2070 = vmatpush2.msra.mxu0 0.0
    %2071 = vmatprep.subr.mxu0 0.0
    %2072 = vmatpush2.msra.mxu0 0.0
    %2073 = vmatprep.subr.mxu0 0.0
    %2074 = vmatpush2.msra.mxu0 0.0
    %2075 = vmatprep.subr.mxu0 0.0
    %2076 = vmatpush2.msra.mxu0 0.0
    %2077 = vmatprep.subr.mxu0 0.0
    %2078 = vmatpush2.msra.mxu0 0.0
    %2079 = vmatprep.subr.mxu0 0.0
    %2080 = vmatpush2.msra.mxu0 0.0
    %2081 = vmatprep.subr.mxu0 0.0
    %2082 = vmatpush2.msra.mxu0 0.0
    %2083 = vmatprep.mubr.f32.mxu0 0.0
    %2084 = vmatmul.mubr.f32.gmra.mxu0 %v1072
    %v2085 = vpop.f32.mrf.mxu0
    %v2086 = vadd.f32 0.0, %v2085
    %v2087 = vpop.f32.mrf.mxu0
    %2088 = vmatprep.mubr.f32.mxu0 0.0
    %2089 = vmatmul.mubr.f32.gmra.mxu0 %v1075
    %v2090 = vpop.f32.mrf.mxu0
    %v2091 = vadd.f32 0.0, %v2090
    %v2092 = vpop.f32.mrf.mxu0
    %2093 = vmatprep.mubr.f32.mxu0 0.0
    %2094 = vmatmul.mubr.f32.gmra.mxu0 %v1078
    %v2095 = vpop.f32.mrf.mxu0
    %v2096 = vadd.f32 0.0, %v2095
    %v2097 = vpop.f32.mrf.mxu0
    %2098 = vmatprep.mubr.f32.mxu0 0.0
    %2099 = vmatmul.mubr.f32.gmra.mxu0 %v1081
    %v2100 = vpop.f32.mrf.mxu0
    %v2101 = vadd.f32 0.0, %v2100
    %v2102 = vpop.f32.mrf.mxu0
    %2103 = vdwg.mxu0
    %2104 = vrot.lane.b32.xlu0 %v1997, 8
    %v2105 = vpop.permute.xlu0 %2104
    %2106 = vrot.lane.b32.xlu0 %v2002, 8
    %v2107 = vpop.permute.xlu0 %2106
    %2108 = vrot.lane.b32.xlu0 %v2007, 8
    %v2109 = vpop.permute.xlu0 %2108
    %2110 = vrot.lane.b32.xlu0 %v2012, 8
    %v2111 = vpop.permute.xlu0 %2110
    %v2112 = vadd.f32 %v1997, %v2105
    %v2113 = vadd.f32 %v2002, %v2107
    %v2114 = vadd.f32 %v2007, %v2109
    %v2115 = vadd.f32 %v2012, %v2111
    %2116 = vrot.lane.b32.xlu0 %v2086, 8
    %v2117 = vpop.permute.xlu0 %2116
    %2118 = vrot.lane.b32.xlu0 %v2091, 8
    %v2119 = vpop.permute.xlu0 %2118
    %2120 = vrot.lane.b32.xlu0 %v2096, 8
    %v2121 = vpop.permute.xlu0 %2120
    %2122 = vrot.lane.b32.xlu0 %v2101, 8
    %v2123 = vpop.permute.xlu0 %2122
    %v2124 = vadd.f32 %v2086, %v2117
    %v2125 = vadd.f32 %v2091, %v2119
    %v2126 = vadd.f32 %v2096, %v2121
    %v2127 = vadd.f32 %v2101, %v2123
    %2128 = vrot.lane.b32.xlu0 %v2112, 16
    %v2129 = vpop.permute.xlu0 %2128
    %2130 = vrot.lane.b32.xlu0 %v2113, 16
    %v2131 = vpop.permute.xlu0 %2130
    %2132 = vrot.lane.b32.xlu0 %v2114, 16
    %v2133 = vpop.permute.xlu0 %2132
    %2134 = vrot.lane.b32.xlu0 %v2115, 16
    %v2135 = vpop.permute.xlu0 %2134
    %v2136 = vadd.f32 %v2112, %v2129
    %v2137 = vadd.f32 %v2113, %v2131
    %v2138 = vadd.f32 %v2114, %v2133
    %v2139 = vadd.f32 %v2115, %v2135
    %2140 = vrot.lane.b32.xlu0 %v2124, 16
    %v2141 = vpop.permute.xlu0 %2140
    %2142 = vrot.lane.b32.xlu0 %v2125, 16
    %v2143 = vpop.permute.xlu0 %2142
    %2144 = vrot.lane.b32.xlu0 %v2126, 16
    %v2145 = vpop.permute.xlu0 %2144
    %2146 = vrot.lane.b32.xlu0 %v2127, 16
    %v2147 = vpop.permute.xlu0 %2146
    %v2148 = vadd.f32 %v2124, %v2141
    %v2149 = vadd.f32 %v2125, %v2143
    %v2150 = vadd.f32 %v2126, %v2145
    %v2151 = vadd.f32 %v2127, %v2147
    %2152 = vrot.lane.b32.xlu0 %v2136, 32
    %v2153 = vpop.permute.xlu0 %2152
    %2154 = vrot.lane.b32.xlu0 %v2137, 32
    %v2155 = vpop.permute.xlu0 %2154
    %2156 = vrot.lane.b32.xlu0 %v2138, 32
    %v2157 = vpop.permute.xlu0 %2156
    %2158 = vrot.lane.b32.xlu0 %v2139, 32
    %v2159 = vpop.permute.xlu0 %2158
    %v2160 = vadd.f32 %v2136, %v2153
    %v2161 = vadd.f32 %v2137, %v2155
    %v2162 = vadd.f32 %v2138, %v2157
    %v2163 = vadd.f32 %v2139, %v2159
    %2164 = vrot.lane.b32.xlu0 %v2148, 32
    %v2165 = vpop.permute.xlu0 %2164
    %2166 = vrot.lane.b32.xlu0 %v2149, 32
    %v2167 = vpop.permute.xlu0 %2166
    %2168 = vrot.lane.b32.xlu0 %v2150, 32
    %v2169 = vpop.permute.xlu0 %2168
    %2170 = vrot.lane.b32.xlu0 %v2151, 32
    %v2171 = vpop.permute.xlu0 %2170
    %v2172 = vadd.f32 %v2148, %v2165
    %v2173 = vadd.f32 %v2149, %v2167
    %v2174 = vadd.f32 %v2150, %v2169
    %v2175 = vadd.f32 %v2151, %v2171
    %2176 = vrot.lane.b32.xlu0 %v2160, 64
    %v2177 = vpop.permute.xlu0 %2176
    %2178 = vrot.lane.b32.xlu0 %v2161, 64
    %v2179 = vpop.permute.xlu0 %2178
    %2180 = vrot.lane.b32.xlu0 %v2162, 64
    %v2181 = vpop.permute.xlu0 %2180
    %2182 = vrot.lane.b32.xlu0 %v2163, 64
    %v2183 = vpop.permute.xlu0 %2182
    %v2184 = vadd.f32 %v2160, %v2177
    %v2185 = vadd.f32 %v2161, %v2179
    %v2186 = vadd.f32 %v2162, %v2181
    %v2187 = vadd.f32 %v2163, %v2183
    %2188 = vrot.lane.b32.xlu0 %v2172, 64
    %v2189 = vpop.permute.xlu0 %2188
    %2190 = vrot.lane.b32.xlu0 %v2173, 64
    %v2191 = vpop.permute.xlu0 %2190
    %2192 = vrot.lane.b32.xlu0 %v2174, 64
    %v2193 = vpop.permute.xlu0 %2192
    %2194 = vrot.lane.b32.xlu0 %v2175, 64
    %v2195 = vpop.permute.xlu0 %2194
    %v2196 = vadd.f32 %v2172, %v2189
    %v2197 = vadd.f32 %v2173, %v2191
    %v2198 = vadd.f32 %v2174, %v2193
    %v2199 = vadd.f32 %v2175, %v2195
    %v2200 = vmul.f32 %v2184, 0.0625
    %v2201 = vmul.f32 %v2185, 0.0625
    %v2202 = vmul.f32 %v2186, 0.0625
    %v2203 = vmul.f32 %v2187, 0.0625
    %v2204 = vmul.f32 %v2196, 0.0625
    %v2205 = vmul.f32 %v2197, 0.0625
    %v2206 = vmul.f32 %v2198, 0.0625
    %v2207 = vmul.f32 %v2199, 0.0625
    %v2208 = vmul.f32 %v2200, %v2200
    %v2209 = vmul.f32 %v2201, %v2201
    %v2210 = vmul.f32 %v2202, %v2202
    %v2211 = vmul.f32 %v2203, %v2203
    %v2212 = vsub.f32 %v2204, %v2208
    %v2213 = vsub.f32 %v2205, %v2209
    %v2214 = vsub.f32 %v2206, %v2210
    %v2215 = vsub.f32 %v2207, %v2211
    %v2216 = vld [vmem:[#allocation16] sm:$0x1]
    %v2217 = vadd.f32 %v2212, 1e-05
    %v2218 = vadd.f32 %v2213, 1e-05
    %v2219 = vadd.f32 %v2214, 1e-05
    %v2220 = vadd.f32 %v2215, 1e-05
    %v2221 = vrsqrt.pop %v2217
    %v2222 = vrsqrt.pop %v2218
    %v2223 = vrsqrt.pop %v2219
    %v2224 = vrsqrt.pop %v2220
    %v2226 = vlaneseq
    %v2227 = vshrl.u32 %v2226, 7
    %v2228 = vsub.s32 0, %v2227
    %v2229 = vrot.slane %v2216, %v2228
    %v2231 = vmul.f32 %v2229, %v2221
    %v2232 = vmul.f32 %v2229, %v2222
    %v2233 = vmul.f32 %v2229, %v2223
    %v2234 = vmul.f32 %v2229, %v2224
    %v2235 = vsub.f32 %v1926, %v2200
    %v2236 = vsub.f32 %v1927, %v2201
    %v2237 = vsub.f32 %v1928, %v2202
    %v2238 = vsub.f32 %v1929, %v2203
    %v2239 = vmul.f32 %v2235, %v2231
    %v2240 = vmul.f32 %v2236, %v2232
    %v2241 = vmul.f32 %v2237, %v2233
    %v2242 = vmul.f32 %v2238, %v2234
    %v2243 = vld [vmem:[#allocation18] sm:$0x1]
    %v2245 = vlaneseq
    %v2246 = vshrl.u32 %v2245, 7
    %v2247 = vsub.s32 0, %v2246
    %v2248 = vrot.slane %v2243, %v2247
    %v2250 = vadd.f32 %v2239, %v2248
    %v2251 = vadd.f32 %v2240, %v2248
    %v2252 = vadd.f32 %v2241, %v2248
    %v2253 = vadd.f32 %v2242, %v2248
    %vm2254 = vcmp.ge.f32.partialorder %v2250, 0.0
    %vm2255 = vcmp.ge.f32.partialorder %v2251, 0.0
    %vm2256 = vcmp.ge.f32.partialorder %v2252, 0.0
    %vm2257 = vcmp.ge.f32.partialorder %v2253, 0.0
    %v2258 = vmul.f32 %v2250, 0.01
    %v2259 = vmul.f32 %v2251, 0.01
    %v2260 = vmul.f32 %v2252, 0.01
    %v2261 = vmul.f32 %v2253, 0.01
    %v2262 = vsel %vm2254, %v2250, %v2258
    %v2263 = vsel %vm2255, %v2251, %v2259
    %v2264 = vsel %vm2256, %v2252, %v2260
    %v2265 = vsel %vm2257, %v2253, %v2261
    %v2266 = vpack.c.bf16 %v2263, %v2262
    %v2267 = vpack.c.bf16 %v2265, %v2264
    %v2268 = vld [vmem:[#allocation4] sm:$0xf]
    %v2269 = vld [vmem:[#allocation4 + $0x4] sm:$0xf]
    %v2272 = vunpack.c.l.b16 %v2268
    %v2273 = vunpack.c.l.b16 %v2269
    %v2274 = vpack.c.b16 %v2273, %v2272
    %v2276 = vsel %vm586, %v2274, 0
    %2278 = vmatprep.subr.bf16.mxu0 0
    %2279 = vmatpush1.bf16.msra.mxu0 0
    %2280 = vmatprep.subr.bf16.mxu0 0
    %2281 = vmatpush1.bf16.msra.mxu0 0
    %2282 = vmatprep.subr.bf16.mxu0 0
    %2283 = vmatpush1.bf16.msra.mxu0 0
    %2284 = vmatprep.subr.bf16.mxu0 0
    %2285 = vmatpush1.bf16.msra.mxu0 0
    %2286 = vmatprep.subr.bf16.mxu0 0
    %2287 = vmatpush1.bf16.msra.mxu0 0
    %2288 = vmatprep.subr.bf16.mxu0 0
    %2289 = vmatpush1.bf16.msra.mxu0 0
    %2290 = vmatprep.subr.bf16.mxu0 0
    %2291 = vmatpush1.bf16.msra.mxu0 %v2267
    %2292 = vmatprep.subr.bf16.mxu0 0
    %2293 = vmatpush1.bf16.msra.mxu0 %v2266
    %2294 = vmatprep.subr.bf16.mxu0 0
    %2295 = vmatpush2.bf16.msra.mxu0 0
    %2296 = vmatprep.subr.bf16.mxu0 0
    %2297 = vmatpush2.bf16.msra.mxu0 0
    %2298 = vmatprep.subr.bf16.mxu0 0
    %2299 = vmatpush2.bf16.msra.mxu0 0
    %2300 = vmatprep.subr.bf16.mxu0 0
    %2301 = vmatpush2.bf16.msra.mxu0 0
    %2302 = vmatprep.subr.bf16.mxu0 0
    %2303 = vmatpush2.bf16.msra.mxu0 0
    %2304 = vmatprep.subr.bf16.mxu0 0
    %2305 = vmatpush2.bf16.msra.mxu0 0
    %2306 = vmatprep.subr.bf16.mxu0 0
    %2307 = vmatpush2.bf16.msra.mxu0 0
    %2308 = vmatprep.subr.bf16.mxu0 0
    %2309 = vmatpush2.bf16.msra.mxu0 0
    %2310 = vmatprep.mubr.bf16.mxu0 0
    %2311 = vmatmul.mubr.bf16.gmra.mxu0 %v2276
    %v2312 = vpop.f32.mrf.mxu0
    %v2313 = vadd.f32 0.0, %v2312
    %v2314 = vpop.f32.mrf.mxu0
    %v2315 = vpop.f32.mrf.mxu0
    %v2316 = vadd.f32 0.0, %v2315
    %v2317 = vpop.f32.mrf.mxu0
    %2318 = vdwg.mxu0
    %v2319 = vpack.c.bf16 %v2316, %v2313
    %v2320 = vld [vmem:[%s39] sm:$0xf]
    %v2321 = vld [vmem:[%s39 + $0x4] sm:$0xf]
    %v2322 = vld [vmem:[%s39 + $0x8] sm:$0xf]
    %v2323 = vld [vmem:[%s39 + $0xc] sm:$0xf]
    %v2324 = vld [vmem:[%s39 + $0x10] sm:$0xf]
    %v2325 = vld [vmem:[%s39 + $0x14] sm:$0xf]
    %v2326 = vld [vmem:[%s39 + $0x18] sm:$0xf]
    %v2327 = vld [vmem:[%s39 + $0x1c] sm:$0xf]
    %v2328 = vld [vmem:[%s39 + $0x20] sm:$0xf]
    %v2329 = vld [vmem:[%s39 + $0x24] sm:$0xf]
    %v2330 = vld [vmem:[%s39 + $0x28] sm:$0xf]
    %v2331 = vld [vmem:[%s39 + $0x2c] sm:$0xf]
    %v2332 = vld [vmem:[%s39 + $0x30] sm:$0xf]
    %v2333 = vld [vmem:[%s39 + $0x34] sm:$0xf]
    %v2334 = vld [vmem:[%s39 + $0x38] sm:$0xf]
    %v2335 = vld [vmem:[%s39 + $0x3c] sm:$0xf]
    %s2336 = scalar_lea.vmem [#allocation4], 8
    %v2337 = vld [vmem:[%s2336] sm:$0xf]
    %v2338 = vld [vmem:[%s2336 + $0x4] sm:$0xf]
    %v2341 = vunpack.c.l.b16 %v2337
    %v2342 = vunpack.c.l.b16 %v2338
    %v2343 = vpack.c.b16 %v2342, %v2341
    %v2345 = vsel %vm586, %v2343, 0
    %2347 = vmatprep.subr.bf16.mxu0 0
    %2348 = vmatpush1.bf16.msra.mxu0 0
    %2349 = vmatprep.subr.bf16.mxu0 0
    %2350 = vmatpush1.bf16.msra.mxu0 0
    %2351 = vmatprep.subr.bf16.mxu0 0
    %2352 = vmatpush1.bf16.msra.mxu0 0
    %2353 = vmatprep.subr.bf16.mxu0 0
    %2354 = vmatpush1.bf16.msra.mxu0 0
    %2355 = vmatprep.subr.bf16.mxu0 0
    %2356 = vmatpush1.bf16.msra.mxu0 0
    %2357 = vmatprep.subr.bf16.mxu0 0
    %2358 = vmatpush1.bf16.msra.mxu0 0
    %2359 = vmatprep.subr.bf16.mxu0 0
    %2360 = vmatpush1.bf16.msra.mxu0 %v2267
    %2361 = vmatprep.subr.bf16.mxu0 0
    %2362 = vmatpush1.bf16.msra.mxu0 %v2266
    %2363 = vmatprep.subr.bf16.mxu0 0
    %2364 = vmatpush2.bf16.msra.mxu0 0
    %2365 = vmatprep.subr.bf16.mxu0 0
    %2366 = vmatpush2.bf16.msra.mxu0 0
    %2367 = vmatprep.subr.bf16.mxu0 0
    %2368 = vmatpush2.bf16.msra.mxu0 0
    %2369 = vmatprep.subr.bf16.mxu0 0
    %2370 = vmatpush2.bf16.msra.mxu0 0
    %2371 = vmatprep.subr.bf16.mxu0 0
    %2372 = vmatpush2.bf16.msra.mxu0 0
    %2373 = vmatprep.subr.bf16.mxu0 0
    %2374 = vmatpush2.bf16.msra.mxu0 0
    %2375 = vmatprep.subr.bf16.mxu0 0
    %2376 = vmatpush2.bf16.msra.mxu0 0
    %2377 = vmatprep.subr.bf16.mxu0 0
    %2378 = vmatpush2.bf16.msra.mxu0 0
    %2379 = vmatprep.mubr.bf16.mxu0 0
    %2380 = vmatmul.mubr.bf16.gmra.mxu0 %v2345
    %v2381 = vpop.f32.mrf.mxu0
    %v2382 = vadd.f32 0.0, %v2381
    %v2383 = vpop.f32.mrf.mxu0
    %v2384 = vpop.f32.mrf.mxu0
    %v2385 = vadd.f32 0.0, %v2384
    %v2386 = vpop.f32.mrf.mxu0
    %2387 = vdwg.mxu0
    %v2388 = vpack.c.bf16 %v2385, %v2382
    %s2389 = scalar_lea.vmem %s39, 64
    %v2390 = vld [vmem:[%s2389] sm:$0xf]
    %v2391 = vld [vmem:[%s2389 + $0x4] sm:$0xf]
    %v2392 = vld [vmem:[%s2389 + $0x8] sm:$0xf]
    %v2393 = vld [vmem:[%s2389 + $0xc] sm:$0xf]
    %v2394 = vld [vmem:[%s2389 + $0x10] sm:$0xf]
    %v2395 = vld [vmem:[%s2389 + $0x14] sm:$0xf]
    %v2396 = vld [vmem:[%s2389 + $0x18] sm:$0xf]
    %v2397 = vld [vmem:[%s2389 + $0x1c] sm:$0xf]
    %v2398 = vld [vmem:[%s2389 + $0x20] sm:$0xf]
    %v2399 = vld [vmem:[%s2389 + $0x24] sm:$0xf]
    %v2400 = vld [vmem:[%s2389 + $0x28] sm:$0xf]
    %v2401 = vld [vmem:[%s2389 + $0x2c] sm:$0xf]
    %v2402 = vld [vmem:[%s2389 + $0x30] sm:$0xf]
    %v2403 = vld [vmem:[%s2389 + $0x34] sm:$0xf]
    %v2404 = vld [vmem:[%s2389 + $0x38] sm:$0xf]
    %v2405 = vld [vmem:[%s2389 + $0x3c] sm:$0xf]
    %v2422 = vunpack.c.l.b16 %v2390
    %v2423 = vunpack.c.l.b16 %v2391
    %v2424 = vunpack.c.l.b16 %v2392
    %v2425 = vunpack.c.l.b16 %v2393
    %v2426 = vunpack.c.l.b16 %v2394
    %v2427 = vunpack.c.l.b16 %v2395
    %v2428 = vunpack.c.l.b16 %v2396
    %v2429 = vunpack.c.l.b16 %v2397
    %v2430 = vunpack.c.l.b16 %v2398
    %v2431 = vunpack.c.l.b16 %v2399
    %v2432 = vunpack.c.l.b16 %v2400
    %v2433 = vunpack.c.l.b16 %v2401
    %v2434 = vunpack.c.l.b16 %v2402
    %v2435 = vunpack.c.l.b16 %v2403
    %v2436 = vunpack.c.l.b16 %v2404
    %v2437 = vunpack.c.l.b16 %v2405
    %v2438 = vpack.c.b16 %v2423, %v2422
    %v2439 = vpack.c.b16 %v2425, %v2424
    %v2440 = vpack.c.b16 %v2427, %v2426
    %v2441 = vpack.c.b16 %v2429, %v2428
    %v2442 = vpack.c.b16 %v2431, %v2430
    %v2443 = vpack.c.b16 %v2433, %v2432
    %v2444 = vpack.c.b16 %v2435, %v2434
    %v2445 = vpack.c.b16 %v2437, %v2436
    %2454 = vmatprep.subr.bf16.mxu0 0
    %2455 = vmatpush1.bf16.msra.mxu0 %v2445
    %2456 = vmatprep.subr.bf16.mxu0 0
    %2457 = vmatpush1.bf16.msra.mxu0 %v2444
    %2458 = vmatprep.subr.bf16.mxu0 0
    %2459 = vmatpush1.bf16.msra.mxu0 %v2443
    %2460 = vmatprep.subr.bf16.mxu0 0
    %2461 = vmatpush1.bf16.msra.mxu0 %v2442
    %2462 = vmatprep.subr.bf16.mxu0 0
    %2463 = vmatpush1.bf16.msra.mxu0 %v2441
    %2464 = vmatprep.subr.bf16.mxu0 0
    %2465 = vmatpush1.bf16.msra.mxu0 %v2440
    %2466 = vmatprep.subr.bf16.mxu0 0
    %2467 = vmatpush1.bf16.msra.mxu0 %v2439
    %2468 = vmatprep.subr.bf16.mxu0 0
    %2469 = vmatpush1.bf16.msra.mxu0 %v2438
    %2470 = vmatprep.subr.bf16.mxu0 0
    %2471 = vmatpush2.bf16.msra.mxu0 0
    %2472 = vmatprep.subr.bf16.mxu0 0
    %2473 = vmatpush2.bf16.msra.mxu0 0
    %2474 = vmatprep.subr.bf16.mxu0 0
    %2475 = vmatpush2.bf16.msra.mxu0 0
    %2476 = vmatprep.subr.bf16.mxu0 0
    %2477 = vmatpush2.bf16.msra.mxu0 0
    %2478 = vmatprep.subr.bf16.mxu0 0
    %2479 = vmatpush2.bf16.msra.mxu0 0
    %2480 = vmatprep.subr.bf16.mxu0 0
    %2481 = vmatpush2.bf16.msra.mxu0 0
    %2482 = vmatprep.subr.bf16.mxu0 0
    %2483 = vmatpush2.bf16.msra.mxu0 0
    %2484 = vmatprep.subr.bf16.mxu0 0
    %2485 = vmatpush2.bf16.msra.mxu0 0
    %2486 = vmatprep.mubr.bf16.mxu0 0
    %2487 = vmatmul.mubr.bf16.gmra.mxu0 %v2388
    %v2488 = vpop.f32.mrf.mxu0
    %v2489 = vadd.f32 0.0, %v2488
    %v2490 = vpop.f32.mrf.mxu0
    %v2491 = vpop.f32.mrf.mxu0
    %v2492 = vadd.f32 0.0, %v2491
    %v2493 = vpop.f32.mrf.mxu0
    %2494 = vdwg.mxu0
    %v2511 = vunpack.c.l.b16 %v2320
    %v2512 = vunpack.c.l.b16 %v2321
    %v2513 = vunpack.c.l.b16 %v2322
    %v2514 = vunpack.c.l.b16 %v2323
    %v2515 = vunpack.c.l.b16 %v2324
    %v2516 = vunpack.c.l.b16 %v2325
    %v2517 = vunpack.c.l.b16 %v2326
    %v2518 = vunpack.c.l.b16 %v2327
    %v2519 = vunpack.c.l.b16 %v2328
    %v2520 = vunpack.c.l.b16 %v2329
    %v2521 = vunpack.c.l.b16 %v2330
    %v2522 = vunpack.c.l.b16 %v2331
    %v2523 = vunpack.c.l.b16 %v2332
    %v2524 = vunpack.c.l.b16 %v2333
    %v2525 = vunpack.c.l.b16 %v2334
    %v2526 = vunpack.c.l.b16 %v2335
    %v2527 = vpack.c.b16 %v2512, %v2511
    %v2528 = vpack.c.b16 %v2514, %v2513
    %v2529 = vpack.c.b16 %v2516, %v2515
    %v2530 = vpack.c.b16 %v2518, %v2517
    %v2531 = vpack.c.b16 %v2520, %v2519
    %v2532 = vpack.c.b16 %v2522, %v2521
    %v2533 = vpack.c.b16 %v2524, %v2523
    %v2534 = vpack.c.b16 %v2526, %v2525
    %2543 = vmatprep.subr.bf16.mxu0 0
    %2544 = vmatpush1.bf16.msra.mxu0 %v2534
    %2545 = vmatprep.subr.bf16.mxu0 0
    %2546 = vmatpush1.bf16.msra.mxu0 %v2533
    %2547 = vmatprep.subr.bf16.mxu0 0
    %2548 = vmatpush1.bf16.msra.mxu0 %v2532
    %2549 = vmatprep.subr.bf16.mxu0 0
    %2550 = vmatpush1.bf16.msra.mxu0 %v2531
    %2551 = vmatprep.subr.bf16.mxu0 0
    %2552 = vmatpush1.bf16.msra.mxu0 %v2530
    %2553 = vmatprep.subr.bf16.mxu0 0
    %2554 = vmatpush1.bf16.msra.mxu0 %v2529
    %2555 = vmatprep.subr.bf16.mxu0 0
    %2556 = vmatpush1.bf16.msra.mxu0 %v2528
    %2557 = vmatprep.subr.bf16.mxu0 0
    %2558 = vmatpush1.bf16.msra.mxu0 %v2527
    %2559 = vmatprep.subr.bf16.mxu0 0
    %2560 = vmatpush2.bf16.msra.mxu0 0
    %2561 = vmatprep.subr.bf16.mxu0 0
    %2562 = vmatpush2.bf16.msra.mxu0 0
    %2563 = vmatprep.subr.bf16.mxu0 0
    %2564 = vmatpush2.bf16.msra.mxu0 0
    %2565 = vmatprep.subr.bf16.mxu0 0
    %2566 = vmatpush2.bf16.msra.mxu0 0
    %2567 = vmatprep.subr.bf16.mxu0 0
    %2568 = vmatpush2.bf16.msra.mxu0 0
    %2569 = vmatprep.subr.bf16.mxu0 0
    %2570 = vmatpush2.bf16.msra.mxu0 0
    %2571 = vmatprep.subr.bf16.mxu0 0
    %2572 = vmatpush2.bf16.msra.mxu0 0
    %2573 = vmatprep.subr.bf16.mxu0 0
    %2574 = vmatpush2.bf16.msra.mxu0 0
    %2575 = vmatprep.mubr.bf16.mxu0 0
    %2576 = vmatmul.mubr.bf16.gmra.mxu0 %v2319
    %v2577 = vpop.f32.mrf.mxu0
    %v2578 = vadd.f32 %v2489, %v2577
    %v2579 = vpop.f32.mrf.mxu0
    %v2580 = vpop.f32.mrf.mxu0
    %v2581 = vadd.f32 %v2492, %v2580
    %v2582 = vpop.f32.mrf.mxu0
    %2583 = vdwg.mxu0
    %s2584 = scalar_lea.vmem [#allocation4], 16
    %v2585 = vld [vmem:[%s2584] sm:$0xf]
    %v2586 = vld [vmem:[%s2584 + $0x4] sm:$0xf]
    %v2589 = vunpack.c.l.b16 %v2585
    %v2590 = vunpack.c.l.b16 %v2586
    %v2591 = vpack.c.b16 %v2590, %v2589
    %v2593 = vsel %vm586, %v2591, 0
    %2595 = vmatprep.subr.bf16.mxu0 0
    %2596 = vmatpush1.bf16.msra.mxu0 0
    %2597 = vmatprep.subr.bf16.mxu0 0
    %2598 = vmatpush1.bf16.msra.mxu0 0
    %2599 = vmatprep.subr.bf16.mxu0 0
    %2600 = vmatpush1.bf16.msra.mxu0 0
    %2601 = vmatprep.subr.bf16.mxu0 0
    %2602 = vmatpush1.bf16.msra.mxu0 0
    %2603 = vmatprep.subr.bf16.mxu0 0
    %2604 = vmatpush1.bf16.msra.mxu0 0
    %2605 = vmatprep.subr.bf16.mxu0 0
    %2606 = vmatpush1.bf16.msra.mxu0 0
    %2607 = vmatprep.subr.bf16.mxu0 0
    %2608 = vmatpush1.bf16.msra.mxu0 %v2267
    %2609 = vmatprep.subr.bf16.mxu0 0
    %2610 = vmatpush1.bf16.msra.mxu0 %v2266
    %2611 = vmatprep.subr.bf16.mxu0 0
    %2612 = vmatpush2.bf16.msra.mxu0 0
    %2613 = vmatprep.subr.bf16.mxu0 0
    %2614 = vmatpush2.bf16.msra.mxu0 0
    %2615 = vmatprep.subr.bf16.mxu0 0
    %2616 = vmatpush2.bf16.msra.mxu0 0
    %2617 = vmatprep.subr.bf16.mxu0 0
    %2618 = vmatpush2.bf16.msra.mxu0 0
    %2619 = vmatprep.subr.bf16.mxu0 0
    %2620 = vmatpush2.bf16.msra.mxu0 0
    %2621 = vmatprep.subr.bf16.mxu0 0
    %2622 = vmatpush2.bf16.msra.mxu0 0
    %2623 = vmatprep.subr.bf16.mxu0 0
    %2624 = vmatpush2.bf16.msra.mxu0 0
    %2625 = vmatprep.subr.bf16.mxu0 0
    %2626 = vmatpush2.bf16.msra.mxu0 0
    %2627 = vmatprep.mubr.bf16.mxu0 0
    %2628 = vmatmul.mubr.bf16.gmra.mxu0 %v2593
    %v2629 = vpop.f32.mrf.mxu0
    %v2630 = vadd.f32 0.0, %v2629
    %v2631 = vpop.f32.mrf.mxu0
    %v2632 = vpop.f32.mrf.mxu0
    %v2633 = vadd.f32 0.0, %v2632
    %v2634 = vpop.f32.mrf.mxu0
    %2635 = vdwg.mxu0
    %v2636 = vpack.c.bf16 %v2633, %v2630
    %s2637 = scalar_lea.vmem %s39, 128
    %v2638 = vld [vmem:[%s2637] sm:$0xf]
    %v2639 = vld [vmem:[%s2637 + $0x4] sm:$0xf]
    %v2640 = vld [vmem:[%s2637 + $0x8] sm:$0xf]
    %v2641 = vld [vmem:[%s2637 + $0xc] sm:$0xf]
    %v2642 = vld [vmem:[%s2637 + $0x10] sm:$0xf]
    %v2643 = vld [vmem:[%s2637 + $0x14] sm:$0xf]
    %v2644 = vld [vmem:[%s2637 + $0x18] sm:$0xf]
    %v2645 = vld [vmem:[%s2637 + $0x1c] sm:$0xf]
    %v2646 = vld [vmem:[%s2637 + $0x20] sm:$0xf]
    %v2647 = vld [vmem:[%s2637 + $0x24] sm:$0xf]
    %v2648 = vld [vmem:[%s2637 + $0x28] sm:$0xf]
    %v2649 = vld [vmem:[%s2637 + $0x2c] sm:$0xf]
    %v2650 = vld [vmem:[%s2637 + $0x30] sm:$0xf]
    %v2651 = vld [vmem:[%s2637 + $0x34] sm:$0xf]
    %v2652 = vld [vmem:[%s2637 + $0x38] sm:$0xf]
    %v2653 = vld [vmem:[%s2637 + $0x3c] sm:$0xf]
    %v2670 = vunpack.c.l.b16 %v2638
    %v2671 = vunpack.c.l.b16 %v2639
    %v2672 = vunpack.c.l.b16 %v2640
    %v2673 = vunpack.c.l.b16 %v2641
    %v2674 = vunpack.c.l.b16 %v2642
    %v2675 = vunpack.c.l.b16 %v2643
    %v2676 = vunpack.c.l.b16 %v2644
    %v2677 = vunpack.c.l.b16 %v2645
    %v2678 = vunpack.c.l.b16 %v2646
    %v2679 = vunpack.c.l.b16 %v2647
    %v2680 = vunpack.c.l.b16 %v2648
    %v2681 = vunpack.c.l.b16 %v2649
    %v2682 = vunpack.c.l.b16 %v2650
    %v2683 = vunpack.c.l.b16 %v2651
    %v2684 = vunpack.c.l.b16 %v2652
    %v2685 = vunpack.c.l.b16 %v2653
    %v2686 = vpack.c.b16 %v2671, %v2670
    %v2687 = vpack.c.b16 %v2673, %v2672
    %v2688 = vpack.c.b16 %v2675, %v2674
    %v2689 = vpack.c.b16 %v2677, %v2676
    %v2690 = vpack.c.b16 %v2679, %v2678
    %v2691 = vpack.c.b16 %v2681, %v2680
    %v2692 = vpack.c.b16 %v2683, %v2682
    %v2693 = vpack.c.b16 %v2685, %v2684
    %2702 = vmatprep.subr.bf16.mxu0 0
    %2703 = vmatpush1.bf16.msra.mxu0 %v2693
    %2704 = vmatprep.subr.bf16.mxu0 0
    %2705 = vmatpush1.bf16.msra.mxu0 %v2692
    %2706 = vmatprep.subr.bf16.mxu0 0
    %2707 = vmatpush1.bf16.msra.mxu0 %v2691
    %2708 = vmatprep.subr.bf16.mxu0 0
    %2709 = vmatpush1.bf16.msra.mxu0 %v2690
    %2710 = vmatprep.subr.bf16.mxu0 0
    %2711 = vmatpush1.bf16.msra.mxu0 %v2689
    %2712 = vmatprep.subr.bf16.mxu0 0
    %2713 = vmatpush1.bf16.msra.mxu0 %v2688
    %2714 = vmatprep.subr.bf16.mxu0 0
    %2715 = vmatpush1.bf16.msra.mxu0 %v2687
    %2716 = vmatprep.subr.bf16.mxu0 0
    %2717 = vmatpush1.bf16.msra.mxu0 %v2686
    %2718 = vmatprep.subr.bf16.mxu0 0
    %2719 = vmatpush2.bf16.msra.mxu0 0
    %2720 = vmatprep.subr.bf16.mxu0 0
    %2721 = vmatpush2.bf16.msra.mxu0 0
    %2722 = vmatprep.subr.bf16.mxu0 0
    %2723 = vmatpush2.bf16.msra.mxu0 0
    %2724 = vmatprep.subr.bf16.mxu0 0
    %2725 = vmatpush2.bf16.msra.mxu0 0
    %2726 = vmatprep.subr.bf16.mxu0 0
    %2727 = vmatpush2.bf16.msra.mxu0 0
    %2728 = vmatprep.subr.bf16.mxu0 0
    %2729 = vmatpush2.bf16.msra.mxu0 0
    %2730 = vmatprep.subr.bf16.mxu0 0
    %2731 = vmatpush2.bf16.msra.mxu0 0
    %2732 = vmatprep.subr.bf16.mxu0 0
    %2733 = vmatpush2.bf16.msra.mxu0 0
    %2734 = vmatprep.mubr.bf16.mxu0 0
    %2735 = vmatmul.mubr.bf16.gmra.mxu0 %v2636
    %v2736 = vpop.f32.mrf.mxu0
    %v2737 = vadd.f32 0.0, %v2736
    %v2738 = vpop.f32.mrf.mxu0
    %v2739 = vpop.f32.mrf.mxu0
    %v2740 = vadd.f32 0.0, %v2739
    %v2741 = vpop.f32.mrf.mxu0
    %2742 = vdwg.mxu0
    %v2743 = vadd.f32 %v2578, %v2737
    %v2744 = vadd.f32 %v2581, %v2740
    %v2745 = vld [vmem:[#allocation19] sm:$0x1]
    %v2747 = vlaneseq
    %v2748 = vshrl.u32 %v2747, 7
    %v2749 = vsub.s32 0, %v2748
    %v2750 = vrot.slane %v2745, %v2749
    %v2752 = vadd.f32 %v2743, %v2750
    %v2753 = vadd.f32 %v2744, %v2750
    %v2754 = vld [vmem:[#allocation12] sm:$0xff]
    %v2755 = vld [vmem:[#allocation12 + $0x8] sm:$0xff]
    %vm2756 = vcmask 130048
    %v2758 = vsel %vm2756, %v2754, 0
    %v2761 = vsel %vm2756, %v2755, 0
    %2763 = vmatprep.subr.mxu0 0.0
    %2764 = vmatpush1.msra.mxu0 0.0
    %2765 = vmatprep.subr.mxu0 0.0
    %2766 = vmatpush1.msra.mxu0 0.0
    %2767 = vmatprep.subr.mxu0 0.0
    %2768 = vmatpush1.msra.mxu0 0.0
    %2769 = vmatprep.subr.mxu0 0.0
    %2770 = vmatpush1.msra.mxu0 0.0
    %2771 = vmatprep.subr.mxu0 0.0
    %2772 = vmatpush1.msra.mxu0 0.0
    %2773 = vmatprep.subr.mxu0 0.0
    %2774 = vmatpush1.msra.mxu0 0.0
    %2775 = vmatprep.subr.mxu0 0.0
    %2776 = vmatpush1.msra.mxu0 0.0
    %2777 = vmatprep.subr.mxu0 0.0
    %2778 = vmatpush1.msra.mxu0 0.0
    %2779 = vmatprep.subr.mxu0 0.0
    %2780 = vmatpush1.msra.mxu0 0.0
    %2781 = vmatprep.subr.mxu0 0.0
    %2782 = vmatpush1.msra.mxu0 0.0
    %2783 = vmatprep.subr.mxu0 0.0
    %2784 = vmatpush1.msra.mxu0 0.0
    %2785 = vmatprep.subr.mxu0 0.0
    %2786 = vmatpush1.msra.mxu0 0.0
    %2787 = vmatprep.subr.mxu0 0.0
    %2788 = vmatpush1.msra.mxu0 0.0
    %2789 = vmatprep.subr.mxu0 0.0
    %2790 = vmatpush1.msra.mxu0 0.0
    %2791 = vmatprep.subr.mxu0 0.0
    %2792 = vmatpush1.msra.mxu0 %v2753
    %2793 = vmatprep.subr.mxu0 0.0
    %2794 = vmatpush1.msra.mxu0 %v2752
    %2795 = vmatprep.subr.mxu0 0.0
    %2796 = vmatpush2.msra.mxu0 0.0
    %2797 = vmatprep.subr.mxu0 0.0
    %2798 = vmatpush2.msra.mxu0 0.0
    %2799 = vmatprep.subr.mxu0 0.0
    %2800 = vmatpush2.msra.mxu0 0.0
    %2801 = vmatprep.subr.mxu0 0.0
    %2802 = vmatpush2.msra.mxu0 0.0
    %2803 = vmatprep.subr.mxu0 0.0
    %2804 = vmatpush2.msra.mxu0 0.0
    %2805 = vmatprep.subr.mxu0 0.0
    %2806 = vmatpush2.msra.mxu0 0.0
    %2807 = vmatprep.subr.mxu0 0.0
    %2808 = vmatpush2.msra.mxu0 0.0
    %2809 = vmatprep.subr.mxu0 0.0
    %2810 = vmatpush2.msra.mxu0 0.0
    %2811 = vmatprep.subr.mxu0 0.0
    %2812 = vmatpush2.msra.mxu0 0.0
    %2813 = vmatprep.subr.mxu0 0.0
    %2814 = vmatpush2.msra.mxu0 0.0
    %2815 = vmatprep.subr.mxu0 0.0
    %2816 = vmatpush2.msra.mxu0 0.0
    %2817 = vmatprep.subr.mxu0 0.0
    %2818 = vmatpush2.msra.mxu0 0.0
    %2819 = vmatprep.subr.mxu0 0.0
    %2820 = vmatpush2.msra.mxu0 0.0
    %2821 = vmatprep.subr.mxu0 0.0
    %2822 = vmatpush2.msra.mxu0 0.0
    %2823 = vmatprep.subr.mxu0 0.0
    %2824 = vmatpush2.msra.mxu0 0.0
    %2825 = vmatprep.subr.mxu0 0.0
    %2826 = vmatpush2.msra.mxu0 0.0
    %2827 = vmatprep.mubr.f32.mxu0 0.0
    %2828 = vmatmul.mubr.f32.gmra.mxu0 %v2758
    %v2829 = vpop.f32.mrf.mxu0
    %v2830 = vadd.f32 0.0, %v2829
    %v2831 = vpop.f32.mrf.mxu0
    %2832 = vmatprep.mubr.f32.mxu0 0.0
    %2833 = vmatmul.mubr.f32.gmra.mxu0 %v2761
    %v2834 = vpop.f32.mrf.mxu0
    %v2835 = vadd.f32 0.0, %v2834
    %v2836 = vpop.f32.mrf.mxu0
    %2837 = vdwg.mxu0
    %v2838 = vmul.f32 %v2752, %v2752
    %v2839 = vmul.f32 %v2753, %v2753
    %2840 = vmatprep.subr.mxu0 0.0
    %2841 = vmatpush1.msra.mxu0 0.0
    %2842 = vmatprep.subr.mxu0 0.0
    %2843 = vmatpush1.msra.mxu0 0.0
    %2844 = vmatprep.subr.mxu0 0.0
    %2845 = vmatpush1.msra.mxu0 0.0
    %2846 = vmatprep.subr.mxu0 0.0
    %2847 = vmatpush1.msra.mxu0 0.0
    %2848 = vmatprep.subr.mxu0 0.0
    %2849 = vmatpush1.msra.mxu0 0.0
    %2850 = vmatprep.subr.mxu0 0.0
    %2851 = vmatpush1.msra.mxu0 0.0
    %2852 = vmatprep.subr.mxu0 0.0
    %2853 = vmatpush1.msra.mxu0 0.0
    %2854 = vmatprep.subr.mxu0 0.0
    %2855 = vmatpush1.msra.mxu0 0.0
    %2856 = vmatprep.subr.mxu0 0.0
    %2857 = vmatpush1.msra.mxu0 0.0
    %2858 = vmatprep.subr.mxu0 0.0
    %2859 = vmatpush1.msra.mxu0 0.0
    %2860 = vmatprep.subr.mxu0 0.0
    %2861 = vmatpush1.msra.mxu0 0.0
    %2862 = vmatprep.subr.mxu0 0.0
    %2863 = vmatpush1.msra.mxu0 0.0
    %2864 = vmatprep.subr.mxu0 0.0
    %2865 = vmatpush1.msra.mxu0 0.0
    %2866 = vmatprep.subr.mxu0 0.0
    %2867 = vmatpush1.msra.mxu0 0.0
    %2868 = vmatprep.subr.mxu0 0.0
    %2869 = vmatpush1.msra.mxu0 %v2839
    %2870 = vmatprep.subr.mxu0 0.0
    %2871 = vmatpush1.msra.mxu0 %v2838
    %2872 = vmatprep.subr.mxu0 0.0
    %2873 = vmatpush2.msra.mxu0 0.0
    %2874 = vmatprep.subr.mxu0 0.0
    %2875 = vmatpush2.msra.mxu0 0.0
    %2876 = vmatprep.subr.mxu0 0.0
    %2877 = vmatpush2.msra.mxu0 0.0
    %2878 = vmatprep.subr.mxu0 0.0
    %2879 = vmatpush2.msra.mxu0 0.0
    %2880 = vmatprep.subr.mxu0 0.0
    %2881 = vmatpush2.msra.mxu0 0.0
    %2882 = vmatprep.subr.mxu0 0.0
    %2883 = vmatpush2.msra.mxu0 0.0
    %2884 = vmatprep.subr.mxu0 0.0
    %2885 = vmatpush2.msra.mxu0 0.0
    %2886 = vmatprep.subr.mxu0 0.0
    %2887 = vmatpush2.msra.mxu0 0.0
    %2888 = vmatprep.subr.mxu0 0.0
    %2889 = vmatpush2.msra.mxu0 0.0
    %2890 = vmatprep.subr.mxu0 0.0
    %2891 = vmatpush2.msra.mxu0 0.0
    %2892 = vmatprep.subr.mxu0 0.0
    %2893 = vmatpush2.msra.mxu0 0.0
    %2894 = vmatprep.subr.mxu0 0.0
    %2895 = vmatpush2.msra.mxu0 0.0
    %2896 = vmatprep.subr.mxu0 0.0
    %2897 = vmatpush2.msra.mxu0 0.0
    %2898 = vmatprep.subr.mxu0 0.0
    %2899 = vmatpush2.msra.mxu0 0.0
    %2900 = vmatprep.subr.mxu0 0.0
    %2901 = vmatpush2.msra.mxu0 0.0
    %2902 = vmatprep.subr.mxu0 0.0
    %2903 = vmatpush2.msra.mxu0 0.0
    %2904 = vmatprep.mubr.f32.mxu0 0.0
    %2905 = vmatmul.mubr.f32.gmra.mxu0 %v2758
    %v2906 = vpop.f32.mrf.mxu0
    %v2907 = vadd.f32 0.0, %v2906
    %v2908 = vpop.f32.mrf.mxu0
    %2909 = vmatprep.mubr.f32.mxu0 0.0
    %2910 = vmatmul.mubr.f32.gmra.mxu0 %v2761
    %v2911 = vpop.f32.mrf.mxu0
    %v2912 = vadd.f32 0.0, %v2911
    %v2913 = vpop.f32.mrf.mxu0
    %2914 = vdwg.mxu0
    %2915 = vrot.lane.b32.xlu0 %v2830, 16
    %v2916 = vpop.permute.xlu0 %2915
    %2917 = vrot.lane.b32.xlu0 %v2835, 16
    %v2918 = vpop.permute.xlu0 %2917
    %v2919 = vadd.f32 %v2830, %v2916
    %v2920 = vadd.f32 %v2835, %v2918
    %2921 = vrot.lane.b32.xlu0 %v2907, 16
    %v2922 = vpop.permute.xlu0 %2921
    %2923 = vrot.lane.b32.xlu0 %v2912, 16
    %v2924 = vpop.permute.xlu0 %2923
    %v2925 = vadd.f32 %v2907, %v2922
    %v2926 = vadd.f32 %v2912, %v2924
    %2927 = vrot.lane.b32.xlu0 %v2919, 32
    %v2928 = vpop.permute.xlu0 %2927
    %2929 = vrot.lane.b32.xlu0 %v2920, 32
    %v2930 = vpop.permute.xlu0 %2929
    %v2931 = vadd.f32 %v2919, %v2928
    %v2932 = vadd.f32 %v2920, %v2930
    %2933 = vrot.lane.b32.xlu0 %v2925, 32
    %v2934 = vpop.permute.xlu0 %2933
    %2935 = vrot.lane.b32.xlu0 %v2926, 32
    %v2936 = vpop.permute.xlu0 %2935
    %v2937 = vadd.f32 %v2925, %v2934
    %v2938 = vadd.f32 %v2926, %v2936
    %2939 = vrot.lane.b32.xlu0 %v2931, 64
    %v2940 = vpop.permute.xlu0 %2939
    %2941 = vrot.lane.b32.xlu0 %v2932, 64
    %v2942 = vpop.permute.xlu0 %2941
    %v2943 = vadd.f32 %v2931, %v2940
    %v2944 = vadd.f32 %v2932, %v2942
    %2945 = vrot.lane.b32.xlu0 %v2937, 64
    %v2946 = vpop.permute.xlu0 %2945
    %2947 = vrot.lane.b32.xlu0 %v2938, 64
    %v2948 = vpop.permute.xlu0 %2947
    %v2949 = vadd.f32 %v2937, %v2946
    %v2950 = vadd.f32 %v2938, %v2948
    %v2951 = vmul.f32 %v2943, 0.125
    %v2952 = vmul.f32 %v2944, 0.125
    %v2953 = vmul.f32 %v2949, 0.125
    %v2954 = vmul.f32 %v2950, 0.125
    %v2955 = vmul.f32 %v2951, %v2951
    %v2956 = vmul.f32 %v2952, %v2952
    %v2957 = vsub.f32 %v2953, %v2955
    %v2958 = vsub.f32 %v2954, %v2956
    %v2959 = vld [vmem:[#allocation21] sm:$0x1]
    %v2960 = vadd.f32 %v2957, 1e-05
    %v2961 = vadd.f32 %v2958, 1e-05
    %v2962 = vrsqrt.pop %v2960
    %v2963 = vrsqrt.pop %v2961
    %v2965 = vlaneseq
    %v2966 = vshrl.u32 %v2965, 7
    %v2967 = vsub.s32 0, %v2966
    %v2968 = vrot.slane %v2959, %v2967
    %v2970 = vmul.f32 %v2968, %v2962
    %v2971 = vmul.f32 %v2968, %v2963
    %v2972 = vsub.f32 %v2752, %v2951
    %v2973 = vsub.f32 %v2753, %v2952
    %v2974 = vmul.f32 %v2972, %v2970
    %v2975 = vmul.f32 %v2973, %v2971
    %v2976 = vld [vmem:[#allocation22] sm:$0x1]
    %v2978 = vlaneseq
    %v2979 = vshrl.u32 %v2978, 7
    %v2980 = vsub.s32 0, %v2979
    %v2981 = vrot.slane %v2976, %v2980
    %v2983 = vadd.f32 %v2974, %v2981
    %v2984 = vadd.f32 %v2975, %v2981
    %vm2985 = vcmp.ge.f32.partialorder %v2983, 0.0
    %vm2986 = vcmp.ge.f32.partialorder %v2984, 0.0
    %v2987 = vmul.f32 %v2983, 0.01
    %v2988 = vmul.f32 %v2984, 0.01
    %v2989 = vsel %vm2985, %v2983, %v2987
    %v2990 = vsel %vm2986, %v2984, %v2988
    %v2991 = vpack.c.bf16 %v2990, %v2989
    %v2992 = vld [vmem:[#allocation6] sm:$0xf]
    %v2993 = vld [vmem:[#allocation6 + $0x4] sm:$0xf]
    %v2996 = vunpack.c.l.b16 %v2992
    %v2997 = vunpack.c.l.b16 %v2993
    %v2998 = vpack.c.b16 %v2997, %v2996
    %v3000 = vsel %vm2756, %v2998, 0
    %3002 = vmatprep.subr.bf16.mxu0 0
    %3003 = vmatpush1.bf16.msra.mxu0 0
    %3004 = vmatprep.subr.bf16.mxu0 0
    %3005 = vmatpush1.bf16.msra.mxu0 0
    %3006 = vmatprep.subr.bf16.mxu0 0
    %3007 = vmatpush1.bf16.msra.mxu0 0
    %3008 = vmatprep.subr.bf16.mxu0 0
    %3009 = vmatpush1.bf16.msra.mxu0 0
    %3010 = vmatprep.subr.bf16.mxu0 0
    %3011 = vmatpush1.bf16.msra.mxu0 0
    %3012 = vmatprep.subr.bf16.mxu0 0
    %3013 = vmatpush1.bf16.msra.mxu0 0
    %3014 = vmatprep.subr.bf16.mxu0 0
    %3015 = vmatpush1.bf16.msra.mxu0 0
    %3016 = vmatprep.subr.bf16.mxu0 0
    %3017 = vmatpush1.bf16.msra.mxu0 %v2991
    %3018 = vmatprep.subr.bf16.mxu0 0
    %3019 = vmatpush2.bf16.msra.mxu0 0
    %3020 = vmatprep.subr.bf16.mxu0 0
    %3021 = vmatpush2.bf16.msra.mxu0 0
    %3022 = vmatprep.subr.bf16.mxu0 0
    %3023 = vmatpush2.bf16.msra.mxu0 0
    %3024 = vmatprep.subr.bf16.mxu0 0
    %3025 = vmatpush2.bf16.msra.mxu0 0
    %3026 = vmatprep.subr.bf16.mxu0 0
    %3027 = vmatpush2.bf16.msra.mxu0 0
    %3028 = vmatprep.subr.bf16.mxu0 0
    %3029 = vmatpush2.bf16.msra.mxu0 0
    %3030 = vmatprep.subr.bf16.mxu0 0
    %3031 = vmatpush2.bf16.msra.mxu0 0
    %3032 = vmatprep.subr.bf16.mxu0 0
    %3033 = vmatpush2.bf16.msra.mxu0 0
    %3034 = vmatprep.mubr.bf16.mxu0 0
    %3035 = vmatmul.mubr.bf16.gmra.mxu0 %v3000
    %v3036 = vpop.f32.mrf.mxu0
    %v3037 = vadd.f32 0.0, %v3036
    %v3038 = vpop.f32.mrf.mxu0
    %v3039 = vpop.f32.mrf.mxu0
    %v3040 = vadd.f32 0.0, %v3039
    %v3041 = vpop.f32.mrf.mxu0
    %3042 = vdwg.mxu0
    %v3043 = vpack.c.bf16 %v3040, %v3037
    %v3044 = vld [vmem:[%s47] sm:$0xf]
    %v3045 = vld [vmem:[%s47 + $0x4] sm:$0xf]
    %v3046 = vld [vmem:[%s47 + $0x8] sm:$0xf]
    %v3047 = vld [vmem:[%s47 + $0xc] sm:$0xf]
    %v3048 = vld [vmem:[%s47 + $0x10] sm:$0xf]
    %v3049 = vld [vmem:[%s47 + $0x14] sm:$0xf]
    %v3050 = vld [vmem:[%s47 + $0x18] sm:$0xf]
    %v3051 = vld [vmem:[%s47 + $0x1c] sm:$0xf]
    %v3052 = vld [vmem:[%s47 + $0x20] sm:$0xf]
    %v3053 = vld [vmem:[%s47 + $0x24] sm:$0xf]
    %v3054 = vld [vmem:[%s47 + $0x28] sm:$0xf]
    %v3055 = vld [vmem:[%s47 + $0x2c] sm:$0xf]
    %v3056 = vld [vmem:[%s47 + $0x30] sm:$0xf]
    %v3057 = vld [vmem:[%s47 + $0x34] sm:$0xf]
    %v3058 = vld [vmem:[%s47 + $0x38] sm:$0xf]
    %v3059 = vld [vmem:[%s47 + $0x3c] sm:$0xf]
    %s3060 = scalar_lea.vmem [#allocation6], 8
    %v3061 = vld [vmem:[%s3060] sm:$0xf]
    %v3062 = vld [vmem:[%s3060 + $0x4] sm:$0xf]
    %v3065 = vunpack.c.l.b16 %v3061
    %v3066 = vunpack.c.l.b16 %v3062
    %v3067 = vpack.c.b16 %v3066, %v3065
    %v3069 = vsel %vm2756, %v3067, 0
    %3071 = vmatprep.subr.bf16.mxu0 0
    %3072 = vmatpush1.bf16.msra.mxu0 0
    %3073 = vmatprep.subr.bf16.mxu0 0
    %3074 = vmatpush1.bf16.msra.mxu0 0
    %3075 = vmatprep.subr.bf16.mxu0 0
    %3076 = vmatpush1.bf16.msra.mxu0 0
    %3077 = vmatprep.subr.bf16.mxu0 0
    %3078 = vmatpush1.bf16.msra.mxu0 0
    %3079 = vmatprep.subr.bf16.mxu0 0
    %3080 = vmatpush1.bf16.msra.mxu0 0
    %3081 = vmatprep.subr.bf16.mxu0 0
    %3082 = vmatpush1.bf16.msra.mxu0 0
    %3083 = vmatprep.subr.bf16.mxu0 0
    %3084 = vmatpush1.bf16.msra.mxu0 0
    %3085 = vmatprep.subr.bf16.mxu0 0
    %3086 = vmatpush1.bf16.msra.mxu0 %v2991
    %3087 = vmatprep.subr.bf16.mxu0 0
    %3088 = vmatpush2.bf16.msra.mxu0 0
    %3089 = vmatprep.subr.bf16.mxu0 0
    %3090 = vmatpush2.bf16.msra.mxu0 0
    %3091 = vmatprep.subr.bf16.mxu0 0
    %3092 = vmatpush2.bf16.msra.mxu0 0
    %3093 = vmatprep.subr.bf16.mxu0 0
    %3094 = vmatpush2.bf16.msra.mxu0 0
    %3095 = vmatprep.subr.bf16.mxu0 0
    %3096 = vmatpush2.bf16.msra.mxu0 0
    %3097 = vmatprep.subr.bf16.mxu0 0
    %3098 = vmatpush2.bf16.msra.mxu0 0
    %3099 = vmatprep.subr.bf16.mxu0 0
    %3100 = vmatpush2.bf16.msra.mxu0 0
    %3101 = vmatprep.subr.bf16.mxu0 0
    %3102 = vmatpush2.bf16.msra.mxu0 0
    %3103 = vmatprep.mubr.bf16.mxu0 0
    %3104 = vmatmul.mubr.bf16.gmra.mxu0 %v3069
    %v3105 = vpop.f32.mrf.mxu0
    %v3106 = vadd.f32 0.0, %v3105
    %v3107 = vpop.f32.mrf.mxu0
    %v3108 = vpop.f32.mrf.mxu0
    %v3109 = vadd.f32 0.0, %v3108
    %v3110 = vpop.f32.mrf.mxu0
    %3111 = vdwg.mxu0
    %v3112 = vpack.c.bf16 %v3109, %v3106
    %s3113 = scalar_lea.vmem %s47, 64
    %v3114 = vld [vmem:[%s3113] sm:$0xf]
    %v3115 = vld [vmem:[%s3113 + $0x4] sm:$0xf]
    %v3116 = vld [vmem:[%s3113 + $0x8] sm:$0xf]
    %v3117 = vld [vmem:[%s3113 + $0xc] sm:$0xf]
    %v3118 = vld [vmem:[%s3113 + $0x10] sm:$0xf]
    %v3119 = vld [vmem:[%s3113 + $0x14] sm:$0xf]
    %v3120 = vld [vmem:[%s3113 + $0x18] sm:$0xf]
    %v3121 = vld [vmem:[%s3113 + $0x1c] sm:$0xf]
    %v3122 = vld [vmem:[%s3113 + $0x20] sm:$0xf]
    %v3123 = vld [vmem:[%s3113 + $0x24] sm:$0xf]
    %v3124 = vld [vmem:[%s3113 + $0x28] sm:$0xf]
    %v3125 = vld [vmem:[%s3113 + $0x2c] sm:$0xf]
    %v3126 = vld [vmem:[%s3113 + $0x30] sm:$0xf]
    %v3127 = vld [vmem:[%s3113 + $0x34] sm:$0xf]
    %v3128 = vld [vmem:[%s3113 + $0x38] sm:$0xf]
    %v3129 = vld [vmem:[%s3113 + $0x3c] sm:$0xf]
    %v3146 = vunpack.c.l.b16 %v3114
    %v3147 = vunpack.c.l.b16 %v3115
    %v3148 = vunpack.c.l.b16 %v3116
    %v3149 = vunpack.c.l.b16 %v3117
    %v3150 = vunpack.c.l.b16 %v3118
    %v3151 = vunpack.c.l.b16 %v3119
    %v3152 = vunpack.c.l.b16 %v3120
    %v3153 = vunpack.c.l.b16 %v3121
    %v3154 = vunpack.c.l.b16 %v3122
    %v3155 = vunpack.c.l.b16 %v3123
    %v3156 = vunpack.c.l.b16 %v3124
    %v3157 = vunpack.c.l.b16 %v3125
    %v3158 = vunpack.c.l.b16 %v3126
    %v3159 = vunpack.c.l.b16 %v3127
    %v3160 = vunpack.c.l.b16 %v3128
    %v3161 = vunpack.c.l.b16 %v3129
    %v3162 = vpack.c.b16 %v3147, %v3146
    %v3163 = vpack.c.b16 %v3149, %v3148
    %v3164 = vpack.c.b16 %v3151, %v3150
    %v3165 = vpack.c.b16 %v3153, %v3152
    %v3166 = vpack.c.b16 %v3155, %v3154
    %v3167 = vpack.c.b16 %v3157, %v3156
    %v3168 = vpack.c.b16 %v3159, %v3158
    %v3169 = vpack.c.b16 %v3161, %v3160
    %3178 = vmatprep.subr.bf16.mxu0 0
    %3179 = vmatpush1.bf16.msra.mxu0 %v3169
    %3180 = vmatprep.subr.bf16.mxu0 0
    %3181 = vmatpush1.bf16.msra.mxu0 %v3168
    %3182 = vmatprep.subr.bf16.mxu0 0
    %3183 = vmatpush1.bf16.msra.mxu0 %v3167
    %3184 = vmatprep.subr.bf16.mxu0 0
    %3185 = vmatpush1.bf16.msra.mxu0 %v3166
    %3186 = vmatprep.subr.bf16.mxu0 0
    %3187 = vmatpush1.bf16.msra.mxu0 %v3165
    %3188 = vmatprep.subr.bf16.mxu0 0
    %3189 = vmatpush1.bf16.msra.mxu0 %v3164
    %3190 = vmatprep.subr.bf16.mxu0 0
    %3191 = vmatpush1.bf16.msra.mxu0 %v3163
    %3192 = vmatprep.subr.bf16.mxu0 0
    %3193 = vmatpush1.bf16.msra.mxu0 %v3162
    %3194 = vmatprep.subr.bf16.mxu0 0
    %3195 = vmatpush2.bf16.msra.mxu0 0
    %3196 = vmatprep.subr.bf16.mxu0 0
    %3197 = vmatpush2.bf16.msra.mxu0 0
    %3198 = vmatprep.subr.bf16.mxu0 0
    %3199 = vmatpush2.bf16.msra.mxu0 0
    %3200 = vmatprep.subr.bf16.mxu0 0
    %3201 = vmatpush2.bf16.msra.mxu0 0
    %3202 = vmatprep.subr.bf16.mxu0 0
    %3203 = vmatpush2.bf16.msra.mxu0 0
    %3204 = vmatprep.subr.bf16.mxu0 0
    %3205 = vmatpush2.bf16.msra.mxu0 0
    %3206 = vmatprep.subr.bf16.mxu0 0
    %3207 = vmatpush2.bf16.msra.mxu0 0
    %3208 = vmatprep.subr.bf16.mxu0 0
    %3209 = vmatpush2.bf16.msra.mxu0 0
    %3210 = vmatprep.mubr.bf16.mxu0 0
    %3211 = vmatmul.mubr.bf16.gmra.mxu0 %v3112
    %v3212 = vpop.f32.mrf.mxu0
    %v3213 = vadd.f32 0.0, %v3212
    %v3214 = vpop.f32.mrf.mxu0
    %v3215 = vpop.f32.mrf.mxu0
    %v3216 = vadd.f32 0.0, %v3215
    %v3217 = vpop.f32.mrf.mxu0
    %3218 = vdwg.mxu0
    %v3235 = vunpack.c.l.b16 %v3044
    %v3236 = vunpack.c.l.b16 %v3045
    %v3237 = vunpack.c.l.b16 %v3046
    %v3238 = vunpack.c.l.b16 %v3047
    %v3239 = vunpack.c.l.b16 %v3048
    %v3240 = vunpack.c.l.b16 %v3049
    %v3241 = vunpack.c.l.b16 %v3050
    %v3242 = vunpack.c.l.b16 %v3051
    %v3243 = vunpack.c.l.b16 %v3052
    %v3244 = vunpack.c.l.b16 %v3053
    %v3245 = vunpack.c.l.b16 %v3054
    %v3246 = vunpack.c.l.b16 %v3055
    %v3247 = vunpack.c.l.b16 %v3056
    %v3248 = vunpack.c.l.b16 %v3057
    %v3249 = vunpack.c.l.b16 %v3058
    %v3250 = vunpack.c.l.b16 %v3059
    %v3251 = vpack.c.b16 %v3236, %v3235
    %v3252 = vpack.c.b16 %v3238, %v3237
    %v3253 = vpack.c.b16 %v3240, %v3239
    %v3254 = vpack.c.b16 %v3242, %v3241
    %v3255 = vpack.c.b16 %v3244, %v3243
    %v3256 = vpack.c.b16 %v3246, %v3245
    %v3257 = vpack.c.b16 %v3248, %v3247
    %v3258 = vpack.c.b16 %v3250, %v3249
    %3267 = vmatprep.subr.bf16.mxu0 0
    %3268 = vmatpush1.bf16.msra.mxu0 %v3258
    %3269 = vmatprep.subr.bf16.mxu0 0
    %3270 = vmatpush1.bf16.msra.mxu0 %v3257
    %3271 = vmatprep.subr.bf16.mxu0 0
    %3272 = vmatpush1.bf16.msra.mxu0 %v3256
    %3273 = vmatprep.subr.bf16.mxu0 0
    %3274 = vmatpush1.bf16.msra.mxu0 %v3255
    %3275 = vmatprep.subr.bf16.mxu0 0
    %3276 = vmatpush1.bf16.msra.mxu0 %v3254
    %3277 = vmatprep.subr.bf16.mxu0 0
    %3278 = vmatpush1.bf16.msra.mxu0 %v3253
    %3279 = vmatprep.subr.bf16.mxu0 0
    %3280 = vmatpush1.bf16.msra.mxu0 %v3252
    %3281 = vmatprep.subr.bf16.mxu0 0
    %3282 = vmatpush1.bf16.msra.mxu0 %v3251
    %3283 = vmatprep.subr.bf16.mxu0 0
    %3284 = vmatpush2.bf16.msra.mxu0 0
    %3285 = vmatprep.subr.bf16.mxu0 0
    %3286 = vmatpush2.bf16.msra.mxu0 0
    %3287 = vmatprep.subr.bf16.mxu0 0
    %3288 = vmatpush2.bf16.msra.mxu0 0
    %3289 = vmatprep.subr.bf16.mxu0 0
    %3290 = vmatpush2.bf16.msra.mxu0 0
    %3291 = vmatprep.subr.bf16.mxu0 0
    %3292 = vmatpush2.bf16.msra.mxu0 0
    %3293 = vmatprep.subr.bf16.mxu0 0
    %3294 = vmatpush2.bf16.msra.mxu0 0
    %3295 = vmatprep.subr.bf16.mxu0 0
    %3296 = vmatpush2.bf16.msra.mxu0 0
    %3297 = vmatprep.subr.bf16.mxu0 0
    %3298 = vmatpush2.bf16.msra.mxu0 0
    %3299 = vmatprep.mubr.bf16.mxu0 0
    %3300 = vmatmul.mubr.bf16.gmra.mxu0 %v3043
    %v3301 = vpop.f32.mrf.mxu0
    %v3302 = vadd.f32 %v3213, %v3301
    %v3303 = vpop.f32.mrf.mxu0
    %v3304 = vpop.f32.mrf.mxu0
    %v3305 = vadd.f32 %v3216, %v3304
    %v3306 = vpop.f32.mrf.mxu0
    %3307 = vdwg.mxu0
    %s3308 = scalar_lea.vmem [#allocation6], 16
    %v3309 = vld [vmem:[%s3308] sm:$0xf]
    %v3310 = vld [vmem:[%s3308 + $0x4] sm:$0xf]
    %v3313 = vunpack.c.l.b16 %v3309
    %v3314 = vunpack.c.l.b16 %v3310
    %v3315 = vpack.c.b16 %v3314, %v3313
    %v3317 = vsel %vm2756, %v3315, 0
    %3319 = vmatprep.subr.bf16.mxu0 0
    %3320 = vmatpush1.bf16.msra.mxu0 0
    %3321 = vmatprep.subr.bf16.mxu0 0
    %3322 = vmatpush1.bf16.msra.mxu0 0
    %3323 = vmatprep.subr.bf16.mxu0 0
    %3324 = vmatpush1.bf16.msra.mxu0 0
    %3325 = vmatprep.subr.bf16.mxu0 0
    %3326 = vmatpush1.bf16.msra.mxu0 0
    %3327 = vmatprep.subr.bf16.mxu0 0
    %3328 = vmatpush1.bf16.msra.mxu0 0
    %3329 = vmatprep.subr.bf16.mxu0 0
    %3330 = vmatpush1.bf16.msra.mxu0 0
    %3331 = vmatprep.subr.bf16.mxu0 0
    %3332 = vmatpush1.bf16.msra.mxu0 0
    %3333 = vmatprep.subr.bf16.mxu0 0
    %3334 = vmatpush1.bf16.msra.mxu0 %v2991
    %3335 = vmatprep.subr.bf16.mxu0 0
    %3336 = vmatpush2.bf16.msra.mxu0 0
    %3337 = vmatprep.subr.bf16.mxu0 0
    %3338 = vmatpush2.bf16.msra.mxu0 0
    %3339 = vmatprep.subr.bf16.mxu0 0
    %3340 = vmatpush2.bf16.msra.mxu0 0
    %3341 = vmatprep.subr.bf16.mxu0 0
    %3342 = vmatpush2.bf16.msra.mxu0 0
    %3343 = vmatprep.subr.bf16.mxu0 0
    %3344 = vmatpush2.bf16.msra.mxu0 0
    %3345 = vmatprep.subr.bf16.mxu0 0
    %3346 = vmatpush2.bf16.msra.mxu0 0
    %3347 = vmatprep.subr.bf16.mxu0 0
    %3348 = vmatpush2.bf16.msra.mxu0 0
    %3349 = vmatprep.subr.bf16.mxu0 0
    %3350 = vmatpush2.bf16.msra.mxu0 0
    %3351 = vmatprep.mubr.bf16.mxu0 0
    %3352 = vmatmul.mubr.bf16.gmra.mxu0 %v3317
    %v3353 = vpop.f32.mrf.mxu0
    %v3354 = vadd.f32 0.0, %v3353
    %v3355 = vpop.f32.mrf.mxu0
    %v3356 = vpop.f32.mrf.mxu0
    %v3357 = vadd.f32 0.0, %v3356
    %v3358 = vpop.f32.mrf.mxu0
    %3359 = vdwg.mxu0
    %v3360 = vpack.c.bf16 %v3357, %v3354
    %s3361 = scalar_lea.vmem %s47, 128
    %v3362 = vld [vmem:[%s3361] sm:$0xf]
    %v3363 = vld [vmem:[%s3361 + $0x4] sm:$0xf]
    %v3364 = vld [vmem:[%s3361 + $0x8] sm:$0xf]
    %v3365 = vld [vmem:[%s3361 + $0xc] sm:$0xf]
    %v3366 = vld [vmem:[%s3361 + $0x10] sm:$0xf]
    %v3367 = vld [vmem:[%s3361 + $0x14] sm:$0xf]
    %v3368 = vld [vmem:[%s3361 + $0x18] sm:$0xf]
    %v3369 = vld [vmem:[%s3361 + $0x1c] sm:$0xf]
    %v3370 = vld [vmem:[%s3361 + $0x20] sm:$0xf]
    %v3371 = vld [vmem:[%s3361 + $0x24] sm:$0xf]
    %v3372 = vld [vmem:[%s3361 + $0x28] sm:$0xf]
    %v3373 = vld [vmem:[%s3361 + $0x2c] sm:$0xf]
    %v3374 = vld [vmem:[%s3361 + $0x30] sm:$0xf]
    %v3375 = vld [vmem:[%s3361 + $0x34] sm:$0xf]
    %v3376 = vld [vmem:[%s3361 + $0x38] sm:$0xf]
    %v3377 = vld [vmem:[%s3361 + $0x3c] sm:$0xf]
    %v3394 = vunpack.c.l.b16 %v3362
    %v3395 = vunpack.c.l.b16 %v3363
    %v3396 = vunpack.c.l.b16 %v3364
    %v3397 = vunpack.c.l.b16 %v3365
    %v3398 = vunpack.c.l.b16 %v3366
    %v3399 = vunpack.c.l.b16 %v3367
    %v3400 = vunpack.c.l.b16 %v3368
    %v3401 = vunpack.c.l.b16 %v3369
    %v3402 = vunpack.c.l.b16 %v3370
    %v3403 = vunpack.c.l.b16 %v3371
    %v3404 = vunpack.c.l.b16 %v3372
    %v3405 = vunpack.c.l.b16 %v3373
    %v3406 = vunpack.c.l.b16 %v3374
    %v3407 = vunpack.c.l.b16 %v3375
    %v3408 = vunpack.c.l.b16 %v3376
    %v3409 = vunpack.c.l.b16 %v3377
    %v3410 = vpack.c.b16 %v3395, %v3394
    %v3411 = vpack.c.b16 %v3397, %v3396
    %v3412 = vpack.c.b16 %v3399, %v3398
    %v3413 = vpack.c.b16 %v3401, %v3400
    %v3414 = vpack.c.b16 %v3403, %v3402
    %v3415 = vpack.c.b16 %v3405, %v3404
    %v3416 = vpack.c.b16 %v3407, %v3406
    %v3417 = vpack.c.b16 %v3409, %v3408
    %3426 = vmatprep.subr.bf16.mxu0 0
    %3427 = vmatpush1.bf16.msra.mxu0 %v3417
    %3428 = vmatprep.subr.bf16.mxu0 0
    %3429 = vmatpush1.bf16.msra.mxu0 %v3416
    %3430 = vmatprep.subr.bf16.mxu0 0
    %3431 = vmatpush1.bf16.msra.mxu0 %v3415
    %3432 = vmatprep.subr.bf16.mxu0 0
    %3433 = vmatpush1.bf16.msra.mxu0 %v3414
    %3434 = vmatprep.subr.bf16.mxu0 0
    %3435 = vmatpush1.bf16.msra.mxu0 %v3413
    %3436 = vmatprep.subr.bf16.mxu0 0
    %3437 = vmatpush1.bf16.msra.mxu0 %v3412
    %3438 = vmatprep.subr.bf16.mxu0 0
    %3439 = vmatpush1.bf16.msra.mxu0 %v3411
    %3440 = vmatprep.subr.bf16.mxu0 0
    %3441 = vmatpush1.bf16.msra.mxu0 %v3410
    %3442 = vmatprep.subr.bf16.mxu0 0
    %3443 = vmatpush2.bf16.msra.mxu0 0
    %3444 = vmatprep.subr.bf16.mxu0 0
    %3445 = vmatpush2.bf16.msra.mxu0 0
    %3446 = vmatprep.subr.bf16.mxu0 0
    %3447 = vmatpush2.bf16.msra.mxu0 0
    %3448 = vmatprep.subr.bf16.mxu0 0
    %3449 = vmatpush2.bf16.msra.mxu0 0
    %3450 = vmatprep.subr.bf16.mxu0 0
    %3451 = vmatpush2.bf16.msra.mxu0 0
    %3452 = vmatprep.subr.bf16.mxu0 0
    %3453 = vmatpush2.bf16.msra.mxu0 0
    %3454 = vmatprep.subr.bf16.mxu0 0
    %3455 = vmatpush2.bf16.msra.mxu0 0
    %3456 = vmatprep.subr.bf16.mxu0 0
    %3457 = vmatpush2.bf16.msra.mxu0 0
    %3458 = vmatprep.mubr.bf16.mxu0 0
    %3459 = vmatmul.mubr.bf16.gmra.mxu0 %v3360
    %v3460 = vpop.f32.mrf.mxu0
    %v3461 = vadd.f32 0.0, %v3460
    %v3462 = vpop.f32.mrf.mxu0
    %v3463 = vpop.f32.mrf.mxu0
    %v3464 = vadd.f32 0.0, %v3463
    %v3465 = vpop.f32.mrf.mxu0
    %3466 = vdwg.mxu0
    %v3467 = vadd.f32 %v3302, %v3461
    %v3468 = vadd.f32 %v3305, %v3464
    %v3469 = vld [vmem:[%s49] sm:$0x1]
    %v3471 = vlaneseq
    %v3472 = vshrl.u32 %v3471, 7
    %v3473 = vsub.s32 0, %v3472
    %v3474 = vrot.slane %v3469, %v3473
    %v3476 = vadd.f32 %v3467, %v3474
    %v3477 = vadd.f32 %v3468, %v3474
    %3478 = vmatprep.subr.mxu0 0.0
    %3479 = vmatpush1.msra.mxu0 0.0
    %3480 = vmatprep.subr.mxu0 0.0
    %3481 = vmatpush1.msra.mxu0 0.0
    %3482 = vmatprep.subr.mxu0 0.0
    %3483 = vmatpush1.msra.mxu0 0.0
    %3484 = vmatprep.subr.mxu0 0.0
    %3485 = vmatpush1.msra.mxu0 0.0
    %3486 = vmatprep.subr.mxu0 0.0
    %3487 = vmatpush1.msra.mxu0 0.0
    %3488 = vmatprep.subr.mxu0 0.0
    %3489 = vmatpush1.msra.mxu0 0.0
    %3490 = vmatprep.subr.mxu0 0.0
    %3491 = vmatpush1.msra.mxu0 0.0
    %3492 = vmatprep.subr.mxu0 0.0
    %3493 = vmatpush1.msra.mxu0 0.0
    %3494 = vmatprep.subr.mxu0 0.0
    %3495 = vmatpush1.msra.mxu0 0.0
    %3496 = vmatprep.subr.mxu0 0.0
    %3497 = vmatpush1.msra.mxu0 0.0
    %3498 = vmatprep.subr.mxu0 0.0
    %3499 = vmatpush1.msra.mxu0 0.0
    %3500 = vmatprep.subr.mxu0 0.0
    %3501 = vmatpush1.msra.mxu0 0.0
    %3502 = vmatprep.subr.mxu0 0.0
    %3503 = vmatpush1.msra.mxu0 0.0
    %3504 = vmatprep.subr.mxu0 0.0
    %3505 = vmatpush1.msra.mxu0 0.0
    %3506 = vmatprep.subr.mxu0 0.0
    %3507 = vmatpush1.msra.mxu0 %v3477
    %3508 = vmatprep.subr.mxu0 0.0
    %3509 = vmatpush1.msra.mxu0 %v3476
    %3510 = vmatprep.subr.mxu0 0.0
    %3511 = vmatpush2.msra.mxu0 0.0
    %3512 = vmatprep.subr.mxu0 0.0
    %3513 = vmatpush2.msra.mxu0 0.0
    %3514 = vmatprep.subr.mxu0 0.0
    %3515 = vmatpush2.msra.mxu0 0.0
    %3516 = vmatprep.subr.mxu0 0.0
    %3517 = vmatpush2.msra.mxu0 0.0
    %3518 = vmatprep.subr.mxu0 0.0
    %3519 = vmatpush2.msra.mxu0 0.0
    %3520 = vmatprep.subr.mxu0 0.0
    %3521 = vmatpush2.msra.mxu0 0.0
    %3522 = vmatprep.subr.mxu0 0.0
    %3523 = vmatpush2.msra.mxu0 0.0
    %3524 = vmatprep.subr.mxu0 0.0
    %3525 = vmatpush2.msra.mxu0 0.0
    %3526 = vmatprep.subr.mxu0 0.0
    %3527 = vmatpush2.msra.mxu0 0.0
    %3528 = vmatprep.subr.mxu0 0.0
    %3529 = vmatpush2.msra.mxu0 0.0
    %3530 = vmatprep.subr.mxu0 0.0
    %3531 = vmatpush2.msra.mxu0 0.0
    %3532 = vmatprep.subr.mxu0 0.0
    %3533 = vmatpush2.msra.mxu0 0.0
    %3534 = vmatprep.subr.mxu0 0.0
    %3535 = vmatpush2.msra.mxu0 0.0
    %3536 = vmatprep.subr.mxu0 0.0
    %3537 = vmatpush2.msra.mxu0 0.0
    %3538 = vmatprep.subr.mxu0 0.0
    %3539 = vmatpush2.msra.mxu0 0.0
    %3540 = vmatprep.subr.mxu0 0.0
    %3541 = vmatpush2.msra.mxu0 0.0
    %3542 = vmatprep.mubr.f32.mxu0 0.0
    %3543 = vmatmul.mubr.f32.gmra.mxu0 %v2758
    %v3544 = vpop.f32.mrf.mxu0
    %v3545 = vadd.f32 0.0, %v3544
    %v3546 = vpop.f32.mrf.mxu0
    %3547 = vmatprep.mubr.f32.mxu0 0.0
    %3548 = vmatmul.mubr.f32.gmra.mxu0 %v2761
    %v3549 = vpop.f32.mrf.mxu0
    %v3550 = vadd.f32 0.0, %v3549
    %v3551 = vpop.f32.mrf.mxu0
    %3552 = vdwg.mxu0
    %v3553 = vmul.f32 %v3476, %v3476
    %v3554 = vmul.f32 %v3477, %v3477
    %3555 = vmatprep.subr.mxu0 0.0
    %3556 = vmatpush1.msra.mxu0 0.0
    %3557 = vmatprep.subr.mxu0 0.0
    %3558 = vmatpush1.msra.mxu0 0.0
    %3559 = vmatprep.subr.mxu0 0.0
    %3560 = vmatpush1.msra.mxu0 0.0
    %3561 = vmatprep.subr.mxu0 0.0
    %3562 = vmatpush1.msra.mxu0 0.0
    %3563 = vmatprep.subr.mxu0 0.0
    %3564 = vmatpush1.msra.mxu0 0.0
    %3565 = vmatprep.subr.mxu0 0.0
    %3566 = vmatpush1.msra.mxu0 0.0
    %3567 = vmatprep.subr.mxu0 0.0
    %3568 = vmatpush1.msra.mxu0 0.0
    %3569 = vmatprep.subr.mxu0 0.0
    %3570 = vmatpush1.msra.mxu0 0.0
    %3571 = vmatprep.subr.mxu0 0.0
    %3572 = vmatpush1.msra.mxu0 0.0
    %3573 = vmatprep.subr.mxu0 0.0
    %3574 = vmatpush1.msra.mxu0 0.0
    %3575 = vmatprep.subr.mxu0 0.0
    %3576 = vmatpush1.msra.mxu0 0.0
    %3577 = vmatprep.subr.mxu0 0.0
    %3578 = vmatpush1.msra.mxu0 0.0
    %3579 = vmatprep.subr.mxu0 0.0
    %3580 = vmatpush1.msra.mxu0 0.0
    %3581 = vmatprep.subr.mxu0 0.0
    %3582 = vmatpush1.msra.mxu0 0.0
    %3583 = vmatprep.subr.mxu0 0.0
    %3584 = vmatpush1.msra.mxu0 %v3554
    %3585 = vmatprep.subr.mxu0 0.0
    %3586 = vmatpush1.msra.mxu0 %v3553
    %3587 = vmatprep.subr.mxu0 0.0
    %3588 = vmatpush2.msra.mxu0 0.0
    %3589 = vmatprep.subr.mxu0 0.0
    %3590 = vmatpush2.msra.mxu0 0.0
    %3591 = vmatprep.subr.mxu0 0.0
    %3592 = vmatpush2.msra.mxu0 0.0
    %3593 = vmatprep.subr.mxu0 0.0
    %3594 = vmatpush2.msra.mxu0 0.0
    %3595 = vmatprep.subr.mxu0 0.0
    %3596 = vmatpush2.msra.mxu0 0.0
    %3597 = vmatprep.subr.mxu0 0.0
    %3598 = vmatpush2.msra.mxu0 0.0
    %3599 = vmatprep.subr.mxu0 0.0
    %3600 = vmatpush2.msra.mxu0 0.0
    %3601 = vmatprep.subr.mxu0 0.0
    %3602 = vmatpush2.msra.mxu0 0.0
    %3603 = vmatprep.subr.mxu0 0.0
    %3604 = vmatpush2.msra.mxu0 0.0
    %3605 = vmatprep.subr.mxu0 0.0
    %3606 = vmatpush2.msra.mxu0 0.0
    %3607 = vmatprep.subr.mxu0 0.0
    %3608 = vmatpush2.msra.mxu0 0.0
    %3609 = vmatprep.subr.mxu0 0.0
    %3610 = vmatpush2.msra.mxu0 0.0
    %3611 = vmatprep.subr.mxu0 0.0
    %3612 = vmatpush2.msra.mxu0 0.0
    %3613 = vmatprep.subr.mxu0 0.0
    %3614 = vmatpush2.msra.mxu0 0.0
    %3615 = vmatprep.subr.mxu0 0.0
    %3616 = vmatpush2.msra.mxu0 0.0
    %3617 = vmatprep.subr.mxu0 0.0
    %3618 = vmatpush2.msra.mxu0 0.0
    %3619 = vmatprep.mubr.f32.mxu0 0.0
    %3620 = vmatmul.mubr.f32.gmra.mxu0 %v2758
    %v3621 = vpop.f32.mrf.mxu0
    %v3622 = vadd.f32 0.0, %v3621
    %v3623 = vpop.f32.mrf.mxu0
    %3624 = vmatprep.mubr.f32.mxu0 0.0
    %3625 = vmatmul.mubr.f32.gmra.mxu0 %v2761
    %v3626 = vpop.f32.mrf.mxu0
    %v3627 = vadd.f32 0.0, %v3626
    %v3628 = vpop.f32.mrf.mxu0
    %3629 = vdwg.mxu0
    %3630 = vrot.lane.b32.xlu0 %v3545, 16
    %v3631 = vpop.permute.xlu0 %3630
    %3632 = vrot.lane.b32.xlu0 %v3550, 16
    %v3633 = vpop.permute.xlu0 %3632
    %v3634 = vadd.f32 %v3545, %v3631
    %v3635 = vadd.f32 %v3550, %v3633
    %3636 = vrot.lane.b32.xlu0 %v3622, 16
    %v3637 = vpop.permute.xlu0 %3636
    %3638 = vrot.lane.b32.xlu0 %v3627, 16
    %v3639 = vpop.permute.xlu0 %3638
    %v3640 = vadd.f32 %v3622, %v3637
    %v3641 = vadd.f32 %v3627, %v3639
    %3642 = vrot.lane.b32.xlu0 %v3634, 32
    %v3643 = vpop.permute.xlu0 %3642
    %3644 = vrot.lane.b32.xlu0 %v3635, 32
    %v3645 = vpop.permute.xlu0 %3644
    %v3646 = vadd.f32 %v3634, %v3643
    %v3647 = vadd.f32 %v3635, %v3645
    %3648 = vrot.lane.b32.xlu0 %v3640, 32
    %v3649 = vpop.permute.xlu0 %3648
    %3650 = vrot.lane.b32.xlu0 %v3641, 32
    %v3651 = vpop.permute.xlu0 %3650
    %v3652 = vadd.f32 %v3640, %v3649
    %v3653 = vadd.f32 %v3641, %v3651
    %3654 = vrot.lane.b32.xlu0 %v3646, 64
    %v3655 = vpop.permute.xlu0 %3654
    %3656 = vrot.lane.b32.xlu0 %v3647, 64
    %v3657 = vpop.permute.xlu0 %3656
    %v3658 = vadd.f32 %v3646, %v3655
    %v3659 = vadd.f32 %v3647, %v3657
    %3660 = vrot.lane.b32.xlu0 %v3652, 64
    %v3661 = vpop.permute.xlu0 %3660
    %3662 = vrot.lane.b32.xlu0 %v3653, 64
    %v3663 = vpop.permute.xlu0 %3662
    %v3664 = vadd.f32 %v3652, %v3661
    %v3665 = vadd.f32 %v3653, %v3663
    %v3666 = vmul.f32 %v3658, 0.125
    %v3667 = vmul.f32 %v3659, 0.125
    %v3668 = vmul.f32 %v3664, 0.125
    %v3669 = vmul.f32 %v3665, 0.125
    %v3670 = vmul.f32 %v3666, %v3666
    %v3671 = vmul.f32 %v3667, %v3667
    %v3672 = vsub.f32 %v3668, %v3670
    %v3673 = vsub.f32 %v3669, %v3671
    %v3674 = vld [vmem:[%s51] sm:$0x1]
    %v3675 = vadd.f32 %v3672, 1e-05
    %v3676 = vadd.f32 %v3673, 1e-05
    %v3677 = vrsqrt.pop %v3675
    %v3678 = vrsqrt.pop %v3676
    %v3680 = vlaneseq
    %v3681 = vshrl.u32 %v3680, 7
    %v3682 = vsub.s32 0, %v3681
    %v3683 = vrot.slane %v3674, %v3682
    %v3685 = vmul.f32 %v3683, %v3677
    %v3686 = vmul.f32 %v3683, %v3678
    %v3687 = vsub.f32 %v3476, %v3666
    %v3688 = vsub.f32 %v3477, %v3667
    %v3689 = vmul.f32 %v3687, %v3685
    %v3690 = vmul.f32 %v3688, %v3686
    %v3691 = vld [vmem:[%s53] sm:$0x1]
    %v3693 = vlaneseq
    %v3694 = vshrl.u32 %v3693, 7
    %v3695 = vsub.s32 0, %v3694
    %v3696 = vrot.slane %v3691, %v3695
    %v3698 = vadd.f32 %v3689, %v3696
    %v3699 = vadd.f32 %v3690, %v3696
    %vm3700 = vcmp.ge.f32.partialorder %v3698, 0.0
    %vm3701 = vcmp.ge.f32.partialorder %v3699, 0.0
    %v3702 = vmul.f32 %v3698, 0.01
    %v3703 = vmul.f32 %v3699, 0.01
    %v3704 = vsel %vm3700, %v3698, %v3702
    %v3705 = vsel %vm3701, %v3699, %v3703
    %v3706 = vpack.c.bf16 %v3705, %v3704
    %v3707 = vld [vmem:[#allocation7] sm:$0xf]
    %v3709 = vsel %vm2756, %v3707, 0
    %3711 = vmatprep.subr.bf16.mxu0 0
    %3712 = vmatpush1.bf16.msra.mxu0 0
    %3713 = vmatprep.subr.bf16.mxu0 0
    %3714 = vmatpush1.bf16.msra.mxu0 0
    %3715 = vmatprep.subr.bf16.mxu0 0
    %3716 = vmatpush1.bf16.msra.mxu0 0
    %3717 = vmatprep.subr.bf16.mxu0 0
    %3718 = vmatpush1.bf16.msra.mxu0 0
    %3719 = vmatprep.subr.bf16.mxu0 0
    %3720 = vmatpush1.bf16.msra.mxu0 0
    %3721 = vmatprep.subr.bf16.mxu0 0
    %3722 = vmatpush1.bf16.msra.mxu0 0
    %3723 = vmatprep.subr.bf16.mxu0 0
    %3724 = vmatpush1.bf16.msra.mxu0 0
    %3725 = vmatprep.subr.bf16.mxu0 0
    %3726 = vmatpush1.bf16.msra.mxu0 %v3706
    %3727 = vmatprep.subr.bf16.mxu0 0
    %3728 = vmatpush2.bf16.msra.mxu0 0
    %3729 = vmatprep.subr.bf16.mxu0 0
    %3730 = vmatpush2.bf16.msra.mxu0 0
    %3731 = vmatprep.subr.bf16.mxu0 0
    %3732 = vmatpush2.bf16.msra.mxu0 0
    %3733 = vmatprep.subr.bf16.mxu0 0
    %3734 = vmatpush2.bf16.msra.mxu0 0
    %3735 = vmatprep.subr.bf16.mxu0 0
    %3736 = vmatpush2.bf16.msra.mxu0 0
    %3737 = vmatprep.subr.bf16.mxu0 0
    %3738 = vmatpush2.bf16.msra.mxu0 0
    %3739 = vmatprep.subr.bf16.mxu0 0
    %3740 = vmatpush2.bf16.msra.mxu0 0
    %3741 = vmatprep.subr.bf16.mxu0 0
    %3742 = vmatpush2.bf16.msra.mxu0 0
    %3743 = vmatprep.mubr.bf16.mxu0 0
    %3744 = vmatmul.mubr.bf16.gmra.mxu0 %v3709
    %v3745 = vpop.f32.mrf.mxu0
    %v3746 = vadd.f32 0.0, %v3745
    %v3747 = vpop.f32.mrf.mxu0
    %v3748 = vpop.f32.mrf.mxu0
    %v3749 = vpop.f32.mrf.mxu0
    %3750 = vdwg.mxu0
    %v3751 = vpack.c.bf16 %v3746, %v3746
    %v3752 = vld [vmem:[#allocation24] sm:$0xf]
    %v3753 = vld [vmem:[#allocation24 + $0x4] sm:$0xf]
    %v3754 = vld [vmem:[#allocation24 + $0x8] sm:$0xf]
    %v3755 = vld [vmem:[#allocation24 + $0xc] sm:$0xf]
    %v3756 = vld [vmem:[#allocation24 + $0x10] sm:$0xf]
    %v3757 = vld [vmem:[#allocation24 + $0x14] sm:$0xf]
    %v3758 = vld [vmem:[#allocation24 + $0x18] sm:$0xf]
    %v3759 = vld [vmem:[#allocation24 + $0x1c] sm:$0xf]
    %v3760 = vld [vmem:[#allocation24 + $0x20] sm:$0xf]
    %v3761 = vld [vmem:[#allocation24 + $0x24] sm:$0xf]
    %v3762 = vld [vmem:[#allocation24 + $0x28] sm:$0xf]
    %v3763 = vld [vmem:[#allocation24 + $0x2c] sm:$0xf]
    %v3764 = vld [vmem:[#allocation24 + $0x30] sm:$0xf]
    %v3765 = vld [vmem:[#allocation24 + $0x34] sm:$0xf]
    %v3766 = vld [vmem:[#allocation24 + $0x38] sm:$0xf]
    %v3767 = vld [vmem:[#allocation24 + $0x3c] sm:$0xf]
    %s3768 = scalar_lea.vmem [#allocation7], 4
    %v3769 = vld [vmem:[%s3768] sm:$0xf]
    %v3771 = vsel %vm2756, %v3769, 0
    %3773 = vmatprep.subr.bf16.mxu0 0
    %3774 = vmatpush1.bf16.msra.mxu0 0
    %3775 = vmatprep.subr.bf16.mxu0 0
    %3776 = vmatpush1.bf16.msra.mxu0 0
    %3777 = vmatprep.subr.bf16.mxu0 0
    %3778 = vmatpush1.bf16.msra.mxu0 0
    %3779 = vmatprep.subr.bf16.mxu0 0
    %3780 = vmatpush1.bf16.msra.mxu0 0
    %3781 = vmatprep.subr.bf16.mxu0 0
    %3782 = vmatpush1.bf16.msra.mxu0 0
    %3783 = vmatprep.subr.bf16.mxu0 0
    %3784 = vmatpush1.bf16.msra.mxu0 0
    %3785 = vmatprep.subr.bf16.mxu0 0
    %3786 = vmatpush1.bf16.msra.mxu0 0
    %3787 = vmatprep.subr.bf16.mxu0 0
    %3788 = vmatpush1.bf16.msra.mxu0 %v3706
    %3789 = vmatprep.subr.bf16.mxu0 0
    %3790 = vmatpush2.bf16.msra.mxu0 0
    %3791 = vmatprep.subr.bf16.mxu0 0
    %3792 = vmatpush2.bf16.msra.mxu0 0
    %3793 = vmatprep.subr.bf16.mxu0 0
    %3794 = vmatpush2.bf16.msra.mxu0 0
    %3795 = vmatprep.subr.bf16.mxu0 0
    %3796 = vmatpush2.bf16.msra.mxu0 0
    %3797 = vmatprep.subr.bf16.mxu0 0
    %3798 = vmatpush2.bf16.msra.mxu0 0
    %3799 = vmatprep.subr.bf16.mxu0 0
    %3800 = vmatpush2.bf16.msra.mxu0 0
    %3801 = vmatprep.subr.bf16.mxu0 0
    %3802 = vmatpush2.bf16.msra.mxu0 0
    %3803 = vmatprep.subr.bf16.mxu0 0
    %3804 = vmatpush2.bf16.msra.mxu0 0
    %3805 = vmatprep.mubr.bf16.mxu0 0
    %3806 = vmatmul.mubr.bf16.gmra.mxu0 %v3771
    %v3807 = vpop.f32.mrf.mxu0
    %v3808 = vadd.f32 0.0, %v3807
    %v3809 = vpop.f32.mrf.mxu0
    %v3810 = vpop.f32.mrf.mxu0
    %v3811 = vpop.f32.mrf.mxu0
    %3812 = vdwg.mxu0
    %v3813 = vpack.c.bf16 %v3808, %v3808
    %s3814 = scalar_lea.vmem [#allocation24], 64
    %v3815 = vld [vmem:[%s3814] sm:$0xf]
    %v3816 = vld [vmem:[%s3814 + $0x4] sm:$0xf]
    %v3817 = vld [vmem:[%s3814 + $0x8] sm:$0xf]
    %v3818 = vld [vmem:[%s3814 + $0xc] sm:$0xf]
    %v3819 = vld [vmem:[%s3814 + $0x10] sm:$0xf]
    %v3820 = vld [vmem:[%s3814 + $0x14] sm:$0xf]
    %v3821 = vld [vmem:[%s3814 + $0x18] sm:$0xf]
    %v3822 = vld [vmem:[%s3814 + $0x1c] sm:$0xf]
    %v3823 = vld [vmem:[%s3814 + $0x20] sm:$0xf]
    %v3824 = vld [vmem:[%s3814 + $0x24] sm:$0xf]
    %v3825 = vld [vmem:[%s3814 + $0x28] sm:$0xf]
    %v3826 = vld [vmem:[%s3814 + $0x2c] sm:$0xf]
    %v3827 = vld [vmem:[%s3814 + $0x30] sm:$0xf]
    %v3828 = vld [vmem:[%s3814 + $0x34] sm:$0xf]
    %v3829 = vld [vmem:[%s3814 + $0x38] sm:$0xf]
    %v3830 = vld [vmem:[%s3814 + $0x3c] sm:$0xf]
    %v3847 = vunpack.c.l.b16 %v3815
    %v3848 = vunpack.c.l.b16 %v3816
    %v3849 = vunpack.c.l.b16 %v3817
    %v3850 = vunpack.c.l.b16 %v3818
    %v3851 = vunpack.c.l.b16 %v3819
    %v3852 = vunpack.c.l.b16 %v3820
    %v3853 = vunpack.c.l.b16 %v3821
    %v3854 = vunpack.c.l.b16 %v3822
    %v3855 = vunpack.c.l.b16 %v3823
    %v3856 = vunpack.c.l.b16 %v3824
    %v3857 = vunpack.c.l.b16 %v3825
    %v3858 = vunpack.c.l.b16 %v3826
    %v3859 = vunpack.c.l.b16 %v3827
    %v3860 = vunpack.c.l.b16 %v3828
    %v3861 = vunpack.c.l.b16 %v3829
    %v3862 = vunpack.c.l.b16 %v3830
    %v3863 = vpack.c.b16 %v3848, %v3847
    %v3864 = vpack.c.b16 %v3850, %v3849
    %v3865 = vpack.c.b16 %v3852, %v3851
    %v3866 = vpack.c.b16 %v3854, %v3853
    %v3867 = vpack.c.b16 %v3856, %v3855
    %v3868 = vpack.c.b16 %v3858, %v3857
    %v3869 = vpack.c.b16 %v3860, %v3859
    %v3870 = vpack.c.b16 %v3862, %v3861
    %3879 = vmatprep.subr.bf16.mxu0 0
    %3880 = vmatpush1.bf16.msra.mxu0 %v3870
    %3881 = vmatprep.subr.bf16.mxu0 0
    %3882 = vmatpush1.bf16.msra.mxu0 %v3869
    %3883 = vmatprep.subr.bf16.mxu0 0
    %3884 = vmatpush1.bf16.msra.mxu0 %v3868
    %3885 = vmatprep.subr.bf16.mxu0 0
    %3886 = vmatpush1.bf16.msra.mxu0 %v3867
    %3887 = vmatprep.subr.bf16.mxu0 0
    %3888 = vmatpush1.bf16.msra.mxu0 %v3866
    %3889 = vmatprep.subr.bf16.mxu0 0
    %3890 = vmatpush1.bf16.msra.mxu0 %v3865
    %3891 = vmatprep.subr.bf16.mxu0 0
    %3892 = vmatpush1.bf16.msra.mxu0 %v3864
    %3893 = vmatprep.subr.bf16.mxu0 0
    %3894 = vmatpush1.bf16.msra.mxu0 %v3863
    %3895 = vmatprep.subr.bf16.mxu0 0
    %3896 = vmatpush2.bf16.msra.mxu0 0
    %3897 = vmatprep.subr.bf16.mxu0 0
    %3898 = vmatpush2.bf16.msra.mxu0 0
    %3899 = vmatprep.subr.bf16.mxu0 0
    %3900 = vmatpush2.bf16.msra.mxu0 0
    %3901 = vmatprep.subr.bf16.mxu0 0
    %3902 = vmatpush2.bf16.msra.mxu0 0
    %3903 = vmatprep.subr.bf16.mxu0 0
    %3904 = vmatpush2.bf16.msra.mxu0 0
    %3905 = vmatprep.subr.bf16.mxu0 0
    %3906 = vmatpush2.bf16.msra.mxu0 0
    %3907 = vmatprep.subr.bf16.mxu0 0
    %3908 = vmatpush2.bf16.msra.mxu0 0
    %3909 = vmatprep.subr.bf16.mxu0 0
    %3910 = vmatpush2.bf16.msra.mxu0 0
    %3911 = vmatprep.mubr.bf16.mxu0 0
    %3912 = vmatmul.mubr.bf16.gmra.mxu0 %v3813
    %v3913 = vpop.f32.mrf.mxu0
    %v3914 = vadd.f32 0.0, %v3913
    %v3915 = vpop.f32.mrf.mxu0
    %v3916 = vpop.f32.mrf.mxu0
    %v3917 = vpop.f32.mrf.mxu0
    %3918 = vdwg.mxu0
    %v3935 = vunpack.c.l.b16 %v3752
    %v3936 = vunpack.c.l.b16 %v3753
    %v3937 = vunpack.c.l.b16 %v3754
    %v3938 = vunpack.c.l.b16 %v3755
    %v3939 = vunpack.c.l.b16 %v3756
    %v3940 = vunpack.c.l.b16 %v3757
    %v3941 = vunpack.c.l.b16 %v3758
    %v3942 = vunpack.c.l.b16 %v3759
    %v3943 = vunpack.c.l.b16 %v3760
    %v3944 = vunpack.c.l.b16 %v3761
    %v3945 = vunpack.c.l.b16 %v3762
    %v3946 = vunpack.c.l.b16 %v3763
    %v3947 = vunpack.c.l.b16 %v3764
    %v3948 = vunpack.c.l.b16 %v3765
    %v3949 = vunpack.c.l.b16 %v3766
    %v3950 = vunpack.c.l.b16 %v3767
    %v3951 = vpack.c.b16 %v3936, %v3935
    %v3952 = vpack.c.b16 %v3938, %v3937
    %v3953 = vpack.c.b16 %v3940, %v3939
    %v3954 = vpack.c.b16 %v3942, %v3941
    %v3955 = vpack.c.b16 %v3944, %v3943
    %v3956 = vpack.c.b16 %v3946, %v3945
    %v3957 = vpack.c.b16 %v3948, %v3947
    %v3958 = vpack.c.b16 %v3950, %v3949
    %3967 = vmatprep.subr.bf16.mxu0 0
    %3968 = vmatpush1.bf16.msra.mxu0 %v3958
    %3969 = vmatprep.subr.bf16.mxu0 0
    %3970 = vmatpush1.bf16.msra.mxu0 %v3957
    %3971 = vmatprep.subr.bf16.mxu0 0
    %3972 = vmatpush1.bf16.msra.mxu0 %v3956
    %3973 = vmatprep.subr.bf16.mxu0 0
    %3974 = vmatpush1.bf16.msra.mxu0 %v3955
    %3975 = vmatprep.subr.bf16.mxu0 0
    %3976 = vmatpush1.bf16.msra.mxu0 %v3954
    %3977 = vmatprep.subr.bf16.mxu0 0
    %3978 = vmatpush1.bf16.msra.mxu0 %v3953
    %3979 = vmatprep.subr.bf16.mxu0 0
    %3980 = vmatpush1.bf16.msra.mxu0 %v3952
    %3981 = vmatprep.subr.bf16.mxu0 0
    %3982 = vmatpush1.bf16.msra.mxu0 %v3951
    %3983 = vmatprep.subr.bf16.mxu0 0
    %3984 = vmatpush2.bf16.msra.mxu0 0
    %3985 = vmatprep.subr.bf16.mxu0 0
    %3986 = vmatpush2.bf16.msra.mxu0 0
    %3987 = vmatprep.subr.bf16.mxu0 0
    %3988 = vmatpush2.bf16.msra.mxu0 0
    %3989 = vmatprep.subr.bf16.mxu0 0
    %3990 = vmatpush2.bf16.msra.mxu0 0
    %3991 = vmatprep.subr.bf16.mxu0 0
    %3992 = vmatpush2.bf16.msra.mxu0 0
    %3993 = vmatprep.subr.bf16.mxu0 0
    %3994 = vmatpush2.bf16.msra.mxu0 0
    %3995 = vmatprep.subr.bf16.mxu0 0
    %3996 = vmatpush2.bf16.msra.mxu0 0
    %3997 = vmatprep.subr.bf16.mxu0 0
    %3998 = vmatpush2.bf16.msra.mxu0 0
    %3999 = vmatprep.mubr.bf16.mxu0 0
    %4000 = vmatmul.mubr.bf16.gmra.mxu0 %v3751
    %v4001 = vpop.f32.mrf.mxu0
    %v4002 = vadd.f32 %v3914, %v4001
    %v4003 = vpop.f32.mrf.mxu0
    %v4004 = vpop.f32.mrf.mxu0
    %v4005 = vpop.f32.mrf.mxu0
    %4006 = vdwg.mxu0
    %s4007 = scalar_lea.vmem [#allocation7], 8
    %v4008 = vld [vmem:[%s4007] sm:$0xf]
    %v4010 = vsel %vm2756, %v4008, 0
    %4012 = vmatprep.subr.bf16.mxu0 0
    %4013 = vmatpush1.bf16.msra.mxu0 0
    %4014 = vmatprep.subr.bf16.mxu0 0
    %4015 = vmatpush1.bf16.msra.mxu0 0
    %4016 = vmatprep.subr.bf16.mxu0 0
    %4017 = vmatpush1.bf16.msra.mxu0 0
    %4018 = vmatprep.subr.bf16.mxu0 0
    %4019 = vmatpush1.bf16.msra.mxu0 0
    %4020 = vmatprep.subr.bf16.mxu0 0
    %4021 = vmatpush1.bf16.msra.mxu0 0
    %4022 = vmatprep.subr.bf16.mxu0 0
    %4023 = vmatpush1.bf16.msra.mxu0 0
    %4024 = vmatprep.subr.bf16.mxu0 0
    %4025 = vmatpush1.bf16.msra.mxu0 0
    %4026 = vmatprep.subr.bf16.mxu0 0
    %4027 = vmatpush1.bf16.msra.mxu0 %v3706
    %4028 = vmatprep.subr.bf16.mxu0 0
    %4029 = vmatpush2.bf16.msra.mxu0 0
    %4030 = vmatprep.subr.bf16.mxu0 0
    %4031 = vmatpush2.bf16.msra.mxu0 0
    %4032 = vmatprep.subr.bf16.mxu0 0
    %4033 = vmatpush2.bf16.msra.mxu0 0
    %4034 = vmatprep.subr.bf16.mxu0 0
    %4035 = vmatpush2.bf16.msra.mxu0 0
    %4036 = vmatprep.subr.bf16.mxu0 0
    %4037 = vmatpush2.bf16.msra.mxu0 0
    %4038 = vmatprep.subr.bf16.mxu0 0
    %4039 = vmatpush2.bf16.msra.mxu0 0
    %4040 = vmatprep.subr.bf16.mxu0 0
    %4041 = vmatpush2.bf16.msra.mxu0 0
    %4042 = vmatprep.subr.bf16.mxu0 0
    %4043 = vmatpush2.bf16.msra.mxu0 0
    %4044 = vmatprep.mubr.bf16.mxu0 0
    %4045 = vmatmul.mubr.bf16.gmra.mxu0 %v4010
    %v4046 = vpop.f32.mrf.mxu0
    %v4047 = vadd.f32 0.0, %v4046
    %v4048 = vpop.f32.mrf.mxu0
    %v4049 = vpop.f32.mrf.mxu0
    %v4050 = vpop.f32.mrf.mxu0
    %4051 = vdwg.mxu0
    %v4052 = vpack.c.bf16 %v4047, %v4047
    %s4053 = scalar_lea.vmem [#allocation24], 128
    %v4054 = vld [vmem:[%s4053] sm:$0xf]
    %v4055 = vld [vmem:[%s4053 + $0x4] sm:$0xf]
    %v4056 = vld [vmem:[%s4053 + $0x8] sm:$0xf]
    %v4057 = vld [vmem:[%s4053 + $0xc] sm:$0xf]
    %v4058 = vld [vmem:[%s4053 + $0x10] sm:$0xf]
    %v4059 = vld [vmem:[%s4053 + $0x14] sm:$0xf]
    %v4060 = vld [vmem:[%s4053 + $0x18] sm:$0xf]
    %v4061 = vld [vmem:[%s4053 + $0x1c] sm:$0xf]
    %v4062 = vld [vmem:[%s4053 + $0x20] sm:$0xf]
    %v4063 = vld [vmem:[%s4053 + $0x24] sm:$0xf]
    %v4064 = vld [vmem:[%s4053 + $0x28] sm:$0xf]
    %v4065 = vld [vmem:[%s4053 + $0x2c] sm:$0xf]
    %v4066 = vld [vmem:[%s4053 + $0x30] sm:$0xf]
    %v4067 = vld [vmem:[%s4053 + $0x34] sm:$0xf]
    %v4068 = vld [vmem:[%s4053 + $0x38] sm:$0xf]
    %v4069 = vld [vmem:[%s4053 + $0x3c] sm:$0xf]
    %v4086 = vunpack.c.l.b16 %v4054
    %v4087 = vunpack.c.l.b16 %v4055
    %v4088 = vunpack.c.l.b16 %v4056
    %v4089 = vunpack.c.l.b16 %v4057
    %v4090 = vunpack.c.l.b16 %v4058
    %v4091 = vunpack.c.l.b16 %v4059
    %v4092 = vunpack.c.l.b16 %v4060
    %v4093 = vunpack.c.l.b16 %v4061
    %v4094 = vunpack.c.l.b16 %v4062
    %v4095 = vunpack.c.l.b16 %v4063
    %v4096 = vunpack.c.l.b16 %v4064
    %v4097 = vunpack.c.l.b16 %v4065
    %v4098 = vunpack.c.l.b16 %v4066
    %v4099 = vunpack.c.l.b16 %v4067
    %v4100 = vunpack.c.l.b16 %v4068
    %v4101 = vunpack.c.l.b16 %v4069
    %v4102 = vpack.c.b16 %v4087, %v4086
    %v4103 = vpack.c.b16 %v4089, %v4088
    %v4104 = vpack.c.b16 %v4091, %v4090
    %v4105 = vpack.c.b16 %v4093, %v4092
    %v4106 = vpack.c.b16 %v4095, %v4094
    %v4107 = vpack.c.b16 %v4097, %v4096
    %v4108 = vpack.c.b16 %v4099, %v4098
    %v4109 = vpack.c.b16 %v4101, %v4100
    %4118 = vmatprep.subr.bf16.mxu0 0
    %4119 = vmatpush1.bf16.msra.mxu0 %v4109
    %4120 = vmatprep.subr.bf16.mxu0 0
    %4121 = vmatpush1.bf16.msra.mxu0 %v4108
    %4122 = vmatprep.subr.bf16.mxu0 0
    %4123 = vmatpush1.bf16.msra.mxu0 %v4107
    %4124 = vmatprep.subr.bf16.mxu0 0
    %4125 = vmatpush1.bf16.msra.mxu0 %v4106
    %4126 = vmatprep.subr.bf16.mxu0 0
    %4127 = vmatpush1.bf16.msra.mxu0 %v4105
    %4128 = vmatprep.subr.bf16.mxu0 0
    %4129 = vmatpush1.bf16.msra.mxu0 %v4104
    %4130 = vmatprep.subr.bf16.mxu0 0
    %4131 = vmatpush1.bf16.msra.mxu0 %v4103
    %4132 = vmatprep.subr.bf16.mxu0 0
    %4133 = vmatpush1.bf16.msra.mxu0 %v4102
    %4134 = vmatprep.subr.bf16.mxu0 0
    %4135 = vmatpush2.bf16.msra.mxu0 0
    %4136 = vmatprep.subr.bf16.mxu0 0
    %4137 = vmatpush2.bf16.msra.mxu0 0
    %4138 = vmatprep.subr.bf16.mxu0 0
    %4139 = vmatpush2.bf16.msra.mxu0 0
    %4140 = vmatprep.subr.bf16.mxu0 0
    %4141 = vmatpush2.bf16.msra.mxu0 0
    %4142 = vmatprep.subr.bf16.mxu0 0
    %4143 = vmatpush2.bf16.msra.mxu0 0
    %4144 = vmatprep.subr.bf16.mxu0 0
    %4145 = vmatpush2.bf16.msra.mxu0 0
    %4146 = vmatprep.subr.bf16.mxu0 0
    %4147 = vmatpush2.bf16.msra.mxu0 0
    %4148 = vmatprep.subr.bf16.mxu0 0
    %4149 = vmatpush2.bf16.msra.mxu0 0
    %4150 = vmatprep.mubr.bf16.mxu0 0
    %4151 = vmatmul.mubr.bf16.gmra.mxu0 %v4052
    %v4152 = vpop.f32.mrf.mxu0
    %v4153 = vadd.f32 0.0, %v4152
    %v4154 = vpop.f32.mrf.mxu0
    %v4155 = vpop.f32.mrf.mxu0
    %v4156 = vpop.f32.mrf.mxu0
    %4157 = vdwg.mxu0
    %v4158 = vadd.f32 %v4002, %v4153
    %v4159 = vld [vmem:[%s57] sm:$0x1]
    %v4161 = vlaneseq
    %v4162 = vshrl.u32 %v4161, 7
    %v4163 = vsub.s32 0, %v4162
    %v4164 = vrot.slane %v4159, %v4163
    %v4166 = vadd.f32 %v4158, %v4164
    %v4167 = vld [vmem:[#allocation13] sm:$0xff]
    %vm4168 = vcmask 64512
    %v4170 = vsel %vm4168, %v4167, 0
    %4172 = vmatprep.subr.mxu0 0.0
    %4173 = vmatpush1.msra.mxu0 0.0
    %4174 = vmatprep.subr.mxu0 0.0
    %4175 = vmatpush1.msra.mxu0 0.0
    %4176 = vmatprep.subr.mxu0 0.0
    %4177 = vmatpush1.msra.mxu0 0.0
    %4178 = vmatprep.subr.mxu0 0.0
    %4179 = vmatpush1.msra.mxu0 0.0
    %4180 = vmatprep.subr.mxu0 0.0
    %4181 = vmatpush1.msra.mxu0 0.0
    %4182 = vmatprep.subr.mxu0 0.0
    %4183 = vmatpush1.msra.mxu0 0.0
    %4184 = vmatprep.subr.mxu0 0.0
    %4185 = vmatpush1.msra.mxu0 0.0
    %4186 = vmatprep.subr.mxu0 0.0
    %4187 = vmatpush1.msra.mxu0 0.0
    %4188 = vmatprep.subr.mxu0 0.0
    %4189 = vmatpush1.msra.mxu0 0.0
    %4190 = vmatprep.subr.mxu0 0.0
    %4191 = vmatpush1.msra.mxu0 0.0
    %4192 = vmatprep.subr.mxu0 0.0
    %4193 = vmatpush1.msra.mxu0 0.0
    %4194 = vmatprep.subr.mxu0 0.0
    %4195 = vmatpush1.msra.mxu0 0.0
    %4196 = vmatprep.subr.mxu0 0.0
    %4197 = vmatpush1.msra.mxu0 0.0
    %4198 = vmatprep.subr.mxu0 0.0
    %4199 = vmatpush1.msra.mxu0 0.0
    %4200 = vmatprep.subr.mxu0 0.0
    %4201 = vmatpush1.msra.mxu0 0.0
    %4202 = vmatprep.subr.mxu0 0.0
    %4203 = vmatpush1.msra.mxu0 %v4166
    %4204 = vmatprep.subr.mxu0 0.0
    %4205 = vmatpush2.msra.mxu0 0.0
    %4206 = vmatprep.subr.mxu0 0.0
    %4207 = vmatpush2.msra.mxu0 0.0
    %4208 = vmatprep.subr.mxu0 0.0
    %4209 = vmatpush2.msra.mxu0 0.0
    %4210 = vmatprep.subr.mxu0 0.0
    %4211 = vmatpush2.msra.mxu0 0.0
    %4212 = vmatprep.subr.mxu0 0.0
    %4213 = vmatpush2.msra.mxu0 0.0
    %4214 = vmatprep.subr.mxu0 0.0
    %4215 = vmatpush2.msra.mxu0 0.0
    %4216 = vmatprep.subr.mxu0 0.0
    %4217 = vmatpush2.msra.mxu0 0.0
    %4218 = vmatprep.subr.mxu0 0.0
    %4219 = vmatpush2.msra.mxu0 0.0
    %4220 = vmatprep.subr.mxu0 0.0
    %4221 = vmatpush2.msra.mxu0 0.0
    %4222 = vmatprep.subr.mxu0 0.0
    %4223 = vmatpush2.msra.mxu0 0.0
    %4224 = vmatprep.subr.mxu0 0.0
    %4225 = vmatpush2.msra.mxu0 0.0
    %4226 = vmatprep.subr.mxu0 0.0
    %4227 = vmatpush2.msra.mxu0 0.0
    %4228 = vmatprep.subr.mxu0 0.0
    %4229 = vmatpush2.msra.mxu0 0.0
    %4230 = vmatprep.subr.mxu0 0.0
    %4231 = vmatpush2.msra.mxu0 0.0
    %4232 = vmatprep.subr.mxu0 0.0
    %4233 = vmatpush2.msra.mxu0 0.0
    %4234 = vmatprep.subr.mxu0 0.0
    %4235 = vmatpush2.msra.mxu0 0.0
    %4236 = vmatprep.mubr.f32.mxu0 0.0
    %4237 = vmatmul.mubr.f32.gmra.mxu0 %v4170
    %v4238 = vpop.f32.mrf.mxu0
    %v4239 = vadd.f32 0.0, %v4238
    %v4240 = vpop.f32.mrf.mxu0
    %4241 = vdwg.mxu0
    %v4242 = vmul.f32 %v4166, %v4166
    %4243 = vmatprep.subr.mxu0 0.0
    %4244 = vmatpush1.msra.mxu0 0.0
    %4245 = vmatprep.subr.mxu0 0.0
    %4246 = vmatpush1.msra.mxu0 0.0
    %4247 = vmatprep.subr.mxu0 0.0
    %4248 = vmatpush1.msra.mxu0 0.0
    %4249 = vmatprep.subr.mxu0 0.0
    %4250 = vmatpush1.msra.mxu0 0.0
    %4251 = vmatprep.subr.mxu0 0.0
    %4252 = vmatpush1.msra.mxu0 0.0
    %4253 = vmatprep.subr.mxu0 0.0
    %4254 = vmatpush1.msra.mxu0 0.0
    %4255 = vmatprep.subr.mxu0 0.0
    %4256 = vmatpush1.msra.mxu0 0.0
    %4257 = vmatprep.subr.mxu0 0.0
    %4258 = vmatpush1.msra.mxu0 0.0
    %4259 = vmatprep.subr.mxu0 0.0
    %4260 = vmatpush1.msra.mxu0 0.0
    %4261 = vmatprep.subr.mxu0 0.0
    %4262 = vmatpush1.msra.mxu0 0.0
    %4263 = vmatprep.subr.mxu0 0.0
    %4264 = vmatpush1.msra.mxu0 0.0
    %4265 = vmatprep.subr.mxu0 0.0
    %4266 = vmatpush1.msra.mxu0 0.0
    %4267 = vmatprep.subr.mxu0 0.0
    %4268 = vmatpush1.msra.mxu0 0.0
    %4269 = vmatprep.subr.mxu0 0.0
    %4270 = vmatpush1.msra.mxu0 0.0
    %4271 = vmatprep.subr.mxu0 0.0
    %4272 = vmatpush1.msra.mxu0 0.0
    %4273 = vmatprep.subr.mxu0 0.0
    %4274 = vmatpush1.msra.mxu0 %v4242
    %4275 = vmatprep.subr.mxu0 0.0
    %4276 = vmatpush2.msra.mxu0 0.0
    %4277 = vmatprep.subr.mxu0 0.0
    %4278 = vmatpush2.msra.mxu0 0.0
    %4279 = vmatprep.subr.mxu0 0.0
    %4280 = vmatpush2.msra.mxu0 0.0
    %4281 = vmatprep.subr.mxu0 0.0
    %4282 = vmatpush2.msra.mxu0 0.0
    %4283 = vmatprep.subr.mxu0 0.0
    %4284 = vmatpush2.msra.mxu0 0.0
    %4285 = vmatprep.subr.mxu0 0.0
    %4286 = vmatpush2.msra.mxu0 0.0
    %4287 = vmatprep.subr.mxu0 0.0
    %4288 = vmatpush2.msra.mxu0 0.0
    %4289 = vmatprep.subr.mxu0 0.0
    %4290 = vmatpush2.msra.mxu0 0.0
    %4291 = vmatprep.subr.mxu0 0.0
    %4292 = vmatpush2.msra.mxu0 0.0
    %4293 = vmatprep.subr.mxu0 0.0
    %4294 = vmatpush2.msra.mxu0 0.0
    %4295 = vmatprep.subr.mxu0 0.0
    %4296 = vmatpush2.msra.mxu0 0.0
    %4297 = vmatprep.subr.mxu0 0.0
    %4298 = vmatpush2.msra.mxu0 0.0
    %4299 = vmatprep.subr.mxu0 0.0
    %4300 = vmatpush2.msra.mxu0 0.0
    %4301 = vmatprep.subr.mxu0 0.0
    %4302 = vmatpush2.msra.mxu0 0.0
    %4303 = vmatprep.subr.mxu0 0.0
    %4304 = vmatpush2.msra.mxu0 0.0
    %4305 = vmatprep.subr.mxu0 0.0
    %4306 = vmatpush2.msra.mxu0 0.0
    %4307 = vmatprep.mubr.f32.mxu0 0.0
    %4308 = vmatmul.mubr.f32.gmra.mxu0 %v4170
    %v4309 = vpop.f32.mrf.mxu0
    %v4310 = vadd.f32 0.0, %v4309
    %v4311 = vpop.f32.mrf.mxu0
    %4312 = vdwg.mxu0
    %4313 = vrot.lane.b32.xlu0 %v4239, 32
    %v4314 = vpop.permute.xlu0 %4313
    %v4315 = vadd.f32 %v4239, %v4314
    %4316 = vrot.lane.b32.xlu0 %v4310, 32
    %v4317 = vpop.permute.xlu0 %4316
    %v4318 = vadd.f32 %v4310, %v4317
    %4319 = vrot.lane.b32.xlu0 %v4315, 64
    %v4320 = vpop.permute.xlu0 %4319
    %v4321 = vadd.f32 %v4315, %v4320
    %4322 = vrot.lane.b32.xlu0 %v4318, 64
    %v4323 = vpop.permute.xlu0 %4322
    %v4324 = vadd.f32 %v4318, %v4323
    %v4325 = vmul.f32 %v4321, 0.25
    %v4326 = vmul.f32 %v4324, 0.25
    %v4327 = vmul.f32 %v4325, %v4325
    %v4328 = vsub.f32 %v4326, %v4327
    %v4329 = vld [vmem:[%s59] sm:$0x1]
    %v4330 = vadd.f32 %v4328, 1e-05
    %v4331 = vrsqrt.pop %v4330
    %v4333 = vlaneseq
    %v4334 = vshrl.u32 %v4333, 7
    %v4335 = vsub.s32 0, %v4334
    %v4336 = vrot.slane %v4329, %v4335
    %v4338 = vmul.f32 %v4336, %v4331
    %v4339 = vsub.f32 %v4166, %v4325
    %v4340 = vmul.f32 %v4339, %v4338
    %v4341 = vld [vmem:[%s61] sm:$0x1]
    %v4343 = vlaneseq
    %v4344 = vshrl.u32 %v4343, 7
    %v4345 = vsub.s32 0, %v4344
    %v4346 = vrot.slane %v4341, %v4345
    %v4348 = vadd.f32 %v4340, %v4346
    %vm4349 = vcmp.ge.f32.partialorder %v4348, 0.0
    %v4350 = vmul.f32 %v4348, 0.01
    %v4351 = vsel %vm4349, %v4348, %v4350
    %v4352 = vpack.c.bf16 %v4351, %v4351
    %v4353 = vld [vmem:[#allocation9] sm:$0xf]
    %v4355 = vsel %vm4168, %v4353, 0
    %vm4357 = vcmask 1043456
    %v4359 = vsel %vm4357, %v4352, 0
    %4361 = vmatprep.subr.bf16.mxu0 0
    %4362 = vmatpush1.bf16.msra.mxu0 0
    %4363 = vmatprep.subr.bf16.mxu0 0
    %4364 = vmatpush1.bf16.msra.mxu0 0
    %4365 = vmatprep.subr.bf16.mxu0 0
    %4366 = vmatpush1.bf16.msra.mxu0 0
    %4367 = vmatprep.subr.bf16.mxu0 0
    %4368 = vmatpush1.bf16.msra.mxu0 0
    %4369 = vmatprep.subr.bf16.mxu0 0
    %4370 = vmatpush1.bf16.msra.mxu0 0
    %4371 = vmatprep.subr.bf16.mxu0 0
    %4372 = vmatpush1.bf16.msra.mxu0 0
    %4373 = vmatprep.subr.bf16.mxu0 0
    %4374 = vmatpush1.bf16.msra.mxu0 0
    %4375 = vmatprep.subr.bf16.mxu0 0
    %4376 = vmatpush1.bf16.msra.mxu0 %v4359
    %4377 = vmatprep.subr.bf16.mxu0 0
    %4378 = vmatpush2.bf16.msra.mxu0 0
    %4379 = vmatprep.subr.bf16.mxu0 0
    %4380 = vmatpush2.bf16.msra.mxu0 0
    %4381 = vmatprep.subr.bf16.mxu0 0
    %4382 = vmatpush2.bf16.msra.mxu0 0
    %4383 = vmatprep.subr.bf16.mxu0 0
    %4384 = vmatpush2.bf16.msra.mxu0 0
    %4385 = vmatprep.subr.bf16.mxu0 0
    %4386 = vmatpush2.bf16.msra.mxu0 0
    %4387 = vmatprep.subr.bf16.mxu0 0
    %4388 = vmatpush2.bf16.msra.mxu0 0
    %4389 = vmatprep.subr.bf16.mxu0 0
    %4390 = vmatpush2.bf16.msra.mxu0 0
    %4391 = vmatprep.subr.bf16.mxu0 0
    %4392 = vmatpush2.bf16.msra.mxu0 0
    %4393 = vmatprep.mubr.bf16.mxu0 0
    %4394 = vmatmul.mubr.bf16.gmra.mxu0 %v4355
    %v4395 = vpop.f32.mrf.mxu0
    %v4396 = vadd.f32 0.0, %v4395
    %v4397 = vpop.f32.mrf.mxu0
    %v4398 = vpop.f32.mrf.mxu0
    %v4399 = vpop.f32.mrf.mxu0
    %4400 = vdwg.mxu0
    %v4401 = vpack.c.bf16 %v4396, %v4396
    %v4402 = vld [vmem:[#allocation25] sm:$0xf]
    %v4403 = vld [vmem:[#allocation25 + $0x4] sm:$0xf]
    %v4404 = vld [vmem:[#allocation25 + $0x8] sm:$0xf]
    %v4405 = vld [vmem:[#allocation25 + $0xc] sm:$0xf]
    %v4406 = vld [vmem:[#allocation25 + $0x10] sm:$0xf]
    %v4407 = vld [vmem:[#allocation25 + $0x14] sm:$0xf]
    %v4408 = vld [vmem:[#allocation25 + $0x18] sm:$0xf]
    %v4409 = vld [vmem:[#allocation25 + $0x1c] sm:$0xf]
    %v4410 = vld [vmem:[#allocation25 + $0x20] sm:$0xf]
    %v4411 = vld [vmem:[#allocation25 + $0x24] sm:$0xf]
    %v4412 = vld [vmem:[#allocation25 + $0x28] sm:$0xf]
    %v4413 = vld [vmem:[#allocation25 + $0x2c] sm:$0xf]
    %v4414 = vld [vmem:[#allocation25 + $0x30] sm:$0xf]
    %v4415 = vld [vmem:[#allocation25 + $0x34] sm:$0xf]
    %v4416 = vld [vmem:[#allocation25 + $0x38] sm:$0xf]
    %v4417 = vld [vmem:[#allocation25 + $0x3c] sm:$0xf]
    %s4418 = scalar_lea.vmem [#allocation9], 4
    %v4419 = vld [vmem:[%s4418] sm:$0xf]
    %v4421 = vsel %vm4168, %v4419, 0
    %4423 = vmatprep.subr.bf16.mxu0 0
    %4424 = vmatpush1.bf16.msra.mxu0 0
    %4425 = vmatprep.subr.bf16.mxu0 0
    %4426 = vmatpush1.bf16.msra.mxu0 0
    %4427 = vmatprep.subr.bf16.mxu0 0
    %4428 = vmatpush1.bf16.msra.mxu0 0
    %4429 = vmatprep.subr.bf16.mxu0 0
    %4430 = vmatpush1.bf16.msra.mxu0 0
    %4431 = vmatprep.subr.bf16.mxu0 0
    %4432 = vmatpush1.bf16.msra.mxu0 0
    %4433 = vmatprep.subr.bf16.mxu0 0
    %4434 = vmatpush1.bf16.msra.mxu0 0
    %4435 = vmatprep.subr.bf16.mxu0 0
    %4436 = vmatpush1.bf16.msra.mxu0 0
    %4437 = vmatprep.subr.bf16.mxu0 0
    %4438 = vmatpush1.bf16.msra.mxu0 %v4359
    %4439 = vmatprep.subr.bf16.mxu0 0
    %4440 = vmatpush2.bf16.msra.mxu0 0
    %4441 = vmatprep.subr.bf16.mxu0 0
    %4442 = vmatpush2.bf16.msra.mxu0 0
    %4443 = vmatprep.subr.bf16.mxu0 0
    %4444 = vmatpush2.bf16.msra.mxu0 0
    %4445 = vmatprep.subr.bf16.mxu0 0
    %4446 = vmatpush2.bf16.msra.mxu0 0
    %4447 = vmatprep.subr.bf16.mxu0 0
    %4448 = vmatpush2.bf16.msra.mxu0 0
    %4449 = vmatprep.subr.bf16.mxu0 0
    %4450 = vmatpush2.bf16.msra.mxu0 0
    %4451 = vmatprep.subr.bf16.mxu0 0
    %4452 = vmatpush2.bf16.msra.mxu0 0
    %4453 = vmatprep.subr.bf16.mxu0 0
    %4454 = vmatpush2.bf16.msra.mxu0 0
    %4455 = vmatprep.mubr.bf16.mxu0 0
    %4456 = vmatmul.mubr.bf16.gmra.mxu0 %v4421
    %v4457 = vpop.f32.mrf.mxu0
    %v4458 = vadd.f32 0.0, %v4457
    %v4459 = vpop.f32.mrf.mxu0
    %v4460 = vpop.f32.mrf.mxu0
    %v4461 = vpop.f32.mrf.mxu0
    %4462 = vdwg.mxu0
    %v4463 = vpack.c.bf16 %v4458, %v4458
    %s4464 = scalar_lea.vmem [#allocation25], 64
    %v4465 = vld [vmem:[%s4464] sm:$0xf]
    %v4466 = vld [vmem:[%s4464 + $0x4] sm:$0xf]
    %v4467 = vld [vmem:[%s4464 + $0x8] sm:$0xf]
    %v4468 = vld [vmem:[%s4464 + $0xc] sm:$0xf]
    %v4469 = vld [vmem:[%s4464 + $0x10] sm:$0xf]
    %v4470 = vld [vmem:[%s4464 + $0x14] sm:$0xf]
    %v4471 = vld [vmem:[%s4464 + $0x18] sm:$0xf]
    %v4472 = vld [vmem:[%s4464 + $0x1c] sm:$0xf]
    %v4473 = vld [vmem:[%s4464 + $0x20] sm:$0xf]
    %v4474 = vld [vmem:[%s4464 + $0x24] sm:$0xf]
    %v4475 = vld [vmem:[%s4464 + $0x28] sm:$0xf]
    %v4476 = vld [vmem:[%s4464 + $0x2c] sm:$0xf]
    %v4477 = vld [vmem:[%s4464 + $0x30] sm:$0xf]
    %v4478 = vld [vmem:[%s4464 + $0x34] sm:$0xf]
    %v4479 = vld [vmem:[%s4464 + $0x38] sm:$0xf]
    %v4480 = vld [vmem:[%s4464 + $0x3c] sm:$0xf]
    %v4497 = vunpack.c.l.b16 %v4465
    %v4498 = vunpack.c.l.b16 %v4466
    %v4499 = vunpack.c.l.b16 %v4467
    %v4500 = vunpack.c.l.b16 %v4468
    %v4501 = vunpack.c.l.b16 %v4469
    %v4502 = vunpack.c.l.b16 %v4470
    %v4503 = vunpack.c.l.b16 %v4471
    %v4504 = vunpack.c.l.b16 %v4472
    %v4505 = vunpack.c.l.b16 %v4473
    %v4506 = vunpack.c.l.b16 %v4474
    %v4507 = vunpack.c.l.b16 %v4475
    %v4508 = vunpack.c.l.b16 %v4476
    %v4509 = vunpack.c.l.b16 %v4477
    %v4510 = vunpack.c.l.b16 %v4478
    %v4511 = vunpack.c.l.b16 %v4479
    %v4512 = vunpack.c.l.b16 %v4480
    %v4513 = vpack.c.b16 %v4498, %v4497
    %v4514 = vpack.c.b16 %v4500, %v4499
    %v4515 = vpack.c.b16 %v4502, %v4501
    %v4516 = vpack.c.b16 %v4504, %v4503
    %v4517 = vpack.c.b16 %v4506, %v4505
    %v4518 = vpack.c.b16 %v4508, %v4507
    %v4519 = vpack.c.b16 %v4510, %v4509
    %v4520 = vpack.c.b16 %v4512, %v4511
    %4529 = vmatprep.subr.bf16.mxu0 0
    %4530 = vmatpush1.bf16.msra.mxu0 %v4520
    %4531 = vmatprep.subr.bf16.mxu0 0
    %4532 = vmatpush1.bf16.msra.mxu0 %v4519
    %4533 = vmatprep.subr.bf16.mxu0 0
    %4534 = vmatpush1.bf16.msra.mxu0 %v4518
    %4535 = vmatprep.subr.bf16.mxu0 0
    %4536 = vmatpush1.bf16.msra.mxu0 %v4517
    %4537 = vmatprep.subr.bf16.mxu0 0
    %4538 = vmatpush1.bf16.msra.mxu0 %v4516
    %4539 = vmatprep.subr.bf16.mxu0 0
    %4540 = vmatpush1.bf16.msra.mxu0 %v4515
    %4541 = vmatprep.subr.bf16.mxu0 0
    %4542 = vmatpush1.bf16.msra.mxu0 %v4514
    %4543 = vmatprep.subr.bf16.mxu0 0
    %4544 = vmatpush1.bf16.msra.mxu0 %v4513
    %4545 = vmatprep.subr.bf16.mxu0 0
    %4546 = vmatpush2.bf16.msra.mxu0 0
    %4547 = vmatprep.subr.bf16.mxu0 0
    %4548 = vmatpush2.bf16.msra.mxu0 0
    %4549 = vmatprep.subr.bf16.mxu0 0
    %4550 = vmatpush2.bf16.msra.mxu0 0
    %4551 = vmatprep.subr.bf16.mxu0 0
    %4552 = vmatpush2.bf16.msra.mxu0 0
    %4553 = vmatprep.subr.bf16.mxu0 0
    %4554 = vmatpush2.bf16.msra.mxu0 0
    %4555 = vmatprep.subr.bf16.mxu0 0
    %4556 = vmatpush2.bf16.msra.mxu0 0
    %4557 = vmatprep.subr.bf16.mxu0 0
    %4558 = vmatpush2.bf16.msra.mxu0 0
    %4559 = vmatprep.subr.bf16.mxu0 0
    %4560 = vmatpush2.bf16.msra.mxu0 0
    %4561 = vmatprep.mubr.bf16.mxu0 0
    %4562 = vmatmul.mubr.bf16.gmra.mxu0 %v4463
    %v4563 = vpop.f32.mrf.mxu0
    %v4564 = vadd.f32 0.0, %v4563
    %v4565 = vpop.f32.mrf.mxu0
    %v4566 = vpop.f32.mrf.mxu0
    %v4567 = vpop.f32.mrf.mxu0
    %4568 = vdwg.mxu0
    %v4585 = vunpack.c.l.b16 %v4402
    %v4586 = vunpack.c.l.b16 %v4403
    %v4587 = vunpack.c.l.b16 %v4404
    %v4588 = vunpack.c.l.b16 %v4405
    %v4589 = vunpack.c.l.b16 %v4406
    %v4590 = vunpack.c.l.b16 %v4407
    %v4591 = vunpack.c.l.b16 %v4408
    %v4592 = vunpack.c.l.b16 %v4409
    %v4593 = vunpack.c.l.b16 %v4410
    %v4594 = vunpack.c.l.b16 %v4411
    %v4595 = vunpack.c.l.b16 %v4412
    %v4596 = vunpack.c.l.b16 %v4413
    %v4597 = vunpack.c.l.b16 %v4414
    %v4598 = vunpack.c.l.b16 %v4415
    %v4599 = vunpack.c.l.b16 %v4416
    %v4600 = vunpack.c.l.b16 %v4417
    %v4601 = vpack.c.b16 %v4586, %v4585
    %v4602 = vpack.c.b16 %v4588, %v4587
    %v4603 = vpack.c.b16 %v4590, %v4589
    %v4604 = vpack.c.b16 %v4592, %v4591
    %v4605 = vpack.c.b16 %v4594, %v4593
    %v4606 = vpack.c.b16 %v4596, %v4595
    %v4607 = vpack.c.b16 %v4598, %v4597
    %v4608 = vpack.c.b16 %v4600, %v4599
    %4617 = vmatprep.subr.bf16.mxu0 0
    %4618 = vmatpush1.bf16.msra.mxu0 %v4608
    %4619 = vmatprep.subr.bf16.mxu0 0
    %4620 = vmatpush1.bf16.msra.mxu0 %v4607
    %4621 = vmatprep.subr.bf16.mxu0 0
    %4622 = vmatpush1.bf16.msra.mxu0 %v4606
    %4623 = vmatprep.subr.bf16.mxu0 0
    %4624 = vmatpush1.bf16.msra.mxu0 %v4605
    %4625 = vmatprep.subr.bf16.mxu0 0
    %4626 = vmatpush1.bf16.msra.mxu0 %v4604
    %4627 = vmatprep.subr.bf16.mxu0 0
    %4628 = vmatpush1.bf16.msra.mxu0 %v4603
    %4629 = vmatprep.subr.bf16.mxu0 0
    %4630 = vmatpush1.bf16.msra.mxu0 %v4602
    %4631 = vmatprep.subr.bf16.mxu0 0
    %4632 = vmatpush1.bf16.msra.mxu0 %v4601
    %4633 = vmatprep.subr.bf16.mxu0 0
    %4634 = vmatpush2.bf16.msra.mxu0 0
    %4635 = vmatprep.subr.bf16.mxu0 0
    %4636 = vmatpush2.bf16.msra.mxu0 0
    %4637 = vmatprep.subr.bf16.mxu0 0
    %4638 = vmatpush2.bf16.msra.mxu0 0
    %4639 = vmatprep.subr.bf16.mxu0 0
    %4640 = vmatpush2.bf16.msra.mxu0 0
    %4641 = vmatprep.subr.bf16.mxu0 0
    %4642 = vmatpush2.bf16.msra.mxu0 0
    %4643 = vmatprep.subr.bf16.mxu0 0
    %4644 = vmatpush2.bf16.msra.mxu0 0
    %4645 = vmatprep.subr.bf16.mxu0 0
    %4646 = vmatpush2.bf16.msra.mxu0 0
    %4647 = vmatprep.subr.bf16.mxu0 0
    %4648 = vmatpush2.bf16.msra.mxu0 0
    %4649 = vmatprep.mubr.bf16.mxu0 0
    %4650 = vmatmul.mubr.bf16.gmra.mxu0 %v4401
    %v4651 = vpop.f32.mrf.mxu0
    %v4652 = vadd.f32 %v4564, %v4651
    %v4653 = vpop.f32.mrf.mxu0
    %v4654 = vpop.f32.mrf.mxu0
    %v4655 = vpop.f32.mrf.mxu0
    %4656 = vdwg.mxu0
    %s4657 = scalar_lea.vmem [#allocation9], 8
    %v4658 = vld [vmem:[%s4657] sm:$0xf]
    %v4660 = vsel %vm4168, %v4658, 0
    %4662 = vmatprep.subr.bf16.mxu0 0
    %4663 = vmatpush1.bf16.msra.mxu0 0
    %4664 = vmatprep.subr.bf16.mxu0 0
    %4665 = vmatpush1.bf16.msra.mxu0 0
    %4666 = vmatprep.subr.bf16.mxu0 0
    %4667 = vmatpush1.bf16.msra.mxu0 0
    %4668 = vmatprep.subr.bf16.mxu0 0
    %4669 = vmatpush1.bf16.msra.mxu0 0
    %4670 = vmatprep.subr.bf16.mxu0 0
    %4671 = vmatpush1.bf16.msra.mxu0 0
    %4672 = vmatprep.subr.bf16.mxu0 0
    %4673 = vmatpush1.bf16.msra.mxu0 0
    %4674 = vmatprep.subr.bf16.mxu0 0
    %4675 = vmatpush1.bf16.msra.mxu0 0
    %4676 = vmatprep.subr.bf16.mxu0 0
    %4677 = vmatpush1.bf16.msra.mxu0 %v4359
    %4678 = vmatprep.subr.bf16.mxu0 0
    %4679 = vmatpush2.bf16.msra.mxu0 0
    %4680 = vmatprep.subr.bf16.mxu0 0
    %4681 = vmatpush2.bf16.msra.mxu0 0
    %4682 = vmatprep.subr.bf16.mxu0 0
    %4683 = vmatpush2.bf16.msra.mxu0 0
    %4684 = vmatprep.subr.bf16.mxu0 0
    %4685 = vmatpush2.bf16.msra.mxu0 0
    %4686 = vmatprep.subr.bf16.mxu0 0
    %4687 = vmatpush2.bf16.msra.mxu0 0
    %4688 = vmatprep.subr.bf16.mxu0 0
    %4689 = vmatpush2.bf16.msra.mxu0 0
    %4690 = vmatprep.subr.bf16.mxu0 0
    %4691 = vmatpush2.bf16.msra.mxu0 0
    %4692 = vmatprep.subr.bf16.mxu0 0
    %4693 = vmatpush2.bf16.msra.mxu0 0
    %4694 = vmatprep.mubr.bf16.mxu0 0
    %4695 = vmatmul.mubr.bf16.gmra.mxu0 %v4660
    %v4696 = vpop.f32.mrf.mxu0
    %v4697 = vadd.f32 0.0, %v4696
    %v4698 = vpop.f32.mrf.mxu0
    %v4699 = vpop.f32.mrf.mxu0
    %v4700 = vpop.f32.mrf.mxu0
    %4701 = vdwg.mxu0
    %v4702 = vpack.c.bf16 %v4697, %v4697
    %s4703 = scalar_lea.vmem [#allocation25], 128
    %v4704 = vld [vmem:[%s4703] sm:$0xf]
    %v4705 = vld [vmem:[%s4703 + $0x4] sm:$0xf]
    %v4706 = vld [vmem:[%s4703 + $0x8] sm:$0xf]
    %v4707 = vld [vmem:[%s4703 + $0xc] sm:$0xf]
    %v4708 = vld [vmem:[%s4703 + $0x10] sm:$0xf]
    %v4709 = vld [vmem:[%s4703 + $0x14] sm:$0xf]
    %v4710 = vld [vmem:[%s4703 + $0x18] sm:$0xf]
    %v4711 = vld [vmem:[%s4703 + $0x1c] sm:$0xf]
    %v4712 = vld [vmem:[%s4703 + $0x20] sm:$0xf]
    %v4713 = vld [vmem:[%s4703 + $0x24] sm:$0xf]
    %v4714 = vld [vmem:[%s4703 + $0x28] sm:$0xf]
    %v4715 = vld [vmem:[%s4703 + $0x2c] sm:$0xf]
    %v4716 = vld [vmem:[%s4703 + $0x30] sm:$0xf]
    %v4717 = vld [vmem:[%s4703 + $0x34] sm:$0xf]
    %v4718 = vld [vmem:[%s4703 + $0x38] sm:$0xf]
    %v4719 = vld [vmem:[%s4703 + $0x3c] sm:$0xf]
    %v4736 = vunpack.c.l.b16 %v4704
    %v4737 = vunpack.c.l.b16 %v4705
    %v4738 = vunpack.c.l.b16 %v4706
    %v4739 = vunpack.c.l.b16 %v4707
    %v4740 = vunpack.c.l.b16 %v4708
    %v4741 = vunpack.c.l.b16 %v4709
    %v4742 = vunpack.c.l.b16 %v4710
    %v4743 = vunpack.c.l.b16 %v4711
    %v4744 = vunpack.c.l.b16 %v4712
    %v4745 = vunpack.c.l.b16 %v4713
    %v4746 = vunpack.c.l.b16 %v4714
    %v4747 = vunpack.c.l.b16 %v4715
    %v4748 = vunpack.c.l.b16 %v4716
    %v4749 = vunpack.c.l.b16 %v4717
    %v4750 = vunpack.c.l.b16 %v4718
    %v4751 = vunpack.c.l.b16 %v4719
    %v4752 = vpack.c.b16 %v4737, %v4736
    %v4753 = vpack.c.b16 %v4739, %v4738
    %v4754 = vpack.c.b16 %v4741, %v4740
    %v4755 = vpack.c.b16 %v4743, %v4742
    %v4756 = vpack.c.b16 %v4745, %v4744
    %v4757 = vpack.c.b16 %v4747, %v4746
    %v4758 = vpack.c.b16 %v4749, %v4748
    %v4759 = vpack.c.b16 %v4751, %v4750
    %4768 = vmatprep.subr.bf16.mxu0 0
    %4769 = vmatpush1.bf16.msra.mxu0 %v4759
    %4770 = vmatprep.subr.bf16.mxu0 0
    %4771 = vmatpush1.bf16.msra.mxu0 %v4758
    %4772 = vmatprep.subr.bf16.mxu0 0
    %4773 = vmatpush1.bf16.msra.mxu0 %v4757
    %4774 = vmatprep.subr.bf16.mxu0 0
    %4775 = vmatpush1.bf16.msra.mxu0 %v4756
    %4776 = vmatprep.subr.bf16.mxu0 0
    %4777 = vmatpush1.bf16.msra.mxu0 %v4755
    %4778 = vmatprep.subr.bf16.mxu0 0
    %4779 = vmatpush1.bf16.msra.mxu0 %v4754
    %4780 = vmatprep.subr.bf16.mxu0 0
    %4781 = vmatpush1.bf16.msra.mxu0 %v4753
    %4782 = vmatprep.subr.bf16.mxu0 0
    %4783 = vmatpush1.bf16.msra.mxu0 %v4752
    %4784 = vmatprep.subr.bf16.mxu0 0
    %4785 = vmatpush2.bf16.msra.mxu0 0
    %4786 = vmatprep.subr.bf16.mxu0 0
    %4787 = vmatpush2.bf16.msra.mxu0 0
    %4788 = vmatprep.subr.bf16.mxu0 0
    %4789 = vmatpush2.bf16.msra.mxu0 0
    %4790 = vmatprep.subr.bf16.mxu0 0
    %4791 = vmatpush2.bf16.msra.mxu0 0
    %4792 = vmatprep.subr.bf16.mxu0 0
    %4793 = vmatpush2.bf16.msra.mxu0 0
    %4794 = vmatprep.subr.bf16.mxu0 0
    %4795 = vmatpush2.bf16.msra.mxu0 0
    %4796 = vmatprep.subr.bf16.mxu0 0
    %4797 = vmatpush2.bf16.msra.mxu0 0
    %4798 = vmatprep.subr.bf16.mxu0 0
    %4799 = vmatpush2.bf16.msra.mxu0 0
    %4800 = vmatprep.mubr.bf16.mxu0 0
    %4801 = vmatmul.mubr.bf16.gmra.mxu0 %v4702
    %v4802 = vpop.f32.mrf.mxu0
    %v4803 = vadd.f32 0.0, %v4802
    %v4804 = vpop.f32.mrf.mxu0
    %v4805 = vpop.f32.mrf.mxu0
    %v4806 = vpop.f32.mrf.mxu0
    %4807 = vdwg.mxu0
    %v4808 = vadd.f32 %v4652, %v4803
    %v4809 = vld [vmem:[%s65] sm:$0x1]
    %v4811 = vlaneseq
    %v4812 = vshrl.u32 %v4811, 7
    %v4813 = vsub.s32 0, %v4812
    %v4814 = vrot.slane %v4809, %v4813
    %v4816 = vadd.f32 %v4808, %v4814
    %4817 = vmatprep.subr.mxu0 0.0
    %4818 = vmatpush1.msra.mxu0 0.0
    %4819 = vmatprep.subr.mxu0 0.0
    %4820 = vmatpush1.msra.mxu0 0.0
    %4821 = vmatprep.subr.mxu0 0.0
    %4822 = vmatpush1.msra.mxu0 0.0
    %4823 = vmatprep.subr.mxu0 0.0
    %4824 = vmatpush1.msra.mxu0 0.0
    %4825 = vmatprep.subr.mxu0 0.0
    %4826 = vmatpush1.msra.mxu0 0.0
    %4827 = vmatprep.subr.mxu0 0.0
    %4828 = vmatpush1.msra.mxu0 0.0
    %4829 = vmatprep.subr.mxu0 0.0
    %4830 = vmatpush1.msra.mxu0 0.0
    %4831 = vmatprep.subr.mxu0 0.0
    %4832 = vmatpush1.msra.mxu0 0.0
    %4833 = vmatprep.subr.mxu0 0.0
    %4834 = vmatpush1.msra.mxu0 0.0
    %4835 = vmatprep.subr.mxu0 0.0
    %4836 = vmatpush1.msra.mxu0 0.0
    %4837 = vmatprep.subr.mxu0 0.0
    %4838 = vmatpush1.msra.mxu0 0.0
    %4839 = vmatprep.subr.mxu0 0.0
    %4840 = vmatpush1.msra.mxu0 0.0
    %4841 = vmatprep.subr.mxu0 0.0
    %4842 = vmatpush1.msra.mxu0 0.0
    %4843 = vmatprep.subr.mxu0 0.0
    %4844 = vmatpush1.msra.mxu0 0.0
    %4845 = vmatprep.subr.mxu0 0.0
    %4846 = vmatpush1.msra.mxu0 0.0
    %4847 = vmatprep.subr.mxu0 0.0
    %4848 = vmatpush1.msra.mxu0 %v4816
    %4849 = vmatprep.subr.mxu0 0.0
    %4850 = vmatpush2.msra.mxu0 0.0
    %4851 = vmatprep.subr.mxu0 0.0
    %4852 = vmatpush2.msra.mxu0 0.0
    %4853 = vmatprep.subr.mxu0 0.0
    %4854 = vmatpush2.msra.mxu0 0.0
    %4855 = vmatprep.subr.mxu0 0.0
    %4856 = vmatpush2.msra.mxu0 0.0
    %4857 = vmatprep.subr.mxu0 0.0
    %4858 = vmatpush2.msra.mxu0 0.0
    %4859 = vmatprep.subr.mxu0 0.0
    %4860 = vmatpush2.msra.mxu0 0.0
    %4861 = vmatprep.subr.mxu0 0.0
    %4862 = vmatpush2.msra.mxu0 0.0
    %4863 = vmatprep.subr.mxu0 0.0
    %4864 = vmatpush2.msra.mxu0 0.0
    %4865 = vmatprep.subr.mxu0 0.0
    %4866 = vmatpush2.msra.mxu0 0.0
    %4867 = vmatprep.subr.mxu0 0.0
    %4868 = vmatpush2.msra.mxu0 0.0
    %4869 = vmatprep.subr.mxu0 0.0
    %4870 = vmatpush2.msra.mxu0 0.0
    %4871 = vmatprep.subr.mxu0 0.0
    %4872 = vmatpush2.msra.mxu0 0.0
    %4873 = vmatprep.subr.mxu0 0.0
    %4874 = vmatpush2.msra.mxu0 0.0
    %4875 = vmatprep.subr.mxu0 0.0
    %4876 = vmatpush2.msra.mxu0 0.0
    %4877 = vmatprep.subr.mxu0 0.0
    %4878 = vmatpush2.msra.mxu0 0.0
    %4879 = vmatprep.subr.mxu0 0.0
    %4880 = vmatpush2.msra.mxu0 0.0
    %4881 = vmatprep.mubr.f32.mxu0 0.0
    %4882 = vmatmul.mubr.f32.gmra.mxu0 %v4170
    %v4883 = vpop.f32.mrf.mxu0
    %v4884 = vadd.f32 0.0, %v4883
    %v4885 = vpop.f32.mrf.mxu0
    %4886 = vdwg.mxu0
    %v4887 = vmul.f32 %v4816, %v4816
    %4888 = vmatprep.subr.mxu0 0.0
    %4889 = vmatpush1.msra.mxu0 0.0
    %4890 = vmatprep.subr.mxu0 0.0
    %4891 = vmatpush1.msra.mxu0 0.0
    %4892 = vmatprep.subr.mxu0 0.0
    %4893 = vmatpush1.msra.mxu0 0.0
    %4894 = vmatprep.subr.mxu0 0.0
    %4895 = vmatpush1.msra.mxu0 0.0
    %4896 = vmatprep.subr.mxu0 0.0
    %4897 = vmatpush1.msra.mxu0 0.0
    %4898 = vmatprep.subr.mxu0 0.0
    %4899 = vmatpush1.msra.mxu0 0.0
    %4900 = vmatprep.subr.mxu0 0.0
    %4901 = vmatpush1.msra.mxu0 0.0
    %4902 = vmatprep.subr.mxu0 0.0
    %4903 = vmatpush1.msra.mxu0 0.0
    %4904 = vmatprep.subr.mxu0 0.0
    %4905 = vmatpush1.msra.mxu0 0.0
    %4906 = vmatprep.subr.mxu0 0.0
    %4907 = vmatpush1.msra.mxu0 0.0
    %4908 = vmatprep.subr.mxu0 0.0
    %4909 = vmatpush1.msra.mxu0 0.0
    %4910 = vmatprep.subr.mxu0 0.0
    %4911 = vmatpush1.msra.mxu0 0.0
    %4912 = vmatprep.subr.mxu0 0.0
    %4913 = vmatpush1.msra.mxu0 0.0
    %4914 = vmatprep.subr.mxu0 0.0
    %4915 = vmatpush1.msra.mxu0 0.0
    %4916 = vmatprep.subr.mxu0 0.0
    %4917 = vmatpush1.msra.mxu0 0.0
    %4918 = vmatprep.subr.mxu0 0.0
    %4919 = vmatpush1.msra.mxu0 %v4887
    %4920 = vmatprep.subr.mxu0 0.0
    %4921 = vmatpush2.msra.mxu0 0.0
    %4922 = vmatprep.subr.mxu0 0.0
    %4923 = vmatpush2.msra.mxu0 0.0
    %4924 = vmatprep.subr.mxu0 0.0
    %4925 = vmatpush2.msra.mxu0 0.0
    %4926 = vmatprep.subr.mxu0 0.0
    %4927 = vmatpush2.msra.mxu0 0.0
    %4928 = vmatprep.subr.mxu0 0.0
    %4929 = vmatpush2.msra.mxu0 0.0
    %4930 = vmatprep.subr.mxu0 0.0
    %4931 = vmatpush2.msra.mxu0 0.0
    %4932 = vmatprep.subr.mxu0 0.0
    %4933 = vmatpush2.msra.mxu0 0.0
    %4934 = vmatprep.subr.mxu0 0.0
    %4935 = vmatpush2.msra.mxu0 0.0
    %4936 = vmatprep.subr.mxu0 0.0
    %4937 = vmatpush2.msra.mxu0 0.0
    %4938 = vmatprep.subr.mxu0 0.0
    %4939 = vmatpush2.msra.mxu0 0.0
    %4940 = vmatprep.subr.mxu0 0.0
    %4941 = vmatpush2.msra.mxu0 0.0
    %4942 = vmatprep.subr.mxu0 0.0
    %4943 = vmatpush2.msra.mxu0 0.0
    %4944 = vmatprep.subr.mxu0 0.0
    %4945 = vmatpush2.msra.mxu0 0.0
    %4946 = vmatprep.subr.mxu0 0.0
    %4947 = vmatpush2.msra.mxu0 0.0
    %4948 = vmatprep.subr.mxu0 0.0
    %4949 = vmatpush2.msra.mxu0 0.0
    %4950 = vmatprep.subr.mxu0 0.0
    %4951 = vmatpush2.msra.mxu0 0.0
    %4952 = vmatprep.mubr.f32.mxu0 0.0
    %4953 = vmatmul.mubr.f32.gmra.mxu0 %v4170
    %v4954 = vpop.f32.mrf.mxu0
    %v4955 = vadd.f32 0.0, %v4954
    %v4956 = vpop.f32.mrf.mxu0
    %4957 = vdwg.mxu0
    %4958 = vrot.lane.b32.xlu0 %v4884, 32
    %v4959 = vpop.permute.xlu0 %4958
    %v4960 = vadd.f32 %v4884, %v4959
    %4961 = vrot.lane.b32.xlu0 %v4955, 32
    %v4962 = vpop.permute.xlu0 %4961
    %v4963 = vadd.f32 %v4955, %v4962
    %4964 = vrot.lane.b32.xlu0 %v4960, 64
    %v4965 = vpop.permute.xlu0 %4964
    %v4966 = vadd.f32 %v4960, %v4965
    %4967 = vrot.lane.b32.xlu0 %v4963, 64
    %v4968 = vpop.permute.xlu0 %4967
    %v4969 = vadd.f32 %v4963, %v4968
    %v4970 = vmul.f32 %v4966, 0.25
    %v4971 = vmul.f32 %v4969, 0.25
    %v4972 = vmul.f32 %v4970, %v4970
    %v4973 = vsub.f32 %v4971, %v4972
    %v4974 = vld [vmem:[%s67] sm:$0x1]
    %v4975 = vadd.f32 %v4973, 1e-05
    %v4976 = vrsqrt.pop %v4975
    %v4978 = vlaneseq
    %v4979 = vshrl.u32 %v4978, 7
    %v4980 = vsub.s32 0, %v4979
    %v4981 = vrot.slane %v4974, %v4980
    %v4983 = vmul.f32 %v4981, %v4976
    %v4984 = vsub.f32 %v4816, %v4970
    %v4985 = vmul.f32 %v4984, %v4983
    %v4986 = vld [vmem:[%s69] sm:$0x1]
    %v4988 = vlaneseq
    %v4989 = vshrl.u32 %v4988, 7
    %v4990 = vsub.s32 0, %v4989
    %v4991 = vrot.slane %v4986, %v4990
    %v4993 = vadd.f32 %v4985, %v4991
    %vm4994 = vcmp.ge.f32.partialorder %v4993, 0.0
    %v4995 = vmul.f32 %v4993, 0.01
    %v4996 = vsel %vm4994, %v4993, %v4995
    %v4997 = vpack.c.bf16 %v4996, %v4996
    %v4998 = vld [vmem:[#allocation27] sm:$0xf]
    %v4999 = vld [vmem:[#allocation27 + $0x4] sm:$0xf]
    %v5000 = vld [vmem:[#allocation27 + $0x8] sm:$0xf]
    %v5001 = vld [vmem:[#allocation27 + $0xc] sm:$0xf]
    %v5002 = vld [vmem:[#allocation27 + $0x10] sm:$0xf]
    %v5003 = vld [vmem:[#allocation27 + $0x14] sm:$0xf]
    %v5004 = vld [vmem:[#allocation27 + $0x18] sm:$0xf]
    %v5005 = vld [vmem:[#allocation27 + $0x1c] sm:$0xf]
    %v5006 = vld [vmem:[#allocation27 + $0x20] sm:$0xf]
    %v5007 = vld [vmem:[#allocation27 + $0x24] sm:$0xf]
    %v5008 = vld [vmem:[#allocation27 + $0x28] sm:$0xf]
    %v5009 = vld [vmem:[#allocation27 + $0x2c] sm:$0xf]
    %v5010 = vld [vmem:[#allocation27 + $0x30] sm:$0xf]
    %v5011 = vld [vmem:[#allocation27 + $0x34] sm:$0xf]
    %v5012 = vld [vmem:[#allocation27 + $0x38] sm:$0xf]
    %v5013 = vld [vmem:[#allocation27 + $0x3c] sm:$0xf]
    %v5030 = vunpack.c.l.b16 %v4998
    %v5031 = vunpack.c.l.b16 %v4999
    %v5032 = vunpack.c.l.b16 %v5000
    %v5033 = vunpack.c.l.b16 %v5001
    %v5034 = vunpack.c.l.b16 %v5002
    %v5035 = vunpack.c.l.b16 %v5003
    %v5036 = vunpack.c.l.b16 %v5004
    %v5037 = vunpack.c.l.b16 %v5005
    %v5038 = vunpack.c.l.b16 %v5006
    %v5039 = vunpack.c.l.b16 %v5007
    %v5040 = vunpack.c.l.b16 %v5008
    %v5041 = vunpack.c.l.b16 %v5009
    %v5042 = vunpack.c.l.b16 %v5010
    %v5043 = vunpack.c.l.b16 %v5011
    %v5044 = vunpack.c.l.b16 %v5012
    %v5045 = vunpack.c.l.b16 %v5013
    %v5046 = vpack.c.b16 %v5031, %v5030
    %v5047 = vpack.c.b16 %v5033, %v5032
    %v5048 = vpack.c.b16 %v5035, %v5034
    %v5049 = vpack.c.b16 %v5037, %v5036
    %v5050 = vpack.c.b16 %v5039, %v5038
    %v5051 = vpack.c.b16 %v5041, %v5040
    %v5052 = vpack.c.b16 %v5043, %v5042
    %v5053 = vpack.c.b16 %v5045, %v5044
    %5062 = vmatprep.subr.bf16.mxu0 0
    %5063 = vmatpush1.bf16.msra.mxu0 %v5053
    %5064 = vmatprep.subr.bf16.mxu0 0
    %5065 = vmatpush1.bf16.msra.mxu0 %v5052
    %5066 = vmatprep.subr.bf16.mxu0 0
    %5067 = vmatpush1.bf16.msra.mxu0 %v5051
    %5068 = vmatprep.subr.bf16.mxu0 0
    %5069 = vmatpush1.bf16.msra.mxu0 %v5050
    %5070 = vmatprep.subr.bf16.mxu0 0
    %5071 = vmatpush1.bf16.msra.mxu0 %v5049
    %5072 = vmatprep.subr.bf16.mxu0 0
    %5073 = vmatpush1.bf16.msra.mxu0 %v5048
    %5074 = vmatprep.subr.bf16.mxu0 0
    %5075 = vmatpush1.bf16.msra.mxu0 %v5047
    %5076 = vmatprep.subr.bf16.mxu0 0
    %5077 = vmatpush1.bf16.msra.mxu0 %v5046
    %5078 = vmatprep.subr.bf16.mxu0 0
    %5079 = vmatpush2.bf16.msra.mxu0 0
    %5080 = vmatprep.subr.bf16.mxu0 0
    %5081 = vmatpush2.bf16.msra.mxu0 0
    %5082 = vmatprep.subr.bf16.mxu0 0
    %5083 = vmatpush2.bf16.msra.mxu0 0
    %5084 = vmatprep.subr.bf16.mxu0 0
    %5085 = vmatpush2.bf16.msra.mxu0 0
    %5086 = vmatprep.subr.bf16.mxu0 0
    %5087 = vmatpush2.bf16.msra.mxu0 0
    %5088 = vmatprep.subr.bf16.mxu0 0
    %5089 = vmatpush2.bf16.msra.mxu0 0
    %5090 = vmatprep.subr.bf16.mxu0 0
    %5091 = vmatpush2.bf16.msra.mxu0 0
    %5092 = vmatprep.subr.bf16.mxu0 0
    %5093 = vmatpush2.bf16.msra.mxu0 0
    %5094 = vmatprep.mubr.bf16.mxu0 0
    %5095 = vmatmul.mubr.bf16.gmra.mxu0 %v4997
    %v5096 = vpop.f32.mrf.mxu0
    %v5097 = vadd.f32 0.0, %v5096
    %v5098 = vpop.f32.mrf.mxu0
    %v5099 = vpop.f32.mrf.mxu0
    %v5100 = vpop.f32.mrf.mxu0
    %5101 = vdwg.mxu0
    %s5102 = scalar_lea.vmem [#allocation27], 64
    %v5103 = vld [vmem:[%s5102] sm:$0xf]
    %v5104 = vld [vmem:[%s5102 + $0x4] sm:$0xf]
    %v5105 = vld [vmem:[%s5102 + $0x8] sm:$0xf]
    %v5106 = vld [vmem:[%s5102 + $0xc] sm:$0xf]
    %v5107 = vld [vmem:[%s5102 + $0x10] sm:$0xf]
    %v5108 = vld [vmem:[%s5102 + $0x14] sm:$0xf]
    %v5109 = vld [vmem:[%s5102 + $0x18] sm:$0xf]
    %v5110 = vld [vmem:[%s5102 + $0x1c] sm:$0xf]
    %v5111 = vld [vmem:[%s5102 + $0x20] sm:$0xf]
    %v5112 = vld [vmem:[%s5102 + $0x24] sm:$0xf]
    %v5113 = vld [vmem:[%s5102 + $0x28] sm:$0xf]
    %v5114 = vld [vmem:[%s5102 + $0x2c] sm:$0xf]
    %v5115 = vld [vmem:[%s5102 + $0x30] sm:$0xf]
    %v5116 = vld [vmem:[%s5102 + $0x34] sm:$0xf]
    %v5117 = vld [vmem:[%s5102 + $0x38] sm:$0xf]
    %v5118 = vld [vmem:[%s5102 + $0x3c] sm:$0xf]
    %v5135 = vunpack.c.l.b16 %v5103
    %v5136 = vunpack.c.l.b16 %v5104
    %v5137 = vunpack.c.l.b16 %v5105
    %v5138 = vunpack.c.l.b16 %v5106
    %v5139 = vunpack.c.l.b16 %v5107
    %v5140 = vunpack.c.l.b16 %v5108
    %v5141 = vunpack.c.l.b16 %v5109
    %v5142 = vunpack.c.l.b16 %v5110
    %v5143 = vunpack.c.l.b16 %v5111
    %v5144 = vunpack.c.l.b16 %v5112
    %v5145 = vunpack.c.l.b16 %v5113
    %v5146 = vunpack.c.l.b16 %v5114
    %v5147 = vunpack.c.l.b16 %v5115
    %v5148 = vunpack.c.l.b16 %v5116
    %v5149 = vunpack.c.l.b16 %v5117
    %v5150 = vunpack.c.l.b16 %v5118
    %v5151 = vpack.c.b16 %v5136, %v5135
    %v5152 = vpack.c.b16 %v5138, %v5137
    %v5153 = vpack.c.b16 %v5140, %v5139
    %v5154 = vpack.c.b16 %v5142, %v5141
    %v5155 = vpack.c.b16 %v5144, %v5143
    %v5156 = vpack.c.b16 %v5146, %v5145
    %v5157 = vpack.c.b16 %v5148, %v5147
    %v5158 = vpack.c.b16 %v5150, %v5149
    %5167 = vmatprep.subr.bf16.mxu0 0
    %5168 = vmatpush1.bf16.msra.mxu0 %v5158
    %5169 = vmatprep.subr.bf16.mxu0 0
    %5170 = vmatpush1.bf16.msra.mxu0 %v5157
    %5171 = vmatprep.subr.bf16.mxu0 0
    %5172 = vmatpush1.bf16.msra.mxu0 %v5156
    %5173 = vmatprep.subr.bf16.mxu0 0
    %5174 = vmatpush1.bf16.msra.mxu0 %v5155
    %5175 = vmatprep.subr.bf16.mxu0 0
    %5176 = vmatpush1.bf16.msra.mxu0 %v5154
    %5177 = vmatprep.subr.bf16.mxu0 0
    %5178 = vmatpush1.bf16.msra.mxu0 %v5153
    %5179 = vmatprep.subr.bf16.mxu0 0
    %5180 = vmatpush1.bf16.msra.mxu0 %v5152
    %5181 = vmatprep.subr.bf16.mxu0 0
    %5182 = vmatpush1.bf16.msra.mxu0 %v5151
    %5183 = vmatprep.subr.bf16.mxu0 0
    %5184 = vmatpush2.bf16.msra.mxu0 0
    %5185 = vmatprep.subr.bf16.mxu0 0
    %5186 = vmatpush2.bf16.msra.mxu0 0
    %5187 = vmatprep.subr.bf16.mxu0 0
    %5188 = vmatpush2.bf16.msra.mxu0 0
    %5189 = vmatprep.subr.bf16.mxu0 0
    %5190 = vmatpush2.bf16.msra.mxu0 0
    %5191 = vmatprep.subr.bf16.mxu0 0
    %5192 = vmatpush2.bf16.msra.mxu0 0
    %5193 = vmatprep.subr.bf16.mxu0 0
    %5194 = vmatpush2.bf16.msra.mxu0 0
    %5195 = vmatprep.subr.bf16.mxu0 0
    %5196 = vmatpush2.bf16.msra.mxu0 0
    %5197 = vmatprep.subr.bf16.mxu0 0
    %5198 = vmatpush2.bf16.msra.mxu0 0
    %5199 = vmatprep.mubr.bf16.mxu0 0
    %5200 = vmatmul.mubr.bf16.gmra.mxu0 %v4997
    %v5201 = vpop.f32.mrf.mxu0
    %v5202 = vadd.f32 0.0, %v5201
    %v5203 = vpop.f32.mrf.mxu0
    %v5204 = vpop.f32.mrf.mxu0
    %v5205 = vpop.f32.mrf.mxu0
    %5206 = vdwg.mxu0
    %v5207 = vld [vmem:[%s19] sm:$0xff]
    %v5208 = vld [vmem:[%s19 + $0x8] sm:$0xff]
    %s5209 = scalar_lea.vmem %s19, 16
    %v5210 = vld [vmem:[%s5209] sm:$0xff]
    %v5211 = vld [vmem:[%s5209 + $0x8] sm:$0xff]
    %v5213 = vsel %vm4168, %v5210, 0
    %v5216 = vsel %vm4168, %v5211, 0
    %5218 = vmatprep.subr.mxu0 0.0
    %5219 = vmatpush1.msra.mxu0 0.0
    %5220 = vmatprep.subr.mxu0 0.0
    %5221 = vmatpush1.msra.mxu0 0.0
    %5222 = vmatprep.subr.mxu0 0.0
    %5223 = vmatpush1.msra.mxu0 0.0
    %5224 = vmatprep.subr.mxu0 0.0
    %5225 = vmatpush1.msra.mxu0 0.0
    %5226 = vmatprep.subr.mxu0 0.0
    %5227 = vmatpush1.msra.mxu0 0.0
    %5228 = vmatprep.subr.mxu0 0.0
    %5229 = vmatpush1.msra.mxu0 0.0
    %5230 = vmatprep.subr.mxu0 0.0
    %5231 = vmatpush1.msra.mxu0 0.0
    %5232 = vmatprep.subr.mxu0 0.0
    %5233 = vmatpush1.msra.mxu0 0.0
    %5234 = vmatprep.subr.mxu0 0.0
    %5235 = vmatpush1.msra.mxu0 0.0
    %5236 = vmatprep.subr.mxu0 0.0
    %5237 = vmatpush1.msra.mxu0 0.0
    %5238 = vmatprep.subr.mxu0 0.0
    %5239 = vmatpush1.msra.mxu0 0.0
    %5240 = vmatprep.subr.mxu0 0.0
    %5241 = vmatpush1.msra.mxu0 0.0
    %5242 = vmatprep.subr.mxu0 0.0
    %5243 = vmatpush1.msra.mxu0 0.0
    %5244 = vmatprep.subr.mxu0 0.0
    %5245 = vmatpush1.msra.mxu0 0.0
    %5246 = vmatprep.subr.mxu0 0.0
    %5247 = vmatpush1.msra.mxu0 0.0
    %5248 = vmatprep.subr.mxu0 0.0
    %5249 = vmatpush1.msra.mxu0 %v5202
    %5250 = vmatprep.subr.mxu0 0.0
    %5251 = vmatpush2.msra.mxu0 0.0
    %5252 = vmatprep.subr.mxu0 0.0
    %5253 = vmatpush2.msra.mxu0 0.0
    %5254 = vmatprep.subr.mxu0 0.0
    %5255 = vmatpush2.msra.mxu0 0.0
    %5256 = vmatprep.subr.mxu0 0.0
    %5257 = vmatpush2.msra.mxu0 0.0
    %5258 = vmatprep.subr.mxu0 0.0
    %5259 = vmatpush2.msra.mxu0 0.0
    %5260 = vmatprep.subr.mxu0 0.0
    %5261 = vmatpush2.msra.mxu0 0.0
    %5262 = vmatprep.subr.mxu0 0.0
    %5263 = vmatpush2.msra.mxu0 0.0
    %5264 = vmatprep.subr.mxu0 0.0
    %5265 = vmatpush2.msra.mxu0 0.0
    %5266 = vmatprep.subr.mxu0 0.0
    %5267 = vmatpush2.msra.mxu0 0.0
    %5268 = vmatprep.subr.mxu0 0.0
    %5269 = vmatpush2.msra.mxu0 0.0
    %5270 = vmatprep.subr.mxu0 0.0
    %5271 = vmatpush2.msra.mxu0 0.0
    %5272 = vmatprep.subr.mxu0 0.0
    %5273 = vmatpush2.msra.mxu0 0.0
    %5274 = vmatprep.subr.mxu0 0.0
    %5275 = vmatpush2.msra.mxu0 0.0
    %5276 = vmatprep.subr.mxu0 0.0
    %5277 = vmatpush2.msra.mxu0 0.0
    %5278 = vmatprep.subr.mxu0 0.0
    %5279 = vmatpush2.msra.mxu0 0.0
    %5280 = vmatprep.subr.mxu0 0.0
    %5281 = vmatpush2.msra.mxu0 0.0
    %5282 = vmatprep.mubr.f32.mxu0 0.0
    %5283 = vmatmul.mubr.f32.gmra.mxu0 %v5213
    %v5284 = vpop.f32.mrf.mxu0
    %v5285 = vadd.f32 0.0, %v5284
    %v5286 = vpop.f32.mrf.mxu0
    %5287 = vmatprep.mubr.f32.mxu0 0.0
    %5288 = vmatmul.mubr.f32.gmra.mxu0 %v5216
    %v5289 = vpop.f32.mrf.mxu0
    %v5290 = vadd.f32 0.0, %v5289
    %v5291 = vpop.f32.mrf.mxu0
    %5292 = vdwg.mxu0
    %v5294 = vsel %vm4168, %v5207, 0
    %v5297 = vsel %vm4168, %v5208, 0
    %5299 = vmatprep.subr.mxu0 0.0
    %5300 = vmatpush1.msra.mxu0 0.0
    %5301 = vmatprep.subr.mxu0 0.0
    %5302 = vmatpush1.msra.mxu0 0.0
    %5303 = vmatprep.subr.mxu0 0.0
    %5304 = vmatpush1.msra.mxu0 0.0
    %5305 = vmatprep.subr.mxu0 0.0
    %5306 = vmatpush1.msra.mxu0 0.0
    %5307 = vmatprep.subr.mxu0 0.0
    %5308 = vmatpush1.msra.mxu0 0.0
    %5309 = vmatprep.subr.mxu0 0.0
    %5310 = vmatpush1.msra.mxu0 0.0
    %5311 = vmatprep.subr.mxu0 0.0
    %5312 = vmatpush1.msra.mxu0 0.0
    %5313 = vmatprep.subr.mxu0 0.0
    %5314 = vmatpush1.msra.mxu0 0.0
    %5315 = vmatprep.subr.mxu0 0.0
    %5316 = vmatpush1.msra.mxu0 0.0
    %5317 = vmatprep.subr.mxu0 0.0
    %5318 = vmatpush1.msra.mxu0 0.0
    %5319 = vmatprep.subr.mxu0 0.0
    %5320 = vmatpush1.msra.mxu0 0.0
    %5321 = vmatprep.subr.mxu0 0.0
    %5322 = vmatpush1.msra.mxu0 0.0
    %5323 = vmatprep.subr.mxu0 0.0
    %5324 = vmatpush1.msra.mxu0 0.0
    %5325 = vmatprep.subr.mxu0 0.0
    %5326 = vmatpush1.msra.mxu0 0.0
    %5327 = vmatprep.subr.mxu0 0.0
    %5328 = vmatpush1.msra.mxu0 0.0
    %5329 = vmatprep.subr.mxu0 0.0
    %5330 = vmatpush1.msra.mxu0 %v5097
    %5331 = vmatprep.subr.mxu0 0.0
    %5332 = vmatpush2.msra.mxu0 0.0
    %5333 = vmatprep.subr.mxu0 0.0
    %5334 = vmatpush2.msra.mxu0 0.0
    %5335 = vmatprep.subr.mxu0 0.0
    %5336 = vmatpush2.msra.mxu0 0.0
    %5337 = vmatprep.subr.mxu0 0.0
    %5338 = vmatpush2.msra.mxu0 0.0
    %5339 = vmatprep.subr.mxu0 0.0
    %5340 = vmatpush2.msra.mxu0 0.0
    %5341 = vmatprep.subr.mxu0 0.0
    %5342 = vmatpush2.msra.mxu0 0.0
    %5343 = vmatprep.subr.mxu0 0.0
    %5344 = vmatpush2.msra.mxu0 0.0
    %5345 = vmatprep.subr.mxu0 0.0
    %5346 = vmatpush2.msra.mxu0 0.0
    %5347 = vmatprep.subr.mxu0 0.0
    %5348 = vmatpush2.msra.mxu0 0.0
    %5349 = vmatprep.subr.mxu0 0.0
    %5350 = vmatpush2.msra.mxu0 0.0
    %5351 = vmatprep.subr.mxu0 0.0
    %5352 = vmatpush2.msra.mxu0 0.0
    %5353 = vmatprep.subr.mxu0 0.0
    %5354 = vmatpush2.msra.mxu0 0.0
    %5355 = vmatprep.subr.mxu0 0.0
    %5356 = vmatpush2.msra.mxu0 0.0
    %5357 = vmatprep.subr.mxu0 0.0
    %5358 = vmatpush2.msra.mxu0 0.0
    %5359 = vmatprep.subr.mxu0 0.0
    %5360 = vmatpush2.msra.mxu0 0.0
    %5361 = vmatprep.subr.mxu0 0.0
    %5362 = vmatpush2.msra.mxu0 0.0
    %5363 = vmatprep.mubr.f32.mxu0 0.0
    %5364 = vmatmul.mubr.f32.gmra.mxu0 %v5294
    %v5365 = vpop.f32.mrf.mxu0
    %v5366 = vadd.f32 %v5285, %v5365
    %v5367 = vpop.f32.mrf.mxu0
    %5368 = vmatprep.mubr.f32.mxu0 0.0
    %5369 = vmatmul.mubr.f32.gmra.mxu0 %v5297
    %v5370 = vpop.f32.mrf.mxu0
    %v5371 = vadd.f32 %v5290, %v5370
    %v5372 = vpop.f32.mrf.mxu0
    %5373 = vdwg.mxu0
    %v5374 = vld [vmem:[%s73] sm:$0x1]
    %v5376 = vlaneseq
    %v5377 = vshrl.u32 %v5376, 7
    %v5378 = vsub.s32 0, %v5377
    %v5379 = vrot.slane %v5374, %v5378
    %v5381 = vadd.f32 %v5366, %v5379
    %v5382 = vadd.f32 %v5371, %v5379
    %v5383 = vpack.c.bf16 %v5382, %v5381
    %5384 = vmatprep.subr.bf16.mxu0 0
    %5385 = vmatpush1.bf16.msra.mxu0 0
    %5386 = vmatprep.subr.bf16.mxu0 0
    %5387 = vmatpush1.bf16.msra.mxu0 0
    %5388 = vmatprep.subr.bf16.mxu0 0
    %5389 = vmatpush1.bf16.msra.mxu0 0
    %5390 = vmatprep.subr.bf16.mxu0 0
    %5391 = vmatpush1.bf16.msra.mxu0 0
    %5392 = vmatprep.subr.bf16.mxu0 0
    %5393 = vmatpush1.bf16.msra.mxu0 0
    %5394 = vmatprep.subr.bf16.mxu0 0
    %5395 = vmatpush1.bf16.msra.mxu0 0
    %5396 = vmatprep.subr.bf16.mxu0 0
    %5397 = vmatpush1.bf16.msra.mxu0 0
    %5398 = vmatprep.subr.bf16.mxu0 0
    %5399 = vmatpush1.bf16.msra.mxu0 %v5383
    %5400 = vmatprep.subr.bf16.mxu0 0
    %5401 = vmatpush2.bf16.msra.mxu0 0
    %5402 = vmatprep.subr.bf16.mxu0 0
    %5403 = vmatpush2.bf16.msra.mxu0 0
    %5404 = vmatprep.subr.bf16.mxu0 0
    %5405 = vmatpush2.bf16.msra.mxu0 0
    %5406 = vmatprep.subr.bf16.mxu0 0
    %5407 = vmatpush2.bf16.msra.mxu0 0
    %5408 = vmatprep.subr.bf16.mxu0 0
    %5409 = vmatpush2.bf16.msra.mxu0 0
    %5410 = vmatprep.subr.bf16.mxu0 0
    %5411 = vmatpush2.bf16.msra.mxu0 0
    %5412 = vmatprep.subr.bf16.mxu0 0
    %5413 = vmatpush2.bf16.msra.mxu0 0
    %5414 = vmatprep.subr.bf16.mxu0 0
    %5415 = vmatpush2.bf16.msra.mxu0 0
    %5416 = vmatprep.mubr.bf16.mxu0 0
    %5417 = vmatmul.mubr.bf16.gmra.mxu0 %v3000
    %v5418 = vpop.f32.mrf.mxu0
    %v5419 = vadd.f32 0.0, %v5418
    %v5420 = vpop.f32.mrf.mxu0
    %v5421 = vpop.f32.mrf.mxu0
    %v5422 = vadd.f32 0.0, %v5421
    %v5423 = vpop.f32.mrf.mxu0
    %5424 = vdwg.mxu0
    %v5425 = vpack.c.bf16 %v5422, %v5419
    %v5426 = vld [vmem:[#allocation28] sm:$0xf]
    %v5427 = vld [vmem:[#allocation28 + $0x4] sm:$0xf]
    %v5428 = vld [vmem:[#allocation28 + $0x8] sm:$0xf]
    %v5429 = vld [vmem:[#allocation28 + $0xc] sm:$0xf]
    %v5430 = vld [vmem:[#allocation28 + $0x10] sm:$0xf]
    %v5431 = vld [vmem:[#allocation28 + $0x14] sm:$0xf]
    %v5432 = vld [vmem:[#allocation28 + $0x18] sm:$0xf]
    %v5433 = vld [vmem:[#allocation28 + $0x1c] sm:$0xf]
    %v5434 = vld [vmem:[#allocation28 + $0x20] sm:$0xf]
    %v5435 = vld [vmem:[#allocation28 + $0x24] sm:$0xf]
    %v5436 = vld [vmem:[#allocation28 + $0x28] sm:$0xf]
    %v5437 = vld [vmem:[#allocation28 + $0x2c] sm:$0xf]
    %v5438 = vld [vmem:[#allocation28 + $0x30] sm:$0xf]
    %v5439 = vld [vmem:[#allocation28 + $0x34] sm:$0xf]
    %v5440 = vld [vmem:[#allocation28 + $0x38] sm:$0xf]
    %v5441 = vld [vmem:[#allocation28 + $0x3c] sm:$0xf]
    %5442 = vmatprep.subr.bf16.mxu0 0
    %5443 = vmatpush1.bf16.msra.mxu0 0
    %5444 = vmatprep.subr.bf16.mxu0 0
    %5445 = vmatpush1.bf16.msra.mxu0 0
    %5446 = vmatprep.subr.bf16.mxu0 0
    %5447 = vmatpush1.bf16.msra.mxu0 0
    %5448 = vmatprep.subr.bf16.mxu0 0
    %5449 = vmatpush1.bf16.msra.mxu0 0
    %5450 = vmatprep.subr.bf16.mxu0 0
    %5451 = vmatpush1.bf16.msra.mxu0 0
    %5452 = vmatprep.subr.bf16.mxu0 0
    %5453 = vmatpush1.bf16.msra.mxu0 0
    %5454 = vmatprep.subr.bf16.mxu0 0
    %5455 = vmatpush1.bf16.msra.mxu0 0
    %5456 = vmatprep.subr.bf16.mxu0 0
    %5457 = vmatpush1.bf16.msra.mxu0 %v3706
    %5458 = vmatprep.subr.bf16.mxu0 0
    %5459 = vmatpush2.bf16.msra.mxu0 0
    %5460 = vmatprep.subr.bf16.mxu0 0
    %5461 = vmatpush2.bf16.msra.mxu0 0
    %5462 = vmatprep.subr.bf16.mxu0 0
    %5463 = vmatpush2.bf16.msra.mxu0 0
    %5464 = vmatprep.subr.bf16.mxu0 0
    %5465 = vmatpush2.bf16.msra.mxu0 0
    %5466 = vmatprep.subr.bf16.mxu0 0
    %5467 = vmatpush2.bf16.msra.mxu0 0
    %5468 = vmatprep.subr.bf16.mxu0 0
    %5469 = vmatpush2.bf16.msra.mxu0 0
    %5470 = vmatprep.subr.bf16.mxu0 0
    %5471 = vmatpush2.bf16.msra.mxu0 0
    %5472 = vmatprep.subr.bf16.mxu0 0
    %5473 = vmatpush2.bf16.msra.mxu0 0
    %5474 = vmatprep.mubr.bf16.mxu0 0
    %5475 = vmatmul.mubr.bf16.gmra.mxu0 %v3000
    %v5476 = vpop.f32.mrf.mxu0
    %v5477 = vadd.f32 0.0, %v5476
    %v5478 = vpop.f32.mrf.mxu0
    %v5479 = vpop.f32.mrf.mxu0
    %v5480 = vadd.f32 0.0, %v5479
    %v5481 = vpop.f32.mrf.mxu0
    %5482 = vdwg.mxu0
    %v5483 = vpack.c.bf16 %v5480, %v5477
    %v5484 = vld [vmem:[#allocation30] sm:$0xf]
    %v5485 = vld [vmem:[#allocation30 + $0x4] sm:$0xf]
    %v5486 = vld [vmem:[#allocation30 + $0x8] sm:$0xf]
    %v5487 = vld [vmem:[#allocation30 + $0xc] sm:$0xf]
    %v5488 = vld [vmem:[#allocation30 + $0x10] sm:$0xf]
    %v5489 = vld [vmem:[#allocation30 + $0x14] sm:$0xf]
    %v5490 = vld [vmem:[#allocation30 + $0x18] sm:$0xf]
    %v5491 = vld [vmem:[#allocation30 + $0x1c] sm:$0xf]
    %v5492 = vld [vmem:[#allocation30 + $0x20] sm:$0xf]
    %v5493 = vld [vmem:[#allocation30 + $0x24] sm:$0xf]
    %v5494 = vld [vmem:[#allocation30 + $0x28] sm:$0xf]
    %v5495 = vld [vmem:[#allocation30 + $0x2c] sm:$0xf]
    %v5496 = vld [vmem:[#allocation30 + $0x30] sm:$0xf]
    %v5497 = vld [vmem:[#allocation30 + $0x34] sm:$0xf]
    %v5498 = vld [vmem:[#allocation30 + $0x38] sm:$0xf]
    %v5499 = vld [vmem:[#allocation30 + $0x3c] sm:$0xf]
    %v5516 = vunpack.c.l.b16 %v5484
    %v5517 = vunpack.c.l.b16 %v5485
    %v5518 = vunpack.c.l.b16 %v5486
    %v5519 = vunpack.c.l.b16 %v5487
    %v5520 = vunpack.c.l.b16 %v5488
    %v5521 = vunpack.c.l.b16 %v5489
    %v5522 = vunpack.c.l.b16 %v5490
    %v5523 = vunpack.c.l.b16 %v5491
    %v5524 = vunpack.c.l.b16 %v5492
    %v5525 = vunpack.c.l.b16 %v5493
    %v5526 = vunpack.c.l.b16 %v5494
    %v5527 = vunpack.c.l.b16 %v5495
    %v5528 = vunpack.c.l.b16 %v5496
    %v5529 = vunpack.c.l.b16 %v5497
    %v5530 = vunpack.c.l.b16 %v5498
    %v5531 = vunpack.c.l.b16 %v5499
    %v5532 = vpack.c.b16 %v5517, %v5516
    %v5533 = vpack.c.b16 %v5519, %v5518
    %v5534 = vpack.c.b16 %v5521, %v5520
    %v5535 = vpack.c.b16 %v5523, %v5522
    %v5536 = vpack.c.b16 %v5525, %v5524
    %v5537 = vpack.c.b16 %v5527, %v5526
    %v5538 = vpack.c.b16 %v5529, %v5528
    %v5539 = vpack.c.b16 %v5531, %v5530
    %5548 = vmatprep.subr.bf16.mxu0 0
    %5549 = vmatpush1.bf16.msra.mxu0 %v5539
    %5550 = vmatprep.subr.bf16.mxu0 0
    %5551 = vmatpush1.bf16.msra.mxu0 %v5538
    %5552 = vmatprep.subr.bf16.mxu0 0
    %5553 = vmatpush1.bf16.msra.mxu0 %v5537
    %5554 = vmatprep.subr.bf16.mxu0 0
    %5555 = vmatpush1.bf16.msra.mxu0 %v5536
    %5556 = vmatprep.subr.bf16.mxu0 0
    %5557 = vmatpush1.bf16.msra.mxu0 %v5535
    %5558 = vmatprep.subr.bf16.mxu0 0
    %5559 = vmatpush1.bf16.msra.mxu0 %v5534
    %5560 = vmatprep.subr.bf16.mxu0 0
    %5561 = vmatpush1.bf16.msra.mxu0 %v5533
    %5562 = vmatprep.subr.bf16.mxu0 0
    %5563 = vmatpush1.bf16.msra.mxu0 %v5532
    %5564 = vmatprep.subr.bf16.mxu0 0
    %5565 = vmatpush2.bf16.msra.mxu0 0
    %5566 = vmatprep.subr.bf16.mxu0 0
    %5567 = vmatpush2.bf16.msra.mxu0 0
    %5568 = vmatprep.subr.bf16.mxu0 0
    %5569 = vmatpush2.bf16.msra.mxu0 0
    %5570 = vmatprep.subr.bf16.mxu0 0
    %5571 = vmatpush2.bf16.msra.mxu0 0
    %5572 = vmatprep.subr.bf16.mxu0 0
    %5573 = vmatpush2.bf16.msra.mxu0 0
    %5574 = vmatprep.subr.bf16.mxu0 0
    %5575 = vmatpush2.bf16.msra.mxu0 0
    %5576 = vmatprep.subr.bf16.mxu0 0
    %5577 = vmatpush2.bf16.msra.mxu0 0
    %5578 = vmatprep.subr.bf16.mxu0 0
    %5579 = vmatpush2.bf16.msra.mxu0 0
    %5580 = vmatprep.mubr.bf16.mxu0 0
    %5581 = vmatmul.mubr.bf16.gmra.mxu0 %v5483
    %v5582 = vpop.f32.mrf.mxu0
    %v5583 = vadd.f32 0.0, %v5582
    %v5584 = vpop.f32.mrf.mxu0
    %v5585 = vpop.f32.mrf.mxu0
    %v5586 = vadd.f32 0.0, %v5585
    %v5587 = vpop.f32.mrf.mxu0
    %5588 = vdwg.mxu0
    %v5605 = vunpack.c.l.b16 %v5426
    %v5606 = vunpack.c.l.b16 %v5427
    %v5607 = vunpack.c.l.b16 %v5428
    %v5608 = vunpack.c.l.b16 %v5429
    %v5609 = vunpack.c.l.b16 %v5430
    %v5610 = vunpack.c.l.b16 %v5431
    %v5611 = vunpack.c.l.b16 %v5432
    %v5612 = vunpack.c.l.b16 %v5433
    %v5613 = vunpack.c.l.b16 %v5434
    %v5614 = vunpack.c.l.b16 %v5435
    %v5615 = vunpack.c.l.b16 %v5436
    %v5616 = vunpack.c.l.b16 %v5437
    %v5617 = vunpack.c.l.b16 %v5438
    %v5618 = vunpack.c.l.b16 %v5439
    %v5619 = vunpack.c.l.b16 %v5440
    %v5620 = vunpack.c.l.b16 %v5441
    %v5621 = vpack.c.b16 %v5606, %v5605
    %v5622 = vpack.c.b16 %v5608, %v5607
    %v5623 = vpack.c.b16 %v5610, %v5609
    %v5624 = vpack.c.b16 %v5612, %v5611
    %v5625 = vpack.c.b16 %v5614, %v5613
    %v5626 = vpack.c.b16 %v5616, %v5615
    %v5627 = vpack.c.b16 %v5618, %v5617
    %v5628 = vpack.c.b16 %v5620, %v5619
    %5637 = vmatprep.subr.bf16.mxu0 0
    %5638 = vmatpush1.bf16.msra.mxu0 %v5628
    %5639 = vmatprep.subr.bf16.mxu0 0
    %5640 = vmatpush1.bf16.msra.mxu0 %v5627
    %5641 = vmatprep.subr.bf16.mxu0 0
    %5642 = vmatpush1.bf16.msra.mxu0 %v5626
    %5643 = vmatprep.subr.bf16.mxu0 0
    %5644 = vmatpush1.bf16.msra.mxu0 %v5625
    %5645 = vmatprep.subr.bf16.mxu0 0
    %5646 = vmatpush1.bf16.msra.mxu0 %v5624
    %5647 = vmatprep.subr.bf16.mxu0 0
    %5648 = vmatpush1.bf16.msra.mxu0 %v5623
    %5649 = vmatprep.subr.bf16.mxu0 0
    %5650 = vmatpush1.bf16.msra.mxu0 %v5622
    %5651 = vmatprep.subr.bf16.mxu0 0
    %5652 = vmatpush1.bf16.msra.mxu0 %v5621
    %5653 = vmatprep.subr.bf16.mxu0 0
    %5654 = vmatpush2.bf16.msra.mxu0 0
    %5655 = vmatprep.subr.bf16.mxu0 0
    %5656 = vmatpush2.bf16.msra.mxu0 0
    %5657 = vmatprep.subr.bf16.mxu0 0
    %5658 = vmatpush2.bf16.msra.mxu0 0
    %5659 = vmatprep.subr.bf16.mxu0 0
    %5660 = vmatpush2.bf16.msra.mxu0 0
    %5661 = vmatprep.subr.bf16.mxu0 0
    %5662 = vmatpush2.bf16.msra.mxu0 0
    %5663 = vmatprep.subr.bf16.mxu0 0
    %5664 = vmatpush2.bf16.msra.mxu0 0
    %5665 = vmatprep.subr.bf16.mxu0 0
    %5666 = vmatpush2.bf16.msra.mxu0 0
    %5667 = vmatprep.subr.bf16.mxu0 0
    %5668 = vmatpush2.bf16.msra.mxu0 0
    %5669 = vmatprep.mubr.bf16.mxu0 0
    %5670 = vmatmul.mubr.bf16.gmra.mxu0 %v5425
    %v5671 = vpop.f32.mrf.mxu0
    %v5672 = vadd.f32 %v5583, %v5671
    %v5673 = vpop.f32.mrf.mxu0
    %v5674 = vpop.f32.mrf.mxu0
    %v5675 = vadd.f32 %v5586, %v5674
    %v5676 = vpop.f32.mrf.mxu0
    %5677 = vdwg.mxu0
    %5678 = vmatprep.subr.bf16.mxu0 0
    %5679 = vmatpush1.bf16.msra.mxu0 0
    %5680 = vmatprep.subr.bf16.mxu0 0
    %5681 = vmatpush1.bf16.msra.mxu0 0
    %5682 = vmatprep.subr.bf16.mxu0 0
    %5683 = vmatpush1.bf16.msra.mxu0 0
    %5684 = vmatprep.subr.bf16.mxu0 0
    %5685 = vmatpush1.bf16.msra.mxu0 0
    %5686 = vmatprep.subr.bf16.mxu0 0
    %5687 = vmatpush1.bf16.msra.mxu0 0
    %5688 = vmatprep.subr.bf16.mxu0 0
    %5689 = vmatpush1.bf16.msra.mxu0 0
    %5690 = vmatprep.subr.bf16.mxu0 0
    %5691 = vmatpush1.bf16.msra.mxu0 0
    %5692 = vmatprep.subr.bf16.mxu0 0
    %5693 = vmatpush1.bf16.msra.mxu0 %v5383
    %5694 = vmatprep.subr.bf16.mxu0 0
    %5695 = vmatpush2.bf16.msra.mxu0 0
    %5696 = vmatprep.subr.bf16.mxu0 0
    %5697 = vmatpush2.bf16.msra.mxu0 0
    %5698 = vmatprep.subr.bf16.mxu0 0
    %5699 = vmatpush2.bf16.msra.mxu0 0
    %5700 = vmatprep.subr.bf16.mxu0 0
    %5701 = vmatpush2.bf16.msra.mxu0 0
    %5702 = vmatprep.subr.bf16.mxu0 0
    %5703 = vmatpush2.bf16.msra.mxu0 0
    %5704 = vmatprep.subr.bf16.mxu0 0
    %5705 = vmatpush2.bf16.msra.mxu0 0
    %5706 = vmatprep.subr.bf16.mxu0 0
    %5707 = vmatpush2.bf16.msra.mxu0 0
    %5708 = vmatprep.subr.bf16.mxu0 0
    %5709 = vmatpush2.bf16.msra.mxu0 0
    %5710 = vmatprep.mubr.bf16.mxu0 0
    %5711 = vmatmul.mubr.bf16.gmra.mxu0 %v3069
    %v5712 = vpop.f32.mrf.mxu0
    %v5713 = vadd.f32 0.0, %v5712
    %v5714 = vpop.f32.mrf.mxu0
    %v5715 = vpop.f32.mrf.mxu0
    %v5716 = vadd.f32 0.0, %v5715
    %v5717 = vpop.f32.mrf.mxu0
    %5718 = vdwg.mxu0
    %v5719 = vpack.c.bf16 %v5716, %v5713
    %s5720 = scalar_lea.vmem [#allocation28], 64
    %v5721 = vld [vmem:[%s5720] sm:$0xf]
    %v5722 = vld [vmem:[%s5720 + $0x4] sm:$0xf]
    %v5723 = vld [vmem:[%s5720 + $0x8] sm:$0xf]
    %v5724 = vld [vmem:[%s5720 + $0xc] sm:$0xf]
    %v5725 = vld [vmem:[%s5720 + $0x10] sm:$0xf]
    %v5726 = vld [vmem:[%s5720 + $0x14] sm:$0xf]
    %v5727 = vld [vmem:[%s5720 + $0x18] sm:$0xf]
    %v5728 = vld [vmem:[%s5720 + $0x1c] sm:$0xf]
    %v5729 = vld [vmem:[%s5720 + $0x20] sm:$0xf]
    %v5730 = vld [vmem:[%s5720 + $0x24] sm:$0xf]
    %v5731 = vld [vmem:[%s5720 + $0x28] sm:$0xf]
    %v5732 = vld [vmem:[%s5720 + $0x2c] sm:$0xf]
    %v5733 = vld [vmem:[%s5720 + $0x30] sm:$0xf]
    %v5734 = vld [vmem:[%s5720 + $0x34] sm:$0xf]
    %v5735 = vld [vmem:[%s5720 + $0x38] sm:$0xf]
    %v5736 = vld [vmem:[%s5720 + $0x3c] sm:$0xf]
    %v5753 = vunpack.c.l.b16 %v5721
    %v5754 = vunpack.c.l.b16 %v5722
    %v5755 = vunpack.c.l.b16 %v5723
    %v5756 = vunpack.c.l.b16 %v5724
    %v5757 = vunpack.c.l.b16 %v5725
    %v5758 = vunpack.c.l.b16 %v5726
    %v5759 = vunpack.c.l.b16 %v5727
    %v5760 = vunpack.c.l.b16 %v5728
    %v5761 = vunpack.c.l.b16 %v5729
    %v5762 = vunpack.c.l.b16 %v5730
    %v5763 = vunpack.c.l.b16 %v5731
    %v5764 = vunpack.c.l.b16 %v5732
    %v5765 = vunpack.c.l.b16 %v5733
    %v5766 = vunpack.c.l.b16 %v5734
    %v5767 = vunpack.c.l.b16 %v5735
    %v5768 = vunpack.c.l.b16 %v5736
    %v5769 = vpack.c.b16 %v5754, %v5753
    %v5770 = vpack.c.b16 %v5756, %v5755
    %v5771 = vpack.c.b16 %v5758, %v5757
    %v5772 = vpack.c.b16 %v5760, %v5759
    %v5773 = vpack.c.b16 %v5762, %v5761
    %v5774 = vpack.c.b16 %v5764, %v5763
    %v5775 = vpack.c.b16 %v5766, %v5765
    %v5776 = vpack.c.b16 %v5768, %v5767
    %5785 = vmatprep.subr.bf16.mxu0 0
    %5786 = vmatpush1.bf16.msra.mxu0 %v5776
    %5787 = vmatprep.subr.bf16.mxu0 0
    %5788 = vmatpush1.bf16.msra.mxu0 %v5775
    %5789 = vmatprep.subr.bf16.mxu0 0
    %5790 = vmatpush1.bf16.msra.mxu0 %v5774
    %5791 = vmatprep.subr.bf16.mxu0 0
    %5792 = vmatpush1.bf16.msra.mxu0 %v5773
    %5793 = vmatprep.subr.bf16.mxu0 0
    %5794 = vmatpush1.bf16.msra.mxu0 %v5772
    %5795 = vmatprep.subr.bf16.mxu0 0
    %5796 = vmatpush1.bf16.msra.mxu0 %v5771
    %5797 = vmatprep.subr.bf16.mxu0 0
    %5798 = vmatpush1.bf16.msra.mxu0 %v5770
    %5799 = vmatprep.subr.bf16.mxu0 0
    %5800 = vmatpush1.bf16.msra.mxu0 %v5769
    %5801 = vmatprep.subr.bf16.mxu0 0
    %5802 = vmatpush2.bf16.msra.mxu0 0
    %5803 = vmatprep.subr.bf16.mxu0 0
    %5804 = vmatpush2.bf16.msra.mxu0 0
    %5805 = vmatprep.subr.bf16.mxu0 0
    %5806 = vmatpush2.bf16.msra.mxu0 0
    %5807 = vmatprep.subr.bf16.mxu0 0
    %5808 = vmatpush2.bf16.msra.mxu0 0
    %5809 = vmatprep.subr.bf16.mxu0 0
    %5810 = vmatpush2.bf16.msra.mxu0 0
    %5811 = vmatprep.subr.bf16.mxu0 0
    %5812 = vmatpush2.bf16.msra.mxu0 0
    %5813 = vmatprep.subr.bf16.mxu0 0
    %5814 = vmatpush2.bf16.msra.mxu0 0
    %5815 = vmatprep.subr.bf16.mxu0 0
    %5816 = vmatpush2.bf16.msra.mxu0 0
    %5817 = vmatprep.mubr.bf16.mxu0 0
    %5818 = vmatmul.mubr.bf16.gmra.mxu0 %v5719
    %v5819 = vpop.f32.mrf.mxu0
    %v5820 = vadd.f32 0.0, %v5819
    %v5821 = vpop.f32.mrf.mxu0
    %v5822 = vpop.f32.mrf.mxu0
    %v5823 = vadd.f32 0.0, %v5822
    %v5824 = vpop.f32.mrf.mxu0
    %5825 = vdwg.mxu0
    %v5826 = vadd.f32 %v5672, %v5820
    %v5827 = vadd.f32 %v5675, %v5823
    %5828 = vmatprep.subr.bf16.mxu0 0
    %5829 = vmatpush1.bf16.msra.mxu0 0
    %5830 = vmatprep.subr.bf16.mxu0 0
    %5831 = vmatpush1.bf16.msra.mxu0 0
    %5832 = vmatprep.subr.bf16.mxu0 0
    %5833 = vmatpush1.bf16.msra.mxu0 0
    %5834 = vmatprep.subr.bf16.mxu0 0
    %5835 = vmatpush1.bf16.msra.mxu0 0
    %5836 = vmatprep.subr.bf16.mxu0 0
    %5837 = vmatpush1.bf16.msra.mxu0 0
    %5838 = vmatprep.subr.bf16.mxu0 0
    %5839 = vmatpush1.bf16.msra.mxu0 0
    %5840 = vmatprep.subr.bf16.mxu0 0
    %5841 = vmatpush1.bf16.msra.mxu0 0
    %5842 = vmatprep.subr.bf16.mxu0 0
    %5843 = vmatpush1.bf16.msra.mxu0 %v3706
    %5844 = vmatprep.subr.bf16.mxu0 0
    %5845 = vmatpush2.bf16.msra.mxu0 0
    %5846 = vmatprep.subr.bf16.mxu0 0
    %5847 = vmatpush2.bf16.msra.mxu0 0
    %5848 = vmatprep.subr.bf16.mxu0 0
    %5849 = vmatpush2.bf16.msra.mxu0 0
    %5850 = vmatprep.subr.bf16.mxu0 0
    %5851 = vmatpush2.bf16.msra.mxu0 0
    %5852 = vmatprep.subr.bf16.mxu0 0
    %5853 = vmatpush2.bf16.msra.mxu0 0
    %5854 = vmatprep.subr.bf16.mxu0 0
    %5855 = vmatpush2.bf16.msra.mxu0 0
    %5856 = vmatprep.subr.bf16.mxu0 0
    %5857 = vmatpush2.bf16.msra.mxu0 0
    %5858 = vmatprep.subr.bf16.mxu0 0
    %5859 = vmatpush2.bf16.msra.mxu0 0
    %5860 = vmatprep.mubr.bf16.mxu0 0
    %5861 = vmatmul.mubr.bf16.gmra.mxu0 %v3069
    %v5862 = vpop.f32.mrf.mxu0
    %v5863 = vadd.f32 0.0, %v5862
    %v5864 = vpop.f32.mrf.mxu0
    %v5865 = vpop.f32.mrf.mxu0
    %v5866 = vadd.f32 0.0, %v5865
    %v5867 = vpop.f32.mrf.mxu0
    %5868 = vdwg.mxu0
    %v5869 = vpack.c.bf16 %v5866, %v5863
    %s5870 = scalar_lea.vmem [#allocation30], 64
    %v5871 = vld [vmem:[%s5870] sm:$0xf]
    %v5872 = vld [vmem:[%s5870 + $0x4] sm:$0xf]
    %v5873 = vld [vmem:[%s5870 + $0x8] sm:$0xf]
    %v5874 = vld [vmem:[%s5870 + $0xc] sm:$0xf]
    %v5875 = vld [vmem:[%s5870 + $0x10] sm:$0xf]
    %v5876 = vld [vmem:[%s5870 + $0x14] sm:$0xf]
    %v5877 = vld [vmem:[%s5870 + $0x18] sm:$0xf]
    %v5878 = vld [vmem:[%s5870 + $0x1c] sm:$0xf]
    %v5879 = vld [vmem:[%s5870 + $0x20] sm:$0xf]
    %v5880 = vld [vmem:[%s5870 + $0x24] sm:$0xf]
    %v5881 = vld [vmem:[%s5870 + $0x28] sm:$0xf]
    %v5882 = vld [vmem:[%s5870 + $0x2c] sm:$0xf]
    %v5883 = vld [vmem:[%s5870 + $0x30] sm:$0xf]
    %v5884 = vld [vmem:[%s5870 + $0x34] sm:$0xf]
    %v5885 = vld [vmem:[%s5870 + $0x38] sm:$0xf]
    %v5886 = vld [vmem:[%s5870 + $0x3c] sm:$0xf]
    %v5903 = vunpack.c.l.b16 %v5871
    %v5904 = vunpack.c.l.b16 %v5872
    %v5905 = vunpack.c.l.b16 %v5873
    %v5906 = vunpack.c.l.b16 %v5874
    %v5907 = vunpack.c.l.b16 %v5875
    %v5908 = vunpack.c.l.b16 %v5876
    %v5909 = vunpack.c.l.b16 %v5877
    %v5910 = vunpack.c.l.b16 %v5878
    %v5911 = vunpack.c.l.b16 %v5879
    %v5912 = vunpack.c.l.b16 %v5880
    %v5913 = vunpack.c.l.b16 %v5881
    %v5914 = vunpack.c.l.b16 %v5882
    %v5915 = vunpack.c.l.b16 %v5883
    %v5916 = vunpack.c.l.b16 %v5884
    %v5917 = vunpack.c.l.b16 %v5885
    %v5918 = vunpack.c.l.b16 %v5886
    %v5919 = vpack.c.b16 %v5904, %v5903
    %v5920 = vpack.c.b16 %v5906, %v5905
    %v5921 = vpack.c.b16 %v5908, %v5907
    %v5922 = vpack.c.b16 %v5910, %v5909
    %v5923 = vpack.c.b16 %v5912, %v5911
    %v5924 = vpack.c.b16 %v5914, %v5913
    %v5925 = vpack.c.b16 %v5916, %v5915
    %v5926 = vpack.c.b16 %v5918, %v5917
    %5935 = vmatprep.subr.bf16.mxu0 0
    %5936 = vmatpush1.bf16.msra.mxu0 %v5926
    %5937 = vmatprep.subr.bf16.mxu0 0
    %5938 = vmatpush1.bf16.msra.mxu0 %v5925
    %5939 = vmatprep.subr.bf16.mxu0 0
    %5940 = vmatpush1.bf16.msra.mxu0 %v5924
    %5941 = vmatprep.subr.bf16.mxu0 0
    %5942 = vmatpush1.bf16.msra.mxu0 %v5923
    %5943 = vmatprep.subr.bf16.mxu0 0
    %5944 = vmatpush1.bf16.msra.mxu0 %v5922
    %5945 = vmatprep.subr.bf16.mxu0 0
    %5946 = vmatpush1.bf16.msra.mxu0 %v5921
    %5947 = vmatprep.subr.bf16.mxu0 0
    %5948 = vmatpush1.bf16.msra.mxu0 %v5920
    %5949 = vmatprep.subr.bf16.mxu0 0
    %5950 = vmatpush1.bf16.msra.mxu0 %v5919
    %5951 = vmatprep.subr.bf16.mxu0 0
    %5952 = vmatpush2.bf16.msra.mxu0 0
    %5953 = vmatprep.subr.bf16.mxu0 0
    %5954 = vmatpush2.bf16.msra.mxu0 0
    %5955 = vmatprep.subr.bf16.mxu0 0
    %5956 = vmatpush2.bf16.msra.mxu0 0
    %5957 = vmatprep.subr.bf16.mxu0 0
    %5958 = vmatpush2.bf16.msra.mxu0 0
    %5959 = vmatprep.subr.bf16.mxu0 0
    %5960 = vmatpush2.bf16.msra.mxu0 0
    %5961 = vmatprep.subr.bf16.mxu0 0
    %5962 = vmatpush2.bf16.msra.mxu0 0
    %5963 = vmatprep.subr.bf16.mxu0 0
    %5964 = vmatpush2.bf16.msra.mxu0 0
    %5965 = vmatprep.subr.bf16.mxu0 0
    %5966 = vmatpush2.bf16.msra.mxu0 0
    %5967 = vmatprep.mubr.bf16.mxu0 0
    %5968 = vmatmul.mubr.bf16.gmra.mxu0 %v5869
    %v5969 = vpop.f32.mrf.mxu0
    %v5970 = vadd.f32 0.0, %v5969
    %v5971 = vpop.f32.mrf.mxu0
    %v5972 = vpop.f32.mrf.mxu0
    %v5973 = vadd.f32 0.0, %v5972
    %v5974 = vpop.f32.mrf.mxu0
    %5975 = vdwg.mxu0
    %v5976 = vadd.f32 %v5826, %v5970
    %v5977 = vadd.f32 %v5827, %v5973
    %5978 = vmatprep.subr.bf16.mxu0 0
    %5979 = vmatpush1.bf16.msra.mxu0 0
    %5980 = vmatprep.subr.bf16.mxu0 0
    %5981 = vmatpush1.bf16.msra.mxu0 0
    %5982 = vmatprep.subr.bf16.mxu0 0
    %5983 = vmatpush1.bf16.msra.mxu0 0
    %5984 = vmatprep.subr.bf16.mxu0 0
    %5985 = vmatpush1.bf16.msra.mxu0 0
    %5986 = vmatprep.subr.bf16.mxu0 0
    %5987 = vmatpush1.bf16.msra.mxu0 0
    %5988 = vmatprep.subr.bf16.mxu0 0
    %5989 = vmatpush1.bf16.msra.mxu0 0
    %5990 = vmatprep.subr.bf16.mxu0 0
    %5991 = vmatpush1.bf16.msra.mxu0 0
    %5992 = vmatprep.subr.bf16.mxu0 0
    %5993 = vmatpush1.bf16.msra.mxu0 %v5383
    %5994 = vmatprep.subr.bf16.mxu0 0
    %5995 = vmatpush2.bf16.msra.mxu0 0
    %5996 = vmatprep.subr.bf16.mxu0 0
    %5997 = vmatpush2.bf16.msra.mxu0 0
    %5998 = vmatprep.subr.bf16.mxu0 0
    %5999 = vmatpush2.bf16.msra.mxu0 0
    %6000 = vmatprep.subr.bf16.mxu0 0
    %6001 = vmatpush2.bf16.msra.mxu0 0
    %6002 = vmatprep.subr.bf16.mxu0 0
    %6003 = vmatpush2.bf16.msra.mxu0 0
    %6004 = vmatprep.subr.bf16.mxu0 0
    %6005 = vmatpush2.bf16.msra.mxu0 0
    %6006 = vmatprep.subr.bf16.mxu0 0
    %6007 = vmatpush2.bf16.msra.mxu0 0
    %6008 = vmatprep.subr.bf16.mxu0 0
    %6009 = vmatpush2.bf16.msra.mxu0 0
    %6010 = vmatprep.mubr.bf16.mxu0 0
    %6011 = vmatmul.mubr.bf16.gmra.mxu0 %v3317
    %v6012 = vpop.f32.mrf.mxu0
    %v6013 = vadd.f32 0.0, %v6012
    %v6014 = vpop.f32.mrf.mxu0
    %v6015 = vpop.f32.mrf.mxu0
    %v6016 = vadd.f32 0.0, %v6015
    %v6017 = vpop.f32.mrf.mxu0
    %6018 = vdwg.mxu0
    %v6019 = vpack.c.bf16 %v6016, %v6013
    %s6020 = scalar_lea.vmem [#allocation28], 128
    %v6021 = vld [vmem:[%s6020] sm:$0xf]
    %v6022 = vld [vmem:[%s6020 + $0x4] sm:$0xf]
    %v6023 = vld [vmem:[%s6020 + $0x8] sm:$0xf]
    %v6024 = vld [vmem:[%s6020 + $0xc] sm:$0xf]
    %v6025 = vld [vmem:[%s6020 + $0x10] sm:$0xf]
    %v6026 = vld [vmem:[%s6020 + $0x14] sm:$0xf]
    %v6027 = vld [vmem:[%s6020 + $0x18] sm:$0xf]
    %v6028 = vld [vmem:[%s6020 + $0x1c] sm:$0xf]
    %v6029 = vld [vmem:[%s6020 + $0x20] sm:$0xf]
    %v6030 = vld [vmem:[%s6020 + $0x24] sm:$0xf]
    %v6031 = vld [vmem:[%s6020 + $0x28] sm:$0xf]
    %v6032 = vld [vmem:[%s6020 + $0x2c] sm:$0xf]
    %v6033 = vld [vmem:[%s6020 + $0x30] sm:$0xf]
    %v6034 = vld [vmem:[%s6020 + $0x34] sm:$0xf]
    %v6035 = vld [vmem:[%s6020 + $0x38] sm:$0xf]
    %v6036 = vld [vmem:[%s6020 + $0x3c] sm:$0xf]
    %v6053 = vunpack.c.l.b16 %v6021
    %v6054 = vunpack.c.l.b16 %v6022
    %v6055 = vunpack.c.l.b16 %v6023
    %v6056 = vunpack.c.l.b16 %v6024
    %v6057 = vunpack.c.l.b16 %v6025
    %v6058 = vunpack.c.l.b16 %v6026
    %v6059 = vunpack.c.l.b16 %v6027
    %v6060 = vunpack.c.l.b16 %v6028
    %v6061 = vunpack.c.l.b16 %v6029
    %v6062 = vunpack.c.l.b16 %v6030
    %v6063 = vunpack.c.l.b16 %v6031
    %v6064 = vunpack.c.l.b16 %v6032
    %v6065 = vunpack.c.l.b16 %v6033
    %v6066 = vunpack.c.l.b16 %v6034
    %v6067 = vunpack.c.l.b16 %v6035
    %v6068 = vunpack.c.l.b16 %v6036
    %v6069 = vpack.c.b16 %v6054, %v6053
    %v6070 = vpack.c.b16 %v6056, %v6055
    %v6071 = vpack.c.b16 %v6058, %v6057
    %v6072 = vpack.c.b16 %v6060, %v6059
    %v6073 = vpack.c.b16 %v6062, %v6061
    %v6074 = vpack.c.b16 %v6064, %v6063
    %v6075 = vpack.c.b16 %v6066, %v6065
    %v6076 = vpack.c.b16 %v6068, %v6067
    %6085 = vmatprep.subr.bf16.mxu0 0
    %6086 = vmatpush1.bf16.msra.mxu0 %v6076
    %6087 = vmatprep.subr.bf16.mxu0 0
    %6088 = vmatpush1.bf16.msra.mxu0 %v6075
    %6089 = vmatprep.subr.bf16.mxu0 0
    %6090 = vmatpush1.bf16.msra.mxu0 %v6074
    %6091 = vmatprep.subr.bf16.mxu0 0
    %6092 = vmatpush1.bf16.msra.mxu0 %v6073
    %6093 = vmatprep.subr.bf16.mxu0 0
    %6094 = vmatpush1.bf16.msra.mxu0 %v6072
    %6095 = vmatprep.subr.bf16.mxu0 0
    %6096 = vmatpush1.bf16.msra.mxu0 %v6071
    %6097 = vmatprep.subr.bf16.mxu0 0
    %6098 = vmatpush1.bf16.msra.mxu0 %v6070
    %6099 = vmatprep.subr.bf16.mxu0 0
    %6100 = vmatpush1.bf16.msra.mxu0 %v6069
    %6101 = vmatprep.subr.bf16.mxu0 0
    %6102 = vmatpush2.bf16.msra.mxu0 0
    %6103 = vmatprep.subr.bf16.mxu0 0
    %6104 = vmatpush2.bf16.msra.mxu0 0
    %6105 = vmatprep.subr.bf16.mxu0 0
    %6106 = vmatpush2.bf16.msra.mxu0 0
    %6107 = vmatprep.subr.bf16.mxu0 0
    %6108 = vmatpush2.bf16.msra.mxu0 0
    %6109 = vmatprep.subr.bf16.mxu0 0
    %6110 = vmatpush2.bf16.msra.mxu0 0
    %6111 = vmatprep.subr.bf16.mxu0 0
    %6112 = vmatpush2.bf16.msra.mxu0 0
    %6113 = vmatprep.subr.bf16.mxu0 0
    %6114 = vmatpush2.bf16.msra.mxu0 0
    %6115 = vmatprep.subr.bf16.mxu0 0
    %6116 = vmatpush2.bf16.msra.mxu0 0
    %6117 = vmatprep.mubr.bf16.mxu0 0
    %6118 = vmatmul.mubr.bf16.gmra.mxu0 %v6019
    %v6119 = vpop.f32.mrf.mxu0
    %v6120 = vadd.f32 0.0, %v6119
    %v6121 = vpop.f32.mrf.mxu0
    %v6122 = vpop.f32.mrf.mxu0
    %v6123 = vadd.f32 0.0, %v6122
    %v6124 = vpop.f32.mrf.mxu0
    %6125 = vdwg.mxu0
    %v6126 = vadd.f32 %v5976, %v6120
    %v6127 = vadd.f32 %v5977, %v6123
    %6128 = vmatprep.subr.bf16.mxu0 0
    %6129 = vmatpush1.bf16.msra.mxu0 0
    %6130 = vmatprep.subr.bf16.mxu0 0
    %6131 = vmatpush1.bf16.msra.mxu0 0
    %6132 = vmatprep.subr.bf16.mxu0 0
    %6133 = vmatpush1.bf16.msra.mxu0 0
    %6134 = vmatprep.subr.bf16.mxu0 0
    %6135 = vmatpush1.bf16.msra.mxu0 0
    %6136 = vmatprep.subr.bf16.mxu0 0
    %6137 = vmatpush1.bf16.msra.mxu0 0
    %6138 = vmatprep.subr.bf16.mxu0 0
    %6139 = vmatpush1.bf16.msra.mxu0 0
    %6140 = vmatprep.subr.bf16.mxu0 0
    %6141 = vmatpush1.bf16.msra.mxu0 0
    %6142 = vmatprep.subr.bf16.mxu0 0
    %6143 = vmatpush1.bf16.msra.mxu0 %v3706
    %6144 = vmatprep.subr.bf16.mxu0 0
    %6145 = vmatpush2.bf16.msra.mxu0 0
    %6146 = vmatprep.subr.bf16.mxu0 0
    %6147 = vmatpush2.bf16.msra.mxu0 0
    %6148 = vmatprep.subr.bf16.mxu0 0
    %6149 = vmatpush2.bf16.msra.mxu0 0
    %6150 = vmatprep.subr.bf16.mxu0 0
    %6151 = vmatpush2.bf16.msra.mxu0 0
    %6152 = vmatprep.subr.bf16.mxu0 0
    %6153 = vmatpush2.bf16.msra.mxu0 0
    %6154 = vmatprep.subr.bf16.mxu0 0
    %6155 = vmatpush2.bf16.msra.mxu0 0
    %6156 = vmatprep.subr.bf16.mxu0 0
    %6157 = vmatpush2.bf16.msra.mxu0 0
    %6158 = vmatprep.subr.bf16.mxu0 0
    %6159 = vmatpush2.bf16.msra.mxu0 0
    %6160 = vmatprep.mubr.bf16.mxu0 0
    %6161 = vmatmul.mubr.bf16.gmra.mxu0 %v3317
    %v6162 = vpop.f32.mrf.mxu0
    %v6163 = vadd.f32 0.0, %v6162
    %v6164 = vpop.f32.mrf.mxu0
    %v6165 = vpop.f32.mrf.mxu0
    %v6166 = vadd.f32 0.0, %v6165
    %v6167 = vpop.f32.mrf.mxu0
    %6168 = vdwg.mxu0
    %v6169 = vpack.c.bf16 %v6166, %v6163
    %s6170 = scalar_lea.vmem [#allocation30], 128
    %v6171 = vld [vmem:[%s6170] sm:$0xf]
    %v6172 = vld [vmem:[%s6170 + $0x4] sm:$0xf]
    %v6173 = vld [vmem:[%s6170 + $0x8] sm:$0xf]
    %v6174 = vld [vmem:[%s6170 + $0xc] sm:$0xf]
    %v6175 = vld [vmem:[%s6170 + $0x10] sm:$0xf]
    %v6176 = vld [vmem:[%s6170 + $0x14] sm:$0xf]
    %v6177 = vld [vmem:[%s6170 + $0x18] sm:$0xf]
    %v6178 = vld [vmem:[%s6170 + $0x1c] sm:$0xf]
    %v6179 = vld [vmem:[%s6170 + $0x20] sm:$0xf]
    %v6180 = vld [vmem:[%s6170 + $0x24] sm:$0xf]
    %v6181 = vld [vmem:[%s6170 + $0x28] sm:$0xf]
    %v6182 = vld [vmem:[%s6170 + $0x2c] sm:$0xf]
    %v6183 = vld [vmem:[%s6170 + $0x30] sm:$0xf]
    %v6184 = vld [vmem:[%s6170 + $0x34] sm:$0xf]
    %v6185 = vld [vmem:[%s6170 + $0x38] sm:$0xf]
    %v6186 = vld [vmem:[%s6170 + $0x3c] sm:$0xf]
    %v6203 = vunpack.c.l.b16 %v6171
    %v6204 = vunpack.c.l.b16 %v6172
    %v6205 = vunpack.c.l.b16 %v6173
    %v6206 = vunpack.c.l.b16 %v6174
    %v6207 = vunpack.c.l.b16 %v6175
    %v6208 = vunpack.c.l.b16 %v6176
    %v6209 = vunpack.c.l.b16 %v6177
    %v6210 = vunpack.c.l.b16 %v6178
    %v6211 = vunpack.c.l.b16 %v6179
    %v6212 = vunpack.c.l.b16 %v6180
    %v6213 = vunpack.c.l.b16 %v6181
    %v6214 = vunpack.c.l.b16 %v6182
    %v6215 = vunpack.c.l.b16 %v6183
    %v6216 = vunpack.c.l.b16 %v6184
    %v6217 = vunpack.c.l.b16 %v6185
    %v6218 = vunpack.c.l.b16 %v6186
    %v6219 = vpack.c.b16 %v6204, %v6203
    %v6220 = vpack.c.b16 %v6206, %v6205
    %v6221 = vpack.c.b16 %v6208, %v6207
    %v6222 = vpack.c.b16 %v6210, %v6209
    %v6223 = vpack.c.b16 %v6212, %v6211
    %v6224 = vpack.c.b16 %v6214, %v6213
    %v6225 = vpack.c.b16 %v6216, %v6215
    %v6226 = vpack.c.b16 %v6218, %v6217
    %6235 = vmatprep.subr.bf16.mxu0 0
    %6236 = vmatpush1.bf16.msra.mxu0 %v6226
    %6237 = vmatprep.subr.bf16.mxu0 0
    %6238 = vmatpush1.bf16.msra.mxu0 %v6225
    %6239 = vmatprep.subr.bf16.mxu0 0
    %6240 = vmatpush1.bf16.msra.mxu0 %v6224
    %6241 = vmatprep.subr.bf16.mxu0 0
    %6242 = vmatpush1.bf16.msra.mxu0 %v6223
    %6243 = vmatprep.subr.bf16.mxu0 0
    %6244 = vmatpush1.bf16.msra.mxu0 %v6222
    %6245 = vmatprep.subr.bf16.mxu0 0
    %6246 = vmatpush1.bf16.msra.mxu0 %v6221
    %6247 = vmatprep.subr.bf16.mxu0 0
    %6248 = vmatpush1.bf16.msra.mxu0 %v6220
    %6249 = vmatprep.subr.bf16.mxu0 0
    %6250 = vmatpush1.bf16.msra.mxu0 %v6219
    %6251 = vmatprep.subr.bf16.mxu0 0
    %6252 = vmatpush2.bf16.msra.mxu0 0
    %6253 = vmatprep.subr.bf16.mxu0 0
    %6254 = vmatpush2.bf16.msra.mxu0 0
    %6255 = vmatprep.subr.bf16.mxu0 0
    %6256 = vmatpush2.bf16.msra.mxu0 0
    %6257 = vmatprep.subr.bf16.mxu0 0
    %6258 = vmatpush2.bf16.msra.mxu0 0
    %6259 = vmatprep.subr.bf16.mxu0 0
    %6260 = vmatpush2.bf16.msra.mxu0 0
    %6261 = vmatprep.subr.bf16.mxu0 0
    %6262 = vmatpush2.bf16.msra.mxu0 0
    %6263 = vmatprep.subr.bf16.mxu0 0
    %6264 = vmatpush2.bf16.msra.mxu0 0
    %6265 = vmatprep.subr.bf16.mxu0 0
    %6266 = vmatpush2.bf16.msra.mxu0 0
    %6267 = vmatprep.mubr.bf16.mxu0 0
    %6268 = vmatmul.mubr.bf16.gmra.mxu0 %v6169
    %v6269 = vpop.f32.mrf.mxu0
    %v6270 = vadd.f32 0.0, %v6269
    %v6271 = vpop.f32.mrf.mxu0
    %v6272 = vpop.f32.mrf.mxu0
    %v6273 = vadd.f32 0.0, %v6272
    %v6274 = vpop.f32.mrf.mxu0
    %6275 = vdwg.mxu0
    %v6276 = vadd.f32 %v6126, %v6270
    %v6277 = vadd.f32 %v6127, %v6273
    %v6278 = vld [vmem:[%s79] sm:$0x1]
    %v6280 = vlaneseq
    %v6281 = vshrl.u32 %v6280, 7
    %v6282 = vsub.s32 0, %v6281
    %v6283 = vrot.slane %v6278, %v6282
    %v6285 = vadd.f32 %v6276, %v6283
    %v6286 = vadd.f32 %v6277, %v6283
    %6287 = vmatprep.subr.mxu0 0.0
    %6288 = vmatpush1.msra.mxu0 0.0
    %6289 = vmatprep.subr.mxu0 0.0
    %6290 = vmatpush1.msra.mxu0 0.0
    %6291 = vmatprep.subr.mxu0 0.0
    %6292 = vmatpush1.msra.mxu0 0.0
    %6293 = vmatprep.subr.mxu0 0.0
    %6294 = vmatpush1.msra.mxu0 0.0
    %6295 = vmatprep.subr.mxu0 0.0
    %6296 = vmatpush1.msra.mxu0 0.0
    %6297 = vmatprep.subr.mxu0 0.0
    %6298 = vmatpush1.msra.mxu0 0.0
    %6299 = vmatprep.subr.mxu0 0.0
    %6300 = vmatpush1.msra.mxu0 0.0
    %6301 = vmatprep.subr.mxu0 0.0
    %6302 = vmatpush1.msra.mxu0 0.0
    %6303 = vmatprep.subr.mxu0 0.0
    %6304 = vmatpush1.msra.mxu0 0.0
    %6305 = vmatprep.subr.mxu0 0.0
    %6306 = vmatpush1.msra.mxu0 0.0
    %6307 = vmatprep.subr.mxu0 0.0
    %6308 = vmatpush1.msra.mxu0 0.0
    %6309 = vmatprep.subr.mxu0 0.0
    %6310 = vmatpush1.msra.mxu0 0.0
    %6311 = vmatprep.subr.mxu0 0.0
    %6312 = vmatpush1.msra.mxu0 0.0
    %6313 = vmatprep.subr.mxu0 0.0
    %6314 = vmatpush1.msra.mxu0 0.0
    %6315 = vmatprep.subr.mxu0 0.0
    %6316 = vmatpush1.msra.mxu0 %v6286
    %6317 = vmatprep.subr.mxu0 0.0
    %6318 = vmatpush1.msra.mxu0 %v6285
    %6319 = vmatprep.subr.mxu0 0.0
    %6320 = vmatpush2.msra.mxu0 0.0
    %6321 = vmatprep.subr.mxu0 0.0
    %6322 = vmatpush2.msra.mxu0 0.0
    %6323 = vmatprep.subr.mxu0 0.0
    %6324 = vmatpush2.msra.mxu0 0.0
    %6325 = vmatprep.subr.mxu0 0.0
    %6326 = vmatpush2.msra.mxu0 0.0
    %6327 = vmatprep.subr.mxu0 0.0
    %6328 = vmatpush2.msra.mxu0 0.0
    %6329 = vmatprep.subr.mxu0 0.0
    %6330 = vmatpush2.msra.mxu0 0.0
    %6331 = vmatprep.subr.mxu0 0.0
    %6332 = vmatpush2.msra.mxu0 0.0
    %6333 = vmatprep.subr.mxu0 0.0
    %6334 = vmatpush2.msra.mxu0 0.0
    %6335 = vmatprep.subr.mxu0 0.0
    %6336 = vmatpush2.msra.mxu0 0.0
    %6337 = vmatprep.subr.mxu0 0.0
    %6338 = vmatpush2.msra.mxu0 0.0
    %6339 = vmatprep.subr.mxu0 0.0
    %6340 = vmatpush2.msra.mxu0 0.0
    %6341 = vmatprep.subr.mxu0 0.0
    %6342 = vmatpush2.msra.mxu0 0.0
    %6343 = vmatprep.subr.mxu0 0.0
    %6344 = vmatpush2.msra.mxu0 0.0
    %6345 = vmatprep.subr.mxu0 0.0
    %6346 = vmatpush2.msra.mxu0 0.0
    %6347 = vmatprep.subr.mxu0 0.0
    %6348 = vmatpush2.msra.mxu0 0.0
    %6349 = vmatprep.subr.mxu0 0.0
    %6350 = vmatpush2.msra.mxu0 0.0
    %6351 = vmatprep.mubr.f32.mxu0 0.0
    %6352 = vmatmul.mubr.f32.gmra.mxu0 %v2758
    %v6353 = vpop.f32.mrf.mxu0
    %v6354 = vadd.f32 0.0, %v6353
    %v6355 = vpop.f32.mrf.mxu0
    %6356 = vmatprep.mubr.f32.mxu0 0.0
    %6357 = vmatmul.mubr.f32.gmra.mxu0 %v2761
    %v6358 = vpop.f32.mrf.mxu0
    %v6359 = vadd.f32 0.0, %v6358
    %v6360 = vpop.f32.mrf.mxu0
    %6361 = vdwg.mxu0
    %v6362 = vmul.f32 %v6285, %v6285
    %v6363 = vmul.f32 %v6286, %v6286
    %6364 = vmatprep.subr.mxu0 0.0
    %6365 = vmatpush1.msra.mxu0 0.0
    %6366 = vmatprep.subr.mxu0 0.0
    %6367 = vmatpush1.msra.mxu0 0.0
    %6368 = vmatprep.subr.mxu0 0.0
    %6369 = vmatpush1.msra.mxu0 0.0
    %6370 = vmatprep.subr.mxu0 0.0
    %6371 = vmatpush1.msra.mxu0 0.0
    %6372 = vmatprep.subr.mxu0 0.0
    %6373 = vmatpush1.msra.mxu0 0.0
    %6374 = vmatprep.subr.mxu0 0.0
    %6375 = vmatpush1.msra.mxu0 0.0
    %6376 = vmatprep.subr.mxu0 0.0
    %6377 = vmatpush1.msra.mxu0 0.0
    %6378 = vmatprep.subr.mxu0 0.0
    %6379 = vmatpush1.msra.mxu0 0.0
    %6380 = vmatprep.subr.mxu0 0.0
    %6381 = vmatpush1.msra.mxu0 0.0
    %6382 = vmatprep.subr.mxu0 0.0
    %6383 = vmatpush1.msra.mxu0 0.0
    %6384 = vmatprep.subr.mxu0 0.0
    %6385 = vmatpush1.msra.mxu0 0.0
    %6386 = vmatprep.subr.mxu0 0.0
    %6387 = vmatpush1.msra.mxu0 0.0
    %6388 = vmatprep.subr.mxu0 0.0
    %6389 = vmatpush1.msra.mxu0 0.0
    %6390 = vmatprep.subr.mxu0 0.0
    %6391 = vmatpush1.msra.mxu0 0.0
    %6392 = vmatprep.subr.mxu0 0.0
    %6393 = vmatpush1.msra.mxu0 %v6363
    %6394 = vmatprep.subr.mxu0 0.0
    %6395 = vmatpush1.msra.mxu0 %v6362
    %6396 = vmatprep.subr.mxu0 0.0
    %6397 = vmatpush2.msra.mxu0 0.0
    %6398 = vmatprep.subr.mxu0 0.0
    %6399 = vmatpush2.msra.mxu0 0.0
    %6400 = vmatprep.subr.mxu0 0.0
    %6401 = vmatpush2.msra.mxu0 0.0
    %6402 = vmatprep.subr.mxu0 0.0
    %6403 = vmatpush2.msra.mxu0 0.0
    %6404 = vmatprep.subr.mxu0 0.0
    %6405 = vmatpush2.msra.mxu0 0.0
    %6406 = vmatprep.subr.mxu0 0.0
    %6407 = vmatpush2.msra.mxu0 0.0
    %6408 = vmatprep.subr.mxu0 0.0
    %6409 = vmatpush2.msra.mxu0 0.0
    %6410 = vmatprep.subr.mxu0 0.0
    %6411 = vmatpush2.msra.mxu0 0.0
    %6412 = vmatprep.subr.mxu0 0.0
    %6413 = vmatpush2.msra.mxu0 0.0
    %6414 = vmatprep.subr.mxu0 0.0
    %6415 = vmatpush2.msra.mxu0 0.0
    %6416 = vmatprep.subr.mxu0 0.0
    %6417 = vmatpush2.msra.mxu0 0.0
    %6418 = vmatprep.subr.mxu0 0.0
    %6419 = vmatpush2.msra.mxu0 0.0
    %6420 = vmatprep.subr.mxu0 0.0
    %6421 = vmatpush2.msra.mxu0 0.0
    %6422 = vmatprep.subr.mxu0 0.0
    %6423 = vmatpush2.msra.mxu0 0.0
    %6424 = vmatprep.subr.mxu0 0.0
    %6425 = vmatpush2.msra.mxu0 0.0
    %6426 = vmatprep.subr.mxu0 0.0
    %6427 = vmatpush2.msra.mxu0 0.0
    %6428 = vmatprep.mubr.f32.mxu0 0.0
    %6429 = vmatmul.mubr.f32.gmra.mxu0 %v2758
    %v6430 = vpop.f32.mrf.mxu0
    %v6431 = vadd.f32 0.0, %v6430
    %v6432 = vpop.f32.mrf.mxu0
    %6433 = vmatprep.mubr.f32.mxu0 0.0
    %6434 = vmatmul.mubr.f32.gmra.mxu0 %v2761
    %v6435 = vpop.f32.mrf.mxu0
    %v6436 = vadd.f32 0.0, %v6435
    %v6437 = vpop.f32.mrf.mxu0
    %6438 = vdwg.mxu0
    %6439 = vrot.lane.b32.xlu0 %v6354, 16
    %v6440 = vpop.permute.xlu0 %6439
    %6441 = vrot.lane.b32.xlu0 %v6359, 16
    %v6442 = vpop.permute.xlu0 %6441
    %v6443 = vadd.f32 %v6354, %v6440
    %v6444 = vadd.f32 %v6359, %v6442
    %6445 = vrot.lane.b32.xlu0 %v6431, 16
    %v6446 = vpop.permute.xlu0 %6445
    %6447 = vrot.lane.b32.xlu0 %v6436, 16
    %v6448 = vpop.permute.xlu0 %6447
    %v6449 = vadd.f32 %v6431, %v6446
    %v6450 = vadd.f32 %v6436, %v6448
    %6451 = vrot.lane.b32.xlu0 %v6443, 32
    %v6452 = vpop.permute.xlu0 %6451
    %6453 = vrot.lane.b32.xlu0 %v6444, 32
    %v6454 = vpop.permute.xlu0 %6453
    %v6455 = vadd.f32 %v6443, %v6452
    %v6456 = vadd.f32 %v6444, %v6454
    %6457 = vrot.lane.b32.xlu0 %v6449, 32
    %v6458 = vpop.permute.xlu0 %6457
    %6459 = vrot.lane.b32.xlu0 %v6450, 32
    %v6460 = vpop.permute.xlu0 %6459
    %v6461 = vadd.f32 %v6449, %v6458
    %v6462 = vadd.f32 %v6450, %v6460
    %6463 = vrot.lane.b32.xlu0 %v6455, 64
    %v6464 = vpop.permute.xlu0 %6463
    %6465 = vrot.lane.b32.xlu0 %v6456, 64
    %v6466 = vpop.permute.xlu0 %6465
    %v6467 = vadd.f32 %v6455, %v6464
    %v6468 = vadd.f32 %v6456, %v6466
    %6469 = vrot.lane.b32.xlu0 %v6461, 64
    %v6470 = vpop.permute.xlu0 %6469
    %6471 = vrot.lane.b32.xlu0 %v6462, 64
    %v6472 = vpop.permute.xlu0 %6471
    %v6473 = vadd.f32 %v6461, %v6470
    %v6474 = vadd.f32 %v6462, %v6472
    %v6475 = vmul.f32 %v6467, 0.125
    %v6476 = vmul.f32 %v6468, 0.125
    %v6477 = vmul.f32 %v6473, 0.125
    %v6478 = vmul.f32 %v6474, 0.125
    %v6479 = vmul.f32 %v6475, %v6475
    %v6480 = vmul.f32 %v6476, %v6476
    %v6481 = vsub.f32 %v6477, %v6479
    %v6482 = vsub.f32 %v6478, %v6480
    %v6483 = vld [vmem:[%s81] sm:$0x1]
    %v6484 = vadd.f32 %v6481, 1e-05
    %v6485 = vadd.f32 %v6482, 1e-05
    %v6486 = vrsqrt.pop %v6484
    %v6487 = vrsqrt.pop %v6485
    %v6489 = vlaneseq
    %v6490 = vshrl.u32 %v6489, 7
    %v6491 = vsub.s32 0, %v6490
    %v6492 = vrot.slane %v6483, %v6491
    %v6494 = vmul.f32 %v6492, %v6486
    %v6495 = vmul.f32 %v6492, %v6487
    %v6496 = vsub.f32 %v6285, %v6475
    %v6497 = vsub.f32 %v6286, %v6476
    %v6498 = vmul.f32 %v6496, %v6494
    %v6499 = vmul.f32 %v6497, %v6495
    %v6500 = vld [vmem:[%s83] sm:$0x1]
    %v6502 = vlaneseq
    %v6503 = vshrl.u32 %v6502, 7
    %v6504 = vsub.s32 0, %v6503
    %v6505 = vrot.slane %v6500, %v6504
    %v6507 = vadd.f32 %v6498, %v6505
    %v6508 = vadd.f32 %v6499, %v6505
    %vm6509 = vcmp.ge.f32.partialorder %v6507, 0.0
    %vm6510 = vcmp.ge.f32.partialorder %v6508, 0.0
    %v6511 = vmul.f32 %v6507, 0.01
    %v6512 = vmul.f32 %v6508, 0.01
    %v6513 = vsel %vm6509, %v6507, %v6511
    %v6514 = vsel %vm6510, %v6508, %v6512
    %v6515 = vpack.c.bf16 %v6514, %v6513
    %6516 = vmatprep.subr.bf16.mxu0 0
    %6517 = vmatpush1.bf16.msra.mxu0 0
    %6518 = vmatprep.subr.bf16.mxu0 0
    %6519 = vmatpush1.bf16.msra.mxu0 0
    %6520 = vmatprep.subr.bf16.mxu0 0
    %6521 = vmatpush1.bf16.msra.mxu0 0
    %6522 = vmatprep.subr.bf16.mxu0 0
    %6523 = vmatpush1.bf16.msra.mxu0 0
    %6524 = vmatprep.subr.bf16.mxu0 0
    %6525 = vmatpush1.bf16.msra.mxu0 0
    %6526 = vmatprep.subr.bf16.mxu0 0
    %6527 = vmatpush1.bf16.msra.mxu0 0
    %6528 = vmatprep.subr.bf16.mxu0 0
    %6529 = vmatpush1.bf16.msra.mxu0 0
    %6530 = vmatprep.subr.bf16.mxu0 0
    %6531 = vmatpush1.bf16.msra.mxu0 %v6515
    %6532 = vmatprep.subr.bf16.mxu0 0
    %6533 = vmatpush2.bf16.msra.mxu0 0
    %6534 = vmatprep.subr.bf16.mxu0 0
    %6535 = vmatpush2.bf16.msra.mxu0 0
    %6536 = vmatprep.subr.bf16.mxu0 0
    %6537 = vmatpush2.bf16.msra.mxu0 0
    %6538 = vmatprep.subr.bf16.mxu0 0
    %6539 = vmatpush2.bf16.msra.mxu0 0
    %6540 = vmatprep.subr.bf16.mxu0 0
    %6541 = vmatpush2.bf16.msra.mxu0 0
    %6542 = vmatprep.subr.bf16.mxu0 0
    %6543 = vmatpush2.bf16.msra.mxu0 0
    %6544 = vmatprep.subr.bf16.mxu0 0
    %6545 = vmatpush2.bf16.msra.mxu0 0
    %6546 = vmatprep.subr.bf16.mxu0 0
    %6547 = vmatpush2.bf16.msra.mxu0 0
    %6548 = vmatprep.mubr.bf16.mxu0 0
    %6549 = vmatmul.mubr.bf16.gmra.mxu0 %v3000
    %v6550 = vpop.f32.mrf.mxu0
    %v6551 = vadd.f32 0.0, %v6550
    %v6552 = vpop.f32.mrf.mxu0
    %v6553 = vpop.f32.mrf.mxu0
    %v6554 = vadd.f32 0.0, %v6553
    %v6555 = vpop.f32.mrf.mxu0
    %6556 = vdwg.mxu0
    %v6557 = vpack.c.bf16 %v6554, %v6551
    %v6558 = vld [vmem:[#allocation31] sm:$0xf]
    %v6559 = vld [vmem:[#allocation31 + $0x4] sm:$0xf]
    %v6560 = vld [vmem:[#allocation31 + $0x8] sm:$0xf]
    %v6561 = vld [vmem:[#allocation31 + $0xc] sm:$0xf]
    %v6562 = vld [vmem:[#allocation31 + $0x10] sm:$0xf]
    %v6563 = vld [vmem:[#allocation31 + $0x14] sm:$0xf]
    %v6564 = vld [vmem:[#allocation31 + $0x18] sm:$0xf]
    %v6565 = vld [vmem:[#allocation31 + $0x1c] sm:$0xf]
    %v6566 = vld [vmem:[#allocation31 + $0x20] sm:$0xf]
    %v6567 = vld [vmem:[#allocation31 + $0x24] sm:$0xf]
    %v6568 = vld [vmem:[#allocation31 + $0x28] sm:$0xf]
    %v6569 = vld [vmem:[#allocation31 + $0x2c] sm:$0xf]
    %v6570 = vld [vmem:[#allocation31 + $0x30] sm:$0xf]
    %v6571 = vld [vmem:[#allocation31 + $0x34] sm:$0xf]
    %v6572 = vld [vmem:[#allocation31 + $0x38] sm:$0xf]
    %v6573 = vld [vmem:[#allocation31 + $0x3c] sm:$0xf]
    %6574 = vmatprep.subr.bf16.mxu0 0
    %6575 = vmatpush1.bf16.msra.mxu0 0
    %6576 = vmatprep.subr.bf16.mxu0 0
    %6577 = vmatpush1.bf16.msra.mxu0 0
    %6578 = vmatprep.subr.bf16.mxu0 0
    %6579 = vmatpush1.bf16.msra.mxu0 0
    %6580 = vmatprep.subr.bf16.mxu0 0
    %6581 = vmatpush1.bf16.msra.mxu0 0
    %6582 = vmatprep.subr.bf16.mxu0 0
    %6583 = vmatpush1.bf16.msra.mxu0 0
    %6584 = vmatprep.subr.bf16.mxu0 0
    %6585 = vmatpush1.bf16.msra.mxu0 0
    %6586 = vmatprep.subr.bf16.mxu0 0
    %6587 = vmatpush1.bf16.msra.mxu0 0
    %6588 = vmatprep.subr.bf16.mxu0 0
    %6589 = vmatpush1.bf16.msra.mxu0 %v6515
    %6590 = vmatprep.subr.bf16.mxu0 0
    %6591 = vmatpush2.bf16.msra.mxu0 0
    %6592 = vmatprep.subr.bf16.mxu0 0
    %6593 = vmatpush2.bf16.msra.mxu0 0
    %6594 = vmatprep.subr.bf16.mxu0 0
    %6595 = vmatpush2.bf16.msra.mxu0 0
    %6596 = vmatprep.subr.bf16.mxu0 0
    %6597 = vmatpush2.bf16.msra.mxu0 0
    %6598 = vmatprep.subr.bf16.mxu0 0
    %6599 = vmatpush2.bf16.msra.mxu0 0
    %6600 = vmatprep.subr.bf16.mxu0 0
    %6601 = vmatpush2.bf16.msra.mxu0 0
    %6602 = vmatprep.subr.bf16.mxu0 0
    %6603 = vmatpush2.bf16.msra.mxu0 0
    %6604 = vmatprep.subr.bf16.mxu0 0
    %6605 = vmatpush2.bf16.msra.mxu0 0
    %6606 = vmatprep.mubr.bf16.mxu0 0
    %6607 = vmatmul.mubr.bf16.gmra.mxu0 %v3069
    %v6608 = vpop.f32.mrf.mxu0
    %v6609 = vadd.f32 0.0, %v6608
    %v6610 = vpop.f32.mrf.mxu0
    %v6611 = vpop.f32.mrf.mxu0
    %v6612 = vadd.f32 0.0, %v6611
    %v6613 = vpop.f32.mrf.mxu0
    %6614 = vdwg.mxu0
    %v6615 = vpack.c.bf16 %v6612, %v6609
    %s6616 = scalar_lea.vmem [#allocation31], 64
    %v6617 = vld [vmem:[%s6616] sm:$0xf]
    %v6618 = vld [vmem:[%s6616 + $0x4] sm:$0xf]
    %v6619 = vld [vmem:[%s6616 + $0x8] sm:$0xf]
    %v6620 = vld [vmem:[%s6616 + $0xc] sm:$0xf]
    %v6621 = vld [vmem:[%s6616 + $0x10] sm:$0xf]
    %v6622 = vld [vmem:[%s6616 + $0x14] sm:$0xf]
    %v6623 = vld [vmem:[%s6616 + $0x18] sm:$0xf]
    %v6624 = vld [vmem:[%s6616 + $0x1c] sm:$0xf]
    %v6625 = vld [vmem:[%s6616 + $0x20] sm:$0xf]
    %v6626 = vld [vmem:[%s6616 + $0x24] sm:$0xf]
    %v6627 = vld [vmem:[%s6616 + $0x28] sm:$0xf]
    %v6628 = vld [vmem:[%s6616 + $0x2c] sm:$0xf]
    %v6629 = vld [vmem:[%s6616 + $0x30] sm:$0xf]
    %v6630 = vld [vmem:[%s6616 + $0x34] sm:$0xf]
    %v6631 = vld [vmem:[%s6616 + $0x38] sm:$0xf]
    %v6632 = vld [vmem:[%s6616 + $0x3c] sm:$0xf]
    %v6649 = vunpack.c.l.b16 %v6617
    %v6650 = vunpack.c.l.b16 %v6618
    %v6651 = vunpack.c.l.b16 %v6619
    %v6652 = vunpack.c.l.b16 %v6620
    %v6653 = vunpack.c.l.b16 %v6621
    %v6654 = vunpack.c.l.b16 %v6622
    %v6655 = vunpack.c.l.b16 %v6623
    %v6656 = vunpack.c.l.b16 %v6624
    %v6657 = vunpack.c.l.b16 %v6625
    %v6658 = vunpack.c.l.b16 %v6626
    %v6659 = vunpack.c.l.b16 %v6627
    %v6660 = vunpack.c.l.b16 %v6628
    %v6661 = vunpack.c.l.b16 %v6629
    %v6662 = vunpack.c.l.b16 %v6630
    %v6663 = vunpack.c.l.b16 %v6631
    %v6664 = vunpack.c.l.b16 %v6632
    %v6665 = vpack.c.b16 %v6650, %v6649
    %v6666 = vpack.c.b16 %v6652, %v6651
    %v6667 = vpack.c.b16 %v6654, %v6653
    %v6668 = vpack.c.b16 %v6656, %v6655
    %v6669 = vpack.c.b16 %v6658, %v6657
    %v6670 = vpack.c.b16 %v6660, %v6659
    %v6671 = vpack.c.b16 %v6662, %v6661
    %v6672 = vpack.c.b16 %v6664, %v6663
    %6681 = vmatprep.subr.bf16.mxu0 0
    %6682 = vmatpush1.bf16.msra.mxu0 %v6672
    %6683 = vmatprep.subr.bf16.mxu0 0
    %6684 = vmatpush1.bf16.msra.mxu0 %v6671
    %6685 = vmatprep.subr.bf16.mxu0 0
    %6686 = vmatpush1.bf16.msra.mxu0 %v6670
    %6687 = vmatprep.subr.bf16.mxu0 0
    %6688 = vmatpush1.bf16.msra.mxu0 %v6669
    %6689 = vmatprep.subr.bf16.mxu0 0
    %6690 = vmatpush1.bf16.msra.mxu0 %v6668
    %6691 = vmatprep.subr.bf16.mxu0 0
    %6692 = vmatpush1.bf16.msra.mxu0 %v6667
    %6693 = vmatprep.subr.bf16.mxu0 0
    %6694 = vmatpush1.bf16.msra.mxu0 %v6666
    %6695 = vmatprep.subr.bf16.mxu0 0
    %6696 = vmatpush1.bf16.msra.mxu0 %v6665
    %6697 = vmatprep.subr.bf16.mxu0 0
    %6698 = vmatpush2.bf16.msra.mxu0 0
    %6699 = vmatprep.subr.bf16.mxu0 0
    %6700 = vmatpush2.bf16.msra.mxu0 0
    %6701 = vmatprep.subr.bf16.mxu0 0
    %6702 = vmatpush2.bf16.msra.mxu0 0
    %6703 = vmatprep.subr.bf16.mxu0 0
    %6704 = vmatpush2.bf16.msra.mxu0 0
    %6705 = vmatprep.subr.bf16.mxu0 0
    %6706 = vmatpush2.bf16.msra.mxu0 0
    %6707 = vmatprep.subr.bf16.mxu0 0
    %6708 = vmatpush2.bf16.msra.mxu0 0
    %6709 = vmatprep.subr.bf16.mxu0 0
    %6710 = vmatpush2.bf16.msra.mxu0 0
    %6711 = vmatprep.subr.bf16.mxu0 0
    %6712 = vmatpush2.bf16.msra.mxu0 0
    %6713 = vmatprep.mubr.bf16.mxu0 0
    %6714 = vmatmul.mubr.bf16.gmra.mxu0 %v6615
    %v6715 = vpop.f32.mrf.mxu0
    %v6716 = vadd.f32 0.0, %v6715
    %v6717 = vpop.f32.mrf.mxu0
    %v6718 = vpop.f32.mrf.mxu0
    %v6719 = vadd.f32 0.0, %v6718
    %v6720 = vpop.f32.mrf.mxu0
    %6721 = vdwg.mxu0
    %v6738 = vunpack.c.l.b16 %v6558
    %v6739 = vunpack.c.l.b16 %v6559
    %v6740 = vunpack.c.l.b16 %v6560
    %v6741 = vunpack.c.l.b16 %v6561
    %v6742 = vunpack.c.l.b16 %v6562
    %v6743 = vunpack.c.l.b16 %v6563
    %v6744 = vunpack.c.l.b16 %v6564
    %v6745 = vunpack.c.l.b16 %v6565
    %v6746 = vunpack.c.l.b16 %v6566
    %v6747 = vunpack.c.l.b16 %v6567
    %v6748 = vunpack.c.l.b16 %v6568
    %v6749 = vunpack.c.l.b16 %v6569
    %v6750 = vunpack.c.l.b16 %v6570
    %v6751 = vunpack.c.l.b16 %v6571
    %v6752 = vunpack.c.l.b16 %v6572
    %v6753 = vunpack.c.l.b16 %v6573
    %v6754 = vpack.c.b16 %v6739, %v6738
    %v6755 = vpack.c.b16 %v6741, %v6740
    %v6756 = vpack.c.b16 %v6743, %v6742
    %v6757 = vpack.c.b16 %v6745, %v6744
    %v6758 = vpack.c.b16 %v6747, %v6746
    %v6759 = vpack.c.b16 %v6749, %v6748
    %v6760 = vpack.c.b16 %v6751, %v6750
    %v6761 = vpack.c.b16 %v6753, %v6752
    %6770 = vmatprep.subr.bf16.mxu0 0
    %6771 = vmatpush1.bf16.msra.mxu0 %v6761
    %6772 = vmatprep.subr.bf16.mxu0 0
    %6773 = vmatpush1.bf16.msra.mxu0 %v6760
    %6774 = vmatprep.subr.bf16.mxu0 0
    %6775 = vmatpush1.bf16.msra.mxu0 %v6759
    %6776 = vmatprep.subr.bf16.mxu0 0
    %6777 = vmatpush1.bf16.msra.mxu0 %v6758
    %6778 = vmatprep.subr.bf16.mxu0 0
    %6779 = vmatpush1.bf16.msra.mxu0 %v6757
    %6780 = vmatprep.subr.bf16.mxu0 0
    %6781 = vmatpush1.bf16.msra.mxu0 %v6756
    %6782 = vmatprep.subr.bf16.mxu0 0
    %6783 = vmatpush1.bf16.msra.mxu0 %v6755
    %6784 = vmatprep.subr.bf16.mxu0 0
    %6785 = vmatpush1.bf16.msra.mxu0 %v6754
    %6786 = vmatprep.subr.bf16.mxu0 0
    %6787 = vmatpush2.bf16.msra.mxu0 0
    %6788 = vmatprep.subr.bf16.mxu0 0
    %6789 = vmatpush2.bf16.msra.mxu0 0
    %6790 = vmatprep.subr.bf16.mxu0 0
    %6791 = vmatpush2.bf16.msra.mxu0 0
    %6792 = vmatprep.subr.bf16.mxu0 0
    %6793 = vmatpush2.bf16.msra.mxu0 0
    %6794 = vmatprep.subr.bf16.mxu0 0
    %6795 = vmatpush2.bf16.msra.mxu0 0
    %6796 = vmatprep.subr.bf16.mxu0 0
    %6797 = vmatpush2.bf16.msra.mxu0 0
    %6798 = vmatprep.subr.bf16.mxu0 0
    %6799 = vmatpush2.bf16.msra.mxu0 0
    %6800 = vmatprep.subr.bf16.mxu0 0
    %6801 = vmatpush2.bf16.msra.mxu0 0
    %6802 = vmatprep.mubr.bf16.mxu0 0
    %6803 = vmatmul.mubr.bf16.gmra.mxu0 %v6557
    %v6804 = vpop.f32.mrf.mxu0
    %v6805 = vadd.f32 %v6716, %v6804
    %v6806 = vpop.f32.mrf.mxu0
    %v6807 = vpop.f32.mrf.mxu0
    %v6808 = vadd.f32 %v6719, %v6807
    %v6809 = vpop.f32.mrf.mxu0
    %6810 = vdwg.mxu0
    %6811 = vmatprep.subr.bf16.mxu0 0
    %6812 = vmatpush1.bf16.msra.mxu0 0
    %6813 = vmatprep.subr.bf16.mxu0 0
    %6814 = vmatpush1.bf16.msra.mxu0 0
    %6815 = vmatprep.subr.bf16.mxu0 0
    %6816 = vmatpush1.bf16.msra.mxu0 0
    %6817 = vmatprep.subr.bf16.mxu0 0
    %6818 = vmatpush1.bf16.msra.mxu0 0
    %6819 = vmatprep.subr.bf16.mxu0 0
    %6820 = vmatpush1.bf16.msra.mxu0 0
    %6821 = vmatprep.subr.bf16.mxu0 0
    %6822 = vmatpush1.bf16.msra.mxu0 0
    %6823 = vmatprep.subr.bf16.mxu0 0
    %6824 = vmatpush1.bf16.msra.mxu0 0
    %6825 = vmatprep.subr.bf16.mxu0 0
    %6826 = vmatpush1.bf16.msra.mxu0 %v6515
    %6827 = vmatprep.subr.bf16.mxu0 0
    %6828 = vmatpush2.bf16.msra.mxu0 0
    %6829 = vmatprep.subr.bf16.mxu0 0
    %6830 = vmatpush2.bf16.msra.mxu0 0
    %6831 = vmatprep.subr.bf16.mxu0 0
    %6832 = vmatpush2.bf16.msra.mxu0 0
    %6833 = vmatprep.subr.bf16.mxu0 0
    %6834 = vmatpush2.bf16.msra.mxu0 0
    %6835 = vmatprep.subr.bf16.mxu0 0
    %6836 = vmatpush2.bf16.msra.mxu0 0
    %6837 = vmatprep.subr.bf16.mxu0 0
    %6838 = vmatpush2.bf16.msra.mxu0 0
    %6839 = vmatprep.subr.bf16.mxu0 0
    %6840 = vmatpush2.bf16.msra.mxu0 0
    %6841 = vmatprep.subr.bf16.mxu0 0
    %6842 = vmatpush2.bf16.msra.mxu0 0
    %6843 = vmatprep.mubr.bf16.mxu0 0
    %6844 = vmatmul.mubr.bf16.gmra.mxu0 %v3317
    %v6845 = vpop.f32.mrf.mxu0
    %v6846 = vadd.f32 0.0, %v6845
    %v6847 = vpop.f32.mrf.mxu0
    %v6848 = vpop.f32.mrf.mxu0
    %v6849 = vadd.f32 0.0, %v6848
    %v6850 = vpop.f32.mrf.mxu0
    %6851 = vdwg.mxu0
    %v6852 = vpack.c.bf16 %v6849, %v6846
    %s6853 = scalar_lea.vmem [#allocation31], 128
    %v6854 = vld [vmem:[%s6853] sm:$0xf]
    %v6855 = vld [vmem:[%s6853 + $0x4] sm:$0xf]
    %v6856 = vld [vmem:[%s6853 + $0x8] sm:$0xf]
    %v6857 = vld [vmem:[%s6853 + $0xc] sm:$0xf]
    %v6858 = vld [vmem:[%s6853 + $0x10] sm:$0xf]
    %v6859 = vld [vmem:[%s6853 + $0x14] sm:$0xf]
    %v6860 = vld [vmem:[%s6853 + $0x18] sm:$0xf]
    %v6861 = vld [vmem:[%s6853 + $0x1c] sm:$0xf]
    %v6862 = vld [vmem:[%s6853 + $0x20] sm:$0xf]
    %v6863 = vld [vmem:[%s6853 + $0x24] sm:$0xf]
    %v6864 = vld [vmem:[%s6853 + $0x28] sm:$0xf]
    %v6865 = vld [vmem:[%s6853 + $0x2c] sm:$0xf]
    %v6866 = vld [vmem:[%s6853 + $0x30] sm:$0xf]
    %v6867 = vld [vmem:[%s6853 + $0x34] sm:$0xf]
    %v6868 = vld [vmem:[%s6853 + $0x38] sm:$0xf]
    %v6869 = vld [vmem:[%s6853 + $0x3c] sm:$0xf]
    %v6886 = vunpack.c.l.b16 %v6854
    %v6887 = vunpack.c.l.b16 %v6855
    %v6888 = vunpack.c.l.b16 %v6856
    %v6889 = vunpack.c.l.b16 %v6857
    %v6890 = vunpack.c.l.b16 %v6858
    %v6891 = vunpack.c.l.b16 %v6859
    %v6892 = vunpack.c.l.b16 %v6860
    %v6893 = vunpack.c.l.b16 %v6861
    %v6894 = vunpack.c.l.b16 %v6862
    %v6895 = vunpack.c.l.b16 %v6863
    %v6896 = vunpack.c.l.b16 %v6864
    %v6897 = vunpack.c.l.b16 %v6865
    %v6898 = vunpack.c.l.b16 %v6866
    %v6899 = vunpack.c.l.b16 %v6867
    %v6900 = vunpack.c.l.b16 %v6868
    %v6901 = vunpack.c.l.b16 %v6869
    %v6902 = vpack.c.b16 %v6887, %v6886
    %v6903 = vpack.c.b16 %v6889, %v6888
    %v6904 = vpack.c.b16 %v6891, %v6890
    %v6905 = vpack.c.b16 %v6893, %v6892
    %v6906 = vpack.c.b16 %v6895, %v6894
    %v6907 = vpack.c.b16 %v6897, %v6896
    %v6908 = vpack.c.b16 %v6899, %v6898
    %v6909 = vpack.c.b16 %v6901, %v6900
    %6918 = vmatprep.subr.bf16.mxu0 0
    %6919 = vmatpush1.bf16.msra.mxu0 %v6909
    %6920 = vmatprep.subr.bf16.mxu0 0
    %6921 = vmatpush1.bf16.msra.mxu0 %v6908
    %6922 = vmatprep.subr.bf16.mxu0 0
    %6923 = vmatpush1.bf16.msra.mxu0 %v6907
    %6924 = vmatprep.subr.bf16.mxu0 0
    %6925 = vmatpush1.bf16.msra.mxu0 %v6906
    %6926 = vmatprep.subr.bf16.mxu0 0
    %6927 = vmatpush1.bf16.msra.mxu0 %v6905
    %6928 = vmatprep.subr.bf16.mxu0 0
    %6929 = vmatpush1.bf16.msra.mxu0 %v6904
    %6930 = vmatprep.subr.bf16.mxu0 0
    %6931 = vmatpush1.bf16.msra.mxu0 %v6903
    %6932 = vmatprep.subr.bf16.mxu0 0
    %6933 = vmatpush1.bf16.msra.mxu0 %v6902
    %6934 = vmatprep.subr.bf16.mxu0 0
    %6935 = vmatpush2.bf16.msra.mxu0 0
    %6936 = vmatprep.subr.bf16.mxu0 0
    %6937 = vmatpush2.bf16.msra.mxu0 0
    %6938 = vmatprep.subr.bf16.mxu0 0
    %6939 = vmatpush2.bf16.msra.mxu0 0
    %6940 = vmatprep.subr.bf16.mxu0 0
    %6941 = vmatpush2.bf16.msra.mxu0 0
    %6942 = vmatprep.subr.bf16.mxu0 0
    %6943 = vmatpush2.bf16.msra.mxu0 0
    %6944 = vmatprep.subr.bf16.mxu0 0
    %6945 = vmatpush2.bf16.msra.mxu0 0
    %6946 = vmatprep.subr.bf16.mxu0 0
    %6947 = vmatpush2.bf16.msra.mxu0 0
    %6948 = vmatprep.subr.bf16.mxu0 0
    %6949 = vmatpush2.bf16.msra.mxu0 0
    %6950 = vmatprep.mubr.bf16.mxu0 0
    %6951 = vmatmul.mubr.bf16.gmra.mxu0 %v6852
    %v6952 = vpop.f32.mrf.mxu0
    %v6953 = vadd.f32 0.0, %v6952
    %v6954 = vpop.f32.mrf.mxu0
    %v6955 = vpop.f32.mrf.mxu0
    %v6956 = vadd.f32 0.0, %v6955
    %v6957 = vpop.f32.mrf.mxu0
    %6958 = vdwg.mxu0
    %v6959 = vadd.f32 %v6805, %v6953
    %v6960 = vadd.f32 %v6808, %v6956
    %v6961 = vld [vmem:[%s87] sm:$0x1]
    %v6963 = vlaneseq
    %v6964 = vshrl.u32 %v6963, 7
    %v6965 = vsub.s32 0, %v6964
    %v6966 = vrot.slane %v6961, %v6965
    %v6968 = vadd.f32 %v6959, %v6966
    %v6969 = vadd.f32 %v6960, %v6966
    %6970 = vmatprep.subr.mxu0 0.0
    %6971 = vmatpush1.msra.mxu0 0.0
    %6972 = vmatprep.subr.mxu0 0.0
    %6973 = vmatpush1.msra.mxu0 0.0
    %6974 = vmatprep.subr.mxu0 0.0
    %6975 = vmatpush1.msra.mxu0 0.0
    %6976 = vmatprep.subr.mxu0 0.0
    %6977 = vmatpush1.msra.mxu0 0.0
    %6978 = vmatprep.subr.mxu0 0.0
    %6979 = vmatpush1.msra.mxu0 0.0
    %6980 = vmatprep.subr.mxu0 0.0
    %6981 = vmatpush1.msra.mxu0 0.0
    %6982 = vmatprep.subr.mxu0 0.0
    %6983 = vmatpush1.msra.mxu0 0.0
    %6984 = vmatprep.subr.mxu0 0.0
    %6985 = vmatpush1.msra.mxu0 0.0
    %6986 = vmatprep.subr.mxu0 0.0
    %6987 = vmatpush1.msra.mxu0 0.0
    %6988 = vmatprep.subr.mxu0 0.0
    %6989 = vmatpush1.msra.mxu0 0.0
    %6990 = vmatprep.subr.mxu0 0.0
    %6991 = vmatpush1.msra.mxu0 0.0
    %6992 = vmatprep.subr.mxu0 0.0
    %6993 = vmatpush1.msra.mxu0 0.0
    %6994 = vmatprep.subr.mxu0 0.0
    %6995 = vmatpush1.msra.mxu0 0.0
    %6996 = vmatprep.subr.mxu0 0.0
    %6997 = vmatpush1.msra.mxu0 0.0
    %6998 = vmatprep.subr.mxu0 0.0
    %6999 = vmatpush1.msra.mxu0 %v6969
    %7000 = vmatprep.subr.mxu0 0.0
    %7001 = vmatpush1.msra.mxu0 %v6968
    %7002 = vmatprep.subr.mxu0 0.0
    %7003 = vmatpush2.msra.mxu0 0.0
    %7004 = vmatprep.subr.mxu0 0.0
    %7005 = vmatpush2.msra.mxu0 0.0
    %7006 = vmatprep.subr.mxu0 0.0
    %7007 = vmatpush2.msra.mxu0 0.0
    %7008 = vmatprep.subr.mxu0 0.0
    %7009 = vmatpush2.msra.mxu0 0.0
    %7010 = vmatprep.subr.mxu0 0.0
    %7011 = vmatpush2.msra.mxu0 0.0
    %7012 = vmatprep.subr.mxu0 0.0
    %7013 = vmatpush2.msra.mxu0 0.0
    %7014 = vmatprep.subr.mxu0 0.0
    %7015 = vmatpush2.msra.mxu0 0.0
    %7016 = vmatprep.subr.mxu0 0.0
    %7017 = vmatpush2.msra.mxu0 0.0
    %7018 = vmatprep.subr.mxu0 0.0
    %7019 = vmatpush2.msra.mxu0 0.0
    %7020 = vmatprep.subr.mxu0 0.0
    %7021 = vmatpush2.msra.mxu0 0.0
    %7022 = vmatprep.subr.mxu0 0.0
    %7023 = vmatpush2.msra.mxu0 0.0
    %7024 = vmatprep.subr.mxu0 0.0
    %7025 = vmatpush2.msra.mxu0 0.0
    %7026 = vmatprep.subr.mxu0 0.0
    %7027 = vmatpush2.msra.mxu0 0.0
    %7028 = vmatprep.subr.mxu0 0.0
    %7029 = vmatpush2.msra.mxu0 0.0
    %7030 = vmatprep.subr.mxu0 0.0
    %7031 = vmatpush2.msra.mxu0 0.0
    %7032 = vmatprep.subr.mxu0 0.0
    %7033 = vmatpush2.msra.mxu0 0.0
    %7034 = vmatprep.mubr.f32.mxu0 0.0
    %7035 = vmatmul.mubr.f32.gmra.mxu0 %v2758
    %v7036 = vpop.f32.mrf.mxu0
    %v7037 = vadd.f32 0.0, %v7036
    %v7038 = vpop.f32.mrf.mxu0
    %7039 = vmatprep.mubr.f32.mxu0 0.0
    %7040 = vmatmul.mubr.f32.gmra.mxu0 %v2761
    %v7041 = vpop.f32.mrf.mxu0
    %v7042 = vadd.f32 0.0, %v7041
    %v7043 = vpop.f32.mrf.mxu0
    %7044 = vdwg.mxu0
    %v7045 = vmul.f32 %v6968, %v6968
    %v7046 = vmul.f32 %v6969, %v6969
    %7047 = vmatprep.subr.mxu0 0.0
    %7048 = vmatpush1.msra.mxu0 0.0
    %7049 = vmatprep.subr.mxu0 0.0
    %7050 = vmatpush1.msra.mxu0 0.0
    %7051 = vmatprep.subr.mxu0 0.0
    %7052 = vmatpush1.msra.mxu0 0.0
    %7053 = vmatprep.subr.mxu0 0.0
    %7054 = vmatpush1.msra.mxu0 0.0
    %7055 = vmatprep.subr.mxu0 0.0
    %7056 = vmatpush1.msra.mxu0 0.0
    %7057 = vmatprep.subr.mxu0 0.0
    %7058 = vmatpush1.msra.mxu0 0.0
    %7059 = vmatprep.subr.mxu0 0.0
    %7060 = vmatpush1.msra.mxu0 0.0
    %7061 = vmatprep.subr.mxu0 0.0
    %7062 = vmatpush1.msra.mxu0 0.0
    %7063 = vmatprep.subr.mxu0 0.0
    %7064 = vmatpush1.msra.mxu0 0.0
    %7065 = vmatprep.subr.mxu0 0.0
    %7066 = vmatpush1.msra.mxu0 0.0
    %7067 = vmatprep.subr.mxu0 0.0
    %7068 = vmatpush1.msra.mxu0 0.0
    %7069 = vmatprep.subr.mxu0 0.0
    %7070 = vmatpush1.msra.mxu0 0.0
    %7071 = vmatprep.subr.mxu0 0.0
    %7072 = vmatpush1.msra.mxu0 0.0
    %7073 = vmatprep.subr.mxu0 0.0
    %7074 = vmatpush1.msra.mxu0 0.0
    %7075 = vmatprep.subr.mxu0 0.0
    %7076 = vmatpush1.msra.mxu0 %v7046
    %7077 = vmatprep.subr.mxu0 0.0
    %7078 = vmatpush1.msra.mxu0 %v7045
    %7079 = vmatprep.subr.mxu0 0.0
    %7080 = vmatpush2.msra.mxu0 0.0
    %7081 = vmatprep.subr.mxu0 0.0
    %7082 = vmatpush2.msra.mxu0 0.0
    %7083 = vmatprep.subr.mxu0 0.0
    %7084 = vmatpush2.msra.mxu0 0.0
    %7085 = vmatprep.subr.mxu0 0.0
    %7086 = vmatpush2.msra.mxu0 0.0
    %7087 = vmatprep.subr.mxu0 0.0
    %7088 = vmatpush2.msra.mxu0 0.0
    %7089 = vmatprep.subr.mxu0 0.0
    %7090 = vmatpush2.msra.mxu0 0.0
    %7091 = vmatprep.subr.mxu0 0.0
    %7092 = vmatpush2.msra.mxu0 0.0
    %7093 = vmatprep.subr.mxu0 0.0
    %7094 = vmatpush2.msra.mxu0 0.0
    %7095 = vmatprep.subr.mxu0 0.0
    %7096 = vmatpush2.msra.mxu0 0.0
    %7097 = vmatprep.subr.mxu0 0.0
    %7098 = vmatpush2.msra.mxu0 0.0
    %7099 = vmatprep.subr.mxu0 0.0
    %7100 = vmatpush2.msra.mxu0 0.0
    %7101 = vmatprep.subr.mxu0 0.0
    %7102 = vmatpush2.msra.mxu0 0.0
    %7103 = vmatprep.subr.mxu0 0.0
    %7104 = vmatpush2.msra.mxu0 0.0
    %7105 = vmatprep.subr.mxu0 0.0
    %7106 = vmatpush2.msra.mxu0 0.0
    %7107 = vmatprep.subr.mxu0 0.0
    %7108 = vmatpush2.msra.mxu0 0.0
    %7109 = vmatprep.subr.mxu0 0.0
    %7110 = vmatpush2.msra.mxu0 0.0
    %7111 = vmatprep.mubr.f32.mxu0 0.0
    %7112 = vmatmul.mubr.f32.gmra.mxu0 %v2758
    %v7113 = vpop.f32.mrf.mxu0
    %v7114 = vadd.f32 0.0, %v7113
    %v7115 = vpop.f32.mrf.mxu0
    %7116 = vmatprep.mubr.f32.mxu0 0.0
    %7117 = vmatmul.mubr.f32.gmra.mxu0 %v2761
    %v7118 = vpop.f32.mrf.mxu0
    %v7119 = vadd.f32 0.0, %v7118
    %v7120 = vpop.f32.mrf.mxu0
    %7121 = vdwg.mxu0
    %7122 = vrot.lane.b32.xlu0 %v7037, 16
    %v7123 = vpop.permute.xlu0 %7122
    %7124 = vrot.lane.b32.xlu0 %v7042, 16
    %v7125 = vpop.permute.xlu0 %7124
    %v7126 = vadd.f32 %v7037, %v7123
    %v7127 = vadd.f32 %v7042, %v7125
    %7128 = vrot.lane.b32.xlu0 %v7114, 16
    %v7129 = vpop.permute.xlu0 %7128
    %7130 = vrot.lane.b32.xlu0 %v7119, 16
    %v7131 = vpop.permute.xlu0 %7130
    %v7132 = vadd.f32 %v7114, %v7129
    %v7133 = vadd.f32 %v7119, %v7131
    %7134 = vrot.lane.b32.xlu0 %v7126, 32
    %v7135 = vpop.permute.xlu0 %7134
    %7136 = vrot.lane.b32.xlu0 %v7127, 32
    %v7137 = vpop.permute.xlu0 %7136
    %v7138 = vadd.f32 %v7126, %v7135
    %v7139 = vadd.f32 %v7127, %v7137
    %7140 = vrot.lane.b32.xlu0 %v7132, 32
    %v7141 = vpop.permute.xlu0 %7140
    %7142 = vrot.lane.b32.xlu0 %v7133, 32
    %v7143 = vpop.permute.xlu0 %7142
    %v7144 = vadd.f32 %v7132, %v7141
    %v7145 = vadd.f32 %v7133, %v7143
    %7146 = vrot.lane.b32.xlu0 %v7138, 64
    %v7147 = vpop.permute.xlu0 %7146
    %7148 = vrot.lane.b32.xlu0 %v7139, 64
    %v7149 = vpop.permute.xlu0 %7148
    %v7150 = vadd.f32 %v7138, %v7147
    %v7151 = vadd.f32 %v7139, %v7149
    %7152 = vrot.lane.b32.xlu0 %v7144, 64
    %v7153 = vpop.permute.xlu0 %7152
    %7154 = vrot.lane.b32.xlu0 %v7145, 64
    %v7155 = vpop.permute.xlu0 %7154
    %v7156 = vadd.f32 %v7144, %v7153
    %v7157 = vadd.f32 %v7145, %v7155
    %v7158 = vmul.f32 %v7150, 0.125
    %v7159 = vmul.f32 %v7151, 0.125
    %v7160 = vmul.f32 %v7156, 0.125
    %v7161 = vmul.f32 %v7157, 0.125
    %v7162 = vmul.f32 %v7158, %v7158
    %v7163 = vmul.f32 %v7159, %v7159
    %v7164 = vsub.f32 %v7160, %v7162
    %v7165 = vsub.f32 %v7161, %v7163
    %v7166 = vld [vmem:[%s89] sm:$0x1]
    %v7167 = vadd.f32 %v7164, 1e-05
    %v7168 = vadd.f32 %v7165, 1e-05
    %v7169 = vrsqrt.pop %v7167
    %v7170 = vrsqrt.pop %v7168
    %v7172 = vlaneseq
    %v7173 = vshrl.u32 %v7172, 7
    %v7174 = vsub.s32 0, %v7173
    %v7175 = vrot.slane %v7166, %v7174
    %v7177 = vmul.f32 %v7175, %v7169
    %v7178 = vmul.f32 %v7175, %v7170
    %v7179 = vsub.f32 %v6968, %v7158
    %v7180 = vsub.f32 %v6969, %v7159
    %v7181 = vmul.f32 %v7179, %v7177
    %v7182 = vmul.f32 %v7180, %v7178
    %v7183 = vld [vmem:[%s91] sm:$0x1]
    %v7185 = vlaneseq
    %v7186 = vshrl.u32 %v7185, 7
    %v7187 = vsub.s32 0, %v7186
    %v7188 = vrot.slane %v7183, %v7187
    %v7190 = vadd.f32 %v7181, %v7188
    %v7191 = vadd.f32 %v7182, %v7188
    %vm7192 = vcmp.ge.f32.partialorder %v7190, 0.0
    %vm7193 = vcmp.ge.f32.partialorder %v7191, 0.0
    %v7194 = vmul.f32 %v7190, 0.01
    %v7195 = vmul.f32 %v7191, 0.01
    %v7196 = vsel %vm7192, %v7190, %v7194
    %v7197 = vsel %vm7193, %v7191, %v7195
    %v7198 = vpack.c.bf16 %v7197, %v7196
    %v7199 = vld [vmem:[#allocation33] sm:$0xf]
    %v7200 = vld [vmem:[#allocation33 + $0x4] sm:$0xf]
    %v7201 = vld [vmem:[#allocation33 + $0x8] sm:$0xf]
    %v7202 = vld [vmem:[#allocation33 + $0xc] sm:$0xf]
    %v7203 = vld [vmem:[#allocation33 + $0x10] sm:$0xf]
    %v7204 = vld [vmem:[#allocation33 + $0x14] sm:$0xf]
    %v7205 = vld [vmem:[#allocation33 + $0x18] sm:$0xf]
    %v7206 = vld [vmem:[#allocation33 + $0x1c] sm:$0xf]
    %v7207 = vld [vmem:[#allocation33 + $0x20] sm:$0xf]
    %v7208 = vld [vmem:[#allocation33 + $0x24] sm:$0xf]
    %v7209 = vld [vmem:[#allocation33 + $0x28] sm:$0xf]
    %v7210 = vld [vmem:[#allocation33 + $0x2c] sm:$0xf]
    %v7211 = vld [vmem:[#allocation33 + $0x30] sm:$0xf]
    %v7212 = vld [vmem:[#allocation33 + $0x34] sm:$0xf]
    %v7213 = vld [vmem:[#allocation33 + $0x38] sm:$0xf]
    %v7214 = vld [vmem:[#allocation33 + $0x3c] sm:$0xf]
    %v7231 = vunpack.c.l.b16 %v7199
    %v7232 = vunpack.c.l.b16 %v7200
    %v7233 = vunpack.c.l.b16 %v7201
    %v7234 = vunpack.c.l.b16 %v7202
    %v7235 = vunpack.c.l.b16 %v7203
    %v7236 = vunpack.c.l.b16 %v7204
    %v7237 = vunpack.c.l.b16 %v7205
    %v7238 = vunpack.c.l.b16 %v7206
    %v7239 = vunpack.c.l.b16 %v7207
    %v7240 = vunpack.c.l.b16 %v7208
    %v7241 = vunpack.c.l.b16 %v7209
    %v7242 = vunpack.c.l.b16 %v7210
    %v7243 = vunpack.c.l.b16 %v7211
    %v7244 = vunpack.c.l.b16 %v7212
    %v7245 = vunpack.c.l.b16 %v7213
    %v7246 = vunpack.c.l.b16 %v7214
    %v7247 = vpack.c.b16 %v7232, %v7231
    %v7248 = vpack.c.b16 %v7234, %v7233
    %v7249 = vpack.c.b16 %v7236, %v7235
    %v7250 = vpack.c.b16 %v7238, %v7237
    %v7251 = vpack.c.b16 %v7240, %v7239
    %v7252 = vpack.c.b16 %v7242, %v7241
    %v7253 = vpack.c.b16 %v7244, %v7243
    %v7254 = vpack.c.b16 %v7246, %v7245
    %7263 = vmatprep.subr.bf16.mxu0 0
    %7264 = vmatpush1.bf16.msra.mxu0 %v7254
    %7265 = vmatprep.subr.bf16.mxu0 0
    %7266 = vmatpush1.bf16.msra.mxu0 %v7253
    %7267 = vmatprep.subr.bf16.mxu0 0
    %7268 = vmatpush1.bf16.msra.mxu0 %v7252
    %7269 = vmatprep.subr.bf16.mxu0 0
    %7270 = vmatpush1.bf16.msra.mxu0 %v7251
    %7271 = vmatprep.subr.bf16.mxu0 0
    %7272 = vmatpush1.bf16.msra.mxu0 %v7250
    %7273 = vmatprep.subr.bf16.mxu0 0
    %7274 = vmatpush1.bf16.msra.mxu0 %v7249
    %7275 = vmatprep.subr.bf16.mxu0 0
    %7276 = vmatpush1.bf16.msra.mxu0 %v7248
    %7277 = vmatprep.subr.bf16.mxu0 0
    %7278 = vmatpush1.bf16.msra.mxu0 %v7247
    %7279 = vmatprep.subr.bf16.mxu0 0
    %7280 = vmatpush2.bf16.msra.mxu0 0
    %7281 = vmatprep.subr.bf16.mxu0 0
    %7282 = vmatpush2.bf16.msra.mxu0 0
    %7283 = vmatprep.subr.bf16.mxu0 0
    %7284 = vmatpush2.bf16.msra.mxu0 0
    %7285 = vmatprep.subr.bf16.mxu0 0
    %7286 = vmatpush2.bf16.msra.mxu0 0
    %7287 = vmatprep.subr.bf16.mxu0 0
    %7288 = vmatpush2.bf16.msra.mxu0 0
    %7289 = vmatprep.subr.bf16.mxu0 0
    %7290 = vmatpush2.bf16.msra.mxu0 0
    %7291 = vmatprep.subr.bf16.mxu0 0
    %7292 = vmatpush2.bf16.msra.mxu0 0
    %7293 = vmatprep.subr.bf16.mxu0 0
    %7294 = vmatpush2.bf16.msra.mxu0 0
    %7295 = vmatprep.mubr.bf16.mxu0 0
    %7296 = vmatmul.mubr.bf16.gmra.mxu0 %v7198
    %v7297 = vpop.f32.mrf.mxu0
    %v7298 = vadd.f32 0.0, %v7297
    %v7299 = vpop.f32.mrf.mxu0
    %v7300 = vpop.f32.mrf.mxu0
    %v7301 = vadd.f32 0.0, %v7300
    %v7302 = vpop.f32.mrf.mxu0
    %7303 = vdwg.mxu0
    %s7304 = scalar_lea.vmem [#allocation33], 64
    %v7305 = vld [vmem:[%s7304] sm:$0xf]
    %v7306 = vld [vmem:[%s7304 + $0x4] sm:$0xf]
    %v7307 = vld [vmem:[%s7304 + $0x8] sm:$0xf]
    %v7308 = vld [vmem:[%s7304 + $0xc] sm:$0xf]
    %v7309 = vld [vmem:[%s7304 + $0x10] sm:$0xf]
    %v7310 = vld [vmem:[%s7304 + $0x14] sm:$0xf]
    %v7311 = vld [vmem:[%s7304 + $0x18] sm:$0xf]
    %v7312 = vld [vmem:[%s7304 + $0x1c] sm:$0xf]
    %v7313 = vld [vmem:[%s7304 + $0x20] sm:$0xf]
    %v7314 = vld [vmem:[%s7304 + $0x24] sm:$0xf]
    %v7315 = vld [vmem:[%s7304 + $0x28] sm:$0xf]
    %v7316 = vld [vmem:[%s7304 + $0x2c] sm:$0xf]
    %v7317 = vld [vmem:[%s7304 + $0x30] sm:$0xf]
    %v7318 = vld [vmem:[%s7304 + $0x34] sm:$0xf]
    %v7319 = vld [vmem:[%s7304 + $0x38] sm:$0xf]
    %v7320 = vld [vmem:[%s7304 + $0x3c] sm:$0xf]
    %v7337 = vunpack.c.l.b16 %v7305
    %v7338 = vunpack.c.l.b16 %v7306
    %v7339 = vunpack.c.l.b16 %v7307
    %v7340 = vunpack.c.l.b16 %v7308
    %v7341 = vunpack.c.l.b16 %v7309
    %v7342 = vunpack.c.l.b16 %v7310
    %v7343 = vunpack.c.l.b16 %v7311
    %v7344 = vunpack.c.l.b16 %v7312
    %v7345 = vunpack.c.l.b16 %v7313
    %v7346 = vunpack.c.l.b16 %v7314
    %v7347 = vunpack.c.l.b16 %v7315
    %v7348 = vunpack.c.l.b16 %v7316
    %v7349 = vunpack.c.l.b16 %v7317
    %v7350 = vunpack.c.l.b16 %v7318
    %v7351 = vunpack.c.l.b16 %v7319
    %v7352 = vunpack.c.l.b16 %v7320
    %v7353 = vpack.c.b16 %v7338, %v7337
    %v7354 = vpack.c.b16 %v7340, %v7339
    %v7355 = vpack.c.b16 %v7342, %v7341
    %v7356 = vpack.c.b16 %v7344, %v7343
    %v7357 = vpack.c.b16 %v7346, %v7345
    %v7358 = vpack.c.b16 %v7348, %v7347
    %v7359 = vpack.c.b16 %v7350, %v7349
    %v7360 = vpack.c.b16 %v7352, %v7351
    %7369 = vmatprep.subr.bf16.mxu0 0
    %7370 = vmatpush1.bf16.msra.mxu0 %v7360
    %7371 = vmatprep.subr.bf16.mxu0 0
    %7372 = vmatpush1.bf16.msra.mxu0 %v7359
    %7373 = vmatprep.subr.bf16.mxu0 0
    %7374 = vmatpush1.bf16.msra.mxu0 %v7358
    %7375 = vmatprep.subr.bf16.mxu0 0
    %7376 = vmatpush1.bf16.msra.mxu0 %v7357
    %7377 = vmatprep.subr.bf16.mxu0 0
    %7378 = vmatpush1.bf16.msra.mxu0 %v7356
    %7379 = vmatprep.subr.bf16.mxu0 0
    %7380 = vmatpush1.bf16.msra.mxu0 %v7355
    %7381 = vmatprep.subr.bf16.mxu0 0
    %7382 = vmatpush1.bf16.msra.mxu0 %v7354
    %7383 = vmatprep.subr.bf16.mxu0 0
    %7384 = vmatpush1.bf16.msra.mxu0 %v7353
    %7385 = vmatprep.subr.bf16.mxu0 0
    %7386 = vmatpush2.bf16.msra.mxu0 0
    %7387 = vmatprep.subr.bf16.mxu0 0
    %7388 = vmatpush2.bf16.msra.mxu0 0
    %7389 = vmatprep.subr.bf16.mxu0 0
    %7390 = vmatpush2.bf16.msra.mxu0 0
    %7391 = vmatprep.subr.bf16.mxu0 0
    %7392 = vmatpush2.bf16.msra.mxu0 0
    %7393 = vmatprep.subr.bf16.mxu0 0
    %7394 = vmatpush2.bf16.msra.mxu0 0
    %7395 = vmatprep.subr.bf16.mxu0 0
    %7396 = vmatpush2.bf16.msra.mxu0 0
    %7397 = vmatprep.subr.bf16.mxu0 0
    %7398 = vmatpush2.bf16.msra.mxu0 0
    %7399 = vmatprep.subr.bf16.mxu0 0
    %7400 = vmatpush2.bf16.msra.mxu0 0
    %7401 = vmatprep.mubr.bf16.mxu0 0
    %7402 = vmatmul.mubr.bf16.gmra.mxu0 %v7198
    %v7403 = vpop.f32.mrf.mxu0
    %v7404 = vadd.f32 0.0, %v7403
    %v7405 = vpop.f32.mrf.mxu0
    %v7406 = vpop.f32.mrf.mxu0
    %v7407 = vadd.f32 0.0, %v7406
    %v7408 = vpop.f32.mrf.mxu0
    %7409 = vdwg.mxu0
    %v7410 = vld [vmem:[%s21] sm:$0xff]
    %v7411 = vld [vmem:[%s21 + $0x8] sm:$0xff]
    %v7412 = vld [vmem:[%s21 + $0x10] sm:$0xff]
    %v7413 = vld [vmem:[%s21 + $0x18] sm:$0xff]
    %s7414 = scalar_lea.vmem %s21, 32
    %v7415 = vld [vmem:[%s7414] sm:$0xff]
    %v7416 = vld [vmem:[%s7414 + $0x8] sm:$0xff]
    %v7417 = vld [vmem:[%s7414 + $0x10] sm:$0xff]
    %v7418 = vld [vmem:[%s7414 + $0x18] sm:$0xff]
    %v7420 = vsel %vm2756, %v7415, 0
    %v7423 = vsel %vm2756, %v7416, 0
    %v7426 = vsel %vm2756, %v7417, 0
    %v7429 = vsel %vm2756, %v7418, 0
    %7431 = vmatprep.subr.mxu0 0.0
    %7432 = vmatpush1.msra.mxu0 0.0
    %7433 = vmatprep.subr.mxu0 0.0
    %7434 = vmatpush1.msra.mxu0 0.0
    %7435 = vmatprep.subr.mxu0 0.0
    %7436 = vmatpush1.msra.mxu0 0.0
    %7437 = vmatprep.subr.mxu0 0.0
    %7438 = vmatpush1.msra.mxu0 0.0
    %7439 = vmatprep.subr.mxu0 0.0
    %7440 = vmatpush1.msra.mxu0 0.0
    %7441 = vmatprep.subr.mxu0 0.0
    %7442 = vmatpush1.msra.mxu0 0.0
    %7443 = vmatprep.subr.mxu0 0.0
    %7444 = vmatpush1.msra.mxu0 0.0
    %7445 = vmatprep.subr.mxu0 0.0
    %7446 = vmatpush1.msra.mxu0 0.0
    %7447 = vmatprep.subr.mxu0 0.0
    %7448 = vmatpush1.msra.mxu0 0.0
    %7449 = vmatprep.subr.mxu0 0.0
    %7450 = vmatpush1.msra.mxu0 0.0
    %7451 = vmatprep.subr.mxu0 0.0
    %7452 = vmatpush1.msra.mxu0 0.0
    %7453 = vmatprep.subr.mxu0 0.0
    %7454 = vmatpush1.msra.mxu0 0.0
    %7455 = vmatprep.subr.mxu0 0.0
    %7456 = vmatpush1.msra.mxu0 0.0
    %7457 = vmatprep.subr.mxu0 0.0
    %7458 = vmatpush1.msra.mxu0 0.0
    %7459 = vmatprep.subr.mxu0 0.0
    %7460 = vmatpush1.msra.mxu0 %v7407
    %7461 = vmatprep.subr.mxu0 0.0
    %7462 = vmatpush1.msra.mxu0 %v7404
    %7463 = vmatprep.subr.mxu0 0.0
    %7464 = vmatpush2.msra.mxu0 0.0
    %7465 = vmatprep.subr.mxu0 0.0
    %7466 = vmatpush2.msra.mxu0 0.0
    %7467 = vmatprep.subr.mxu0 0.0
    %7468 = vmatpush2.msra.mxu0 0.0
    %7469 = vmatprep.subr.mxu0 0.0
    %7470 = vmatpush2.msra.mxu0 0.0
    %7471 = vmatprep.subr.mxu0 0.0
    %7472 = vmatpush2.msra.mxu0 0.0
    %7473 = vmatprep.subr.mxu0 0.0
    %7474 = vmatpush2.msra.mxu0 0.0
    %7475 = vmatprep.subr.mxu0 0.0
    %7476 = vmatpush2.msra.mxu0 0.0
    %7477 = vmatprep.subr.mxu0 0.0
    %7478 = vmatpush2.msra.mxu0 0.0
    %7479 = vmatprep.subr.mxu0 0.0
    %7480 = vmatpush2.msra.mxu0 0.0
    %7481 = vmatprep.subr.mxu0 0.0
    %7482 = vmatpush2.msra.mxu0 0.0
    %7483 = vmatprep.subr.mxu0 0.0
    %7484 = vmatpush2.msra.mxu0 0.0
    %7485 = vmatprep.subr.mxu0 0.0
    %7486 = vmatpush2.msra.mxu0 0.0
    %7487 = vmatprep.subr.mxu0 0.0
    %7488 = vmatpush2.msra.mxu0 0.0
    %7489 = vmatprep.subr.mxu0 0.0
    %7490 = vmatpush2.msra.mxu0 0.0
    %7491 = vmatprep.subr.mxu0 0.0
    %7492 = vmatpush2.msra.mxu0 0.0
    %7493 = vmatprep.subr.mxu0 0.0
    %7494 = vmatpush2.msra.mxu0 0.0
    %7495 = vmatprep.mubr.f32.mxu0 0.0
    %7496 = vmatmul.mubr.f32.gmra.mxu0 %v7420
    %v7497 = vpop.f32.mrf.mxu0
    %v7498 = vadd.f32 0.0, %v7497
    %v7499 = vpop.f32.mrf.mxu0
    %7500 = vmatprep.mubr.f32.mxu0 0.0
    %7501 = vmatmul.mubr.f32.gmra.mxu0 %v7423
    %v7502 = vpop.f32.mrf.mxu0
    %v7503 = vadd.f32 0.0, %v7502
    %v7504 = vpop.f32.mrf.mxu0
    %7505 = vmatprep.mubr.f32.mxu0 0.0
    %7506 = vmatmul.mubr.f32.gmra.mxu0 %v7426
    %v7507 = vpop.f32.mrf.mxu0
    %v7508 = vadd.f32 0.0, %v7507
    %v7509 = vpop.f32.mrf.mxu0
    %7510 = vmatprep.mubr.f32.mxu0 0.0
    %7511 = vmatmul.mubr.f32.gmra.mxu0 %v7429
    %v7512 = vpop.f32.mrf.mxu0
    %v7513 = vadd.f32 0.0, %v7512
    %v7514 = vpop.f32.mrf.mxu0
    %7515 = vdwg.mxu0
    %v7517 = vsel %vm2756, %v7410, 0
    %v7520 = vsel %vm2756, %v7411, 0
    %v7523 = vsel %vm2756, %v7412, 0
    %v7526 = vsel %vm2756, %v7413, 0
    %7528 = vmatprep.subr.mxu0 0.0
    %7529 = vmatpush1.msra.mxu0 0.0
    %7530 = vmatprep.subr.mxu0 0.0
    %7531 = vmatpush1.msra.mxu0 0.0
    %7532 = vmatprep.subr.mxu0 0.0
    %7533 = vmatpush1.msra.mxu0 0.0
    %7534 = vmatprep.subr.mxu0 0.0
    %7535 = vmatpush1.msra.mxu0 0.0
    %7536 = vmatprep.subr.mxu0 0.0
    %7537 = vmatpush1.msra.mxu0 0.0
    %7538 = vmatprep.subr.mxu0 0.0
    %7539 = vmatpush1.msra.mxu0 0.0
    %7540 = vmatprep.subr.mxu0 0.0
    %7541 = vmatpush1.msra.mxu0 0.0
    %7542 = vmatprep.subr.mxu0 0.0
    %7543 = vmatpush1.msra.mxu0 0.0
    %7544 = vmatprep.subr.mxu0 0.0
    %7545 = vmatpush1.msra.mxu0 0.0
    %7546 = vmatprep.subr.mxu0 0.0
    %7547 = vmatpush1.msra.mxu0 0.0
    %7548 = vmatprep.subr.mxu0 0.0
    %7549 = vmatpush1.msra.mxu0 0.0
    %7550 = vmatprep.subr.mxu0 0.0
    %7551 = vmatpush1.msra.mxu0 0.0
    %7552 = vmatprep.subr.mxu0 0.0
    %7553 = vmatpush1.msra.mxu0 0.0
    %7554 = vmatprep.subr.mxu0 0.0
    %7555 = vmatpush1.msra.mxu0 0.0
    %7556 = vmatprep.subr.mxu0 0.0
    %7557 = vmatpush1.msra.mxu0 %v7301
    %7558 = vmatprep.subr.mxu0 0.0
    %7559 = vmatpush1.msra.mxu0 %v7298
    %7560 = vmatprep.subr.mxu0 0.0
    %7561 = vmatpush2.msra.mxu0 0.0
    %7562 = vmatprep.subr.mxu0 0.0
    %7563 = vmatpush2.msra.mxu0 0.0
    %7564 = vmatprep.subr.mxu0 0.0
    %7565 = vmatpush2.msra.mxu0 0.0
    %7566 = vmatprep.subr.mxu0 0.0
    %7567 = vmatpush2.msra.mxu0 0.0
    %7568 = vmatprep.subr.mxu0 0.0
    %7569 = vmatpush2.msra.mxu0 0.0
    %7570 = vmatprep.subr.mxu0 0.0
    %7571 = vmatpush2.msra.mxu0 0.0
    %7572 = vmatprep.subr.mxu0 0.0
    %7573 = vmatpush2.msra.mxu0 0.0
    %7574 = vmatprep.subr.mxu0 0.0
    %7575 = vmatpush2.msra.mxu0 0.0
    %7576 = vmatprep.subr.mxu0 0.0
    %7577 = vmatpush2.msra.mxu0 0.0
    %7578 = vmatprep.subr.mxu0 0.0
    %7579 = vmatpush2.msra.mxu0 0.0
    %7580 = vmatprep.subr.mxu0 0.0
    %7581 = vmatpush2.msra.mxu0 0.0
    %7582 = vmatprep.subr.mxu0 0.0
    %7583 = vmatpush2.msra.mxu0 0.0
    %7584 = vmatprep.subr.mxu0 0.0
    %7585 = vmatpush2.msra.mxu0 0.0
    %7586 = vmatprep.subr.mxu0 0.0
    %7587 = vmatpush2.msra.mxu0 0.0
    %7588 = vmatprep.subr.mxu0 0.0
    %7589 = vmatpush2.msra.mxu0 0.0
    %7590 = vmatprep.subr.mxu0 0.0
    %7591 = vmatpush2.msra.mxu0 0.0
    %7592 = vmatprep.mubr.f32.mxu0 0.0
    %7593 = vmatmul.mubr.f32.gmra.mxu0 %v7517
    %v7594 = vpop.f32.mrf.mxu0
    %v7595 = vadd.f32 %v7498, %v7594
    %v7596 = vpop.f32.mrf.mxu0
    %7597 = vmatprep.mubr.f32.mxu0 0.0
    %7598 = vmatmul.mubr.f32.gmra.mxu0 %v7520
    %v7599 = vpop.f32.mrf.mxu0
    %v7600 = vadd.f32 %v7503, %v7599
    %v7601 = vpop.f32.mrf.mxu0
    %7602 = vmatprep.mubr.f32.mxu0 0.0
    %7603 = vmatmul.mubr.f32.gmra.mxu0 %v7523
    %v7604 = vpop.f32.mrf.mxu0
    %v7605 = vadd.f32 %v7508, %v7604
    %v7606 = vpop.f32.mrf.mxu0
    %7607 = vmatprep.mubr.f32.mxu0 0.0
    %7608 = vmatmul.mubr.f32.gmra.mxu0 %v7526
    %v7609 = vpop.f32.mrf.mxu0
    %v7610 = vadd.f32 %v7513, %v7609
    %v7611 = vpop.f32.mrf.mxu0
    %7612 = vdwg.mxu0
    %v7613 = vld [vmem:[%s95] sm:$0x1]
    %v7615 = vlaneseq
    %v7616 = vshrl.u32 %v7615, 7
    %v7617 = vsub.s32 0, %v7616
    %v7618 = vrot.slane %v7613, %v7617
    %v7620 = vadd.f32 %v7595, %v7618
    %v7621 = vadd.f32 %v7600, %v7618
    %v7622 = vadd.f32 %v7605, %v7618
    %v7623 = vadd.f32 %v7610, %v7618
    %v7624 = vpack.c.bf16 %v7621, %v7620
    %v7625 = vpack.c.bf16 %v7623, %v7622
    %7626 = vmatprep.subr.bf16.mxu0 0
    %7627 = vmatpush1.bf16.msra.mxu0 0
    %7628 = vmatprep.subr.bf16.mxu0 0
    %7629 = vmatpush1.bf16.msra.mxu0 0
    %7630 = vmatprep.subr.bf16.mxu0 0
    %7631 = vmatpush1.bf16.msra.mxu0 0
    %7632 = vmatprep.subr.bf16.mxu0 0
    %7633 = vmatpush1.bf16.msra.mxu0 0
    %7634 = vmatprep.subr.bf16.mxu0 0
    %7635 = vmatpush1.bf16.msra.mxu0 0
    %7636 = vmatprep.subr.bf16.mxu0 0
    %7637 = vmatpush1.bf16.msra.mxu0 0
    %7638 = vmatprep.subr.bf16.mxu0 0
    %7639 = vmatpush1.bf16.msra.mxu0 %v7625
    %7640 = vmatprep.subr.bf16.mxu0 0
    %7641 = vmatpush1.bf16.msra.mxu0 %v7624
    %7642 = vmatprep.subr.bf16.mxu0 0
    %7643 = vmatpush2.bf16.msra.mxu0 0
    %7644 = vmatprep.subr.bf16.mxu0 0
    %7645 = vmatpush2.bf16.msra.mxu0 0
    %7646 = vmatprep.subr.bf16.mxu0 0
    %7647 = vmatpush2.bf16.msra.mxu0 0
    %7648 = vmatprep.subr.bf16.mxu0 0
    %7649 = vmatpush2.bf16.msra.mxu0 0
    %7650 = vmatprep.subr.bf16.mxu0 0
    %7651 = vmatpush2.bf16.msra.mxu0 0
    %7652 = vmatprep.subr.bf16.mxu0 0
    %7653 = vmatpush2.bf16.msra.mxu0 0
    %7654 = vmatprep.subr.bf16.mxu0 0
    %7655 = vmatpush2.bf16.msra.mxu0 0
    %7656 = vmatprep.subr.bf16.mxu0 0
    %7657 = vmatpush2.bf16.msra.mxu0 0
    %7658 = vmatprep.mubr.bf16.mxu0 0
    %7659 = vmatmul.mubr.bf16.gmra.mxu0 %v588
    %v7660 = vpop.f32.mrf.mxu0
    %v7661 = vadd.f32 0.0, %v7660
    %v7662 = vpop.f32.mrf.mxu0
    %v7663 = vpop.f32.mrf.mxu0
    %v7664 = vadd.f32 0.0, %v7663
    %v7665 = vpop.f32.mrf.mxu0
    %7666 = vmatprep.mubr.bf16.mxu0 0
    %7667 = vmatmul.mubr.bf16.gmra.mxu0 %v591
    %v7668 = vpop.f32.mrf.mxu0
    %v7669 = vadd.f32 0.0, %v7668
    %v7670 = vpop.f32.mrf.mxu0
    %v7671 = vpop.f32.mrf.mxu0
    %v7672 = vadd.f32 0.0, %v7671
    %v7673 = vpop.f32.mrf.mxu0
    %7674 = vdwg.mxu0
    %v7675 = vpack.c.bf16 %v7664, %v7661
    %v7676 = vpack.c.bf16 %v7672, %v7669
    %v7677 = vld [vmem:[#allocation34] sm:$0xf]
    %v7678 = vld [vmem:[#allocation34 + $0x4] sm:$0xf]
    %v7679 = vld [vmem:[#allocation34 + $0x8] sm:$0xf]
    %v7680 = vld [vmem:[#allocation34 + $0xc] sm:$0xf]
    %v7681 = vld [vmem:[#allocation34 + $0x10] sm:$0xf]
    %v7682 = vld [vmem:[#allocation34 + $0x14] sm:$0xf]
    %v7683 = vld [vmem:[#allocation34 + $0x18] sm:$0xf]
    %v7684 = vld [vmem:[#allocation34 + $0x1c] sm:$0xf]
    %v7685 = vld [vmem:[#allocation34 + $0x20] sm:$0xf]
    %v7686 = vld [vmem:[#allocation34 + $0x24] sm:$0xf]
    %v7687 = vld [vmem:[#allocation34 + $0x28] sm:$0xf]
    %v7688 = vld [vmem:[#allocation34 + $0x2c] sm:$0xf]
    %v7689 = vld [vmem:[#allocation34 + $0x30] sm:$0xf]
    %v7690 = vld [vmem:[#allocation34 + $0x34] sm:$0xf]
    %v7691 = vld [vmem:[#allocation34 + $0x38] sm:$0xf]
    %v7692 = vld [vmem:[#allocation34 + $0x3c] sm:$0xf]
    %7693 = vmatprep.subr.bf16.mxu0 0
    %7694 = vmatpush1.bf16.msra.mxu0 0
    %7695 = vmatprep.subr.bf16.mxu0 0
    %7696 = vmatpush1.bf16.msra.mxu0 0
    %7697 = vmatprep.subr.bf16.mxu0 0
    %7698 = vmatpush1.bf16.msra.mxu0 0
    %7699 = vmatprep.subr.bf16.mxu0 0
    %7700 = vmatpush1.bf16.msra.mxu0 0
    %7701 = vmatprep.subr.bf16.mxu0 0
    %7702 = vmatpush1.bf16.msra.mxu0 0
    %7703 = vmatprep.subr.bf16.mxu0 0
    %7704 = vmatpush1.bf16.msra.mxu0 0
    %7705 = vmatprep.subr.bf16.mxu0 0
    %7706 = vmatpush1.bf16.msra.mxu0 %v2267
    %7707 = vmatprep.subr.bf16.mxu0 0
    %7708 = vmatpush1.bf16.msra.mxu0 %v2266
    %7709 = vmatprep.subr.bf16.mxu0 0
    %7710 = vmatpush2.bf16.msra.mxu0 0
    %7711 = vmatprep.subr.bf16.mxu0 0
    %7712 = vmatpush2.bf16.msra.mxu0 0
    %7713 = vmatprep.subr.bf16.mxu0 0
    %7714 = vmatpush2.bf16.msra.mxu0 0
    %7715 = vmatprep.subr.bf16.mxu0 0
    %7716 = vmatpush2.bf16.msra.mxu0 0
    %7717 = vmatprep.subr.bf16.mxu0 0
    %7718 = vmatpush2.bf16.msra.mxu0 0
    %7719 = vmatprep.subr.bf16.mxu0 0
    %7720 = vmatpush2.bf16.msra.mxu0 0
    %7721 = vmatprep.subr.bf16.mxu0 0
    %7722 = vmatpush2.bf16.msra.mxu0 0
    %7723 = vmatprep.subr.bf16.mxu0 0
    %7724 = vmatpush2.bf16.msra.mxu0 0
    %7725 = vmatprep.mubr.bf16.mxu0 0
    %7726 = vmatmul.mubr.bf16.gmra.mxu0 %v588
    %v7727 = vpop.f32.mrf.mxu0
    %v7728 = vadd.f32 0.0, %v7727
    %v7729 = vpop.f32.mrf.mxu0
    %v7730 = vpop.f32.mrf.mxu0
    %v7731 = vadd.f32 0.0, %v7730
    %v7732 = vpop.f32.mrf.mxu0
    %7733 = vmatprep.mubr.bf16.mxu0 0
    %7734 = vmatmul.mubr.bf16.gmra.mxu0 %v591
    %v7735 = vpop.f32.mrf.mxu0
    %v7736 = vadd.f32 0.0, %v7735
    %v7737 = vpop.f32.mrf.mxu0
    %v7738 = vpop.f32.mrf.mxu0
    %v7739 = vadd.f32 0.0, %v7738
    %v7740 = vpop.f32.mrf.mxu0
    %7741 = vdwg.mxu0
    %v7742 = vpack.c.bf16 %v7731, %v7728
    %v7743 = vpack.c.bf16 %v7739, %v7736
    %v7744 = vld [vmem:[#allocation36] sm:$0xf]
    %v7745 = vld [vmem:[#allocation36 + $0x4] sm:$0xf]
    %v7746 = vld [vmem:[#allocation36 + $0x8] sm:$0xf]
    %v7747 = vld [vmem:[#allocation36 + $0xc] sm:$0xf]
    %v7748 = vld [vmem:[#allocation36 + $0x10] sm:$0xf]
    %v7749 = vld [vmem:[#allocation36 + $0x14] sm:$0xf]
    %v7750 = vld [vmem:[#allocation36 + $0x18] sm:$0xf]
    %v7751 = vld [vmem:[#allocation36 + $0x1c] sm:$0xf]
    %v7752 = vld [vmem:[#allocation36 + $0x20] sm:$0xf]
    %v7753 = vld [vmem:[#allocation36 + $0x24] sm:$0xf]
    %v7754 = vld [vmem:[#allocation36 + $0x28] sm:$0xf]
    %v7755 = vld [vmem:[#allocation36 + $0x2c] sm:$0xf]
    %v7756 = vld [vmem:[#allocation36 + $0x30] sm:$0xf]
    %v7757 = vld [vmem:[#allocation36 + $0x34] sm:$0xf]
    %v7758 = vld [vmem:[#allocation36 + $0x38] sm:$0xf]
    %v7759 = vld [vmem:[#allocation36 + $0x3c] sm:$0xf]
    %v7776 = vunpack.c.l.b16 %v7744
    %v7777 = vunpack.c.l.b16 %v7745
    %v7778 = vunpack.c.l.b16 %v7746
    %v7779 = vunpack.c.l.b16 %v7747
    %v7780 = vunpack.c.l.b16 %v7748
    %v7781 = vunpack.c.l.b16 %v7749
    %v7782 = vunpack.c.l.b16 %v7750
    %v7783 = vunpack.c.l.b16 %v7751
    %v7784 = vunpack.c.l.b16 %v7752
    %v7785 = vunpack.c.l.b16 %v7753
    %v7786 = vunpack.c.l.b16 %v7754
    %v7787 = vunpack.c.l.b16 %v7755
    %v7788 = vunpack.c.l.b16 %v7756
    %v7789 = vunpack.c.l.b16 %v7757
    %v7790 = vunpack.c.l.b16 %v7758
    %v7791 = vunpack.c.l.b16 %v7759
    %v7792 = vpack.c.b16 %v7777, %v7776
    %v7793 = vpack.c.b16 %v7779, %v7778
    %v7794 = vpack.c.b16 %v7781, %v7780
    %v7795 = vpack.c.b16 %v7783, %v7782
    %v7796 = vpack.c.b16 %v7785, %v7784
    %v7797 = vpack.c.b16 %v7787, %v7786
    %v7798 = vpack.c.b16 %v7789, %v7788
    %v7799 = vpack.c.b16 %v7791, %v7790
    %7808 = vmatprep.subr.bf16.mxu0 0
    %7809 = vmatpush1.bf16.msra.mxu0 %v7799
    %7810 = vmatprep.subr.bf16.mxu0 0
    %7811 = vmatpush1.bf16.msra.mxu0 %v7798
    %7812 = vmatprep.subr.bf16.mxu0 0
    %7813 = vmatpush1.bf16.msra.mxu0 %v7797
    %7814 = vmatprep.subr.bf16.mxu0 0
    %7815 = vmatpush1.bf16.msra.mxu0 %v7796
    %7816 = vmatprep.subr.bf16.mxu0 0
    %7817 = vmatpush1.bf16.msra.mxu0 %v7795
    %7818 = vmatprep.subr.bf16.mxu0 0
    %7819 = vmatpush1.bf16.msra.mxu0 %v7794
    %7820 = vmatprep.subr.bf16.mxu0 0
    %7821 = vmatpush1.bf16.msra.mxu0 %v7793
    %7822 = vmatprep.subr.bf16.mxu0 0
    %7823 = vmatpush1.bf16.msra.mxu0 %v7792
    %7824 = vmatprep.subr.bf16.mxu0 0
    %7825 = vmatpush2.bf16.msra.mxu0 0
    %7826 = vmatprep.subr.bf16.mxu0 0
    %7827 = vmatpush2.bf16.msra.mxu0 0
    %7828 = vmatprep.subr.bf16.mxu0 0
    %7829 = vmatpush2.bf16.msra.mxu0 0
    %7830 = vmatprep.subr.bf16.mxu0 0
    %7831 = vmatpush2.bf16.msra.mxu0 0
    %7832 = vmatprep.subr.bf16.mxu0 0
    %7833 = vmatpush2.bf16.msra.mxu0 0
    %7834 = vmatprep.subr.bf16.mxu0 0
    %7835 = vmatpush2.bf16.msra.mxu0 0
    %7836 = vmatprep.subr.bf16.mxu0 0
    %7837 = vmatpush2.bf16.msra.mxu0 0
    %7838 = vmatprep.subr.bf16.mxu0 0
    %7839 = vmatpush2.bf16.msra.mxu0 0
    %7840 = vmatprep.mubr.bf16.mxu0 0
    %7841 = vmatmul.mubr.bf16.gmra.mxu0 %v7742
    %v7842 = vpop.f32.mrf.mxu0
    %v7843 = vadd.f32 0.0, %v7842
    %v7844 = vpop.f32.mrf.mxu0
    %v7845 = vpop.f32.mrf.mxu0
    %v7846 = vadd.f32 0.0, %v7845
    %v7847 = vpop.f32.mrf.mxu0
    %7848 = vmatprep.mubr.bf16.mxu0 0
    %7849 = vmatmul.mubr.bf16.gmra.mxu0 %v7743
    %v7850 = vpop.f32.mrf.mxu0
    %v7851 = vadd.f32 0.0, %v7850
    %v7852 = vpop.f32.mrf.mxu0
    %v7853 = vpop.f32.mrf.mxu0
    %v7854 = vadd.f32 0.0, %v7853
    %v7855 = vpop.f32.mrf.mxu0
    %7856 = vdwg.mxu0
    %v7873 = vunpack.c.l.b16 %v7677
    %v7874 = vunpack.c.l.b16 %v7678
    %v7875 = vunpack.c.l.b16 %v7679
    %v7876 = vunpack.c.l.b16 %v7680
    %v7877 = vunpack.c.l.b16 %v7681
    %v7878 = vunpack.c.l.b16 %v7682
    %v7879 = vunpack.c.l.b16 %v7683
    %v7880 = vunpack.c.l.b16 %v7684
    %v7881 = vunpack.c.l.b16 %v7685
    %v7882 = vunpack.c.l.b16 %v7686
    %v7883 = vunpack.c.l.b16 %v7687
    %v7884 = vunpack.c.l.b16 %v7688
    %v7885 = vunpack.c.l.b16 %v7689
    %v7886 = vunpack.c.l.b16 %v7690
    %v7887 = vunpack.c.l.b16 %v7691
    %v7888 = vunpack.c.l.b16 %v7692
    %v7889 = vpack.c.b16 %v7874, %v7873
    %v7890 = vpack.c.b16 %v7876, %v7875
    %v7891 = vpack.c.b16 %v7878, %v7877
    %v7892 = vpack.c.b16 %v7880, %v7879
    %v7893 = vpack.c.b16 %v7882, %v7881
    %v7894 = vpack.c.b16 %v7884, %v7883
    %v7895 = vpack.c.b16 %v7886, %v7885
    %v7896 = vpack.c.b16 %v7888, %v7887
    %7905 = vmatprep.subr.bf16.mxu0 0
    %7906 = vmatpush1.bf16.msra.mxu0 %v7896
    %7907 = vmatprep.subr.bf16.mxu0 0
    %7908 = vmatpush1.bf16.msra.mxu0 %v7895
    %7909 = vmatprep.subr.bf16.mxu0 0
    %7910 = vmatpush1.bf16.msra.mxu0 %v7894
    %7911 = vmatprep.subr.bf16.mxu0 0
    %7912 = vmatpush1.bf16.msra.mxu0 %v7893
    %7913 = vmatprep.subr.bf16.mxu0 0
    %7914 = vmatpush1.bf16.msra.mxu0 %v7892
    %7915 = vmatprep.subr.bf16.mxu0 0
    %7916 = vmatpush1.bf16.msra.mxu0 %v7891
    %7917 = vmatprep.subr.bf16.mxu0 0
    %7918 = vmatpush1.bf16.msra.mxu0 %v7890
    %7919 = vmatprep.subr.bf16.mxu0 0
    %7920 = vmatpush1.bf16.msra.mxu0 %v7889
    %7921 = vmatprep.subr.bf16.mxu0 0
    %7922 = vmatpush2.bf16.msra.mxu0 0
    %7923 = vmatprep.subr.bf16.mxu0 0
    %7924 = vmatpush2.bf16.msra.mxu0 0
    %7925 = vmatprep.subr.bf16.mxu0 0
    %7926 = vmatpush2.bf16.msra.mxu0 0
    %7927 = vmatprep.subr.bf16.mxu0 0
    %7928 = vmatpush2.bf16.msra.mxu0 0
    %7929 = vmatprep.subr.bf16.mxu0 0
    %7930 = vmatpush2.bf16.msra.mxu0 0
    %7931 = vmatprep.subr.bf16.mxu0 0
    %7932 = vmatpush2.bf16.msra.mxu0 0
    %7933 = vmatprep.subr.bf16.mxu0 0
    %7934 = vmatpush2.bf16.msra.mxu0 0
    %7935 = vmatprep.subr.bf16.mxu0 0
    %7936 = vmatpush2.bf16.msra.mxu0 0
    %7937 = vmatprep.mubr.bf16.mxu0 0
    %7938 = vmatmul.mubr.bf16.gmra.mxu0 %v7675
    %v7939 = vpop.f32.mrf.mxu0
    %v7940 = vadd.f32 %v7843, %v7939
    %v7941 = vpop.f32.mrf.mxu0
    %v7942 = vpop.f32.mrf.mxu0
    %v7943 = vadd.f32 %v7846, %v7942
    %v7944 = vpop.f32.mrf.mxu0
    %7945 = vmatprep.mubr.bf16.mxu0 0
    %7946 = vmatmul.mubr.bf16.gmra.mxu0 %v7676
    %v7947 = vpop.f32.mrf.mxu0
    %v7948 = vadd.f32 %v7851, %v7947
    %v7949 = vpop.f32.mrf.mxu0
    %v7950 = vpop.f32.mrf.mxu0
    %v7951 = vadd.f32 %v7854, %v7950
    %v7952 = vpop.f32.mrf.mxu0
    %7953 = vdwg.mxu0
    %7954 = vmatprep.subr.bf16.mxu0 0
    %7955 = vmatpush1.bf16.msra.mxu0 0
    %7956 = vmatprep.subr.bf16.mxu0 0
    %7957 = vmatpush1.bf16.msra.mxu0 0
    %7958 = vmatprep.subr.bf16.mxu0 0
    %7959 = vmatpush1.bf16.msra.mxu0 0
    %7960 = vmatprep.subr.bf16.mxu0 0
    %7961 = vmatpush1.bf16.msra.mxu0 0
    %7962 = vmatprep.subr.bf16.mxu0 0
    %7963 = vmatpush1.bf16.msra.mxu0 0
    %7964 = vmatprep.subr.bf16.mxu0 0
    %7965 = vmatpush1.bf16.msra.mxu0 0
    %7966 = vmatprep.subr.bf16.mxu0 0
    %7967 = vmatpush1.bf16.msra.mxu0 %v7625
    %7968 = vmatprep.subr.bf16.mxu0 0
    %7969 = vmatpush1.bf16.msra.mxu0 %v7624
    %7970 = vmatprep.subr.bf16.mxu0 0
    %7971 = vmatpush2.bf16.msra.mxu0 0
    %7972 = vmatprep.subr.bf16.mxu0 0
    %7973 = vmatpush2.bf16.msra.mxu0 0
    %7974 = vmatprep.subr.bf16.mxu0 0
    %7975 = vmatpush2.bf16.msra.mxu0 0
    %7976 = vmatprep.subr.bf16.mxu0 0
    %7977 = vmatpush2.bf16.msra.mxu0 0
    %7978 = vmatprep.subr.bf16.mxu0 0
    %7979 = vmatpush2.bf16.msra.mxu0 0
    %7980 = vmatprep.subr.bf16.mxu0 0
    %7981 = vmatpush2.bf16.msra.mxu0 0
    %7982 = vmatprep.subr.bf16.mxu0 0
    %7983 = vmatpush2.bf16.msra.mxu0 0
    %7984 = vmatprep.subr.bf16.mxu0 0
    %7985 = vmatpush2.bf16.msra.mxu0 0
    %7986 = vmatprep.mubr.bf16.mxu0 0
    %7987 = vmatmul.mubr.bf16.gmra.mxu0 %v668
    %v7988 = vpop.f32.mrf.mxu0
    %v7989 = vadd.f32 0.0, %v7988
    %v7990 = vpop.f32.mrf.mxu0
    %v7991 = vpop.f32.mrf.mxu0
    %v7992 = vadd.f32 0.0, %v7991
    %v7993 = vpop.f32.mrf.mxu0
    %7994 = vmatprep.mubr.bf16.mxu0 0
    %7995 = vmatmul.mubr.bf16.gmra.mxu0 %v671
    %v7996 = vpop.f32.mrf.mxu0
    %v7997 = vadd.f32 0.0, %v7996
    %v7998 = vpop.f32.mrf.mxu0
    %v7999 = vpop.f32.mrf.mxu0
    %v8000 = vadd.f32 0.0, %v7999
    %v8001 = vpop.f32.mrf.mxu0
    %8002 = vdwg.mxu0
    %v8003 = vpack.c.bf16 %v7992, %v7989
    %v8004 = vpack.c.bf16 %v8000, %v7997
    %s8005 = scalar_lea.vmem [#allocation34], 64
    %v8006 = vld [vmem:[%s8005] sm:$0xf]
    %v8007 = vld [vmem:[%s8005 + $0x4] sm:$0xf]
    %v8008 = vld [vmem:[%s8005 + $0x8] sm:$0xf]
    %v8009 = vld [vmem:[%s8005 + $0xc] sm:$0xf]
    %v8010 = vld [vmem:[%s8005 + $0x10] sm:$0xf]
    %v8011 = vld [vmem:[%s8005 + $0x14] sm:$0xf]
    %v8012 = vld [vmem:[%s8005 + $0x18] sm:$0xf]
    %v8013 = vld [vmem:[%s8005 + $0x1c] sm:$0xf]
    %v8014 = vld [vmem:[%s8005 + $0x20] sm:$0xf]
    %v8015 = vld [vmem:[%s8005 + $0x24] sm:$0xf]
    %v8016 = vld [vmem:[%s8005 + $0x28] sm:$0xf]
    %v8017 = vld [vmem:[%s8005 + $0x2c] sm:$0xf]
    %v8018 = vld [vmem:[%s8005 + $0x30] sm:$0xf]
    %v8019 = vld [vmem:[%s8005 + $0x34] sm:$0xf]
    %v8020 = vld [vmem:[%s8005 + $0x38] sm:$0xf]
    %v8021 = vld [vmem:[%s8005 + $0x3c] sm:$0xf]
    %v8038 = vunpack.c.l.b16 %v8006
    %v8039 = vunpack.c.l.b16 %v8007
    %v8040 = vunpack.c.l.b16 %v8008
    %v8041 = vunpack.c.l.b16 %v8009
    %v8042 = vunpack.c.l.b16 %v8010
    %v8043 = vunpack.c.l.b16 %v8011
    %v8044 = vunpack.c.l.b16 %v8012
    %v8045 = vunpack.c.l.b16 %v8013
    %v8046 = vunpack.c.l.b16 %v8014
    %v8047 = vunpack.c.l.b16 %v8015
    %v8048 = vunpack.c.l.b16 %v8016
    %v8049 = vunpack.c.l.b16 %v8017
    %v8050 = vunpack.c.l.b16 %v8018
    %v8051 = vunpack.c.l.b16 %v8019
    %v8052 = vunpack.c.l.b16 %v8020
    %v8053 = vunpack.c.l.b16 %v8021
    %v8054 = vpack.c.b16 %v8039, %v8038
    %v8055 = vpack.c.b16 %v8041, %v8040
    %v8056 = vpack.c.b16 %v8043, %v8042
    %v8057 = vpack.c.b16 %v8045, %v8044
    %v8058 = vpack.c.b16 %v8047, %v8046
    %v8059 = vpack.c.b16 %v8049, %v8048
    %v8060 = vpack.c.b16 %v8051, %v8050
    %v8061 = vpack.c.b16 %v8053, %v8052
    %8070 = vmatprep.subr.bf16.mxu0 0
    %8071 = vmatpush1.bf16.msra.mxu0 %v8061
    %8072 = vmatprep.subr.bf16.mxu0 0
    %8073 = vmatpush1.bf16.msra.mxu0 %v8060
    %8074 = vmatprep.subr.bf16.mxu0 0
    %8075 = vmatpush1.bf16.msra.mxu0 %v8059
    %8076 = vmatprep.subr.bf16.mxu0 0
    %8077 = vmatpush1.bf16.msra.mxu0 %v8058
    %8078 = vmatprep.subr.bf16.mxu0 0
    %8079 = vmatpush1.bf16.msra.mxu0 %v8057
    %8080 = vmatprep.subr.bf16.mxu0 0
    %8081 = vmatpush1.bf16.msra.mxu0 %v8056
    %8082 = vmatprep.subr.bf16.mxu0 0
    %8083 = vmatpush1.bf16.msra.mxu0 %v8055
    %8084 = vmatprep.subr.bf16.mxu0 0
    %8085 = vmatpush1.bf16.msra.mxu0 %v8054
    %8086 = vmatprep.subr.bf16.mxu0 0
    %8087 = vmatpush2.bf16.msra.mxu0 0
    %8088 = vmatprep.subr.bf16.mxu0 0
    %8089 = vmatpush2.bf16.msra.mxu0 0
    %8090 = vmatprep.subr.bf16.mxu0 0
    %8091 = vmatpush2.bf16.msra.mxu0 0
    %8092 = vmatprep.subr.bf16.mxu0 0
    %8093 = vmatpush2.bf16.msra.mxu0 0
    %8094 = vmatprep.subr.bf16.mxu0 0
    %8095 = vmatpush2.bf16.msra.mxu0 0
    %8096 = vmatprep.subr.bf16.mxu0 0
    %8097 = vmatpush2.bf16.msra.mxu0 0
    %8098 = vmatprep.subr.bf16.mxu0 0
    %8099 = vmatpush2.bf16.msra.mxu0 0
    %8100 = vmatprep.subr.bf16.mxu0 0
    %8101 = vmatpush2.bf16.msra.mxu0 0
    %8102 = vmatprep.mubr.bf16.mxu0 0
    %8103 = vmatmul.mubr.bf16.gmra.mxu0 %v8003
    %v8104 = vpop.f32.mrf.mxu0
    %v8105 = vadd.f32 0.0, %v8104
    %v8106 = vpop.f32.mrf.mxu0
    %v8107 = vpop.f32.mrf.mxu0
    %v8108 = vadd.f32 0.0, %v8107
    %v8109 = vpop.f32.mrf.mxu0
    %8110 = vmatprep.mubr.bf16.mxu0 0
    %8111 = vmatmul.mubr.bf16.gmra.mxu0 %v8004
    %v8112 = vpop.f32.mrf.mxu0
    %v8113 = vadd.f32 0.0, %v8112
    %v8114 = vpop.f32.mrf.mxu0
    %v8115 = vpop.f32.mrf.mxu0
    %v8116 = vadd.f32 0.0, %v8115
    %v8117 = vpop.f32.mrf.mxu0
    %8118 = vdwg.mxu0
    %v8119 = vadd.f32 %v7940, %v8105
    %v8120 = vadd.f32 %v7943, %v8108
    %v8121 = vadd.f32 %v7948, %v8113
    %v8122 = vadd.f32 %v7951, %v8116
    %8123 = vmatprep.subr.bf16.mxu0 0
    %8124 = vmatpush1.bf16.msra.mxu0 0
    %8125 = vmatprep.subr.bf16.mxu0 0
    %8126 = vmatpush1.bf16.msra.mxu0 0
    %8127 = vmatprep.subr.bf16.mxu0 0
    %8128 = vmatpush1.bf16.msra.mxu0 0
    %8129 = vmatprep.subr.bf16.mxu0 0
    %8130 = vmatpush1.bf16.msra.mxu0 0
    %8131 = vmatprep.subr.bf16.mxu0 0
    %8132 = vmatpush1.bf16.msra.mxu0 0
    %8133 = vmatprep.subr.bf16.mxu0 0
    %8134 = vmatpush1.bf16.msra.mxu0 0
    %8135 = vmatprep.subr.bf16.mxu0 0
    %8136 = vmatpush1.bf16.msra.mxu0 %v2267
    %8137 = vmatprep.subr.bf16.mxu0 0
    %8138 = vmatpush1.bf16.msra.mxu0 %v2266
    %8139 = vmatprep.subr.bf16.mxu0 0
    %8140 = vmatpush2.bf16.msra.mxu0 0
    %8141 = vmatprep.subr.bf16.mxu0 0
    %8142 = vmatpush2.bf16.msra.mxu0 0
    %8143 = vmatprep.subr.bf16.mxu0 0
    %8144 = vmatpush2.bf16.msra.mxu0 0
    %8145 = vmatprep.subr.bf16.mxu0 0
    %8146 = vmatpush2.bf16.msra.mxu0 0
    %8147 = vmatprep.subr.bf16.mxu0 0
    %8148 = vmatpush2.bf16.msra.mxu0 0
    %8149 = vmatprep.subr.bf16.mxu0 0
    %8150 = vmatpush2.bf16.msra.mxu0 0
    %8151 = vmatprep.subr.bf16.mxu0 0
    %8152 = vmatpush2.bf16.msra.mxu0 0
    %8153 = vmatprep.subr.bf16.mxu0 0
    %8154 = vmatpush2.bf16.msra.mxu0 0
    %8155 = vmatprep.mubr.bf16.mxu0 0
    %8156 = vmatmul.mubr.bf16.gmra.mxu0 %v668
    %v8157 = vpop.f32.mrf.mxu0
    %v8158 = vadd.f32 0.0, %v8157
    %v8159 = vpop.f32.mrf.mxu0
    %v8160 = vpop.f32.mrf.mxu0
    %v8161 = vadd.f32 0.0, %v8160
    %v8162 = vpop.f32.mrf.mxu0
    %8163 = vmatprep.mubr.bf16.mxu0 0
    %8164 = vmatmul.mubr.bf16.gmra.mxu0 %v671
    %v8165 = vpop.f32.mrf.mxu0
    %v8166 = vadd.f32 0.0, %v8165
    %v8167 = vpop.f32.mrf.mxu0
    %v8168 = vpop.f32.mrf.mxu0
    %v8169 = vadd.f32 0.0, %v8168
    %v8170 = vpop.f32.mrf.mxu0
    %8171 = vdwg.mxu0
    %v8172 = vpack.c.bf16 %v8161, %v8158
    %v8173 = vpack.c.bf16 %v8169, %v8166
    %s8174 = scalar_lea.vmem [#allocation36], 64
    %v8175 = vld [vmem:[%s8174] sm:$0xf]
    %v8176 = vld [vmem:[%s8174 + $0x4] sm:$0xf]
    %v8177 = vld [vmem:[%s8174 + $0x8] sm:$0xf]
    %v8178 = vld [vmem:[%s8174 + $0xc] sm:$0xf]
    %v8179 = vld [vmem:[%s8174 + $0x10] sm:$0xf]
    %v8180 = vld [vmem:[%s8174 + $0x14] sm:$0xf]
    %v8181 = vld [vmem:[%s8174 + $0x18] sm:$0xf]
    %v8182 = vld [vmem:[%s8174 + $0x1c] sm:$0xf]
    %v8183 = vld [vmem:[%s8174 + $0x20] sm:$0xf]
    %v8184 = vld [vmem:[%s8174 + $0x24] sm:$0xf]
    %v8185 = vld [vmem:[%s8174 + $0x28] sm:$0xf]
    %v8186 = vld [vmem:[%s8174 + $0x2c] sm:$0xf]
    %v8187 = vld [vmem:[%s8174 + $0x30] sm:$0xf]
    %v8188 = vld [vmem:[%s8174 + $0x34] sm:$0xf]
    %v8189 = vld [vmem:[%s8174 + $0x38] sm:$0xf]
    %v8190 = vld [vmem:[%s8174 + $0x3c] sm:$0xf]
    %v8207 = vunpack.c.l.b16 %v8175
    %v8208 = vunpack.c.l.b16 %v8176
    %v8209 = vunpack.c.l.b16 %v8177
    %v8210 = vunpack.c.l.b16 %v8178
    %v8211 = vunpack.c.l.b16 %v8179
    %v8212 = vunpack.c.l.b16 %v8180
    %v8213 = vunpack.c.l.b16 %v8181
    %v8214 = vunpack.c.l.b16 %v8182
    %v8215 = vunpack.c.l.b16 %v8183
    %v8216 = vunpack.c.l.b16 %v8184
    %v8217 = vunpack.c.l.b16 %v8185
    %v8218 = vunpack.c.l.b16 %v8186
    %v8219 = vunpack.c.l.b16 %v8187
    %v8220 = vunpack.c.l.b16 %v8188
    %v8221 = vunpack.c.l.b16 %v8189
    %v8222 = vunpack.c.l.b16 %v8190
    %v8223 = vpack.c.b16 %v8208, %v8207
    %v8224 = vpack.c.b16 %v8210, %v8209
    %v8225 = vpack.c.b16 %v8212, %v8211
    %v8226 = vpack.c.b16 %v8214, %v8213
    %v8227 = vpack.c.b16 %v8216, %v8215
    %v8228 = vpack.c.b16 %v8218, %v8217
    %v8229 = vpack.c.b16 %v8220, %v8219
    %v8230 = vpack.c.b16 %v8222, %v8221
    %8239 = vmatprep.subr.bf16.mxu0 0
    %8240 = vmatpush1.bf16.msra.mxu0 %v8230
    %8241 = vmatprep.subr.bf16.mxu0 0
    %8242 = vmatpush1.bf16.msra.mxu0 %v8229
    %8243 = vmatprep.subr.bf16.mxu0 0
    %8244 = vmatpush1.bf16.msra.mxu0 %v8228
    %8245 = vmatprep.subr.bf16.mxu0 0
    %8246 = vmatpush1.bf16.msra.mxu0 %v8227
    %8247 = vmatprep.subr.bf16.mxu0 0
    %8248 = vmatpush1.bf16.msra.mxu0 %v8226
    %8249 = vmatprep.subr.bf16.mxu0 0
    %8250 = vmatpush1.bf16.msra.mxu0 %v8225
    %8251 = vmatprep.subr.bf16.mxu0 0
    %8252 = vmatpush1.bf16.msra.mxu0 %v8224
    %8253 = vmatprep.subr.bf16.mxu0 0
    %8254 = vmatpush1.bf16.msra.mxu0 %v8223
    %8255 = vmatprep.subr.bf16.mxu0 0
    %8256 = vmatpush2.bf16.msra.mxu0 0
    %8257 = vmatprep.subr.bf16.mxu0 0
    %8258 = vmatpush2.bf16.msra.mxu0 0
    %8259 = vmatprep.subr.bf16.mxu0 0
    %8260 = vmatpush2.bf16.msra.mxu0 0
    %8261 = vmatprep.subr.bf16.mxu0 0
    %8262 = vmatpush2.bf16.msra.mxu0 0
    %8263 = vmatprep.subr.bf16.mxu0 0
    %8264 = vmatpush2.bf16.msra.mxu0 0
    %8265 = vmatprep.subr.bf16.mxu0 0
    %8266 = vmatpush2.bf16.msra.mxu0 0
    %8267 = vmatprep.subr.bf16.mxu0 0
    %8268 = vmatpush2.bf16.msra.mxu0 0
    %8269 = vmatprep.subr.bf16.mxu0 0
    %8270 = vmatpush2.bf16.msra.mxu0 0
    %8271 = vmatprep.mubr.bf16.mxu0 0
    %8272 = vmatmul.mubr.bf16.gmra.mxu0 %v8172
    %v8273 = vpop.f32.mrf.mxu0
    %v8274 = vadd.f32 0.0, %v8273
    %v8275 = vpop.f32.mrf.mxu0
    %v8276 = vpop.f32.mrf.mxu0
    %v8277 = vadd.f32 0.0, %v8276
    %v8278 = vpop.f32.mrf.mxu0
    %8279 = vmatprep.mubr.bf16.mxu0 0
    %8280 = vmatmul.mubr.bf16.gmra.mxu0 %v8173
    %v8281 = vpop.f32.mrf.mxu0
    %v8282 = vadd.f32 0.0, %v8281
    %v8283 = vpop.f32.mrf.mxu0
    %v8284 = vpop.f32.mrf.mxu0
    %v8285 = vadd.f32 0.0, %v8284
    %v8286 = vpop.f32.mrf.mxu0
    %8287 = vdwg.mxu0
    %v8288 = vadd.f32 %v8119, %v8274
    %v8289 = vadd.f32 %v8120, %v8277
    %v8290 = vadd.f32 %v8121, %v8282
    %v8291 = vadd.f32 %v8122, %v8285
    %8292 = vmatprep.subr.bf16.mxu0 0
    %8293 = vmatpush1.bf16.msra.mxu0 0
    %8294 = vmatprep.subr.bf16.mxu0 0
    %8295 = vmatpush1.bf16.msra.mxu0 0
    %8296 = vmatprep.subr.bf16.mxu0 0
    %8297 = vmatpush1.bf16.msra.mxu0 0
    %8298 = vmatprep.subr.bf16.mxu0 0
    %8299 = vmatpush1.bf16.msra.mxu0 0
    %8300 = vmatprep.subr.bf16.mxu0 0
    %8301 = vmatpush1.bf16.msra.mxu0 0
    %8302 = vmatprep.subr.bf16.mxu0 0
    %8303 = vmatpush1.bf16.msra.mxu0 0
    %8304 = vmatprep.subr.bf16.mxu0 0
    %8305 = vmatpush1.bf16.msra.mxu0 %v7625
    %8306 = vmatprep.subr.bf16.mxu0 0
    %8307 = vmatpush1.bf16.msra.mxu0 %v7624
    %8308 = vmatprep.subr.bf16.mxu0 0
    %8309 = vmatpush2.bf16.msra.mxu0 0
    %8310 = vmatprep.subr.bf16.mxu0 0
    %8311 = vmatpush2.bf16.msra.mxu0 0
    %8312 = vmatprep.subr.bf16.mxu0 0
    %8313 = vmatpush2.bf16.msra.mxu0 0
    %8314 = vmatprep.subr.bf16.mxu0 0
    %8315 = vmatpush2.bf16.msra.mxu0 0
    %8316 = vmatprep.subr.bf16.mxu0 0
    %8317 = vmatpush2.bf16.msra.mxu0 0
    %8318 = vmatprep.subr.bf16.mxu0 0
    %8319 = vmatpush2.bf16.msra.mxu0 0
    %8320 = vmatprep.subr.bf16.mxu0 0
    %8321 = vmatpush2.bf16.msra.mxu0 0
    %8322 = vmatprep.subr.bf16.mxu0 0
    %8323 = vmatpush2.bf16.msra.mxu0 0
    %8324 = vmatprep.mubr.bf16.mxu0 0
    %8325 = vmatmul.mubr.bf16.gmra.mxu0 %v908
    %v8326 = vpop.f32.mrf.mxu0
    %v8327 = vadd.f32 0.0, %v8326
    %v8328 = vpop.f32.mrf.mxu0
    %v8329 = vpop.f32.mrf.mxu0
    %v8330 = vadd.f32 0.0, %v8329
    %v8331 = vpop.f32.mrf.mxu0
    %8332 = vmatprep.mubr.bf16.mxu0 0
    %8333 = vmatmul.mubr.bf16.gmra.mxu0 %v911
    %v8334 = vpop.f32.mrf.mxu0
    %v8335 = vadd.f32 0.0, %v8334
    %v8336 = vpop.f32.mrf.mxu0
    %v8337 = vpop.f32.mrf.mxu0
    %v8338 = vadd.f32 0.0, %v8337
    %v8339 = vpop.f32.mrf.mxu0
    %8340 = vdwg.mxu0
    %v8341 = vpack.c.bf16 %v8330, %v8327
    %v8342 = vpack.c.bf16 %v8338, %v8335
    %s8343 = scalar_lea.vmem [#allocation34], 128
    %v8344 = vld [vmem:[%s8343] sm:$0xf]
    %v8345 = vld [vmem:[%s8343 + $0x4] sm:$0xf]
    %v8346 = vld [vmem:[%s8343 + $0x8] sm:$0xf]
    %v8347 = vld [vmem:[%s8343 + $0xc] sm:$0xf]
    %v8348 = vld [vmem:[%s8343 + $0x10] sm:$0xf]
    %v8349 = vld [vmem:[%s8343 + $0x14] sm:$0xf]
    %v8350 = vld [vmem:[%s8343 + $0x18] sm:$0xf]
    %v8351 = vld [vmem:[%s8343 + $0x1c] sm:$0xf]
    %v8352 = vld [vmem:[%s8343 + $0x20] sm:$0xf]
    %v8353 = vld [vmem:[%s8343 + $0x24] sm:$0xf]
    %v8354 = vld [vmem:[%s8343 + $0x28] sm:$0xf]
    %v8355 = vld [vmem:[%s8343 + $0x2c] sm:$0xf]
    %v8356 = vld [vmem:[%s8343 + $0x30] sm:$0xf]
    %v8357 = vld [vmem:[%s8343 + $0x34] sm:$0xf]
    %v8358 = vld [vmem:[%s8343 + $0x38] sm:$0xf]
    %v8359 = vld [vmem:[%s8343 + $0x3c] sm:$0xf]
    %v8376 = vunpack.c.l.b16 %v8344
    %v8377 = vunpack.c.l.b16 %v8345
    %v8378 = vunpack.c.l.b16 %v8346
    %v8379 = vunpack.c.l.b16 %v8347
    %v8380 = vunpack.c.l.b16 %v8348
    %v8381 = vunpack.c.l.b16 %v8349
    %v8382 = vunpack.c.l.b16 %v8350
    %v8383 = vunpack.c.l.b16 %v8351
    %v8384 = vunpack.c.l.b16 %v8352
    %v8385 = vunpack.c.l.b16 %v8353
    %v8386 = vunpack.c.l.b16 %v8354
    %v8387 = vunpack.c.l.b16 %v8355
    %v8388 = vunpack.c.l.b16 %v8356
    %v8389 = vunpack.c.l.b16 %v8357
    %v8390 = vunpack.c.l.b16 %v8358
    %v8391 = vunpack.c.l.b16 %v8359
    %v8392 = vpack.c.b16 %v8377, %v8376
    %v8393 = vpack.c.b16 %v8379, %v8378
    %v8394 = vpack.c.b16 %v8381, %v8380
    %v8395 = vpack.c.b16 %v8383, %v8382
    %v8396 = vpack.c.b16 %v8385, %v8384
    %v8397 = vpack.c.b16 %v8387, %v8386
    %v8398 = vpack.c.b16 %v8389, %v8388
    %v8399 = vpack.c.b16 %v8391, %v8390
    %8408 = vmatprep.subr.bf16.mxu0 0
    %8409 = vmatpush1.bf16.msra.mxu0 %v8399
    %8410 = vmatprep.subr.bf16.mxu0 0
    %8411 = vmatpush1.bf16.msra.mxu0 %v8398
    %8412 = vmatprep.subr.bf16.mxu0 0
    %8413 = vmatpush1.bf16.msra.mxu0 %v8397
    %8414 = vmatprep.subr.bf16.mxu0 0
    %8415 = vmatpush1.bf16.msra.mxu0 %v8396
    %8416 = vmatprep.subr.bf16.mxu0 0
    %8417 = vmatpush1.bf16.msra.mxu0 %v8395
    %8418 = vmatprep.subr.bf16.mxu0 0
    %8419 = vmatpush1.bf16.msra.mxu0 %v8394
    %8420 = vmatprep.subr.bf16.mxu0 0
    %8421 = vmatpush1.bf16.msra.mxu0 %v8393
    %8422 = vmatprep.subr.bf16.mxu0 0
    %8423 = vmatpush1.bf16.msra.mxu0 %v8392
    %8424 = vmatprep.subr.bf16.mxu0 0
    %8425 = vmatpush2.bf16.msra.mxu0 0
    %8426 = vmatprep.subr.bf16.mxu0 0
    %8427 = vmatpush2.bf16.msra.mxu0 0
    %8428 = vmatprep.subr.bf16.mxu0 0
    %8429 = vmatpush2.bf16.msra.mxu0 0
    %8430 = vmatprep.subr.bf16.mxu0 0
    %8431 = vmatpush2.bf16.msra.mxu0 0
    %8432 = vmatprep.subr.bf16.mxu0 0
    %8433 = vmatpush2.bf16.msra.mxu0 0
    %8434 = vmatprep.subr.bf16.mxu0 0
    %8435 = vmatpush2.bf16.msra.mxu0 0
    %8436 = vmatprep.subr.bf16.mxu0 0
    %8437 = vmatpush2.bf16.msra.mxu0 0
    %8438 = vmatprep.subr.bf16.mxu0 0
    %8439 = vmatpush2.bf16.msra.mxu0 0
    %8440 = vmatprep.mubr.bf16.mxu0 0
    %8441 = vmatmul.mubr.bf16.gmra.mxu0 %v8341
    %v8442 = vpop.f32.mrf.mxu0
    %v8443 = vadd.f32 0.0, %v8442
    %v8444 = vpop.f32.mrf.mxu0
    %v8445 = vpop.f32.mrf.mxu0
    %v8446 = vadd.f32 0.0, %v8445
    %v8447 = vpop.f32.mrf.mxu0
    %8448 = vmatprep.mubr.bf16.mxu0 0
    %8449 = vmatmul.mubr.bf16.gmra.mxu0 %v8342
    %v8450 = vpop.f32.mrf.mxu0
    %v8451 = vadd.f32 0.0, %v8450
    %v8452 = vpop.f32.mrf.mxu0
    %v8453 = vpop.f32.mrf.mxu0
    %v8454 = vadd.f32 0.0, %v8453
    %v8455 = vpop.f32.mrf.mxu0
    %8456 = vdwg.mxu0
    %v8457 = vadd.f32 %v8288, %v8443
    %v8458 = vadd.f32 %v8289, %v8446
    %v8459 = vadd.f32 %v8290, %v8451
    %v8460 = vadd.f32 %v8291, %v8454
    %8461 = vmatprep.subr.bf16.mxu0 0
    %8462 = vmatpush1.bf16.msra.mxu0 0
    %8463 = vmatprep.subr.bf16.mxu0 0
    %8464 = vmatpush1.bf16.msra.mxu0 0
    %8465 = vmatprep.subr.bf16.mxu0 0
    %8466 = vmatpush1.bf16.msra.mxu0 0
    %8467 = vmatprep.subr.bf16.mxu0 0
    %8468 = vmatpush1.bf16.msra.mxu0 0
    %8469 = vmatprep.subr.bf16.mxu0 0
    %8470 = vmatpush1.bf16.msra.mxu0 0
    %8471 = vmatprep.subr.bf16.mxu0 0
    %8472 = vmatpush1.bf16.msra.mxu0 0
    %8473 = vmatprep.subr.bf16.mxu0 0
    %8474 = vmatpush1.bf16.msra.mxu0 %v2267
    %8475 = vmatprep.subr.bf16.mxu0 0
    %8476 = vmatpush1.bf16.msra.mxu0 %v2266
    %8477 = vmatprep.subr.bf16.mxu0 0
    %8478 = vmatpush2.bf16.msra.mxu0 0
    %8479 = vmatprep.subr.bf16.mxu0 0
    %8480 = vmatpush2.bf16.msra.mxu0 0
    %8481 = vmatprep.subr.bf16.mxu0 0
    %8482 = vmatpush2.bf16.msra.mxu0 0
    %8483 = vmatprep.subr.bf16.mxu0 0
    %8484 = vmatpush2.bf16.msra.mxu0 0
    %8485 = vmatprep.subr.bf16.mxu0 0
    %8486 = vmatpush2.bf16.msra.mxu0 0
    %8487 = vmatprep.subr.bf16.mxu0 0
    %8488 = vmatpush2.bf16.msra.mxu0 0
    %8489 = vmatprep.subr.bf16.mxu0 0
    %8490 = vmatpush2.bf16.msra.mxu0 0
    %8491 = vmatprep.subr.bf16.mxu0 0
    %8492 = vmatpush2.bf16.msra.mxu0 0
    %8493 = vmatprep.mubr.bf16.mxu0 0
    %8494 = vmatmul.mubr.bf16.gmra.mxu0 %v908
    %v8495 = vpop.f32.mrf.mxu0
    %v8496 = vadd.f32 0.0, %v8495
    %v8497 = vpop.f32.mrf.mxu0
    %v8498 = vpop.f32.mrf.mxu0
    %v8499 = vadd.f32 0.0, %v8498
    %v8500 = vpop.f32.mrf.mxu0
    %8501 = vmatprep.mubr.bf16.mxu0 0
    %8502 = vmatmul.mubr.bf16.gmra.mxu0 %v911
    %v8503 = vpop.f32.mrf.mxu0
    %v8504 = vadd.f32 0.0, %v8503
    %v8505 = vpop.f32.mrf.mxu0
    %v8506 = vpop.f32.mrf.mxu0
    %v8507 = vadd.f32 0.0, %v8506
    %v8508 = vpop.f32.mrf.mxu0
    %8509 = vdwg.mxu0
    %v8510 = vpack.c.bf16 %v8499, %v8496
    %v8511 = vpack.c.bf16 %v8507, %v8504
    %s8512 = scalar_lea.vmem [#allocation36], 128
    %v8513 = vld [vmem:[%s8512] sm:$0xf]
    %v8514 = vld [vmem:[%s8512 + $0x4] sm:$0xf]
    %v8515 = vld [vmem:[%s8512 + $0x8] sm:$0xf]
    %v8516 = vld [vmem:[%s8512 + $0xc] sm:$0xf]
    %v8517 = vld [vmem:[%s8512 + $0x10] sm:$0xf]
    %v8518 = vld [vmem:[%s8512 + $0x14] sm:$0xf]
    %v8519 = vld [vmem:[%s8512 + $0x18] sm:$0xf]
    %v8520 = vld [vmem:[%s8512 + $0x1c] sm:$0xf]
    %v8521 = vld [vmem:[%s8512 + $0x20] sm:$0xf]
    %v8522 = vld [vmem:[%s8512 + $0x24] sm:$0xf]
    %v8523 = vld [vmem:[%s8512 + $0x28] sm:$0xf]
    %v8524 = vld [vmem:[%s8512 + $0x2c] sm:$0xf]
    %v8525 = vld [vmem:[%s8512 + $0x30] sm:$0xf]
    %v8526 = vld [vmem:[%s8512 + $0x34] sm:$0xf]
    %v8527 = vld [vmem:[%s8512 + $0x38] sm:$0xf]
    %v8528 = vld [vmem:[%s8512 + $0x3c] sm:$0xf]
    %v8545 = vunpack.c.l.b16 %v8513
    %v8546 = vunpack.c.l.b16 %v8514
    %v8547 = vunpack.c.l.b16 %v8515
    %v8548 = vunpack.c.l.b16 %v8516
    %v8549 = vunpack.c.l.b16 %v8517
    %v8550 = vunpack.c.l.b16 %v8518
    %v8551 = vunpack.c.l.b16 %v8519
    %v8552 = vunpack.c.l.b16 %v8520
    %v8553 = vunpack.c.l.b16 %v8521
    %v8554 = vunpack.c.l.b16 %v8522
    %v8555 = vunpack.c.l.b16 %v8523
    %v8556 = vunpack.c.l.b16 %v8524
    %v8557 = vunpack.c.l.b16 %v8525
    %v8558 = vunpack.c.l.b16 %v8526
    %v8559 = vunpack.c.l.b16 %v8527
    %v8560 = vunpack.c.l.b16 %v8528
    %v8561 = vpack.c.b16 %v8546, %v8545
    %v8562 = vpack.c.b16 %v8548, %v8547
    %v8563 = vpack.c.b16 %v8550, %v8549
    %v8564 = vpack.c.b16 %v8552, %v8551
    %v8565 = vpack.c.b16 %v8554, %v8553
    %v8566 = vpack.c.b16 %v8556, %v8555
    %v8567 = vpack.c.b16 %v8558, %v8557
    %v8568 = vpack.c.b16 %v8560, %v8559
    %8577 = vmatprep.subr.bf16.mxu0 0
    %8578 = vmatpush1.bf16.msra.mxu0 %v8568
    %8579 = vmatprep.subr.bf16.mxu0 0
    %8580 = vmatpush1.bf16.msra.mxu0 %v8567
    %8581 = vmatprep.subr.bf16.mxu0 0
    %8582 = vmatpush1.bf16.msra.mxu0 %v8566
    %8583 = vmatprep.subr.bf16.mxu0 0
    %8584 = vmatpush1.bf16.msra.mxu0 %v8565
    %8585 = vmatprep.subr.bf16.mxu0 0
    %8586 = vmatpush1.bf16.msra.mxu0 %v8564
    %8587 = vmatprep.subr.bf16.mxu0 0
    %8588 = vmatpush1.bf16.msra.mxu0 %v8563
    %8589 = vmatprep.subr.bf16.mxu0 0
    %8590 = vmatpush1.bf16.msra.mxu0 %v8562
    %8591 = vmatprep.subr.bf16.mxu0 0
    %8592 = vmatpush1.bf16.msra.mxu0 %v8561
    %8593 = vmatprep.subr.bf16.mxu0 0
    %8594 = vmatpush2.bf16.msra.mxu0 0
    %8595 = vmatprep.subr.bf16.mxu0 0
    %8596 = vmatpush2.bf16.msra.mxu0 0
    %8597 = vmatprep.subr.bf16.mxu0 0
    %8598 = vmatpush2.bf16.msra.mxu0 0
    %8599 = vmatprep.subr.bf16.mxu0 0
    %8600 = vmatpush2.bf16.msra.mxu0 0
    %8601 = vmatprep.subr.bf16.mxu0 0
    %8602 = vmatpush2.bf16.msra.mxu0 0
    %8603 = vmatprep.subr.bf16.mxu0 0
    %8604 = vmatpush2.bf16.msra.mxu0 0
    %8605 = vmatprep.subr.bf16.mxu0 0
    %8606 = vmatpush2.bf16.msra.mxu0 0
    %8607 = vmatprep.subr.bf16.mxu0 0
    %8608 = vmatpush2.bf16.msra.mxu0 0
    %8609 = vmatprep.mubr.bf16.mxu0 0
    %8610 = vmatmul.mubr.bf16.gmra.mxu0 %v8510
    %v8611 = vpop.f32.mrf.mxu0
    %v8612 = vadd.f32 0.0, %v8611
    %v8613 = vpop.f32.mrf.mxu0
    %v8614 = vpop.f32.mrf.mxu0
    %v8615 = vadd.f32 0.0, %v8614
    %v8616 = vpop.f32.mrf.mxu0
    %8617 = vmatprep.mubr.bf16.mxu0 0
    %8618 = vmatmul.mubr.bf16.gmra.mxu0 %v8511
    %v8619 = vpop.f32.mrf.mxu0
    %v8620 = vadd.f32 0.0, %v8619
    %v8621 = vpop.f32.mrf.mxu0
    %v8622 = vpop.f32.mrf.mxu0
    %v8623 = vadd.f32 0.0, %v8622
    %v8624 = vpop.f32.mrf.mxu0
    %8625 = vdwg.mxu0
    %v8626 = vadd.f32 %v8457, %v8612
    %v8627 = vadd.f32 %v8458, %v8615
    %v8628 = vadd.f32 %v8459, %v8620
    %v8629 = vadd.f32 %v8460, %v8623
    %v8630 = vld [vmem:[%s101] sm:$0x1]
    %v8632 = vlaneseq
    %v8633 = vshrl.u32 %v8632, 7
    %v8634 = vsub.s32 0, %v8633
    %v8635 = vrot.slane %v8630, %v8634
    %v8637 = vadd.f32 %v8626, %v8635
    %v8638 = vadd.f32 %v8627, %v8635
    %v8639 = vadd.f32 %v8628, %v8635
    %v8640 = vadd.f32 %v8629, %v8635
    %8641 = vmatprep.subr.mxu0 0.0
    %8642 = vmatpush1.msra.mxu0 0.0
    %8643 = vmatprep.subr.mxu0 0.0
    %8644 = vmatpush1.msra.mxu0 0.0
    %8645 = vmatprep.subr.mxu0 0.0
    %8646 = vmatpush1.msra.mxu0 0.0
    %8647 = vmatprep.subr.mxu0 0.0
    %8648 = vmatpush1.msra.mxu0 0.0
    %8649 = vmatprep.subr.mxu0 0.0
    %8650 = vmatpush1.msra.mxu0 0.0
    %8651 = vmatprep.subr.mxu0 0.0
    %8652 = vmatpush1.msra.mxu0 0.0
    %8653 = vmatprep.subr.mxu0 0.0
    %8654 = vmatpush1.msra.mxu0 0.0
    %8655 = vmatprep.subr.mxu0 0.0
    %8656 = vmatpush1.msra.mxu0 0.0
    %8657 = vmatprep.subr.mxu0 0.0
    %8658 = vmatpush1.msra.mxu0 0.0
    %8659 = vmatprep.subr.mxu0 0.0
    %8660 = vmatpush1.msra.mxu0 0.0
    %8661 = vmatprep.subr.mxu0 0.0
    %8662 = vmatpush1.msra.mxu0 0.0
    %8663 = vmatprep.subr.mxu0 0.0
    %8664 = vmatpush1.msra.mxu0 0.0
    %8665 = vmatprep.subr.mxu0 0.0
    %8666 = vmatpush1.msra.mxu0 %v8640
    %8667 = vmatprep.subr.mxu0 0.0
    %8668 = vmatpush1.msra.mxu0 %v8639
    %8669 = vmatprep.subr.mxu0 0.0
    %8670 = vmatpush1.msra.mxu0 %v8638
    %8671 = vmatprep.subr.mxu0 0.0
    %8672 = vmatpush1.msra.mxu0 %v8637
    %8673 = vmatprep.subr.mxu0 0.0
    %8674 = vmatpush2.msra.mxu0 0.0
    %8675 = vmatprep.subr.mxu0 0.0
    %8676 = vmatpush2.msra.mxu0 0.0
    %8677 = vmatprep.subr.mxu0 0.0
    %8678 = vmatpush2.msra.mxu0 0.0
    %8679 = vmatprep.subr.mxu0 0.0
    %8680 = vmatpush2.msra.mxu0 0.0
    %8681 = vmatprep.subr.mxu0 0.0
    %8682 = vmatpush2.msra.mxu0 0.0
    %8683 = vmatprep.subr.mxu0 0.0
    %8684 = vmatpush2.msra.mxu0 0.0
    %8685 = vmatprep.subr.mxu0 0.0
    %8686 = vmatpush2.msra.mxu0 0.0
    %8687 = vmatprep.subr.mxu0 0.0
    %8688 = vmatpush2.msra.mxu0 0.0
    %8689 = vmatprep.subr.mxu0 0.0
    %8690 = vmatpush2.msra.mxu0 0.0
    %8691 = vmatprep.subr.mxu0 0.0
    %8692 = vmatpush2.msra.mxu0 0.0
    %8693 = vmatprep.subr.mxu0 0.0
    %8694 = vmatpush2.msra.mxu0 0.0
    %8695 = vmatprep.subr.mxu0 0.0
    %8696 = vmatpush2.msra.mxu0 0.0
    %8697 = vmatprep.subr.mxu0 0.0
    %8698 = vmatpush2.msra.mxu0 0.0
    %8699 = vmatprep.subr.mxu0 0.0
    %8700 = vmatpush2.msra.mxu0 0.0
    %8701 = vmatprep.subr.mxu0 0.0
    %8702 = vmatpush2.msra.mxu0 0.0
    %8703 = vmatprep.subr.mxu0 0.0
    %8704 = vmatpush2.msra.mxu0 0.0
    %8705 = vmatprep.mubr.f32.mxu0 0.0
    %8706 = vmatmul.mubr.f32.gmra.mxu0 %v1072
    %v8707 = vpop.f32.mrf.mxu0
    %v8708 = vadd.f32 0.0, %v8707
    %v8709 = vpop.f32.mrf.mxu0
    %8710 = vmatprep.mubr.f32.mxu0 0.0
    %8711 = vmatmul.mubr.f32.gmra.mxu0 %v1075
    %v8712 = vpop.f32.mrf.mxu0
    %v8713 = vadd.f32 0.0, %v8712
    %v8714 = vpop.f32.mrf.mxu0
    %8715 = vmatprep.mubr.f32.mxu0 0.0
    %8716 = vmatmul.mubr.f32.gmra.mxu0 %v1078
    %v8717 = vpop.f32.mrf.mxu0
    %v8718 = vadd.f32 0.0, %v8717
    %v8719 = vpop.f32.mrf.mxu0
    %8720 = vmatprep.mubr.f32.mxu0 0.0
    %8721 = vmatmul.mubr.f32.gmra.mxu0 %v1081
    %v8722 = vpop.f32.mrf.mxu0
    %v8723 = vadd.f32 0.0, %v8722
    %v8724 = vpop.f32.mrf.mxu0
    %8725 = vdwg.mxu0
    %v8726 = vmul.f32 %v8637, %v8637
    %v8727 = vmul.f32 %v8638, %v8638
    %v8728 = vmul.f32 %v8639, %v8639
    %v8729 = vmul.f32 %v8640, %v8640
    %8730 = vmatprep.subr.mxu0 0.0
    %8731 = vmatpush1.msra.mxu0 0.0
    %8732 = vmatprep.subr.mxu0 0.0
    %8733 = vmatpush1.msra.mxu0 0.0
    %8734 = vmatprep.subr.mxu0 0.0
    %8735 = vmatpush1.msra.mxu0 0.0
    %8736 = vmatprep.subr.mxu0 0.0
    %8737 = vmatpush1.msra.mxu0 0.0
    %8738 = vmatprep.subr.mxu0 0.0
    %8739 = vmatpush1.msra.mxu0 0.0
    %8740 = vmatprep.subr.mxu0 0.0
    %8741 = vmatpush1.msra.mxu0 0.0
    %8742 = vmatprep.subr.mxu0 0.0
    %8743 = vmatpush1.msra.mxu0 0.0
    %8744 = vmatprep.subr.mxu0 0.0
    %8745 = vmatpush1.msra.mxu0 0.0
    %8746 = vmatprep.subr.mxu0 0.0
    %8747 = vmatpush1.msra.mxu0 0.0
    %8748 = vmatprep.subr.mxu0 0.0
    %8749 = vmatpush1.msra.mxu0 0.0
    %8750 = vmatprep.subr.mxu0 0.0
    %8751 = vmatpush1.msra.mxu0 0.0
    %8752 = vmatprep.subr.mxu0 0.0
    %8753 = vmatpush1.msra.mxu0 0.0
    %8754 = vmatprep.subr.mxu0 0.0
    %8755 = vmatpush1.msra.mxu0 %v8729
    %8756 = vmatprep.subr.mxu0 0.0
    %8757 = vmatpush1.msra.mxu0 %v8728
    %8758 = vmatprep.subr.mxu0 0.0
    %8759 = vmatpush1.msra.mxu0 %v8727
    %8760 = vmatprep.subr.mxu0 0.0
    %8761 = vmatpush1.msra.mxu0 %v8726
    %8762 = vmatprep.subr.mxu0 0.0
    %8763 = vmatpush2.msra.mxu0 0.0
    %8764 = vmatprep.subr.mxu0 0.0
    %8765 = vmatpush2.msra.mxu0 0.0
    %8766 = vmatprep.subr.mxu0 0.0
    %8767 = vmatpush2.msra.mxu0 0.0
    %8768 = vmatprep.subr.mxu0 0.0
    %8769 = vmatpush2.msra.mxu0 0.0
    %8770 = vmatprep.subr.mxu0 0.0
    %8771 = vmatpush2.msra.mxu0 0.0
    %8772 = vmatprep.subr.mxu0 0.0
    %8773 = vmatpush2.msra.mxu0 0.0
    %8774 = vmatprep.subr.mxu0 0.0
    %8775 = vmatpush2.msra.mxu0 0.0
    %8776 = vmatprep.subr.mxu0 0.0
    %8777 = vmatpush2.msra.mxu0 0.0
    %8778 = vmatprep.subr.mxu0 0.0
    %8779 = vmatpush2.msra.mxu0 0.0
    %8780 = vmatprep.subr.mxu0 0.0
    %8781 = vmatpush2.msra.mxu0 0.0
    %8782 = vmatprep.subr.mxu0 0.0
    %8783 = vmatpush2.msra.mxu0 0.0
    %8784 = vmatprep.subr.mxu0 0.0
    %8785 = vmatpush2.msra.mxu0 0.0
    %8786 = vmatprep.subr.mxu0 0.0
    %8787 = vmatpush2.msra.mxu0 0.0
    %8788 = vmatprep.subr.mxu0 0.0
    %8789 = vmatpush2.msra.mxu0 0.0
    %8790 = vmatprep.subr.mxu0 0.0
    %8791 = vmatpush2.msra.mxu0 0.0
    %8792 = vmatprep.subr.mxu0 0.0
    %8793 = vmatpush2.msra.mxu0 0.0
    %8794 = vmatprep.mubr.f32.mxu0 0.0
    %8795 = vmatmul.mubr.f32.gmra.mxu0 %v1072
    %v8796 = vpop.f32.mrf.mxu0
    %v8797 = vadd.f32 0.0, %v8796
    %v8798 = vpop.f32.mrf.mxu0
    %8799 = vmatprep.mubr.f32.mxu0 0.0
    %8800 = vmatmul.mubr.f32.gmra.mxu0 %v1075
    %v8801 = vpop.f32.mrf.mxu0
    %v8802 = vadd.f32 0.0, %v8801
    %v8803 = vpop.f32.mrf.mxu0
    %8804 = vmatprep.mubr.f32.mxu0 0.0
    %8805 = vmatmul.mubr.f32.gmra.mxu0 %v1078
    %v8806 = vpop.f32.mrf.mxu0
    %v8807 = vadd.f32 0.0, %v8806
    %v8808 = vpop.f32.mrf.mxu0
    %8809 = vmatprep.mubr.f32.mxu0 0.0
    %8810 = vmatmul.mubr.f32.gmra.mxu0 %v1081
    %v8811 = vpop.f32.mrf.mxu0
    %v8812 = vadd.f32 0.0, %v8811
    %v8813 = vpop.f32.mrf.mxu0
    %8814 = vdwg.mxu0
    %8815 = vrot.lane.b32.xlu0 %v8708, 8
    %v8816 = vpop.permute.xlu0 %8815
    %8817 = vrot.lane.b32.xlu0 %v8713, 8
    %v8818 = vpop.permute.xlu0 %8817
    %8819 = vrot.lane.b32.xlu0 %v8718, 8
    %v8820 = vpop.permute.xlu0 %8819
    %8821 = vrot.lane.b32.xlu0 %v8723, 8
    %v8822 = vpop.permute.xlu0 %8821
    %v8823 = vadd.f32 %v8708, %v8816
    %v8824 = vadd.f32 %v8713, %v8818
    %v8825 = vadd.f32 %v8718, %v8820
    %v8826 = vadd.f32 %v8723, %v8822
    %8827 = vrot.lane.b32.xlu0 %v8797, 8
    %v8828 = vpop.permute.xlu0 %8827
    %8829 = vrot.lane.b32.xlu0 %v8802, 8
    %v8830 = vpop.permute.xlu0 %8829
    %8831 = vrot.lane.b32.xlu0 %v8807, 8
    %v8832 = vpop.permute.xlu0 %8831
    %8833 = vrot.lane.b32.xlu0 %v8812, 8
    %v8834 = vpop.permute.xlu0 %8833
    %v8835 = vadd.f32 %v8797, %v8828
    %v8836 = vadd.f32 %v8802, %v8830
    %v8837 = vadd.f32 %v8807, %v8832
    %v8838 = vadd.f32 %v8812, %v8834
    %8839 = vrot.lane.b32.xlu0 %v8823, 16
    %v8840 = vpop.permute.xlu0 %8839
    %8841 = vrot.lane.b32.xlu0 %v8824, 16
    %v8842 = vpop.permute.xlu0 %8841
    %8843 = vrot.lane.b32.xlu0 %v8825, 16
    %v8844 = vpop.permute.xlu0 %8843
    %8845 = vrot.lane.b32.xlu0 %v8826, 16
    %v8846 = vpop.permute.xlu0 %8845
    %v8847 = vadd.f32 %v8823, %v8840
    %v8848 = vadd.f32 %v8824, %v8842
    %v8849 = vadd.f32 %v8825, %v8844
    %v8850 = vadd.f32 %v8826, %v8846
    %8851 = vrot.lane.b32.xlu0 %v8835, 16
    %v8852 = vpop.permute.xlu0 %8851
    %8853 = vrot.lane.b32.xlu0 %v8836, 16
    %v8854 = vpop.permute.xlu0 %8853
    %8855 = vrot.lane.b32.xlu0 %v8837, 16
    %v8856 = vpop.permute.xlu0 %8855
    %8857 = vrot.lane.b32.xlu0 %v8838, 16
    %v8858 = vpop.permute.xlu0 %8857
    %v8859 = vadd.f32 %v8835, %v8852
    %v8860 = vadd.f32 %v8836, %v8854
    %v8861 = vadd.f32 %v8837, %v8856
    %v8862 = vadd.f32 %v8838, %v8858
    %8863 = vrot.lane.b32.xlu0 %v8847, 32
    %v8864 = vpop.permute.xlu0 %8863
    %8865 = vrot.lane.b32.xlu0 %v8848, 32
    %v8866 = vpop.permute.xlu0 %8865
    %8867 = vrot.lane.b32.xlu0 %v8849, 32
    %v8868 = vpop.permute.xlu0 %8867
    %8869 = vrot.lane.b32.xlu0 %v8850, 32
    %v8870 = vpop.permute.xlu0 %8869
    %v8871 = vadd.f32 %v8847, %v8864
    %v8872 = vadd.f32 %v8848, %v8866
    %v8873 = vadd.f32 %v8849, %v8868
    %v8874 = vadd.f32 %v8850, %v8870
    %8875 = vrot.lane.b32.xlu0 %v8859, 32
    %v8876 = vpop.permute.xlu0 %8875
    %8877 = vrot.lane.b32.xlu0 %v8860, 32
    %v8878 = vpop.permute.xlu0 %8877
    %8879 = vrot.lane.b32.xlu0 %v8861, 32
    %v8880 = vpop.permute.xlu0 %8879
    %8881 = vrot.lane.b32.xlu0 %v8862, 32
    %v8882 = vpop.permute.xlu0 %8881
    %v8883 = vadd.f32 %v8859, %v8876
    %v8884 = vadd.f32 %v8860, %v8878
    %v8885 = vadd.f32 %v8861, %v8880
    %v8886 = vadd.f32 %v8862, %v8882
    %8887 = vrot.lane.b32.xlu0 %v8871, 64
    %v8888 = vpop.permute.xlu0 %8887
    %8889 = vrot.lane.b32.xlu0 %v8872, 64
    %v8890 = vpop.permute.xlu0 %8889
    %8891 = vrot.lane.b32.xlu0 %v8873, 64
    %v8892 = vpop.permute.xlu0 %8891
    %8893 = vrot.lane.b32.xlu0 %v8874, 64
    %v8894 = vpop.permute.xlu0 %8893
    %v8895 = vadd.f32 %v8871, %v8888
    %v8896 = vadd.f32 %v8872, %v8890
    %v8897 = vadd.f32 %v8873, %v8892
    %v8898 = vadd.f32 %v8874, %v8894
    %8899 = vrot.lane.b32.xlu0 %v8883, 64
    %v8900 = vpop.permute.xlu0 %8899
    %8901 = vrot.lane.b32.xlu0 %v8884, 64
    %v8902 = vpop.permute.xlu0 %8901
    %8903 = vrot.lane.b32.xlu0 %v8885, 64
    %v8904 = vpop.permute.xlu0 %8903
    %8905 = vrot.lane.b32.xlu0 %v8886, 64
    %v8906 = vpop.permute.xlu0 %8905
    %v8907 = vadd.f32 %v8883, %v8900
    %v8908 = vadd.f32 %v8884, %v8902
    %v8909 = vadd.f32 %v8885, %v8904
    %v8910 = vadd.f32 %v8886, %v8906
    %v8911 = vmul.f32 %v8895, 0.0625
    %v8912 = vmul.f32 %v8896, 0.0625
    %v8913 = vmul.f32 %v8897, 0.0625
    %v8914 = vmul.f32 %v8898, 0.0625
    %v8915 = vmul.f32 %v8907, 0.0625
    %v8916 = vmul.f32 %v8908, 0.0625
    %v8917 = vmul.f32 %v8909, 0.0625
    %v8918 = vmul.f32 %v8910, 0.0625
    %v8919 = vmul.f32 %v8911, %v8911
    %v8920 = vmul.f32 %v8912, %v8912
    %v8921 = vmul.f32 %v8913, %v8913
    %v8922 = vmul.f32 %v8914, %v8914
    %v8923 = vsub.f32 %v8915, %v8919
    %v8924 = vsub.f32 %v8916, %v8920
    %v8925 = vsub.f32 %v8917, %v8921
    %v8926 = vsub.f32 %v8918, %v8922
    %v8927 = vld [vmem:[%s103] sm:$0x1]
    %v8928 = vadd.f32 %v8923, 1e-05
    %v8929 = vadd.f32 %v8924, 1e-05
    %v8930 = vadd.f32 %v8925, 1e-05
    %v8931 = vadd.f32 %v8926, 1e-05
    %v8932 = vrsqrt.pop %v8928
    %v8933 = vrsqrt.pop %v8929
    %v8934 = vrsqrt.pop %v8930
    %v8935 = vrsqrt.pop %v8931
    %v8937 = vlaneseq
    %v8938 = vshrl.u32 %v8937, 7
    %v8939 = vsub.s32 0, %v8938
    %v8940 = vrot.slane %v8927, %v8939
    %v8942 = vmul.f32 %v8940, %v8932
    %v8943 = vmul.f32 %v8940, %v8933
    %v8944 = vmul.f32 %v8940, %v8934
    %v8945 = vmul.f32 %v8940, %v8935
    %v8946 = vsub.f32 %v8637, %v8911
    %v8947 = vsub.f32 %v8638, %v8912
    %v8948 = vsub.f32 %v8639, %v8913
    %v8949 = vsub.f32 %v8640, %v8914
    %v8950 = vmul.f32 %v8946, %v8942
    %v8951 = vmul.f32 %v8947, %v8943
    %v8952 = vmul.f32 %v8948, %v8944
    %v8953 = vmul.f32 %v8949, %v8945
    %v8954 = vld [vmem:[%s105] sm:$0x1]
    %v8956 = vlaneseq
    %v8957 = vshrl.u32 %v8956, 7
    %v8958 = vsub.s32 0, %v8957
    %v8959 = vrot.slane %v8954, %v8958
    %v8961 = vadd.f32 %v8950, %v8959
    %v8962 = vadd.f32 %v8951, %v8959
    %v8963 = vadd.f32 %v8952, %v8959
    %v8964 = vadd.f32 %v8953, %v8959
    %vm8965 = vcmp.ge.f32.partialorder %v8961, 0.0
    %vm8966 = vcmp.ge.f32.partialorder %v8962, 0.0
    %vm8967 = vcmp.ge.f32.partialorder %v8963, 0.0
    %vm8968 = vcmp.ge.f32.partialorder %v8964, 0.0
    %v8969 = vmul.f32 %v8961, 0.01
    %v8970 = vmul.f32 %v8962, 0.01
    %v8971 = vmul.f32 %v8963, 0.01
    %v8972 = vmul.f32 %v8964, 0.01
    %v8973 = vsel %vm8965, %v8961, %v8969
    %v8974 = vsel %vm8966, %v8962, %v8970
    %v8975 = vsel %vm8967, %v8963, %v8971
    %v8976 = vsel %vm8968, %v8964, %v8972
    %v8977 = vpack.c.bf16 %v8974, %v8973
    %v8978 = vpack.c.bf16 %v8976, %v8975
    %8979 = vmatprep.subr.bf16.mxu0 0
    %8980 = vmatpush1.bf16.msra.mxu0 0
    %8981 = vmatprep.subr.bf16.mxu0 0
    %8982 = vmatpush1.bf16.msra.mxu0 0
    %8983 = vmatprep.subr.bf16.mxu0 0
    %8984 = vmatpush1.bf16.msra.mxu0 0
    %8985 = vmatprep.subr.bf16.mxu0 0
    %8986 = vmatpush1.bf16.msra.mxu0 0
    %8987 = vmatprep.subr.bf16.mxu0 0
    %8988 = vmatpush1.bf16.msra.mxu0 0
    %8989 = vmatprep.subr.bf16.mxu0 0
    %8990 = vmatpush1.bf16.msra.mxu0 0
    %8991 = vmatprep.subr.bf16.mxu0 0
    %8992 = vmatpush1.bf16.msra.mxu0 %v8978
    %8993 = vmatprep.subr.bf16.mxu0 0
    %8994 = vmatpush1.bf16.msra.mxu0 %v8977
    %8995 = vmatprep.subr.bf16.mxu0 0
    %8996 = vmatpush2.bf16.msra.mxu0 0
    %8997 = vmatprep.subr.bf16.mxu0 0
    %8998 = vmatpush2.bf16.msra.mxu0 0
    %8999 = vmatprep.subr.bf16.mxu0 0
    %9000 = vmatpush2.bf16.msra.mxu0 0
    %9001 = vmatprep.subr.bf16.mxu0 0
    %9002 = vmatpush2.bf16.msra.mxu0 0
    %9003 = vmatprep.subr.bf16.mxu0 0
    %9004 = vmatpush2.bf16.msra.mxu0 0
    %9005 = vmatprep.subr.bf16.mxu0 0
    %9006 = vmatpush2.bf16.msra.mxu0 0
    %9007 = vmatprep.subr.bf16.mxu0 0
    %9008 = vmatpush2.bf16.msra.mxu0 0
    %9009 = vmatprep.subr.bf16.mxu0 0
    %9010 = vmatpush2.bf16.msra.mxu0 0
    %9011 = vmatprep.mubr.bf16.mxu0 0
    %9012 = vmatmul.mubr.bf16.gmra.mxu0 %v588
    %v9013 = vpop.f32.mrf.mxu0
    %v9014 = vadd.f32 0.0, %v9013
    %v9015 = vpop.f32.mrf.mxu0
    %v9016 = vpop.f32.mrf.mxu0
    %v9017 = vadd.f32 0.0, %v9016
    %v9018 = vpop.f32.mrf.mxu0
    %9019 = vmatprep.mubr.bf16.mxu0 0
    %9020 = vmatmul.mubr.bf16.gmra.mxu0 %v591
    %v9021 = vpop.f32.mrf.mxu0
    %v9022 = vadd.f32 0.0, %v9021
    %v9023 = vpop.f32.mrf.mxu0
    %v9024 = vpop.f32.mrf.mxu0
    %v9025 = vadd.f32 0.0, %v9024
    %v9026 = vpop.f32.mrf.mxu0
    %9027 = vdwg.mxu0
    %v9028 = vpack.c.bf16 %v9017, %v9014
    %v9029 = vpack.c.bf16 %v9025, %v9022
    %v9030 = vld [vmem:[#allocation37] sm:$0xf]
    %v9031 = vld [vmem:[#allocation37 + $0x4] sm:$0xf]
    %v9032 = vld [vmem:[#allocation37 + $0x8] sm:$0xf]
    %v9033 = vld [vmem:[#allocation37 + $0xc] sm:$0xf]
    %v9034 = vld [vmem:[#allocation37 + $0x10] sm:$0xf]
    %v9035 = vld [vmem:[#allocation37 + $0x14] sm:$0xf]
    %v9036 = vld [vmem:[#allocation37 + $0x18] sm:$0xf]
    %v9037 = vld [vmem:[#allocation37 + $0x1c] sm:$0xf]
    %v9038 = vld [vmem:[#allocation37 + $0x20] sm:$0xf]
    %v9039 = vld [vmem:[#allocation37 + $0x24] sm:$0xf]
    %v9040 = vld [vmem:[#allocation37 + $0x28] sm:$0xf]
    %v9041 = vld [vmem:[#allocation37 + $0x2c] sm:$0xf]
    %v9042 = vld [vmem:[#allocation37 + $0x30] sm:$0xf]
    %v9043 = vld [vmem:[#allocation37 + $0x34] sm:$0xf]
    %v9044 = vld [vmem:[#allocation37 + $0x38] sm:$0xf]
    %v9045 = vld [vmem:[#allocation37 + $0x3c] sm:$0xf]
    %9046 = vmatprep.subr.bf16.mxu0 0
    %9047 = vmatpush1.bf16.msra.mxu0 0
    %9048 = vmatprep.subr.bf16.mxu0 0
    %9049 = vmatpush1.bf16.msra.mxu0 0
    %9050 = vmatprep.subr.bf16.mxu0 0
    %9051 = vmatpush1.bf16.msra.mxu0 0
    %9052 = vmatprep.subr.bf16.mxu0 0
    %9053 = vmatpush1.bf16.msra.mxu0 0
    %9054 = vmatprep.subr.bf16.mxu0 0
    %9055 = vmatpush1.bf16.msra.mxu0 0
    %9056 = vmatprep.subr.bf16.mxu0 0
    %9057 = vmatpush1.bf16.msra.mxu0 0
    %9058 = vmatprep.subr.bf16.mxu0 0
    %9059 = vmatpush1.bf16.msra.mxu0 %v8978
    %9060 = vmatprep.subr.bf16.mxu0 0
    %9061 = vmatpush1.bf16.msra.mxu0 %v8977
    %9062 = vmatprep.subr.bf16.mxu0 0
    %9063 = vmatpush2.bf16.msra.mxu0 0
    %9064 = vmatprep.subr.bf16.mxu0 0
    %9065 = vmatpush2.bf16.msra.mxu0 0
    %9066 = vmatprep.subr.bf16.mxu0 0
    %9067 = vmatpush2.bf16.msra.mxu0 0
    %9068 = vmatprep.subr.bf16.mxu0 0
    %9069 = vmatpush2.bf16.msra.mxu0 0
    %9070 = vmatprep.subr.bf16.mxu0 0
    %9071 = vmatpush2.bf16.msra.mxu0 0
    %9072 = vmatprep.subr.bf16.mxu0 0
    %9073 = vmatpush2.bf16.msra.mxu0 0
    %9074 = vmatprep.subr.bf16.mxu0 0
    %9075 = vmatpush2.bf16.msra.mxu0 0
    %9076 = vmatprep.subr.bf16.mxu0 0
    %9077 = vmatpush2.bf16.msra.mxu0 0
    %9078 = vmatprep.mubr.bf16.mxu0 0
    %9079 = vmatmul.mubr.bf16.gmra.mxu0 %v668
    %v9080 = vpop.f32.mrf.mxu0
    %v9081 = vadd.f32 0.0, %v9080
    %v9082 = vpop.f32.mrf.mxu0
    %v9083 = vpop.f32.mrf.mxu0
    %v9084 = vadd.f32 0.0, %v9083
    %v9085 = vpop.f32.mrf.mxu0
    %9086 = vmatprep.mubr.bf16.mxu0 0
    %9087 = vmatmul.mubr.bf16.gmra.mxu0 %v671
    %v9088 = vpop.f32.mrf.mxu0
    %v9089 = vadd.f32 0.0, %v9088
    %v9090 = vpop.f32.mrf.mxu0
    %v9091 = vpop.f32.mrf.mxu0
    %v9092 = vadd.f32 0.0, %v9091
    %v9093 = vpop.f32.mrf.mxu0
    %9094 = vdwg.mxu0
    %v9095 = vpack.c.bf16 %v9084, %v9081
    %v9096 = vpack.c.bf16 %v9092, %v9089
    %s9097 = scalar_lea.vmem [#allocation37], 64
    %v9098 = vld [vmem:[%s9097] sm:$0xf]
    %v9099 = vld [vmem:[%s9097 + $0x4] sm:$0xf]
    %v9100 = vld [vmem:[%s9097 + $0x8] sm:$0xf]
    %v9101 = vld [vmem:[%s9097 + $0xc] sm:$0xf]
    %v9102 = vld [vmem:[%s9097 + $0x10] sm:$0xf]
    %v9103 = vld [vmem:[%s9097 + $0x14] sm:$0xf]
    %v9104 = vld [vmem:[%s9097 + $0x18] sm:$0xf]
    %v9105 = vld [vmem:[%s9097 + $0x1c] sm:$0xf]
    %v9106 = vld [vmem:[%s9097 + $0x20] sm:$0xf]
    %v9107 = vld [vmem:[%s9097 + $0x24] sm:$0xf]
    %v9108 = vld [vmem:[%s9097 + $0x28] sm:$0xf]
    %v9109 = vld [vmem:[%s9097 + $0x2c] sm:$0xf]
    %v9110 = vld [vmem:[%s9097 + $0x30] sm:$0xf]
    %v9111 = vld [vmem:[%s9097 + $0x34] sm:$0xf]
    %v9112 = vld [vmem:[%s9097 + $0x38] sm:$0xf]
    %v9113 = vld [vmem:[%s9097 + $0x3c] sm:$0xf]
    %v9130 = vunpack.c.l.b16 %v9098
    %v9131 = vunpack.c.l.b16 %v9099
    %v9132 = vunpack.c.l.b16 %v9100
    %v9133 = vunpack.c.l.b16 %v9101
    %v9134 = vunpack.c.l.b16 %v9102
    %v9135 = vunpack.c.l.b16 %v9103
    %v9136 = vunpack.c.l.b16 %v9104
    %v9137 = vunpack.c.l.b16 %v9105
    %v9138 = vunpack.c.l.b16 %v9106
    %v9139 = vunpack.c.l.b16 %v9107
    %v9140 = vunpack.c.l.b16 %v9108
    %v9141 = vunpack.c.l.b16 %v9109
    %v9142 = vunpack.c.l.b16 %v9110
    %v9143 = vunpack.c.l.b16 %v9111
    %v9144 = vunpack.c.l.b16 %v9112
    %v9145 = vunpack.c.l.b16 %v9113
    %v9146 = vpack.c.b16 %v9131, %v9130
    %v9147 = vpack.c.b16 %v9133, %v9132
    %v9148 = vpack.c.b16 %v9135, %v9134
    %v9149 = vpack.c.b16 %v9137, %v9136
    %v9150 = vpack.c.b16 %v9139, %v9138
    %v9151 = vpack.c.b16 %v9141, %v9140
    %v9152 = vpack.c.b16 %v9143, %v9142
    %v9153 = vpack.c.b16 %v9145, %v9144
    %9162 = vmatprep.subr.bf16.mxu0 0
    %9163 = vmatpush1.bf16.msra.mxu0 %v9153
    %9164 = vmatprep.subr.bf16.mxu0 0
    %9165 = vmatpush1.bf16.msra.mxu0 %v9152
    %9166 = vmatprep.subr.bf16.mxu0 0
    %9167 = vmatpush1.bf16.msra.mxu0 %v9151
    %9168 = vmatprep.subr.bf16.mxu0 0
    %9169 = vmatpush1.bf16.msra.mxu0 %v9150
    %9170 = vmatprep.subr.bf16.mxu0 0
    %9171 = vmatpush1.bf16.msra.mxu0 %v9149
    %9172 = vmatprep.subr.bf16.mxu0 0
    %9173 = vmatpush1.bf16.msra.mxu0 %v9148
    %9174 = vmatprep.subr.bf16.mxu0 0
    %9175 = vmatpush1.bf16.msra.mxu0 %v9147
    %9176 = vmatprep.subr.bf16.mxu0 0
    %9177 = vmatpush1.bf16.msra.mxu0 %v9146
    %9178 = vmatprep.subr.bf16.mxu0 0
    %9179 = vmatpush2.bf16.msra.mxu0 0
    %9180 = vmatprep.subr.bf16.mxu0 0
    %9181 = vmatpush2.bf16.msra.mxu0 0
    %9182 = vmatprep.subr.bf16.mxu0 0
    %9183 = vmatpush2.bf16.msra.mxu0 0
    %9184 = vmatprep.subr.bf16.mxu0 0
    %9185 = vmatpush2.bf16.msra.mxu0 0
    %9186 = vmatprep.subr.bf16.mxu0 0
    %9187 = vmatpush2.bf16.msra.mxu0 0
    %9188 = vmatprep.subr.bf16.mxu0 0
    %9189 = vmatpush2.bf16.msra.mxu0 0
    %9190 = vmatprep.subr.bf16.mxu0 0
    %9191 = vmatpush2.bf16.msra.mxu0 0
    %9192 = vmatprep.subr.bf16.mxu0 0
    %9193 = vmatpush2.bf16.msra.mxu0 0
    %9194 = vmatprep.mubr.bf16.mxu0 0
    %9195 = vmatmul.mubr.bf16.gmra.mxu0 %v9095
    %v9196 = vpop.f32.mrf.mxu0
    %v9197 = vadd.f32 0.0, %v9196
    %v9198 = vpop.f32.mrf.mxu0
    %v9199 = vpop.f32.mrf.mxu0
    %v9200 = vadd.f32 0.0, %v9199
    %v9201 = vpop.f32.mrf.mxu0
    %9202 = vmatprep.mubr.bf16.mxu0 0
    %9203 = vmatmul.mubr.bf16.gmra.mxu0 %v9096
    %v9204 = vpop.f32.mrf.mxu0
    %v9205 = vadd.f32 0.0, %v9204
    %v9206 = vpop.f32.mrf.mxu0
    %v9207 = vpop.f32.mrf.mxu0
    %v9208 = vadd.f32 0.0, %v9207
    %v9209 = vpop.f32.mrf.mxu0
    %9210 = vdwg.mxu0
    %v9227 = vunpack.c.l.b16 %v9030
    %v9228 = vunpack.c.l.b16 %v9031
    %v9229 = vunpack.c.l.b16 %v9032
    %v9230 = vunpack.c.l.b16 %v9033
    %v9231 = vunpack.c.l.b16 %v9034
    %v9232 = vunpack.c.l.b16 %v9035
    %v9233 = vunpack.c.l.b16 %v9036
    %v9234 = vunpack.c.l.b16 %v9037
    %v9235 = vunpack.c.l.b16 %v9038
    %v9236 = vunpack.c.l.b16 %v9039
    %v9237 = vunpack.c.l.b16 %v9040
    %v9238 = vunpack.c.l.b16 %v9041
    %v9239 = vunpack.c.l.b16 %v9042
    %v9240 = vunpack.c.l.b16 %v9043
    %v9241 = vunpack.c.l.b16 %v9044
    %v9242 = vunpack.c.l.b16 %v9045
    %v9243 = vpack.c.b16 %v9228, %v9227
    %v9244 = vpack.c.b16 %v9230, %v9229
    %v9245 = vpack.c.b16 %v9232, %v9231
    %v9246 = vpack.c.b16 %v9234, %v9233
    %v9247 = vpack.c.b16 %v9236, %v9235
    %v9248 = vpack.c.b16 %v9238, %v9237
    %v9249 = vpack.c.b16 %v9240, %v9239
    %v9250 = vpack.c.b16 %v9242, %v9241
    %9259 = vmatprep.subr.bf16.mxu0 0
    %9260 = vmatpush1.bf16.msra.mxu0 %v9250
    %9261 = vmatprep.subr.bf16.mxu0 0
    %9262 = vmatpush1.bf16.msra.mxu0 %v9249
    %9263 = vmatprep.subr.bf16.mxu0 0
    %9264 = vmatpush1.bf16.msra.mxu0 %v9248
    %9265 = vmatprep.subr.bf16.mxu0 0
    %9266 = vmatpush1.bf16.msra.mxu0 %v9247
    %9267 = vmatprep.subr.bf16.mxu0 0
    %9268 = vmatpush1.bf16.msra.mxu0 %v9246
    %9269 = vmatprep.subr.bf16.mxu0 0
    %9270 = vmatpush1.bf16.msra.mxu0 %v9245
    %9271 = vmatprep.subr.bf16.mxu0 0
    %9272 = vmatpush1.bf16.msra.mxu0 %v9244
    %9273 = vmatprep.subr.bf16.mxu0 0
    %9274 = vmatpush1.bf16.msra.mxu0 %v9243
    %9275 = vmatprep.subr.bf16.mxu0 0
    %9276 = vmatpush2.bf16.msra.mxu0 0
    %9277 = vmatprep.subr.bf16.mxu0 0
    %9278 = vmatpush2.bf16.msra.mxu0 0
    %9279 = vmatprep.subr.bf16.mxu0 0
    %9280 = vmatpush2.bf16.msra.mxu0 0
    %9281 = vmatprep.subr.bf16.mxu0 0
    %9282 = vmatpush2.bf16.msra.mxu0 0
    %9283 = vmatprep.subr.bf16.mxu0 0
    %9284 = vmatpush2.bf16.msra.mxu0 0
    %9285 = vmatprep.subr.bf16.mxu0 0
    %9286 = vmatpush2.bf16.msra.mxu0 0
    %9287 = vmatprep.subr.bf16.mxu0 0
    %9288 = vmatpush2.bf16.msra.mxu0 0
    %9289 = vmatprep.subr.bf16.mxu0 0
    %9290 = vmatpush2.bf16.msra.mxu0 0
    %9291 = vmatprep.mubr.bf16.mxu0 0
    %9292 = vmatmul.mubr.bf16.gmra.mxu0 %v9028
    %v9293 = vpop.f32.mrf.mxu0
    %v9294 = vadd.f32 %v9197, %v9293
    %v9295 = vpop.f32.mrf.mxu0
    %v9296 = vpop.f32.mrf.mxu0
    %v9297 = vadd.f32 %v9200, %v9296
    %v9298 = vpop.f32.mrf.mxu0
    %9299 = vmatprep.mubr.bf16.mxu0 0
    %9300 = vmatmul.mubr.bf16.gmra.mxu0 %v9029
    %v9301 = vpop.f32.mrf.mxu0
    %v9302 = vadd.f32 %v9205, %v9301
    %v9303 = vpop.f32.mrf.mxu0
    %v9304 = vpop.f32.mrf.mxu0
    %v9305 = vadd.f32 %v9208, %v9304
    %v9306 = vpop.f32.mrf.mxu0
    %9307 = vdwg.mxu0
    %9308 = vmatprep.subr.bf16.mxu0 0
    %9309 = vmatpush1.bf16.msra.mxu0 0
    %9310 = vmatprep.subr.bf16.mxu0 0
    %9311 = vmatpush1.bf16.msra.mxu0 0
    %9312 = vmatprep.subr.bf16.mxu0 0
    %9313 = vmatpush1.bf16.msra.mxu0 0
    %9314 = vmatprep.subr.bf16.mxu0 0
    %9315 = vmatpush1.bf16.msra.mxu0 0
    %9316 = vmatprep.subr.bf16.mxu0 0
    %9317 = vmatpush1.bf16.msra.mxu0 0
    %9318 = vmatprep.subr.bf16.mxu0 0
    %9319 = vmatpush1.bf16.msra.mxu0 0
    %9320 = vmatprep.subr.bf16.mxu0 0
    %9321 = vmatpush1.bf16.msra.mxu0 %v8978
    %9322 = vmatprep.subr.bf16.mxu0 0
    %9323 = vmatpush1.bf16.msra.mxu0 %v8977
    %9324 = vmatprep.subr.bf16.mxu0 0
    %9325 = vmatpush2.bf16.msra.mxu0 0
    %9326 = vmatprep.subr.bf16.mxu0 0
    %9327 = vmatpush2.bf16.msra.mxu0 0
    %9328 = vmatprep.subr.bf16.mxu0 0
    %9329 = vmatpush2.bf16.msra.mxu0 0
    %9330 = vmatprep.subr.bf16.mxu0 0
    %9331 = vmatpush2.bf16.msra.mxu0 0
    %9332 = vmatprep.subr.bf16.mxu0 0
    %9333 = vmatpush2.bf16.msra.mxu0 0
    %9334 = vmatprep.subr.bf16.mxu0 0
    %9335 = vmatpush2.bf16.msra.mxu0 0
    %9336 = vmatprep.subr.bf16.mxu0 0
    %9337 = vmatpush2.bf16.msra.mxu0 0
    %9338 = vmatprep.subr.bf16.mxu0 0
    %9339 = vmatpush2.bf16.msra.mxu0 0
    %9340 = vmatprep.mubr.bf16.mxu0 0
    %9341 = vmatmul.mubr.bf16.gmra.mxu0 %v908
    %v9342 = vpop.f32.mrf.mxu0
    %v9343 = vadd.f32 0.0, %v9342
    %v9344 = vpop.f32.mrf.mxu0
    %v9345 = vpop.f32.mrf.mxu0
    %v9346 = vadd.f32 0.0, %v9345
    %v9347 = vpop.f32.mrf.mxu0
    %9348 = vmatprep.mubr.bf16.mxu0 0
    %9349 = vmatmul.mubr.bf16.gmra.mxu0 %v911
    %v9350 = vpop.f32.mrf.mxu0
    %v9351 = vadd.f32 0.0, %v9350
    %v9352 = vpop.f32.mrf.mxu0
    %v9353 = vpop.f32.mrf.mxu0
    %v9354 = vadd.f32 0.0, %v9353
    %v9355 = vpop.f32.mrf.mxu0
    %9356 = vdwg.mxu0
    %v9357 = vpack.c.bf16 %v9346, %v9343
    %v9358 = vpack.c.bf16 %v9354, %v9351
    %s9359 = scalar_lea.vmem [#allocation37], 128
    %v9360 = vld [vmem:[%s9359] sm:$0xf]
    %v9361 = vld [vmem:[%s9359 + $0x4] sm:$0xf]
    %v9362 = vld [vmem:[%s9359 + $0x8] sm:$0xf]
    %v9363 = vld [vmem:[%s9359 + $0xc] sm:$0xf]
    %v9364 = vld [vmem:[%s9359 + $0x10] sm:$0xf]
    %v9365 = vld [vmem:[%s9359 + $0x14] sm:$0xf]
    %v9366 = vld [vmem:[%s9359 + $0x18] sm:$0xf]
    %v9367 = vld [vmem:[%s9359 + $0x1c] sm:$0xf]
    %v9368 = vld [vmem:[%s9359 + $0x20] sm:$0xf]
    %v9369 = vld [vmem:[%s9359 + $0x24] sm:$0xf]
    %v9370 = vld [vmem:[%s9359 + $0x28] sm:$0xf]
    %v9371 = vld [vmem:[%s9359 + $0x2c] sm:$0xf]
    %v9372 = vld [vmem:[%s9359 + $0x30] sm:$0xf]
    %v9373 = vld [vmem:[%s9359 + $0x34] sm:$0xf]
    %v9374 = vld [vmem:[%s9359 + $0x38] sm:$0xf]
    %v9375 = vld [vmem:[%s9359 + $0x3c] sm:$0xf]
    %v9392 = vunpack.c.l.b16 %v9360
    %v9393 = vunpack.c.l.b16 %v9361
    %v9394 = vunpack.c.l.b16 %v9362
    %v9395 = vunpack.c.l.b16 %v9363
    %v9396 = vunpack.c.l.b16 %v9364
    %v9397 = vunpack.c.l.b16 %v9365
    %v9398 = vunpack.c.l.b16 %v9366
    %v9399 = vunpack.c.l.b16 %v9367
    %v9400 = vunpack.c.l.b16 %v9368
    %v9401 = vunpack.c.l.b16 %v9369
    %v9402 = vunpack.c.l.b16 %v9370
    %v9403 = vunpack.c.l.b16 %v9371
    %v9404 = vunpack.c.l.b16 %v9372
    %v9405 = vunpack.c.l.b16 %v9373
    %v9406 = vunpack.c.l.b16 %v9374
    %v9407 = vunpack.c.l.b16 %v9375
    %v9408 = vpack.c.b16 %v9393, %v9392
    %v9409 = vpack.c.b16 %v9395, %v9394
    %v9410 = vpack.c.b16 %v9397, %v9396
    %v9411 = vpack.c.b16 %v9399, %v9398
    %v9412 = vpack.c.b16 %v9401, %v9400
    %v9413 = vpack.c.b16 %v9403, %v9402
    %v9414 = vpack.c.b16 %v9405, %v9404
    %v9415 = vpack.c.b16 %v9407, %v9406
    %9424 = vmatprep.subr.bf16.mxu0 0
    %9425 = vmatpush1.bf16.msra.mxu0 %v9415
    %9426 = vmatprep.subr.bf16.mxu0 0
    %9427 = vmatpush1.bf16.msra.mxu0 %v9414
    %9428 = vmatprep.subr.bf16.mxu0 0
    %9429 = vmatpush1.bf16.msra.mxu0 %v9413
    %9430 = vmatprep.subr.bf16.mxu0 0
    %9431 = vmatpush1.bf16.msra.mxu0 %v9412
    %9432 = vmatprep.subr.bf16.mxu0 0
    %9433 = vmatpush1.bf16.msra.mxu0 %v9411
    %9434 = vmatprep.subr.bf16.mxu0 0
    %9435 = vmatpush1.bf16.msra.mxu0 %v9410
    %9436 = vmatprep.subr.bf16.mxu0 0
    %9437 = vmatpush1.bf16.msra.mxu0 %v9409
    %9438 = vmatprep.subr.bf16.mxu0 0
    %9439 = vmatpush1.bf16.msra.mxu0 %v9408
    %9440 = vmatprep.subr.bf16.mxu0 0
    %9441 = vmatpush2.bf16.msra.mxu0 0
    %9442 = vmatprep.subr.bf16.mxu0 0
    %9443 = vmatpush2.bf16.msra.mxu0 0
    %9444 = vmatprep.subr.bf16.mxu0 0
    %9445 = vmatpush2.bf16.msra.mxu0 0
    %9446 = vmatprep.subr.bf16.mxu0 0
    %9447 = vmatpush2.bf16.msra.mxu0 0
    %9448 = vmatprep.subr.bf16.mxu0 0
    %9449 = vmatpush2.bf16.msra.mxu0 0
    %9450 = vmatprep.subr.bf16.mxu0 0
    %9451 = vmatpush2.bf16.msra.mxu0 0
    %9452 = vmatprep.subr.bf16.mxu0 0
    %9453 = vmatpush2.bf16.msra.mxu0 0
    %9454 = vmatprep.subr.bf16.mxu0 0
    %9455 = vmatpush2.bf16.msra.mxu0 0
    %9456 = vmatprep.mubr.bf16.mxu0 0
    %9457 = vmatmul.mubr.bf16.gmra.mxu0 %v9357
    %v9458 = vpop.f32.mrf.mxu0
    %v9459 = vadd.f32 0.0, %v9458
    %v9460 = vpop.f32.mrf.mxu0
    %v9461 = vpop.f32.mrf.mxu0
    %v9462 = vadd.f32 0.0, %v9461
    %v9463 = vpop.f32.mrf.mxu0
    %9464 = vmatprep.mubr.bf16.mxu0 0
    %9465 = vmatmul.mubr.bf16.gmra.mxu0 %v9358
    %v9466 = vpop.f32.mrf.mxu0
    %v9467 = vadd.f32 0.0, %v9466
    %v9468 = vpop.f32.mrf.mxu0
    %v9469 = vpop.f32.mrf.mxu0
    %v9470 = vadd.f32 0.0, %v9469
    %v9471 = vpop.f32.mrf.mxu0
    %9472 = vdwg.mxu0
    %v9473 = vadd.f32 %v9294, %v9459
    %v9474 = vadd.f32 %v9297, %v9462
    %v9475 = vadd.f32 %v9302, %v9467
    %v9476 = vadd.f32 %v9305, %v9470
    %v9477 = vld [vmem:[%s109] sm:$0x1]
    %v9479 = vlaneseq
    %v9480 = vshrl.u32 %v9479, 7
    %v9481 = vsub.s32 0, %v9480
    %v9482 = vrot.slane %v9477, %v9481
    %v9484 = vadd.f32 %v9473, %v9482
    %v9485 = vadd.f32 %v9474, %v9482
    %v9486 = vadd.f32 %v9475, %v9482
    %v9487 = vadd.f32 %v9476, %v9482
    %9488 = vmatprep.subr.mxu0 0.0
    %9489 = vmatpush1.msra.mxu0 0.0
    %9490 = vmatprep.subr.mxu0 0.0
    %9491 = vmatpush1.msra.mxu0 0.0
    %9492 = vmatprep.subr.mxu0 0.0
    %9493 = vmatpush1.msra.mxu0 0.0
    %9494 = vmatprep.subr.mxu0 0.0
    %9495 = vmatpush1.msra.mxu0 0.0
    %9496 = vmatprep.subr.mxu0 0.0
    %9497 = vmatpush1.msra.mxu0 0.0
    %9498 = vmatprep.subr.mxu0 0.0
    %9499 = vmatpush1.msra.mxu0 0.0
    %9500 = vmatprep.subr.mxu0 0.0
    %9501 = vmatpush1.msra.mxu0 0.0
    %9502 = vmatprep.subr.mxu0 0.0
    %9503 = vmatpush1.msra.mxu0 0.0
    %9504 = vmatprep.subr.mxu0 0.0
    %9505 = vmatpush1.msra.mxu0 0.0
    %9506 = vmatprep.subr.mxu0 0.0
    %9507 = vmatpush1.msra.mxu0 0.0
    %9508 = vmatprep.subr.mxu0 0.0
    %9509 = vmatpush1.msra.mxu0 0.0
    %9510 = vmatprep.subr.mxu0 0.0
    %9511 = vmatpush1.msra.mxu0 0.0
    %9512 = vmatprep.subr.mxu0 0.0
    %9513 = vmatpush1.msra.mxu0 %v9487
    %9514 = vmatprep.subr.mxu0 0.0
    %9515 = vmatpush1.msra.mxu0 %v9486
    %9516 = vmatprep.subr.mxu0 0.0
    %9517 = vmatpush1.msra.mxu0 %v9485
    %9518 = vmatprep.subr.mxu0 0.0
    %9519 = vmatpush1.msra.mxu0 %v9484
    %9520 = vmatprep.subr.mxu0 0.0
    %9521 = vmatpush2.msra.mxu0 0.0
    %9522 = vmatprep.subr.mxu0 0.0
    %9523 = vmatpush2.msra.mxu0 0.0
    %9524 = vmatprep.subr.mxu0 0.0
    %9525 = vmatpush2.msra.mxu0 0.0
    %9526 = vmatprep.subr.mxu0 0.0
    %9527 = vmatpush2.msra.mxu0 0.0
    %9528 = vmatprep.subr.mxu0 0.0
    %9529 = vmatpush2.msra.mxu0 0.0
    %9530 = vmatprep.subr.mxu0 0.0
    %9531 = vmatpush2.msra.mxu0 0.0
    %9532 = vmatprep.subr.mxu0 0.0
    %9533 = vmatpush2.msra.mxu0 0.0
    %9534 = vmatprep.subr.mxu0 0.0
    %9535 = vmatpush2.msra.mxu0 0.0
    %9536 = vmatprep.subr.mxu0 0.0
    %9537 = vmatpush2.msra.mxu0 0.0
    %9538 = vmatprep.subr.mxu0 0.0
    %9539 = vmatpush2.msra.mxu0 0.0
    %9540 = vmatprep.subr.mxu0 0.0
    %9541 = vmatpush2.msra.mxu0 0.0
    %9542 = vmatprep.subr.mxu0 0.0
    %9543 = vmatpush2.msra.mxu0 0.0
    %9544 = vmatprep.subr.mxu0 0.0
    %9545 = vmatpush2.msra.mxu0 0.0
    %9546 = vmatprep.subr.mxu0 0.0
    %9547 = vmatpush2.msra.mxu0 0.0
    %9548 = vmatprep.subr.mxu0 0.0
    %9549 = vmatpush2.msra.mxu0 0.0
    %9550 = vmatprep.subr.mxu0 0.0
    %9551 = vmatpush2.msra.mxu0 0.0
    %9552 = vmatprep.mubr.f32.mxu0 0.0
    %9553 = vmatmul.mubr.f32.gmra.mxu0 %v1072
    %v9554 = vpop.f32.mrf.mxu0
    %v9555 = vadd.f32 0.0, %v9554
    %v9556 = vpop.f32.mrf.mxu0
    %9557 = vmatprep.mubr.f32.mxu0 0.0
    %9558 = vmatmul.mubr.f32.gmra.mxu0 %v1075
    %v9559 = vpop.f32.mrf.mxu0
    %v9560 = vadd.f32 0.0, %v9559
    %v9561 = vpop.f32.mrf.mxu0
    %9562 = vmatprep.mubr.f32.mxu0 0.0
    %9563 = vmatmul.mubr.f32.gmra.mxu0 %v1078
    %v9564 = vpop.f32.mrf.mxu0
    %v9565 = vadd.f32 0.0, %v9564
    %v9566 = vpop.f32.mrf.mxu0
    %9567 = vmatprep.mubr.f32.mxu0 0.0
    %9568 = vmatmul.mubr.f32.gmra.mxu0 %v1081
    %v9569 = vpop.f32.mrf.mxu0
    %v9570 = vadd.f32 0.0, %v9569
    %v9571 = vpop.f32.mrf.mxu0
    %9572 = vdwg.mxu0
    %v9573 = vmul.f32 %v9484, %v9484
    %v9574 = vmul.f32 %v9485, %v9485
    %v9575 = vmul.f32 %v9486, %v9486
    %v9576 = vmul.f32 %v9487, %v9487
    %9577 = vmatprep.subr.mxu0 0.0
    %9578 = vmatpush1.msra.mxu0 0.0
    %9579 = vmatprep.subr.mxu0 0.0
    %9580 = vmatpush1.msra.mxu0 0.0
    %9581 = vmatprep.subr.mxu0 0.0
    %9582 = vmatpush1.msra.mxu0 0.0
    %9583 = vmatprep.subr.mxu0 0.0
    %9584 = vmatpush1.msra.mxu0 0.0
    %9585 = vmatprep.subr.mxu0 0.0
    %9586 = vmatpush1.msra.mxu0 0.0
    %9587 = vmatprep.subr.mxu0 0.0
    %9588 = vmatpush1.msra.mxu0 0.0
    %9589 = vmatprep.subr.mxu0 0.0
    %9590 = vmatpush1.msra.mxu0 0.0
    %9591 = vmatprep.subr.mxu0 0.0
    %9592 = vmatpush1.msra.mxu0 0.0
    %9593 = vmatprep.subr.mxu0 0.0
    %9594 = vmatpush1.msra.mxu0 0.0
    %9595 = vmatprep.subr.mxu0 0.0
    %9596 = vmatpush1.msra.mxu0 0.0
    %9597 = vmatprep.subr.mxu0 0.0
    %9598 = vmatpush1.msra.mxu0 0.0
    %9599 = vmatprep.subr.mxu0 0.0
    %9600 = vmatpush1.msra.mxu0 0.0
    %9601 = vmatprep.subr.mxu0 0.0
    %9602 = vmatpush1.msra.mxu0 %v9576
    %9603 = vmatprep.subr.mxu0 0.0
    %9604 = vmatpush1.msra.mxu0 %v9575
    %9605 = vmatprep.subr.mxu0 0.0
    %9606 = vmatpush1.msra.mxu0 %v9574
    %9607 = vmatprep.subr.mxu0 0.0
    %9608 = vmatpush1.msra.mxu0 %v9573
    %9609 = vmatprep.subr.mxu0 0.0
    %9610 = vmatpush2.msra.mxu0 0.0
    %9611 = vmatprep.subr.mxu0 0.0
    %9612 = vmatpush2.msra.mxu0 0.0
    %9613 = vmatprep.subr.mxu0 0.0
    %9614 = vmatpush2.msra.mxu0 0.0
    %9615 = vmatprep.subr.mxu0 0.0
    %9616 = vmatpush2.msra.mxu0 0.0
    %9617 = vmatprep.subr.mxu0 0.0
    %9618 = vmatpush2.msra.mxu0 0.0
    %9619 = vmatprep.subr.mxu0 0.0
    %9620 = vmatpush2.msra.mxu0 0.0
    %9621 = vmatprep.subr.mxu0 0.0
    %9622 = vmatpush2.msra.mxu0 0.0
    %9623 = vmatprep.subr.mxu0 0.0
    %9624 = vmatpush2.msra.mxu0 0.0
    %9625 = vmatprep.subr.mxu0 0.0
    %9626 = vmatpush2.msra.mxu0 0.0
    %9627 = vmatprep.subr.mxu0 0.0
    %9628 = vmatpush2.msra.mxu0 0.0
    %9629 = vmatprep.subr.mxu0 0.0
    %9630 = vmatpush2.msra.mxu0 0.0
    %9631 = vmatprep.subr.mxu0 0.0
    %9632 = vmatpush2.msra.mxu0 0.0
    %9633 = vmatprep.subr.mxu0 0.0
    %9634 = vmatpush2.msra.mxu0 0.0
    %9635 = vmatprep.subr.mxu0 0.0
    %9636 = vmatpush2.msra.mxu0 0.0
    %9637 = vmatprep.subr.mxu0 0.0
    %9638 = vmatpush2.msra.mxu0 0.0
    %9639 = vmatprep.subr.mxu0 0.0
    %9640 = vmatpush2.msra.mxu0 0.0
    %9641 = vmatprep.mubr.f32.mxu0 0.0
    %9642 = vmatmul.mubr.f32.gmra.mxu0 %v1072
    %v9643 = vpop.f32.mrf.mxu0
    %v9644 = vadd.f32 0.0, %v9643
    %v9645 = vpop.f32.mrf.mxu0
    %9646 = vmatprep.mubr.f32.mxu0 0.0
    %9647 = vmatmul.mubr.f32.gmra.mxu0 %v1075
    %v9648 = vpop.f32.mrf.mxu0
    %v9649 = vadd.f32 0.0, %v9648
    %v9650 = vpop.f32.mrf.mxu0
    %9651 = vmatprep.mubr.f32.mxu0 0.0
    %9652 = vmatmul.mubr.f32.gmra.mxu0 %v1078
    %v9653 = vpop.f32.mrf.mxu0
    %v9654 = vadd.f32 0.0, %v9653
    %v9655 = vpop.f32.mrf.mxu0
    %9656 = vmatprep.mubr.f32.mxu0 0.0
    %9657 = vmatmul.mubr.f32.gmra.mxu0 %v1081
    %v9658 = vpop.f32.mrf.mxu0
    %v9659 = vadd.f32 0.0, %v9658
    %v9660 = vpop.f32.mrf.mxu0
    %9661 = vdwg.mxu0
    %9662 = vrot.lane.b32.xlu0 %v9555, 8
    %v9663 = vpop.permute.xlu0 %9662
    %9664 = vrot.lane.b32.xlu0 %v9560, 8
    %v9665 = vpop.permute.xlu0 %9664
    %9666 = vrot.lane.b32.xlu0 %v9565, 8
    %v9667 = vpop.permute.xlu0 %9666
    %9668 = vrot.lane.b32.xlu0 %v9570, 8
    %v9669 = vpop.permute.xlu0 %9668
    %v9670 = vadd.f32 %v9555, %v9663
    %v9671 = vadd.f32 %v9560, %v9665
    %v9672 = vadd.f32 %v9565, %v9667
    %v9673 = vadd.f32 %v9570, %v9669
    %9674 = vrot.lane.b32.xlu0 %v9644, 8
    %v9675 = vpop.permute.xlu0 %9674
    %9676 = vrot.lane.b32.xlu0 %v9649, 8
    %v9677 = vpop.permute.xlu0 %9676
    %9678 = vrot.lane.b32.xlu0 %v9654, 8
    %v9679 = vpop.permute.xlu0 %9678
    %9680 = vrot.lane.b32.xlu0 %v9659, 8
    %v9681 = vpop.permute.xlu0 %9680
    %v9682 = vadd.f32 %v9644, %v9675
    %v9683 = vadd.f32 %v9649, %v9677
    %v9684 = vadd.f32 %v9654, %v9679
    %v9685 = vadd.f32 %v9659, %v9681
    %9686 = vrot.lane.b32.xlu0 %v9670, 16
    %v9687 = vpop.permute.xlu0 %9686
    %9688 = vrot.lane.b32.xlu0 %v9671, 16
    %v9689 = vpop.permute.xlu0 %9688
    %9690 = vrot.lane.b32.xlu0 %v9672, 16
    %v9691 = vpop.permute.xlu0 %9690
    %9692 = vrot.lane.b32.xlu0 %v9673, 16
    %v9693 = vpop.permute.xlu0 %9692
    %v9694 = vadd.f32 %v9670, %v9687
    %v9695 = vadd.f32 %v9671, %v9689
    %v9696 = vadd.f32 %v9672, %v9691
    %v9697 = vadd.f32 %v9673, %v9693
    %9698 = vrot.lane.b32.xlu0 %v9682, 16
    %v9699 = vpop.permute.xlu0 %9698
    %9700 = vrot.lane.b32.xlu0 %v9683, 16
    %v9701 = vpop.permute.xlu0 %9700
    %9702 = vrot.lane.b32.xlu0 %v9684, 16
    %v9703 = vpop.permute.xlu0 %9702
    %9704 = vrot.lane.b32.xlu0 %v9685, 16
    %v9705 = vpop.permute.xlu0 %9704
    %v9706 = vadd.f32 %v9682, %v9699
    %v9707 = vadd.f32 %v9683, %v9701
    %v9708 = vadd.f32 %v9684, %v9703
    %v9709 = vadd.f32 %v9685, %v9705
    %9710 = vrot.lane.b32.xlu0 %v9694, 32
    %v9711 = vpop.permute.xlu0 %9710
    %9712 = vrot.lane.b32.xlu0 %v9695, 32
    %v9713 = vpop.permute.xlu0 %9712
    %9714 = vrot.lane.b32.xlu0 %v9696, 32
    %v9715 = vpop.permute.xlu0 %9714
    %9716 = vrot.lane.b32.xlu0 %v9697, 32
    %v9717 = vpop.permute.xlu0 %9716
    %v9718 = vadd.f32 %v9694, %v9711
    %v9719 = vadd.f32 %v9695, %v9713
    %v9720 = vadd.f32 %v9696, %v9715
    %v9721 = vadd.f32 %v9697, %v9717
    %9722 = vrot.lane.b32.xlu0 %v9706, 32
    %v9723 = vpop.permute.xlu0 %9722
    %9724 = vrot.lane.b32.xlu0 %v9707, 32
    %v9725 = vpop.permute.xlu0 %9724
    %9726 = vrot.lane.b32.xlu0 %v9708, 32
    %v9727 = vpop.permute.xlu0 %9726
    %9728 = vrot.lane.b32.xlu0 %v9709, 32
    %v9729 = vpop.permute.xlu0 %9728
    %v9730 = vadd.f32 %v9706, %v9723
    %v9731 = vadd.f32 %v9707, %v9725
    %v9732 = vadd.f32 %v9708, %v9727
    %v9733 = vadd.f32 %v9709, %v9729
    %9734 = vrot.lane.b32.xlu0 %v9718, 64
    %v9735 = vpop.permute.xlu0 %9734
    %9736 = vrot.lane.b32.xlu0 %v9719, 64
    %v9737 = vpop.permute.xlu0 %9736
    %9738 = vrot.lane.b32.xlu0 %v9720, 64
    %v9739 = vpop.permute.xlu0 %9738
    %9740 = vrot.lane.b32.xlu0 %v9721, 64
    %v9741 = vpop.permute.xlu0 %9740
    %v9742 = vadd.f32 %v9718, %v9735
    %v9743 = vadd.f32 %v9719, %v9737
    %v9744 = vadd.f32 %v9720, %v9739
    %v9745 = vadd.f32 %v9721, %v9741
    %9746 = vrot.lane.b32.xlu0 %v9730, 64
    %v9747 = vpop.permute.xlu0 %9746
    %9748 = vrot.lane.b32.xlu0 %v9731, 64
    %v9749 = vpop.permute.xlu0 %9748
    %9750 = vrot.lane.b32.xlu0 %v9732, 64
    %v9751 = vpop.permute.xlu0 %9750
    %9752 = vrot.lane.b32.xlu0 %v9733, 64
    %v9753 = vpop.permute.xlu0 %9752
    %v9754 = vadd.f32 %v9730, %v9747
    %v9755 = vadd.f32 %v9731, %v9749
    %v9756 = vadd.f32 %v9732, %v9751
    %v9757 = vadd.f32 %v9733, %v9753
    %v9758 = vmul.f32 %v9742, 0.0625
    %v9759 = vmul.f32 %v9743, 0.0625
    %v9760 = vmul.f32 %v9744, 0.0625
    %v9761 = vmul.f32 %v9745, 0.0625
    %v9762 = vmul.f32 %v9754, 0.0625
    %v9763 = vmul.f32 %v9755, 0.0625
    %v9764 = vmul.f32 %v9756, 0.0625
    %v9765 = vmul.f32 %v9757, 0.0625
    %v9766 = vmul.f32 %v9758, %v9758
    %v9767 = vmul.f32 %v9759, %v9759
    %v9768 = vmul.f32 %v9760, %v9760
    %v9769 = vmul.f32 %v9761, %v9761
    %v9770 = vsub.f32 %v9762, %v9766
    %v9771 = vsub.f32 %v9763, %v9767
    %v9772 = vsub.f32 %v9764, %v9768
    %v9773 = vsub.f32 %v9765, %v9769
    %v9774 = vld [vmem:[%s111] sm:$0x1]
    %v9775 = vadd.f32 %v9770, 1e-05
    %v9776 = vadd.f32 %v9771, 1e-05
    %v9777 = vadd.f32 %v9772, 1e-05
    %v9778 = vadd.f32 %v9773, 1e-05
    %v9779 = vrsqrt.pop %v9775
    %v9780 = vrsqrt.pop %v9776
    %v9781 = vrsqrt.pop %v9777
    %v9782 = vrsqrt.pop %v9778
    %v9784 = vlaneseq
    %v9785 = vshrl.u32 %v9784, 7
    %v9786 = vsub.s32 0, %v9785
    %v9787 = vrot.slane %v9774, %v9786
    %v9789 = vmul.f32 %v9787, %v9779
    %v9790 = vmul.f32 %v9787, %v9780
    %v9791 = vmul.f32 %v9787, %v9781
    %v9792 = vmul.f32 %v9787, %v9782
    %v9793 = vsub.f32 %v9484, %v9758
    %v9794 = vsub.f32 %v9485, %v9759
    %v9795 = vsub.f32 %v9486, %v9760
    %v9796 = vsub.f32 %v9487, %v9761
    %v9797 = vmul.f32 %v9793, %v9789
    %v9798 = vmul.f32 %v9794, %v9790
    %v9799 = vmul.f32 %v9795, %v9791
    %v9800 = vmul.f32 %v9796, %v9792
    %v9801 = vld [vmem:[%s113] sm:$0x1]
    %v9803 = vlaneseq
    %v9804 = vshrl.u32 %v9803, 7
    %v9805 = vsub.s32 0, %v9804
    %v9806 = vrot.slane %v9801, %v9805
    %v9808 = vadd.f32 %v9797, %v9806
    %v9809 = vadd.f32 %v9798, %v9806
    %v9810 = vadd.f32 %v9799, %v9806
    %v9811 = vadd.f32 %v9800, %v9806
    %vm9812 = vcmp.ge.f32.partialorder %v9808, 0.0
    %vm9813 = vcmp.ge.f32.partialorder %v9809, 0.0
    %vm9814 = vcmp.ge.f32.partialorder %v9810, 0.0
    %vm9815 = vcmp.ge.f32.partialorder %v9811, 0.0
    %v9816 = vmul.f32 %v9808, 0.01
    %v9817 = vmul.f32 %v9809, 0.01
    %v9818 = vmul.f32 %v9810, 0.01
    %v9819 = vmul.f32 %v9811, 0.01
    %v9820 = vsel %vm9812, %v9808, %v9816
    %v9821 = vsel %vm9813, %v9809, %v9817
    %v9822 = vsel %vm9814, %v9810, %v9818
    %v9823 = vsel %vm9815, %v9811, %v9819
    %v9824 = vpack.c.bf16 %v9821, %v9820
    %v9825 = vpack.c.bf16 %v9823, %v9822
    %v9826 = vld [vmem:[%s115] sm:$0xf]
    %v9827 = vld [vmem:[%s115 + $0x4] sm:$0xf]
    %v9828 = vld [vmem:[%s115 + $0x8] sm:$0xf]
    %v9829 = vld [vmem:[%s115 + $0xc] sm:$0xf]
    %v9830 = vld [vmem:[%s115 + $0x10] sm:$0xf]
    %v9831 = vld [vmem:[%s115 + $0x14] sm:$0xf]
    %v9832 = vld [vmem:[%s115 + $0x18] sm:$0xf]
    %v9833 = vld [vmem:[%s115 + $0x1c] sm:$0xf]
    %v9834 = vld [vmem:[%s115 + $0x20] sm:$0xf]
    %v9835 = vld [vmem:[%s115 + $0x24] sm:$0xf]
    %v9836 = vld [vmem:[%s115 + $0x28] sm:$0xf]
    %v9837 = vld [vmem:[%s115 + $0x2c] sm:$0xf]
    %v9838 = vld [vmem:[%s115 + $0x30] sm:$0xf]
    %v9839 = vld [vmem:[%s115 + $0x34] sm:$0xf]
    %v9840 = vld [vmem:[%s115 + $0x38] sm:$0xf]
    %v9841 = vld [vmem:[%s115 + $0x3c] sm:$0xf]
    %v9842 = vld [vmem:[%s117] sm:$0x1]
    %v9844 = vlaneseq
    %v9845 = vshrl.u32 %v9844, 7
    %v9846 = vsub.s32 0, %v9845
    %v9847 = vrot.slane %v9842, %v9846
    %v9865 = vunpack.c.l.b16 %v9826
    %v9866 = vunpack.c.l.b16 %v9827
    %v9867 = vunpack.c.l.b16 %v9828
    %v9868 = vunpack.c.l.b16 %v9829
    %v9869 = vunpack.c.l.b16 %v9830
    %v9870 = vunpack.c.l.b16 %v9831
    %v9871 = vunpack.c.l.b16 %v9832
    %v9872 = vunpack.c.l.b16 %v9833
    %v9873 = vunpack.c.l.b16 %v9834
    %v9874 = vunpack.c.l.b16 %v9835
    %v9875 = vunpack.c.l.b16 %v9836
    %v9876 = vunpack.c.l.b16 %v9837
    %v9877 = vunpack.c.l.b16 %v9838
    %v9878 = vunpack.c.l.b16 %v9839
    %v9879 = vunpack.c.l.b16 %v9840
    %v9880 = vunpack.c.l.b16 %v9841
    %v9881 = vpack.c.b16 %v9866, %v9865
    %v9882 = vpack.c.b16 %v9868, %v9867
    %v9883 = vpack.c.b16 %v9870, %v9869
    %v9884 = vpack.c.b16 %v9872, %v9871
    %v9885 = vpack.c.b16 %v9874, %v9873
    %v9886 = vpack.c.b16 %v9876, %v9875
    %v9887 = vpack.c.b16 %v9878, %v9877
    %v9888 = vpack.c.b16 %v9880, %v9879
    %9897 = vmatprep.subr.bf16.mxu0 0
    %9898 = vmatpush1.bf16.msra.mxu0 %v9888
    %9899 = vmatprep.subr.bf16.mxu0 0
    %9900 = vmatpush1.bf16.msra.mxu0 %v9887
    %9901 = vmatprep.subr.bf16.mxu0 0
    %9902 = vmatpush1.bf16.msra.mxu0 %v9886
    %9903 = vmatprep.subr.bf16.mxu0 0
    %9904 = vmatpush1.bf16.msra.mxu0 %v9885
    %9905 = vmatprep.subr.bf16.mxu0 0
    %9906 = vmatpush1.bf16.msra.mxu0 %v9884
    %9907 = vmatprep.subr.bf16.mxu0 0
    %9908 = vmatpush1.bf16.msra.mxu0 %v9883
    %9909 = vmatprep.subr.bf16.mxu0 0
    %9910 = vmatpush1.bf16.msra.mxu0 %v9882
    %9911 = vmatprep.subr.bf16.mxu0 0
    %9912 = vmatpush1.bf16.msra.mxu0 %v9881
    %9913 = vmatprep.subr.bf16.mxu0 0
    %9914 = vmatpush2.bf16.msra.mxu0 0
    %9915 = vmatprep.subr.bf16.mxu0 0
    %9916 = vmatpush2.bf16.msra.mxu0 0
    %9917 = vmatprep.subr.bf16.mxu0 0
    %9918 = vmatpush2.bf16.msra.mxu0 0
    %9919 = vmatprep.subr.bf16.mxu0 0
    %9920 = vmatpush2.bf16.msra.mxu0 0
    %9921 = vmatprep.subr.bf16.mxu0 0
    %9922 = vmatpush2.bf16.msra.mxu0 0
    %9923 = vmatprep.subr.bf16.mxu0 0
    %9924 = vmatpush2.bf16.msra.mxu0 0
    %9925 = vmatprep.subr.bf16.mxu0 0
    %9926 = vmatpush2.bf16.msra.mxu0 0
    %9927 = vmatprep.subr.bf16.mxu0 0
    %9928 = vmatpush2.bf16.msra.mxu0 0
    %9929 = vmatprep.mubr.bf16.mxu0 0
    %9930 = vmatmul.mubr.bf16.gmra.mxu0 %v9824
    %v9931 = vpop.f32.mrf.mxu0
    %v9932 = vadd.f32 %v9847, %v9931
    %v9933 = vpop.f32.mrf.mxu0
    %v9934 = vpop.f32.mrf.mxu0
    %v9935 = vadd.f32 %v9847, %v9934
    %v9936 = vpop.f32.mrf.mxu0
    %9937 = vmatprep.mubr.bf16.mxu0 0
    %9938 = vmatmul.mubr.bf16.gmra.mxu0 %v9825
    %v9939 = vpop.f32.mrf.mxu0
    %v9940 = vadd.f32 %v9847, %v9939
    %v9941 = vpop.f32.mrf.mxu0
    %v9942 = vpop.f32.mrf.mxu0
    %v9943 = vadd.f32 %v9847, %v9942
    %v9944 = vpop.f32.mrf.mxu0
    %9945 = vdwg.mxu0
    %9946 = vst [vmem:[%s119] sm:$0xff] %v9932
    %9947 = vst [vmem:[%s119 + $0x8] sm:$0xff] %v9935
    %9948 = vst [vmem:[%s119 + $0x10] sm:$0xff] %v9940
    %9949 = vst [vmem:[%s119 + $0x18] sm:$0xff] %v9943
    // Predicated region
    $region334: #{forward.1} parent=1 // pred_check
      _
    $region335: #{forward.1} parent=1 // pred_check_branch
      %9951 = sbr.rel (0) target = $region337
    $region336: #{forward.1} parent=1 // pred_region
      _
    $region337: #{forward.1} parent=1 // pred_fallthru
      _
    // Predicated region
    $region338: #{forward.1} parent=1 // pred_check
      _
    $region339: #{forward.1} parent=1 // pred_check_branch
      %9953 = sbr.rel (0) target = $region341
    $region340: #{forward.1} parent=1 // pred_region
      _
    $region341: #{forward.1} parent=1 // pred_fallthru
      _
    %9954 = vsyncpa [#allocation3], 1
    %9955 = vsyncpa [#allocation5], 1
    %9956 = vsyncpa [#allocation8], 1
    %9957 = vsyncpa [#allocation11], 1
    %9958 = vsyncpa [#allocation14], 1
    %9959 = vsyncpa [#allocation17], 1
    %9960 = vsyncpa [#allocation20], 1
    %9961 = vsyncpa [#allocation23], 1
    %9962 = vsyncpa [#allocation26], 1
    %9963 = vsyncpa [#allocation29], 1
    %9964 = vsyncpa [#allocation32], 1
    %9965 = vsyncpa [#allocation35], 1
    %9966 = vsyncpa [#allocation38], 1

</llo_original>
